<compile_context>
chip_gen: v7x
topology: tpu7x:2x2x1
jax: 0.10.0
libtpu: 0.0.40
codegen_flags: <defaults>
</compile_context>

<pallas_src>
import functools

import jax
import jax.numpy as jnp
from jax import lax
from jax.experimental import pallas as pl
from jax.experimental.pallas import tpu as pltpu


def _dense_block_kernel(x_ref, *refs, layers, growth, in_channels, kh, kw,
                        H, W, b_tile):
    """Fused DenseBlock for one batch tile.

    x_ref : (B_TILE, Cin0, H*W)            f32  NCHW input block (lane = H*W)
    refs  = (w_0..w_{L-1}, b_0..b_{L-1}, o_ref, comb)
      w_l : (kh*kw, Cin_l, growth)         bf16 per-tap weight slabs
      b_l : (1, growth)                    f32  bias row
      o_ref: (B_TILE, Ctot, H*W)           f32  NCHW output block (lane = H*W)
      comb : (B_TILE, Hp, Wp, Cused)       bf16 combined zero-padded features
    """
    w_refs = refs[:layers]
    b_refs = refs[layers:2 * layers]
    o_ref = refs[2 * layers]
    comb = refs[2 * layers + 1]

    HW = H * W
    Hp, Wp = H + kh - 1, W + kw - 1
    M = b_tile * HW
    c_used = comb.shape[-1]            # in_channels + (layers-1)*growth

    # Zero ONLY the thin right/bottom pad strips (ConstantPad2d semantics).
    # Done unconditionally every grid step, so it is also correct when each
    # TensorCore owns a private scratch copy (CORE_PARALLEL on v7x).
    if kh > 1:
        comb[:, H:Hp, :, :] = jnp.zeros((b_tile, kh - 1, Wp, c_used),
                                        comb.dtype)
    if kw > 1:
        comb[:, 0:H, W:Wp, :] = jnp.zeros((b_tile, H, kw - 1, c_used),
                                          comb.dtype)

    # Stage the NCHW input into the channel-last padded scratch (bf16 for the
    # im2col/matmul path) and copy it straight through to the NCHW output
    # (exact f32 passthrough, lane-dense store).
    for b in range(b_tile):
        x_b = x_ref[b]                                        # (Cin0, HW) f32
        o_ref[b, 0:in_channels, :] = x_b
        x_hwc = jnp.transpose(x_b, (1, 0)).reshape(H, W, in_channels)
        comb[b, 0:H, 0:W, 0:in_channels] = x_hwc.astype(comb.dtype)

    c_in = in_channels
    for l in range(layers):
        w_ref = w_refs[l]                                     # (kh*kw, c_in, g)

        # kh*kw accumulating MXU matmuls; each tap is ONE contiguous slice of
        # the combined scratch (no multi-segment channel concatenates).
        acc = None
        t = 0
        for dh in range(kh):
            for dw in range(kw):
                tap = comb[:, dh:dh + H, dw:dw + W, 0:c_in].reshape(M, c_in)
                part = jnp.dot(tap, w_ref[t],                 # bf16 x bf16
                               preferred_element_type=jnp.float32)
                acc = part if acc is None else acc + part
                t += 1

        y = jnp.maximum(acc + b_refs[l][...], 0.0)            # f32 bias + ReLU

        coff = in_channels + l * growth
        for b in range(b_tile):
            y_b = y[b * HW:(b + 1) * HW, :]                   # (HW, g) f32
            # Lane-dense NCHW store of this layer's channel slice.
            o_ref[b, coff:coff + growth, :] = (
                jnp.transpose(y_b, (1, 0)).astype(o_ref.dtype))
            # Stage y back into the padded scratch only if a later layer
            # reads it (the last layer's output is never re-read).
            if l + 1 < layers:
                comb[b, 0:H, 0:W, coff:coff + growth] = (
                    y_b.reshape(H, W, growth).astype(comb.dtype))
        c_in += growth


def _pick_batch_tile(n):
    """>=2 grid steps when possible (so v7x's 2 TCs both get work) while
    batching several images per step to amortize per-step overhead."""
    for cand in (8, 4, 2):
        if n % cand == 0 and n // cand >= 2:
            return cand
    return 1


def _batch_dim_semantics():
    """CORE_PARALLEL on v7x (2 TensorCores/chip), PARALLEL elsewhere."""
    try:
        kind = jax.devices()[0].device_kind.lower()
    except Exception:
        kind = ""
    if "v7" in kind or "7x" in kind:
        return (pltpu.CORE_PARALLEL,)
    return (pltpu.PARALLEL,)


def dense_block_pallas(x_nchw, params, kernel_size, *, b_tile=None):
    """Fused DenseBlock forward. Input/output layout NCHW (matches PyTorch)."""
    kh, kw = kernel_size
    N, cin0, H, W = x_nchw.shape
    layers = len(params)
    growth = params[0][1].shape[0]
    ctot = cin0 + layers * growth
    HW = H * W
    Hp, Wp = H + kh - 1, W + kw - 1
    if b_tile is None:
        b_tile = _pick_batch_tile(N)
    assert N % b_tile == 0, (N, b_tile)

    # Free (contiguous) reshape: NCHW -> (N, C, H*W); lane dim = H*W.
    x_flat = x_nchw.reshape(N, cin0, HW)

    # Pre-pack params (tiny, static): HWIO (kh,kw,Cin_l,g) -> per-tap slabs
    # (kh*kw, Cin_l, g) in bf16; (1, g) f32 bias rows.
    w_inputs, b_inputs = [], []
    c = cin0
    for (w, b) in params:
        w_inputs.append(w.reshape(kh * kw, c, growth).astype(jnp.bfloat16))
        b_inputs.append(b.reshape(1, growth).astype(jnp.float32))
        c += growth

    # The last layer's output is never re-read, so the padded scratch only
    # needs the first in_channels + (layers-1)*growth channels.
    c_used = cin0 + (layers - 1) * growth

    kernel = functools.partial(
        _dense_block_kernel, layers=layers, growth=growth, in_channels=cin0,
        kh=kh, kw=kw, H=H, W=W, b_tile=b_tile)

    in_specs = [pl.BlockSpec((b_tile, cin0, HW), lambda n: (n, 0, 0))]
    in_specs += [pl.BlockSpec(wi.shape, lambda n: (0, 0, 0)) for wi in w_inputs]
    in_specs += [pl.BlockSpec(bi.shape, lambda n: (0, 0)) for bi in b_inputs]

    out_flat = pl.pallas_call(
        kernel,
        out_shape=jax.ShapeDtypeStruct((N, ctot, HW), jnp.float32),
        grid_spec=pltpu.PrefetchScalarGridSpec(
            num_scalar_prefetch=0,
            grid=(N // b_tile,),
            in_specs=in_specs,
            out_specs=pl.BlockSpec((b_tile, ctot, HW), lambda n: (n, 0, 0)),
            scratch_shapes=[
                pltpu.VMEM((b_tile, Hp, Wp, c_used), jnp.bfloat16)],
        ),
        compiler_params=pltpu.CompilerParams(
            dimension_semantics=_batch_dim_semantics()),
    )(x_flat, *w_inputs, *b_inputs)

    # Free reshape back to NCHW spatial layout.
    return out_flat.reshape(N, ctot, H, W)


def dense_block_forward(x_nchw, params, kernel_size):
    """DenseBlock.forward, NCHW in / NCHW out (no wrapper transposes)."""
    return dense_block_pallas(x_nchw, params, kernel_size)


def init_dense_block_params(key, in_channels, growth_rate, kernel_size, layers):
    """Deterministic PyTorch-Conv2d-style uniform init; HWIO weights."""
    kh, kw = kernel_size
    params = []
    c = in_channels
    for _ in range(layers):
        key, kw_key, kb_key = jax.random.split(key, 3)
        fan_in = c * kh * kw
        bound = 1.0 / jnp.sqrt(jnp.float32(fan_in))
        w = jax.random.uniform(kw_key, (kh, kw, c, growth_rate),
                               minval=-bound, maxval=bound, dtype=jnp.float32)
        b = jax.random.uniform(kb_key, (growth_rate,),
                               minval=-bound, maxval=bound, dtype=jnp.float32)
        params.append((w, b))
        c += growth_rate
    return params


def dense_block_reference(x_nchw, params, kernel_size, matmul_dtype=jnp.float32):
    """Pure-JAX reference (lax.conv). matmul_dtype=bf16 mirrors the kernel's
    MXU operand precision (f32 accumulation in both)."""
    kh, kw = kernel_size
    x = jnp.transpose(x_nchw, (0, 2, 3, 1))
    for (w, b) in params:
        y = lax.conv_general_dilated(
            x.astype(matmul_dtype), w.astype(matmul_dtype),
            window_strides=(1, 1),
            padding=((0, kh - 1), (0, kw - 1)),
            dimension_numbers=('NHWC', 'HWIO', 'NHWC'),
            preferred_element_type=jnp.float32,
        ) + b[None, None, None, :]
        y = jnp.maximum(y, 0.0)
        x = jnp.concatenate([x, y], axis=-1)
    return jnp.transpose(x, (0, 3, 1, 2))


if __name__ == "__main__":
    # Module defaults: growth_rate=20, kernel_size=(2,2), layers_per_dense_block=3.
    in_channels = 4
    growth_rate = 20
    kernel_size = (2, 2)
    layers = 3

    key = jax.random.PRNGKey(0)
    key, xkey = jax.random.split(key)
    x = jax.random.normal(xkey, (2, in_channels, 16, 16), dtype=jnp.float32)  # NCHW

    params = init_dense_block_params(key, in_channels, growth_rate,
                                     kernel_size, layers)

    fwd = jax.jit(functools.partial(dense_block_forward, kernel_size=kernel_size))
    out = jax.block_until_ready(fwd(x, params))

    expected_channels = in_channels + layers * growth_rate
    assert out.shape == (2, expected_channels, 16, 16), out.shape

    # Tight check against a reference with the kernel's mixed precision
    # (bf16 MXU operands, f32 accumulation): only accumulation-order deltas.
    ref_bf16 = jax.block_until_ready(
        dense_block_reference(x, params, kernel_size, matmul_dtype=jnp.bfloat16))
    assert jnp.allclose(out, ref_bf16, atol=1e-2, rtol=1e-2), \
        float(jnp.max(jnp.abs(out - ref_bf16)))

    # Sanity check against full-f32 module semantics (tolerance covers bf16
    # operand rounding only; the x passthrough and outputs stay f32).
    ref_f32 = jax.block_until_ready(
        dense_block_reference(x, params, kernel_size, matmul_dtype=jnp.float32))
    assert jnp.allclose(out, ref_f32, atol=8e-2, rtol=8e-2), \
        float(jnp.max(jnp.abs(out - ref_f32)))

    print("KERNEL_OK")
</pallas_src>

<mosaic_0001>
module attributes {stable_mosaic.version = 11 : i64} {
  func.func @_dense_block_kernel(%arg0: i32, %arg1: memref<1x4x256xf32, #tpu.memory_space<vmem>>, %arg2: memref<4x4x20xbf16, #tpu.memory_space<vmem>>, %arg3: memref<4x24x20xbf16, #tpu.memory_space<vmem>>, %arg4: memref<4x44x20xbf16, #tpu.memory_space<vmem>>, %arg5: memref<1x20xf32, #tpu.memory_space<vmem>>, %arg6: memref<1x20xf32, #tpu.memory_space<vmem>>, %arg7: memref<1x20xf32, #tpu.memory_space<vmem>>, %arg8: memref<1x64x256xf32, #tpu.memory_space<vmem>>, %arg9: memref<1x17x17x44xbf16, #tpu.memory_space<vmem>>) attributes {dimension_semantics = [#tpu.dimension_semantics<parallel>], iteration_bounds = array<i64: 2>, scalar_prefetch = 0 : i64, scratch_operands = 1 : i64, tpu.core_type = #tpu.core_type<tc>, window_params = [{transform_indices = @transform_0, window_bounds = array<i64: 1, 4, 256>}, {pipeline_mode = #tpu.pipeline_mode<synchronous>, transform_indices = @transform_1, window_bounds = array<i64: 4, 4, 20>}, {pipeline_mode = #tpu.pipeline_mode<synchronous>, transform_indices = @transform_2, window_bounds = array<i64: 4, 24, 20>}, {pipeline_mode = #tpu.pipeline_mode<synchronous>, transform_indices = @transform_3, window_bounds = array<i64: 4, 44, 20>}, {pipeline_mode = #tpu.pipeline_mode<synchronous>, transform_indices = @transform_4, window_bounds = array<i64: 1, 20>}, {pipeline_mode = #tpu.pipeline_mode<synchronous>, transform_indices = @transform_5, window_bounds = array<i64: 1, 20>}, {pipeline_mode = #tpu.pipeline_mode<synchronous>, transform_indices = @transform_6, window_bounds = array<i64: 1, 20>}, {transform_indices = @transform_7, window_bounds = array<i64: 1, 64, 256>}]} {
    %cst = arith.constant 0.000000e+00 : bf16
    %0 = vector.broadcast %cst : bf16 to vector<1x1x17x44xbf16>
    %c0 = arith.constant 0 : index
    %c16 = arith.constant 16 : index
    %c0_0 = arith.constant 0 : index
    %c0_1 = arith.constant 0 : index
    %1 = vector.load %arg9[%c0, %c16, %c0_0, %c0_1] : memref<1x17x17x44xbf16, #tpu.memory_space<vmem>>, vector<1x1x17x44xbf16>
    tpu.vector_store %arg9[%c0, %c16, %c0_0, %c0_1], %0 {strides = array<i32>} : memref<1x17x17x44xbf16, #tpu.memory_space<vmem>>, vector<1x1x17x44xbf16>,
    %cst_2 = arith.constant 0.000000e+00 : bf16
    %2 = vector.broadcast %cst_2 : bf16 to vector<1x16x1x44xbf16>
    %c0_3 = arith.constant 0 : index
    %c0_4 = arith.constant 0 : index
    %c16_5 = arith.constant 16 : index
    %c0_6 = arith.constant 0 : index
    %3 = vector.load %arg9[%c0_3, %c0_4, %c16_5, %c0_6] : memref<1x17x17x44xbf16, #tpu.memory_space<vmem>>, vector<1x16x1x44xbf16>
    tpu.vector_store %arg9[%c0_3, %c0_4, %c16_5, %c0_6], %2 {strides = array<i32>} : memref<1x17x17x44xbf16, #tpu.memory_space<vmem>>, vector<1x16x1x44xbf16>,
    %c0_7 = arith.constant 0 : index
    %c0_8 = arith.constant 0 : index
    %c0_9 = arith.constant 0 : index
    %4 = vector.load %arg1[%c0_7, %c0_8, %c0_9] : memref<1x4x256xf32, #tpu.memory_space<vmem>>, vector<1x4x256xf32>
    %5 = vector.shape_cast %4 : vector<1x4x256xf32> to vector<4x256xf32>
    %c0_10 = arith.constant 0 : index
    %c0_11 = arith.constant 0 : index
    %c0_12 = arith.constant 0 : index
    %6 = vector.load %arg8[%c0_10, %c0_11, %c0_12] : memref<1x64x256xf32, #tpu.memory_space<vmem>>, vector<1x4x256xf32>
    %7 = vector.shape_cast %6 : vector<1x4x256xf32> to vector<4x256xf32>
    %8 = vector.shape_cast %5 : vector<4x256xf32> to vector<1x4x256xf32>
    tpu.vector_store %arg8[%c0_10, %c0_11, %c0_12], %8 {strides = array<i32>} : memref<1x64x256xf32, #tpu.memory_space<vmem>>, vector<1x4x256xf32>,
    %9 = tpu.transpose %5, [1, 0] : vector<4x256xf32> -> vector<256x4xf32>
    %10 = vector.shape_cast %9 : vector<256x4xf32> to vector<16x16x4xf32>
    %11 = arith.truncf %10 : vector<16x16x4xf32> to vector<16x16x4xbf16>
    %c0_13 = arith.constant 0 : index
    %c0_14 = arith.constant 0 : index
    %c0_15 = arith.constant 0 : index
    %c0_16 = arith.constant 0 : index
    %12 = vector.load %arg9[%c0_13, %c0_14, %c0_15, %c0_16] : memref<1x17x17x44xbf16, #tpu.memory_space<vmem>>, vector<1x16x16x4xbf16>
    %13 = vector.shape_cast %12 : vector<1x16x16x4xbf16> to vector<16x16x4xbf16>
    %14 = vector.shape_cast %11 : vector<16x16x4xbf16> to vector<1x16x16x4xbf16>
    tpu.vector_store %arg9[%c0_13, %c0_14, %c0_15, %c0_16], %14 {strides = array<i32>} : memref<1x17x17x44xbf16, #tpu.memory_space<vmem>>, vector<1x16x16x4xbf16>,
    %c0_17 = arith.constant 0 : index
    %c0_18 = arith.constant 0 : index
    %c0_19 = arith.constant 0 : index
    %c0_20 = arith.constant 0 : index
    %15 = vector.load %arg9[%c0_17, %c0_18, %c0_19, %c0_20] : memref<1x17x17x44xbf16, #tpu.memory_space<vmem>>, vector<1x16x16x4xbf16>
    %16 = vector.shape_cast %15 : vector<1x16x16x4xbf16> to vector<256x4xbf16>
    %c0_21 = arith.constant 0 : index
    %c0_22 = arith.constant 0 : index
    %c0_23 = arith.constant 0 : index
    %17 = vector.load %arg2[%c0_21, %c0_22, %c0_23] : memref<4x4x20xbf16, #tpu.memory_space<vmem>>, vector<1x4x20xbf16>
    %18 = vector.shape_cast %17 : vector<1x4x20xbf16> to vector<4x20xbf16>
    %cst_24 = arith.constant dense<0.000000e+00> : vector<256x20xf32>
    %19 = tpu.matmul %16, %18, %cst_24 {dimension_numbers = #tpu.dot_dimension_numbers<[1], [0], [0], [1], [0, 0, 1, 1], [], []>} : vector<256x4xbf16>, vector<4x20xbf16>, vector<256x20xf32> -> vector<256x20xf32>
    %c0_25 = arith.constant 0 : index
    %c0_26 = arith.constant 0 : index
    %c1 = arith.constant 1 : index
    %c0_27 = arith.constant 0 : index
    %20 = vector.load %arg9[%c0_25, %c0_26, %c1, %c0_27] : memref<1x17x17x44xbf16, #tpu.memory_space<vmem>>, vector<1x16x16x4xbf16>
    %21 = vector.shape_cast %20 : vector<1x16x16x4xbf16> to vector<256x4xbf16>
    %c1_28 = arith.constant 1 : index
    %c0_29 = arith.constant 0 : index
    %c0_30 = arith.constant 0 : index
    %22 = vector.load %arg2[%c1_28, %c0_29, %c0_30] : memref<4x4x20xbf16, #tpu.memory_space<vmem>>, vector<1x4x20xbf16>
    %23 = vector.shape_cast %22 : vector<1x4x20xbf16> to vector<4x20xbf16>
    %cst_31 = arith.constant dense<0.000000e+00> : vector<256x20xf32>
    %24 = tpu.matmul %21, %23, %cst_31 {dimension_numbers = #tpu.dot_dimension_numbers<[1], [0], [0], [1], [0, 0, 1, 1], [], []>} : vector<256x4xbf16>, vector<4x20xbf16>, vector<256x20xf32> -> vector<256x20xf32>
    %25 = arith.addf %19, %24 : vector<256x20xf32>
    %c0_32 = arith.constant 0 : index
    %c1_33 = arith.constant 1 : index
    %c0_34 = arith.constant 0 : index
    %c0_35 = arith.constant 0 : index
    %26 = vector.load %arg9[%c0_32, %c1_33, %c0_34, %c0_35] : memref<1x17x17x44xbf16, #tpu.memory_space<vmem>>, vector<1x16x16x4xbf16>
    %27 = vector.shape_cast %26 : vector<1x16x16x4xbf16> to vector<256x4xbf16>
    %c2 = arith.constant 2 : index
    %c0_36 = arith.constant 0 : index
    %c0_37 = arith.constant 0 : index
    %28 = vector.load %arg2[%c2, %c0_36, %c0_37] : memref<4x4x20xbf16, #tpu.memory_space<vmem>>, vector<1x4x20xbf16>
    %29 = vector.shape_cast %28 : vector<1x4x20xbf16> to vector<4x20xbf16>
    %cst_38 = arith.constant dense<0.000000e+00> : vector<256x20xf32>
    %30 = tpu.matmul %27, %29, %cst_38 {dimension_numbers = #tpu.dot_dimension_numbers<[1], [0], [0], [1], [0, 0, 1, 1], [], []>} : vector<256x4xbf16>, vector<4x20xbf16>, vector<256x20xf32> -> vector<256x20xf32>
    %31 = arith.addf %25, %30 : vector<256x20xf32>
    %c0_39 = arith.constant 0 : index
    %c1_40 = arith.constant 1 : index
    %c1_41 = arith.constant 1 : index
    %c0_42 = arith.constant 0 : index
    %32 = vector.load %arg9[%c0_39, %c1_40, %c1_41, %c0_42] : memref<1x17x17x44xbf16, #tpu.memory_space<vmem>>, vector<1x16x16x4xbf16>
    %33 = vector.shape_cast %32 : vector<1x16x16x4xbf16> to vector<256x4xbf16>
    %c3 = arith.constant 3 : index
    %c0_43 = arith.constant 0 : index
    %c0_44 = arith.constant 0 : index
    %34 = vector.load %arg2[%c3, %c0_43, %c0_44] : memref<4x4x20xbf16, #tpu.memory_space<vmem>>, vector<1x4x20xbf16>
    %35 = vector.shape_cast %34 : vector<1x4x20xbf16> to vector<4x20xbf16>
    %cst_45 = arith.constant dense<0.000000e+00> : vector<256x20xf32>
    %36 = tpu.matmul %33, %35, %cst_45 {dimension_numbers = #tpu.dot_dimension_numbers<[1], [0], [0], [1], [0, 0, 1, 1], [], []>} : vector<256x4xbf16>, vector<4x20xbf16>, vector<256x20xf32> -> vector<256x20xf32>
    %37 = arith.addf %31, %36 : vector<256x20xf32>
    %c0_46 = arith.constant 0 : index
    %c0_47 = arith.constant 0 : index
    %38 = vector.load %arg5[%c0_46, %c0_47] : memref<1x20xf32, #tpu.memory_space<vmem>>, vector<1x20xf32>
    %39 = vector.broadcast %38 : vector<1x20xf32> to vector<256x20xf32>
    %40 = arith.addf %37, %39 : vector<256x20xf32>
    %cst_48 = arith.constant 0.000000e+00 : f32
    %41 = vector.broadcast %cst_48 : f32 to vector<256x20xf32>
    %42 = arith.maximumf %40, %41 : vector<256x20xf32>
    %43 = tpu.transpose %42, [1, 0] : vector<256x20xf32> -> vector<20x256xf32>
    %c0_49 = arith.constant 0 : index
    %c4 = arith.constant 4 : index
    %c0_50 = arith.constant 0 : index
    %44 = vector.load %arg8[%c0_49, %c4, %c0_50] : memref<1x64x256xf32, #tpu.memory_space<vmem>>, vector<1x20x256xf32>
    %45 = vector.shape_cast %44 : vector<1x20x256xf32> to vector<20x256xf32>
    %46 = vector.shape_cast %43 : vector<20x256xf32> to vector<1x20x256xf32>
    tpu.vector_store %arg8[%c0_49, %c4, %c0_50], %46 {strides = array<i32>} : memref<1x64x256xf32, #tpu.memory_space<vmem>>, vector<1x20x256xf32>,
    %47 = vector.shape_cast %42 : vector<256x20xf32> to vector<16x16x20xf32>
    %48 = arith.truncf %47 : vector<16x16x20xf32> to vector<16x16x20xbf16>
    %c0_51 = arith.constant 0 : index
    %c0_52 = arith.constant 0 : index
    %c0_53 = arith.constant 0 : index
    %c4_54 = arith.constant 4 : index
    %49 = vector.load %arg9[%c0_51, %c0_52, %c0_53, %c4_54] : memref<1x17x17x44xbf16, #tpu.memory_space<vmem>>, vector<1x16x16x20xbf16>
    %50 = vector.shape_cast %49 : vector<1x16x16x20xbf16> to vector<16x16x20xbf16>
    %51 = vector.shape_cast %48 : vector<16x16x20xbf16> to vector<1x16x16x20xbf16>
    tpu.vector_store %arg9[%c0_51, %c0_52, %c0_53, %c4_54], %51 {strides = array<i32>} : memref<1x17x17x44xbf16, #tpu.memory_space<vmem>>, vector<1x16x16x20xbf16>,
    %c0_55 = arith.constant 0 : index
    %c0_56 = arith.constant 0 : index
    %c0_57 = arith.constant 0 : index
    %c0_58 = arith.constant 0 : index
    %52 = vector.load %arg9[%c0_55, %c0_56, %c0_57, %c0_58] : memref<1x17x17x44xbf16, #tpu.memory_space<vmem>>, vector<1x16x16x24xbf16>
    %53 = vector.shape_cast %52 : vector<1x16x16x24xbf16> to vector<256x24xbf16>
    %c0_59 = arith.constant 0 : index
    %c0_60 = arith.constant 0 : index
    %c0_61 = arith.constant 0 : index
    %54 = vector.load %arg3[%c0_59, %c0_60, %c0_61] : memref<4x24x20xbf16, #tpu.memory_space<vmem>>, vector<1x24x20xbf16>
    %55 = vector.shape_cast %54 : vector<1x24x20xbf16> to vector<24x20xbf16>
    %cst_62 = arith.constant dense<0.000000e+00> : vector<256x20xf32>
    %56 = tpu.matmul %53, %55, %cst_62 {dimension_numbers = #tpu.dot_dimension_numbers<[1], [0], [0], [1], [0, 0, 1, 1], [], []>} : vector<256x24xbf16>, vector<24x20xbf16>, vector<256x20xf32> -> vector<256x20xf32>
    %c0_63 = arith.constant 0 : index
    %c0_64 = arith.constant 0 : index
    %c1_65 = arith.constant 1 : index
    %c0_66 = arith.constant 0 : index
    %57 = vector.load %arg9[%c0_63, %c0_64, %c1_65, %c0_66] : memref<1x17x17x44xbf16, #tpu.memory_space<vmem>>, vector<1x16x16x24xbf16>
    %58 = vector.shape_cast %57 : vector<1x16x16x24xbf16> to vector<256x24xbf16>
    %c1_67 = arith.constant 1 : index
    %c0_68 = arith.constant 0 : index
    %c0_69 = arith.constant 0 : index
    %59 = vector.load %arg3[%c1_67, %c0_68, %c0_69] : memref<4x24x20xbf16, #tpu.memory_space<vmem>>, vector<1x24x20xbf16>
    %60 = vector.shape_cast %59 : vector<1x24x20xbf16> to vector<24x20xbf16>
    %cst_70 = arith.constant dense<0.000000e+00> : vector<256x20xf32>
    %61 = tpu.matmul %58, %60, %cst_70 {dimension_numbers = #tpu.dot_dimension_numbers<[1], [0], [0], [1], [0, 0, 1, 1], [], []>} : vector<256x24xbf16>, vector<24x20xbf16>, vector<256x20xf32> -> vector<256x20xf32>
    %62 = arith.addf %56, %61 : vector<256x20xf32>
    %c0_71 = arith.constant 0 : index
    %c1_72 = arith.constant 1 : index
    %c0_73 = arith.constant 0 : index
    %c0_74 = arith.constant 0 : index
    %63 = vector.load %arg9[%c0_71, %c1_72, %c0_73, %c0_74] : memref<1x17x17x44xbf16, #tpu.memory_space<vmem>>, vector<1x16x16x24xbf16>
    %64 = vector.shape_cast %63 : vector<1x16x16x24xbf16> to vector<256x24xbf16>
    %c2_75 = arith.constant 2 : index
    %c0_76 = arith.constant 0 : index
    %c0_77 = arith.constant 0 : index
    %65 = vector.load %arg3[%c2_75, %c0_76, %c0_77] : memref<4x24x20xbf16, #tpu.memory_space<vmem>>, vector<1x24x20xbf16>
    %66 = vector.shape_cast %65 : vector<1x24x20xbf16> to vector<24x20xbf16>
    %cst_78 = arith.constant dense<0.000000e+00> : vector<256x20xf32>
    %67 = tpu.matmul %64, %66, %cst_78 {dimension_numbers = #tpu.dot_dimension_numbers<[1], [0], [0], [1], [0, 0, 1, 1], [], []>} : vector<256x24xbf16>, vector<24x20xbf16>, vector<256x20xf32> -> vector<256x20xf32>
    %68 = arith.addf %62, %67 : vector<256x20xf32>
    %c0_79 = arith.constant 0 : index
    %c1_80 = arith.constant 1 : index
    %c1_81 = arith.constant 1 : index
    %c0_82 = arith.constant 0 : index
    %69 = vector.load %arg9[%c0_79, %c1_80, %c1_81, %c0_82] : memref<1x17x17x44xbf16, #tpu.memory_space<vmem>>, vector<1x16x16x24xbf16>
    %70 = vector.shape_cast %69 : vector<1x16x16x24xbf16> to vector<256x24xbf16>
    %c3_83 = arith.constant 3 : index
    %c0_84 = arith.constant 0 : index
    %c0_85 = arith.constant 0 : index
    %71 = vector.load %arg3[%c3_83, %c0_84, %c0_85] : memref<4x24x20xbf16, #tpu.memory_space<vmem>>, vector<1x24x20xbf16>
    %72 = vector.shape_cast %71 : vector<1x24x20xbf16> to vector<24x20xbf16>
    %cst_86 = arith.constant dense<0.000000e+00> : vector<256x20xf32>
    %73 = tpu.matmul %70, %72, %cst_86 {dimension_numbers = #tpu.dot_dimension_numbers<[1], [0], [0], [1], [0, 0, 1, 1], [], []>} : vector<256x24xbf16>, vector<24x20xbf16>, vector<256x20xf32> -> vector<256x20xf32>
    %74 = arith.addf %68, %73 : vector<256x20xf32>
    %c0_87 = arith.constant 0 : index
    %c0_88 = arith.constant 0 : index
    %75 = vector.load %arg6[%c0_87, %c0_88] : memref<1x20xf32, #tpu.memory_space<vmem>>, vector<1x20xf32>
    %76 = vector.broadcast %75 : vector<1x20xf32> to vector<256x20xf32>
    %77 = arith.addf %74, %76 : vector<256x20xf32>
    %cst_89 = arith.constant 0.000000e+00 : f32
    %78 = vector.broadcast %cst_89 : f32 to vector<256x20xf32>
    %79 = arith.maximumf %77, %78 : vector<256x20xf32>
    %80 = tpu.transpose %79, [1, 0] : vector<256x20xf32> -> vector<20x256xf32>
    %c0_90 = arith.constant 0 : index
    %c24 = arith.constant 24 : index
    %c0_91 = arith.constant 0 : index
    %81 = vector.load %arg8[%c0_90, %c24, %c0_91] : memref<1x64x256xf32, #tpu.memory_space<vmem>>, vector<1x20x256xf32>
    %82 = vector.shape_cast %81 : vector<1x20x256xf32> to vector<20x256xf32>
    %83 = vector.shape_cast %80 : vector<20x256xf32> to vector<1x20x256xf32>
    tpu.vector_store %arg8[%c0_90, %c24, %c0_91], %83 {strides = array<i32>} : memref<1x64x256xf32, #tpu.memory_space<vmem>>, vector<1x20x256xf32>,
    %84 = vector.shape_cast %79 : vector<256x20xf32> to vector<16x16x20xf32>
    %85 = arith.truncf %84 : vector<16x16x20xf32> to vector<16x16x20xbf16>
    %c0_92 = arith.constant 0 : index
    %c0_93 = arith.constant 0 : index
    %c0_94 = arith.constant 0 : index
    %c24_95 = arith.constant 24 : index
    %86 = vector.load %arg9[%c0_92, %c0_93, %c0_94, %c24_95] : memref<1x17x17x44xbf16, #tpu.memory_space<vmem>>, vector<1x16x16x20xbf16>
    %87 = vector.shape_cast %86 : vector<1x16x16x20xbf16> to vector<16x16x20xbf16>
    %88 = vector.shape_cast %85 : vector<16x16x20xbf16> to vector<1x16x16x20xbf16>
    tpu.vector_store %arg9[%c0_92, %c0_93, %c0_94, %c24_95], %88 {strides = array<i32>} : memref<1x17x17x44xbf16, #tpu.memory_space<vmem>>, vector<1x16x16x20xbf16>,
    %c0_96 = arith.constant 0 : index
    %c0_97 = arith.constant 0 : index
    %c0_98 = arith.constant 0 : index
    %c0_99 = arith.constant 0 : index
    %89 = vector.load %arg9[%c0_96, %c0_97, %c0_98, %c0_99] : memref<1x17x17x44xbf16, #tpu.memory_space<vmem>>, vector<1x16x16x44xbf16>
    %90 = vector.shape_cast %89 : vector<1x16x16x44xbf16> to vector<256x44xbf16>
    %c0_100 = arith.constant 0 : index
    %c0_101 = arith.constant 0 : index
    %c0_102 = arith.constant 0 : index
    %91 = vector.load %arg4[%c0_100, %c0_101, %c0_102] : memref<4x44x20xbf16, #tpu.memory_space<vmem>>, vector<1x44x20xbf16>
    %92 = vector.shape_cast %91 : vector<1x44x20xbf16> to vector<44x20xbf16>
    %cst_103 = arith.constant dense<0.000000e+00> : vector<256x20xf32>
    %93 = tpu.matmul %90, %92, %cst_103 {dimension_numbers = #tpu.dot_dimension_numbers<[1], [0], [0], [1], [0, 0, 1, 1], [], []>} : vector<256x44xbf16>, vector<44x20xbf16>, vector<256x20xf32> -> vector<256x20xf32>
    %c0_104 = arith.constant 0 : index
    %c0_105 = arith.constant 0 : index
    %c1_106 = arith.constant 1 : index
    %c0_107 = arith.constant 0 : index
    %94 = vector.load %arg9[%c0_104, %c0_105, %c1_106, %c0_107] : memref<1x17x17x44xbf16, #tpu.memory_space<vmem>>, vector<1x16x16x44xbf16>
    %95 = vector.shape_cast %94 : vector<1x16x16x44xbf16> to vector<256x44xbf16>
    %c1_108 = arith.constant 1 : index
    %c0_109 = arith.constant 0 : index
    %c0_110 = arith.constant 0 : index
    %96 = vector.load %arg4[%c1_108, %c0_109, %c0_110] : memref<4x44x20xbf16, #tpu.memory_space<vmem>>, vector<1x44x20xbf16>
    %97 = vector.shape_cast %96 : vector<1x44x20xbf16> to vector<44x20xbf16>
    %cst_111 = arith.constant dense<0.000000e+00> : vector<256x20xf32>
    %98 = tpu.matmul %95, %97, %cst_111 {dimension_numbers = #tpu.dot_dimension_numbers<[1], [0], [0], [1], [0, 0, 1, 1], [], []>} : vector<256x44xbf16>, vector<44x20xbf16>, vector<256x20xf32> -> vector<256x20xf32>
    %99 = arith.addf %93, %98 : vector<256x20xf32>
    %c0_112 = arith.constant 0 : index
    %c1_113 = arith.constant 1 : index
    %c0_114 = arith.constant 0 : index
    %c0_115 = arith.constant 0 : index
    %100 = vector.load %arg9[%c0_112, %c1_113, %c0_114, %c0_115] : memref<1x17x17x44xbf16, #tpu.memory_space<vmem>>, vector<1x16x16x44xbf16>
    %101 = vector.shape_cast %100 : vector<1x16x16x44xbf16> to vector<256x44xbf16>
    %c2_116 = arith.constant 2 : index
    %c0_117 = arith.constant 0 : index
    %c0_118 = arith.constant 0 : index
    %102 = vector.load %arg4[%c2_116, %c0_117, %c0_118] : memref<4x44x20xbf16, #tpu.memory_space<vmem>>, vector<1x44x20xbf16>
    %103 = vector.shape_cast %102 : vector<1x44x20xbf16> to vector<44x20xbf16>
    %cst_119 = arith.constant dense<0.000000e+00> : vector<256x20xf32>
    %104 = tpu.matmul %101, %103, %cst_119 {dimension_numbers = #tpu.dot_dimension_numbers<[1], [0], [0], [1], [0, 0, 1, 1], [], []>} : vector<256x44xbf16>, vector<44x20xbf16>, vector<256x20xf32> -> vector<256x20xf32>
    %105 = arith.addf %99, %104 : vector<256x20xf32>
    %c0_120 = arith.constant 0 : index
    %c1_121 = arith.constant 1 : index
    %c1_122 = arith.constant 1 : index
    %c0_123 = arith.constant 0 : index
    %106 = vector.load %arg9[%c0_120, %c1_121, %c1_122, %c0_123] : memref<1x17x17x44xbf16, #tpu.memory_space<vmem>>, vector<1x16x16x44xbf16>
    %107 = vector.shape_cast %106 : vector<1x16x16x44xbf16> to vector<256x44xbf16>
    %c3_124 = arith.constant 3 : index
    %c0_125 = arith.constant 0 : index
    %c0_126 = arith.constant 0 : index
    %108 = vector.load %arg4[%c3_124, %c0_125, %c0_126] : memref<4x44x20xbf16, #tpu.memory_space<vmem>>, vector<1x44x20xbf16>
    %109 = vector.shape_cast %108 : vector<1x44x20xbf16> to vector<44x20xbf16>
    %cst_127 = arith.constant dense<0.000000e+00> : vector<256x20xf32>
    %110 = tpu.matmul %107, %109, %cst_127 {dimension_numbers = #tpu.dot_dimension_numbers<[1], [0], [0], [1], [0, 0, 1, 1], [], []>} : vector<256x44xbf16>, vector<44x20xbf16>, vector<256x20xf32> -> vector<256x20xf32>
    %111 = arith.addf %105, %110 : vector<256x20xf32>
    %c0_128 = arith.constant 0 : index
    %c0_129 = arith.constant 0 : index
    %112 = vector.load %arg7[%c0_128, %c0_129] : memref<1x20xf32, #tpu.memory_space<vmem>>, vector<1x20xf32>
    %113 = vector.broadcast %112 : vector<1x20xf32> to vector<256x20xf32>
    %114 = arith.addf %111, %113 : vector<256x20xf32>
    %cst_130 = arith.constant 0.000000e+00 : f32
    %115 = vector.broadcast %cst_130 : f32 to vector<256x20xf32>
    %116 = arith.maximumf %114, %115 : vector<256x20xf32>
    %117 = tpu.transpose %116, [1, 0] : vector<256x20xf32> -> vector<20x256xf32>
    %c0_131 = arith.constant 0 : index
    %c44 = arith.constant 44 : index
    %c0_132 = arith.constant 0 : index
    %118 = vector.load %arg8[%c0_131, %c44, %c0_132] : memref<1x64x256xf32, #tpu.memory_space<vmem>>, vector<1x20x256xf32>
    %119 = vector.shape_cast %118 : vector<1x20x256xf32> to vector<20x256xf32>
    %120 = vector.shape_cast %117 : vector<20x256xf32> to vector<1x20x256xf32>
    tpu.vector_store %arg8[%c0_131, %c44, %c0_132], %120 {strides = array<i32>} : memref<1x64x256xf32, #tpu.memory_space<vmem>>, vector<1x20x256xf32>,
    return
  }
  func.func @transform_0(%arg0: i32) -> (i32, i32, i32) {
    %c0_i32 = arith.constant 0 : i32
    %c0_i32_0 = arith.constant 0 : i32
    %c0_i32_1 = arith.constant 0 : i32
    return %arg0, %c0_i32, %c0_i32_0 : i32, i32, i32
  }
  func.func @transform_1(%arg0: i32) -> (i32, i32, i32) {
    %c0_i32 = arith.constant 0 : i32
    %c0_i32_0 = arith.constant 0 : i32
    %c0_i32_1 = arith.constant 0 : i32
    %c0_i32_2 = arith.constant 0 : i32
    return %c0_i32, %c0_i32_0, %c0_i32_1 : i32, i32, i32
  }
  func.func @transform_2(%arg0: i32) -> (i32, i32, i32) {
    %c0_i32 = arith.constant 0 : i32
    %c0_i32_0 = arith.constant 0 : i32
    %c0_i32_1 = arith.constant 0 : i32
    %c0_i32_2 = arith.constant 0 : i32
    return %c0_i32, %c0_i32_0, %c0_i32_1 : i32, i32, i32
  }
  func.func @transform_3(%arg0: i32) -> (i32, i32, i32) {
    %c0_i32 = arith.constant 0 : i32
    %c0_i32_0 = arith.constant 0 : i32
    %c0_i32_1 = arith.constant 0 : i32
    %c0_i32_2 = arith.constant 0 : i32
    return %c0_i32, %c0_i32_0, %c0_i32_1 : i32, i32, i32
  }
  func.func @transform_4(%arg0: i32) -> (i32, i32) {
    %c0_i32 = arith.constant 0 : i32
    %c0_i32_0 = arith.constant 0 : i32
    %c0_i32_1 = arith.constant 0 : i32
    return %c0_i32, %c0_i32_0 : i32, i32
  }
  func.func @transform_5(%arg0: i32) -> (i32, i32) {
    %c0_i32 = arith.constant 0 : i32
    %c0_i32_0 = arith.constant 0 : i32
    %c0_i32_1 = arith.constant 0 : i32
    return %c0_i32, %c0_i32_0 : i32, i32
  }
  func.func @transform_6(%arg0: i32) -> (i32, i32) {
    %c0_i32 = arith.constant 0 : i32
    %c0_i32_0 = arith.constant 0 : i32
    %c0_i32_1 = arith.constant 0 : i32
    return %c0_i32, %c0_i32_0 : i32, i32
  }
  func.func @transform_7(%arg0: i32) -> (i32, i32, i32) {
    %c0_i32 = arith.constant 0 : i32
    %c0_i32_0 = arith.constant 0 : i32
    %c0_i32_1 = arith.constant 0 : i32
    return %arg0, %c0_i32, %c0_i32_0 : i32, i32, i32
  }
}

</mosaic_0001>

<llo_original>
// kernel: dense_block_forward.1
$region0: #{dense_block_forward.1}
  #allocation0 [shape = 'u32[]', space=smem, size = 0x4, offset = 0x4, fixed_abs, tag = 'smem constant byte address 0x4 - core index']
  #allocation1 [shape = 'u32[144,128]{1,0:T(1,128)}', space=vmem, size = 0x12000, scoped, tag = 'internal scratch']
  #allocation2 [shape = 'bf16[1,17,17,44]{3,2,1,0:T(8,128)(2,1)}', space=vmem, size = 0x19800, scoped, tag = 'scratch operand']
  %s0 = inlined_call_operand.vmem [shape: f32[2,4,256], index: 0, kind: input, shape index: {}]
  %s1 = inlined_call_operand.vmem [shape: bf16[4,4,20], index: 1, kind: input, shape index: {}]
  %s2 = inlined_call_operand.vmem [shape: bf16[4,24,20], index: 2, kind: input, shape index: {}]
  %s3 = inlined_call_operand.vmem [shape: bf16[4,44,20], index: 3, kind: input, shape index: {}]
  %s4 = inlined_call_operand.vmem [shape: f32[1,20], index: 4, kind: input, shape index: {}]
  %s5 = inlined_call_operand.vmem [shape: f32[1,20], index: 5, kind: input, shape index: {}]
  %s6 = inlined_call_operand.vmem [shape: f32[1,20], index: 6, kind: input, shape index: {}]
  %s7 = inlined_call_operand.vmem [shape: f32[2,64,256], index: 7, kind: output, shape index: {}]
  %s8 = sld [smem:[#allocation0]]
  $region61: #{dense_block_forward.1} parent=0
    _
  %s10 = ssub.s32 1, %s8
  %s11 = scalar_select 0, %s10, %s8
  loop: start=0, step=1, limit=4
  $region2: #{dense_block_forward.1} parent=0 // loop_pre_header
    _
  $region3: #{dense_block_forward.1} parent=0 // loop_header
    %s13 = sphi 0, %s17
    %p14 = scmp.ge.s32.totalorder %s13, 4
    %s23 = sphi 0, %s25
    %s26 = sphi 0, %s23
    %s27 = sphi 0, %s26
    %s43 = sphi 0, %s27
    %s47 = sphi 0, %s47
    %s49 = sphi 0, %s47
    %s50 = sphi 0, %s49
    %s64 = sphi 0, %s50
    %s68 = sphi 0, %s68
    %s70 = sphi 0, %s68
    %s71 = sphi 0, %s70
    %s85 = sphi 0, %s71
    %s89 = sphi 0, %s89
    %s91 = sphi 0, %s89
    %s92 = sphi 0, %s91
    %s106 = sphi 0, %s92
    %s110 = sphi 0, %s110
    %s112 = sphi 0, %s110
    %s113 = sphi 0, %s112
    %s127 = sphi 0, %s113
    %s131 = sphi 0, %s131
    %s133 = sphi 0, %s131
    %s134 = sphi 0, %s133
    %s148 = sphi 0, %s134
    %s152 = sphi 0, %s152
    %s154 = sphi 0, %s152
    %s155 = sphi 0, %s154
    %s169 = sphi 0, %s155
    %s175 = sphi 0, %s177
    %s178 = sphi 0, %s175
    %s179 = sphi 0, %s178
    %s195 = sphi 0, %s179
  $region4: #{dense_block_forward.1} parent=0 // loop_header_branch
    %16 = sbr.rel (%p14) target = $region8
  $region5: #{dense_block_forward.1} parent=0 // loop_body
    %s18 = ssub.s32 %s13, 1
    %s19 = ssub.s32 %s13, 2
    %s20 = sadd.s32 %s13, 1
    %s21 = ssub.s32 %s13, %s20
    %p22 = scmp.eq.s32.totalorder %s21, 0
    %s24 = sadd.s32 %s23, 1
    %s25 = scalar_select %p22, %s23, %s24
    %p28 = pneg %p22
    %p29 = scmp.eq.s32.totalorder %s13, 1
    %p30 = por %p28, %p29
    %p31 = scmp.ne.s32.totalorder %s23, %s26
    %p32 = scmp.eq.s32.totalorder %s13, 0
    %p33 = por %p31, %p32
    %p34 = scmp.ne.s32.totalorder %s23, %s26
    %p35 = scmp.eq.s32.totalorder %s18, 1
    %p36 = por %p34, %p35
    %p37 = scmp.ne.s32.totalorder %s26, %s27
    %p38 = scmp.eq.s32.totalorder %s18, 0
    %p39 = por %p37, %p38
    %p40 = scmp.ne.s32.totalorder %s26, %s27
    %p41 = scmp.eq.s32.totalorder %s19, 1
    %p42 = por %p40, %p41
    %p44 = scmp.ne.s32.totalorder %s27, %s43
    %p45 = scmp.eq.s32.totalorder %s19, 0
    %p46 = por %p44, %p45
    %s48 = sadd.s32 %s47, 1
    %p51 = scmp.eq.s32.totalorder %s13, 1
    %p52 = scmp.ne.s32.totalorder %s47, %s49
    %p53 = scmp.eq.s32.totalorder %s13, 0
    %p54 = por %p52, %p53
    %p55 = scmp.ne.s32.totalorder %s47, %s49
    %p56 = scmp.eq.s32.totalorder %s18, 1
    %p57 = por %p55, %p56
    %p58 = scmp.ne.s32.totalorder %s49, %s50
    %p59 = scmp.eq.s32.totalorder %s18, 0
    %p60 = por %p58, %p59
    %p61 = scmp.ne.s32.totalorder %s49, %s50
    %p62 = scmp.eq.s32.totalorder %s19, 1
    %p63 = por %p61, %p62
    %p65 = scmp.ne.s32.totalorder %s50, %s64
    %p66 = scmp.eq.s32.totalorder %s19, 0
    %p67 = por %p65, %p66
    %s69 = sadd.s32 %s68, 1
    %p72 = scmp.eq.s32.totalorder %s13, 1
    %p73 = scmp.ne.s32.totalorder %s68, %s70
    %p74 = scmp.eq.s32.totalorder %s13, 0
    %p75 = por %p73, %p74
    %p76 = scmp.ne.s32.totalorder %s68, %s70
    %p77 = scmp.eq.s32.totalorder %s18, 1
    %p78 = por %p76, %p77
    %p79 = scmp.ne.s32.totalorder %s70, %s71
    %p80 = scmp.eq.s32.totalorder %s18, 0
    %p81 = por %p79, %p80
    %p82 = scmp.ne.s32.totalorder %s70, %s71
    %p83 = scmp.eq.s32.totalorder %s19, 1
    %p84 = por %p82, %p83
    %p86 = scmp.ne.s32.totalorder %s71, %s85
    %p87 = scmp.eq.s32.totalorder %s19, 0
    %p88 = por %p86, %p87
    %s90 = sadd.s32 %s89, 1
    %p93 = scmp.eq.s32.totalorder %s13, 1
    %p94 = scmp.ne.s32.totalorder %s89, %s91
    %p95 = scmp.eq.s32.totalorder %s13, 0
    %p96 = por %p94, %p95
    %p97 = scmp.ne.s32.totalorder %s89, %s91
    %p98 = scmp.eq.s32.totalorder %s18, 1
    %p99 = por %p97, %p98
    %p100 = scmp.ne.s32.totalorder %s91, %s92
    %p101 = scmp.eq.s32.totalorder %s18, 0
    %p102 = por %p100, %p101
    %p103 = scmp.ne.s32.totalorder %s91, %s92
    %p104 = scmp.eq.s32.totalorder %s19, 1
    %p105 = por %p103, %p104
    %p107 = scmp.ne.s32.totalorder %s92, %s106
    %p108 = scmp.eq.s32.totalorder %s19, 0
    %p109 = por %p107, %p108
    %s111 = sadd.s32 %s110, 1
    %p114 = scmp.eq.s32.totalorder %s13, 1
    %p115 = scmp.ne.s32.totalorder %s110, %s112
    %p116 = scmp.eq.s32.totalorder %s13, 0
    %p117 = por %p115, %p116
    %p118 = scmp.ne.s32.totalorder %s110, %s112
    %p119 = scmp.eq.s32.totalorder %s18, 1
    %p120 = por %p118, %p119
    %p121 = scmp.ne.s32.totalorder %s112, %s113
    %p122 = scmp.eq.s32.totalorder %s18, 0
    %p123 = por %p121, %p122
    %p124 = scmp.ne.s32.totalorder %s112, %s113
    %p125 = scmp.eq.s32.totalorder %s19, 1
    %p126 = por %p124, %p125
    %p128 = scmp.ne.s32.totalorder %s113, %s127
    %p129 = scmp.eq.s32.totalorder %s19, 0
    %p130 = por %p128, %p129
    %s132 = sadd.s32 %s131, 1
    %p135 = scmp.eq.s32.totalorder %s13, 1
    %p136 = scmp.ne.s32.totalorder %s131, %s133
    %p137 = scmp.eq.s32.totalorder %s13, 0
    %p138 = por %p136, %p137
    %p139 = scmp.ne.s32.totalorder %s131, %s133
    %p140 = scmp.eq.s32.totalorder %s18, 1
    %p141 = por %p139, %p140
    %p142 = scmp.ne.s32.totalorder %s133, %s134
    %p143 = scmp.eq.s32.totalorder %s18, 0
    %p144 = por %p142, %p143
    %p145 = scmp.ne.s32.totalorder %s133, %s134
    %p146 = scmp.eq.s32.totalorder %s19, 1
    %p147 = por %p145, %p146
    %p149 = scmp.ne.s32.totalorder %s134, %s148
    %p150 = scmp.eq.s32.totalorder %s19, 0
    %p151 = por %p149, %p150
    %s153 = sadd.s32 %s152, 1
    %p156 = scmp.eq.s32.totalorder %s13, 1
    %p157 = scmp.ne.s32.totalorder %s152, %s154
    %p158 = scmp.eq.s32.totalorder %s13, 0
    %p159 = por %p157, %p158
    %p160 = scmp.ne.s32.totalorder %s152, %s154
    %p161 = scmp.eq.s32.totalorder %s18, 1
    %p162 = por %p160, %p161
    %p163 = scmp.ne.s32.totalorder %s154, %s155
    %p164 = scmp.eq.s32.totalorder %s18, 0
    %p165 = por %p163, %p164
    %p166 = scmp.ne.s32.totalorder %s154, %s155
    %p167 = scmp.eq.s32.totalorder %s19, 1
    %p168 = por %p166, %p167
    %p170 = scmp.ne.s32.totalorder %s155, %s169
    %p171 = scmp.eq.s32.totalorder %s19, 0
    %p172 = por %p170, %p171
    %s173 = ssub.s32 %s13, %s20
    %p174 = scmp.eq.s32.totalorder %s173, 0
    %s176 = sadd.s32 %s175, 1
    %s177 = scalar_select %p174, %s175, %s176
    %p180 = pneg %p174
    %p181 = scmp.eq.s32.totalorder %s13, 1
    %p182 = por %p180, %p181
    %p183 = scmp.ne.s32.totalorder %s175, %s178
    %p184 = scmp.eq.s32.totalorder %s13, 0
    %p185 = por %p183, %p184
    %p186 = scmp.ne.s32.totalorder %s175, %s178
    %p187 = scmp.eq.s32.totalorder %s18, 1
    %p188 = por %p186, %p187
    %p189 = scmp.ne.s32.totalorder %s178, %s179
    %p190 = scmp.eq.s32.totalorder %s18, 0
    %p191 = por %p189, %p190
    %p192 = scmp.ne.s32.totalorder %s178, %s179
    %p193 = scmp.eq.s32.totalorder %s19, 1
    %p194 = por %p192, %p193
    %p196 = scmp.ne.s32.totalorder %s179, %s195
    %p197 = scmp.eq.s32.totalorder %s19, 0
    %p198 = por %p196, %p197
    %p199 = scmp.le.s32.totalorder 1, %s13
    %p200 = scmp.lt.s32.totalorder %s13, 3
    %p201 = pnand %p199, %p200
    %p202 = pneg %p201
    // Predicated region
    $region9: #{dense_block_forward.1} parent=5 // pred_check
      _
    $region10: #{dense_block_forward.1} parent=5 // pred_check_branch
      %204 = sbr.rel (%p201) target = $region12
    $region11: #{dense_block_forward.1} parent=5 // pred_region
      %s205 = ssub.s32 %s13, 1
      // Predicated region
      $region13: #{dense_block_forward.1} parent=11 // pred_check
        %p206 = pneg %p60
      $region14: #{dense_block_forward.1} parent=11 // pred_check_branch
        %208 = sbr.rel (%p206) target = $region16
      $region15: #{dense_block_forward.1} parent=11 // pred_region
        _
      $region16: #{dense_block_forward.1} parent=11 // pred_fallthru
        _
      // Predicated region
      $region17: #{dense_block_forward.1} parent=11 // pred_check
        %p209 = pneg %p81
      $region18: #{dense_block_forward.1} parent=11 // pred_check_branch
        %211 = sbr.rel (%p209) target = $region20
      $region19: #{dense_block_forward.1} parent=11 // pred_region
        _
      $region20: #{dense_block_forward.1} parent=11 // pred_fallthru
        _
      // Predicated region
      $region21: #{dense_block_forward.1} parent=11 // pred_check
        %p212 = pneg %p102
      $region22: #{dense_block_forward.1} parent=11 // pred_check_branch
        %214 = sbr.rel (%p212) target = $region24
      $region23: #{dense_block_forward.1} parent=11 // pred_region
        _
      $region24: #{dense_block_forward.1} parent=11 // pred_fallthru
        _
      // Predicated region
      $region25: #{dense_block_forward.1} parent=11 // pred_check
        %p215 = pneg %p123
      $region26: #{dense_block_forward.1} parent=11 // pred_check_branch
        %217 = sbr.rel (%p215) target = $region28
      $region27: #{dense_block_forward.1} parent=11 // pred_region
        _
      $region28: #{dense_block_forward.1} parent=11 // pred_fallthru
        _
      // Predicated region
      $region29: #{dense_block_forward.1} parent=11 // pred_check
        %p218 = pneg %p144
      $region30: #{dense_block_forward.1} parent=11 // pred_check_branch
        %220 = sbr.rel (%p218) target = $region32
      $region31: #{dense_block_forward.1} parent=11 // pred_region
        _
      $region32: #{dense_block_forward.1} parent=11 // pred_fallthru
        _
      // Predicated region
      $region33: #{dense_block_forward.1} parent=11 // pred_check
        %p221 = pneg %p165
      $region34: #{dense_block_forward.1} parent=11 // pred_check_branch
        %223 = sbr.rel (%p221) target = $region36
      $region35: #{dense_block_forward.1} parent=11 // pred_region
        _
      $region36: #{dense_block_forward.1} parent=11 // pred_fallthru
        _
    $region12: #{dense_block_forward.1} parent=5 // pred_fallthru
      _
    %p224 = scmp.lt.s32.totalorder %s13, 2
    // Predicated region
    $region37: #{dense_block_forward.1} parent=5 // pred_check
      %p225 = pneg %p224
    $region38: #{dense_block_forward.1} parent=5 // pred_check_branch
      %227 = sbr.rel (%p225) target = $region40
    $region39: #{dense_block_forward.1} parent=5 // pred_region
      // Predicated region
      $region41: #{dense_block_forward.1} parent=39 // pred_check
        %p228 = pneg %p33
      $region42: #{dense_block_forward.1} parent=39 // pred_check_branch
        %230 = sbr.rel (%p228) target = $region44
      $region43: #{dense_block_forward.1} parent=39 // pred_region
        %p231 = scmp.lt.s32.totalorder %s13, 1
        %s232 = scalar_select %p231, %s13, 1
        %s233 = smul.addr %s232, 2
        %s234 = smul.addr %s233, 4
        %s235 = scalar_lea.vmem %s0, %s234
      $region44: #{dense_block_forward.1} parent=39 // pred_fallthru
        _
    $region40: #{dense_block_forward.1} parent=5 // pred_fallthru
      _
    %p236 = scmp.le.s32.totalorder 1, %s13
    %p237 = scmp.lt.s32.totalorder %s13, 3
    %p238 = pnand %p236, %p237
    %p239 = pneg %p238
    // Predicated region
    $region45: #{dense_block_forward.1} parent=5 // pred_check
      _
    $region46: #{dense_block_forward.1} parent=5 // pred_check_branch
      %241 = sbr.rel (%p238) target = $region48
    $region47: #{dense_block_forward.1} parent=5 // pred_region
      %s242 = ssub.s32 %s13, 1
      %p243 = scmp.lt.s32.totalorder %s18, 1
      %s244 = scalar_select %p243, %s18, 1
      %s245 = smul.addr %s244, 2
      %s246 = smul.addr %s245, 4
      %s247 = scalar_lea.vmem %s0, %s246
      %p248 = pneg %p39
      %p249 = pneg %p36
      %p250 = pneg %p60
      %p251 = pneg %p57
      %p252 = pneg %p81
      %p253 = pneg %p78
      %p254 = pneg %p102
      %p255 = pneg %p99
      %p256 = pneg %p123
      %p257 = pneg %p120
      %p258 = pneg %p144
      %p259 = pneg %p141
      %p260 = pneg %p165
      %p261 = pneg %p162
      %p262 = pneg %p191
      %p263 = pneg %p188
      %p264 = scmp.lt.s32.totalorder %s18, 1
      %s265 = scalar_select %p264, %s18, 1
      %s266 = smul.addr %s265, 16
      %s267 = smul.addr %s266, 8
      %s268 = scalar_lea.vmem %s7, %s267
      %p269 = scmp.lt.s32.totalorder %s18, 1
      %s270 = scalar_select %p269, %s18, 1
      %s271 = smul.addr %s270, 2
      %s272 = smul.addr %s271, 4
      %s273 = scalar_lea.vmem %s0, %s272
      %p274 = scmp.lt.s32.totalorder %s18, 1
      %s275 = scalar_select %p274, %s18, 1
      %s276 = smul.addr %s275, 16
      %s277 = smul.addr %s276, 8
      %s278 = scalar_lea.vmem %s7, %s277
      %s280 = scalar_lea.vmem [#allocation2], 192
      %vm281 = vcmask 355328
      %282 = vst.msk [vmem:[%s280] sm:$0xf] %vm281, 0
      %283 = vst.msk [vmem:[%s280 + $0x4] sm:$0xf] %vm281, 0
      %vm284 = vcmask 352256
      %vm285 = vsmask.f32 256
      %vm286 = vmand %vm284, %vm285
      %v287 = vld [vmem:[%s280 + $0x8] sm:$0x1]
      %v288 = vsel %vm286, 0, %v287
      %289 = vst [vmem:[%s280 + $0x8] sm:$0x1] %v288
      %v290 = vld [vmem:[#allocation2 + $0x8] sm:$0x1]
      %v291 = vsel %vm286, 0, %v290
      %292 = vst [vmem:[#allocation2 + $0x8] sm:$0x1] %v291
      %v293 = vld [vmem:[#allocation2 + $0x14] sm:$0x1]
      %v294 = vsel %vm286, 0, %v293
      %295 = vst [vmem:[#allocation2 + $0x14] sm:$0x1] %v294
      %v296 = vld [vmem:[#allocation2 + $0x20] sm:$0x1]
      %v297 = vsel %vm286, 0, %v296
      %298 = vst [vmem:[#allocation2 + $0x20] sm:$0x1] %v297
      %v299 = vld [vmem:[#allocation2 + $0x2c] sm:$0x1]
      %v300 = vsel %vm286, 0, %v299
      %301 = vst [vmem:[#allocation2 + $0x2c] sm:$0x1] %v300
      %v302 = vld [vmem:[#allocation2 + $0x38] sm:$0x1]
      %v303 = vsel %vm286, 0, %v302
      %304 = vst [vmem:[#allocation2 + $0x38] sm:$0x1] %v303
      %v305 = vld [vmem:[#allocation2 + $0x44] sm:$0x1]
      %v306 = vsel %vm286, 0, %v305
      %307 = vst [vmem:[#allocation2 + $0x44] sm:$0x1] %v306
      %v308 = vld [vmem:[#allocation2 + $0x50] sm:$0x1]
      %v309 = vsel %vm286, 0, %v308
      %310 = vst [vmem:[#allocation2 + $0x50] sm:$0x1] %v309
      %v311 = vld [vmem:[#allocation2 + $0x5c] sm:$0x1]
      %v312 = vsel %vm286, 0, %v311
      %313 = vst [vmem:[#allocation2 + $0x5c] sm:$0x1] %v312
      %v314 = vld [vmem:[#allocation2 + $0x68] sm:$0x1]
      %v315 = vsel %vm286, 0, %v314
      %316 = vst [vmem:[#allocation2 + $0x68] sm:$0x1] %v315
      %v317 = vld [vmem:[#allocation2 + $0x74] sm:$0x1]
      %v318 = vsel %vm286, 0, %v317
      %319 = vst [vmem:[#allocation2 + $0x74] sm:$0x1] %v318
      %v320 = vld [vmem:[#allocation2 + $0x80] sm:$0x1]
      %v321 = vsel %vm286, 0, %v320
      %322 = vst [vmem:[#allocation2 + $0x80] sm:$0x1] %v321
      %v323 = vld [vmem:[#allocation2 + $0x8c] sm:$0x1]
      %v324 = vsel %vm286, 0, %v323
      %325 = vst [vmem:[#allocation2 + $0x8c] sm:$0x1] %v324
      %v326 = vld [vmem:[#allocation2 + $0x98] sm:$0x1]
      %v327 = vsel %vm286, 0, %v326
      %328 = vst [vmem:[#allocation2 + $0x98] sm:$0x1] %v327
      %v329 = vld [vmem:[#allocation2 + $0xa4] sm:$0x1]
      %v330 = vsel %vm286, 0, %v329
      %331 = vst [vmem:[#allocation2 + $0xa4] sm:$0x1] %v330
      %v332 = vld [vmem:[#allocation2 + $0xb0] sm:$0x1]
      %v333 = vsel %vm286, 0, %v332
      %334 = vst [vmem:[#allocation2 + $0xb0] sm:$0x1] %v333
      %v335 = vld [vmem:[#allocation2 + $0xbc] sm:$0x1]
      %v336 = vsel %vm286, 0, %v335
      %337 = vst [vmem:[#allocation2 + $0xbc] sm:$0x1] %v336
      %v338 = vld [vmem:[%s273] sm:$0xff]
      %v340 = vcombine.high %v338, %v338
      %342 = vst [vmem:[%s278] sm:$0xf] %v338
      %343 = vst [vmem:[%s278 + $0x8] sm:$0xf] %v340
      %344 = vxpose.xlu0.b32.start [1/16] %v338, 128
      %345 = vxpose.xlu0.b32.cont [2/16] 0.0, 128
      %346 = vxpose.xlu0.b32.cont [3/16] 0.0, 128
      %347 = vxpose.xlu0.b32.cont [4/16] 0.0, 128
      %348 = vxpose.xlu0.b32.cont [5/16] 0.0, 128
      %349 = vxpose.xlu0.b32.cont [6/16] 0.0, 128
      %350 = vxpose.xlu0.b32.cont [7/16] 0.0, 128
      %351 = vxpose.xlu0.b32.cont [8/16] 0.0, 128
      %352 = vxpose.xlu0.b32.cont [9/16] 0.0, 128
      %353 = vxpose.xlu0.b32.cont [10/16] 0.0, 128
      %354 = vxpose.xlu0.b32.cont [11/16] 0.0, 128
      %355 = vxpose.xlu0.b32.cont [12/16] 0.0, 128
      %356 = vxpose.xlu0.b32.cont [13/16] 0.0, 128
      %357 = vxpose.xlu0.b32.cont [14/16] 0.0, 128
      %358 = vxpose.xlu0.b32.cont [15/16] 0.0, 128
      %359 = vxpose.xlu0.b32.end [16/16] 0.0, 128
      %v360 = vpop.trf.xlu0
      %v361 = vpop.trf.xlu0
      %v362 = vpop.trf.xlu0
      %v363 = vpop.trf.xlu0
      %v364 = vpop.trf.xlu0
      %v365 = vpop.trf.xlu0
      %v366 = vpop.trf.xlu0
      %v367 = vpop.trf.xlu0
      %v368 = vpop.trf.xlu0
      %v369 = vpop.trf.xlu0
      %v370 = vpop.trf.xlu0
      %v371 = vpop.trf.xlu0
      %v372 = vpop.trf.xlu0
      %v373 = vpop.trf.xlu0
      %v374 = vpop.trf.xlu0
      %v375 = vpop.trf.xlu0
      %376 = vxpose.xlu0.b32.start [1/16] %v340, 128
      %377 = vxpose.xlu0.b32.cont [2/16] 0.0, 128
      %378 = vxpose.xlu0.b32.cont [3/16] 0.0, 128
      %379 = vxpose.xlu0.b32.cont [4/16] 0.0, 128
      %380 = vxpose.xlu0.b32.cont [5/16] 0.0, 128
      %381 = vxpose.xlu0.b32.cont [6/16] 0.0, 128
      %382 = vxpose.xlu0.b32.cont [7/16] 0.0, 128
      %383 = vxpose.xlu0.b32.cont [8/16] 0.0, 128
      %384 = vxpose.xlu0.b32.cont [9/16] 0.0, 128
      %385 = vxpose.xlu0.b32.cont [10/16] 0.0, 128
      %386 = vxpose.xlu0.b32.cont [11/16] 0.0, 128
      %387 = vxpose.xlu0.b32.cont [12/16] 0.0, 128
      %388 = vxpose.xlu0.b32.cont [13/16] 0.0, 128
      %389 = vxpose.xlu0.b32.cont [14/16] 0.0, 128
      %390 = vxpose.xlu0.b32.cont [15/16] 0.0, 128
      %391 = vxpose.xlu0.b32.end [16/16] 0.0, 128
      %v392 = vpop.trf.xlu0
      %v393 = vpop.trf.xlu0
      %v394 = vpop.trf.xlu0
      %v395 = vpop.trf.xlu0
      %v396 = vpop.trf.xlu0
      %v397 = vpop.trf.xlu0
      %v398 = vpop.trf.xlu0
      %v399 = vpop.trf.xlu0
      %v400 = vpop.trf.xlu0
      %v401 = vpop.trf.xlu0
      %v402 = vpop.trf.xlu0
      %v403 = vpop.trf.xlu0
      %v404 = vpop.trf.xlu0
      %v405 = vpop.trf.xlu0
      %v406 = vpop.trf.xlu0
      %v407 = vpop.trf.xlu0
      %v408 = vpack.c.bf16 %v361, %v360
      %v409 = vpack.c.bf16 %v363, %v362
      %v410 = vpack.c.bf16 %v365, %v364
      %v411 = vpack.c.bf16 %v367, %v366
      %v412 = vpack.c.bf16 %v369, %v368
      %v413 = vpack.c.bf16 %v371, %v370
      %v414 = vpack.c.bf16 %v373, %v372
      %v415 = vpack.c.bf16 %v375, %v374
      %v416 = vpack.c.bf16 %v393, %v392
      %v417 = vpack.c.bf16 %v395, %v394
      %v418 = vpack.c.bf16 %v397, %v396
      %v419 = vpack.c.bf16 %v399, %v398
      %v420 = vpack.c.bf16 %v401, %v400
      %v421 = vpack.c.bf16 %v403, %v402
      %v422 = vpack.c.bf16 %v405, %v404
      %v423 = vpack.c.bf16 %v407, %v406
      %v440 = vunpack.c.l.b16 %v408
      %v441 = vunpack.c.h.b16 %v408
      %v442 = vunpack.c.l.b16 %v409
      %v443 = vunpack.c.h.b16 %v409
      %v444 = vunpack.c.l.b16 %v410
      %v445 = vunpack.c.h.b16 %v410
      %v446 = vunpack.c.l.b16 %v411
      %v447 = vunpack.c.h.b16 %v411
      %v448 = vunpack.c.l.b16 %v412
      %v449 = vunpack.c.h.b16 %v412
      %v450 = vunpack.c.l.b16 %v413
      %v451 = vunpack.c.h.b16 %v413
      %v452 = vunpack.c.l.b16 %v414
      %v453 = vunpack.c.h.b16 %v414
      %v454 = vunpack.c.l.b16 %v415
      %v455 = vunpack.c.h.b16 %v415
      %v456 = vunpack.c.l.b16 %v416
      %v457 = vunpack.c.h.b16 %v416
      %v458 = vunpack.c.l.b16 %v417
      %v459 = vunpack.c.h.b16 %v417
      %v460 = vunpack.c.l.b16 %v418
      %v461 = vunpack.c.h.b16 %v418
      %v462 = vunpack.c.l.b16 %v419
      %v463 = vunpack.c.h.b16 %v419
      %v464 = vunpack.c.l.b16 %v420
      %v465 = vunpack.c.h.b16 %v420
      %v466 = vunpack.c.l.b16 %v421
      %v467 = vunpack.c.h.b16 %v421
      %v468 = vunpack.c.l.b16 %v422
      %v469 = vunpack.c.h.b16 %v422
      %v470 = vunpack.c.l.b16 %v423
      %v471 = vunpack.c.h.b16 %v423
      %v472 = vpack.c.b16 %v440, %v440
      %v473 = vpack.c.b16 %v441, %v441
      %v474 = vpack.c.b16 %v442, %v442
      %v475 = vpack.c.b16 %v443, %v443
      %v476 = vpack.c.b16 %v444, %v444
      %v477 = vpack.c.b16 %v445, %v445
      %v478 = vpack.c.b16 %v446, %v446
      %v479 = vpack.c.b16 %v447, %v447
      %v480 = vpack.c.b16 %v448, %v448
      %v481 = vpack.c.b16 %v449, %v449
      %v482 = vpack.c.b16 %v450, %v450
      %v483 = vpack.c.b16 %v451, %v451
      %v484 = vpack.c.b16 %v452, %v452
      %v485 = vpack.c.b16 %v453, %v453
      %v486 = vpack.c.b16 %v454, %v454
      %v487 = vpack.c.b16 %v455, %v455
      %v488 = vpack.c.b16 %v456, %v456
      %v489 = vpack.c.b16 %v457, %v457
      %v490 = vpack.c.b16 %v458, %v458
      %v491 = vpack.c.b16 %v459, %v459
      %v492 = vpack.c.b16 %v460, %v460
      %v493 = vpack.c.b16 %v461, %v461
      %v494 = vpack.c.b16 %v462, %v462
      %v495 = vpack.c.b16 %v463, %v463
      %v496 = vpack.c.b16 %v464, %v464
      %v497 = vpack.c.b16 %v465, %v465
      %v498 = vpack.c.b16 %v466, %v466
      %v499 = vpack.c.b16 %v467, %v467
      %v500 = vpack.c.b16 %v468, %v468
      %v501 = vpack.c.b16 %v469, %v469
      %v502 = vpack.c.b16 %v470, %v470
      %v503 = vpack.c.b16 %v471, %v471
      %vm536 = vcmask 27648
      %537 = vst.msk [vmem:[#allocation2] sm:$0xf] %vm536, %v472
      %538 = vst.msk [vmem:[#allocation2 + $0x4] sm:$0xf] %vm536, %v473
      %539 = vst.msk [vmem:[#allocation2 + $0xc] sm:$0xf] %vm536, %v474
      %540 = vst.msk [vmem:[#allocation2 + $0x10] sm:$0xf] %vm536, %v475
      %541 = vst.msk [vmem:[#allocation2 + $0x18] sm:$0xf] %vm536, %v476
      %542 = vst.msk [vmem:[#allocation2 + $0x1c] sm:$0xf] %vm536, %v477
      %543 = vst.msk [vmem:[#allocation2 + $0x24] sm:$0xf] %vm536, %v478
      %544 = vst.msk [vmem:[#allocation2 + $0x28] sm:$0xf] %vm536, %v479
      %545 = vst.msk [vmem:[#allocation2 + $0x30] sm:$0xf] %vm536, %v480
      %546 = vst.msk [vmem:[#allocation2 + $0x34] sm:$0xf] %vm536, %v481
      %547 = vst.msk [vmem:[#allocation2 + $0x3c] sm:$0xf] %vm536, %v482
      %548 = vst.msk [vmem:[#allocation2 + $0x40] sm:$0xf] %vm536, %v483
      %549 = vst.msk [vmem:[#allocation2 + $0x48] sm:$0xf] %vm536, %v484
      %550 = vst.msk [vmem:[#allocation2 + $0x4c] sm:$0xf] %vm536, %v485
      %551 = vst.msk [vmem:[#allocation2 + $0x54] sm:$0xf] %vm536, %v486
      %552 = vst.msk [vmem:[#allocation2 + $0x58] sm:$0xf] %vm536, %v487
      %553 = vst.msk [vmem:[#allocation2 + $0x60] sm:$0xf] %vm536, %v488
      %554 = vst.msk [vmem:[#allocation2 + $0x64] sm:$0xf] %vm536, %v489
      %555 = vst.msk [vmem:[#allocation2 + $0x6c] sm:$0xf] %vm536, %v490
      %556 = vst.msk [vmem:[#allocation2 + $0x70] sm:$0xf] %vm536, %v491
      %557 = vst.msk [vmem:[#allocation2 + $0x78] sm:$0xf] %vm536, %v492
      %558 = vst.msk [vmem:[#allocation2 + $0x7c] sm:$0xf] %vm536, %v493
      %559 = vst.msk [vmem:[#allocation2 + $0x84] sm:$0xf] %vm536, %v494
      %560 = vst.msk [vmem:[#allocation2 + $0x88] sm:$0xf] %vm536, %v495
      %561 = vst.msk [vmem:[#allocation2 + $0x90] sm:$0xf] %vm536, %v496
      %562 = vst.msk [vmem:[#allocation2 + $0x94] sm:$0xf] %vm536, %v497
      %563 = vst.msk [vmem:[#allocation2 + $0x9c] sm:$0xf] %vm536, %v498
      %564 = vst.msk [vmem:[#allocation2 + $0xa0] sm:$0xf] %vm536, %v499
      %565 = vst.msk [vmem:[#allocation2 + $0xa8] sm:$0xf] %vm536, %v500
      %566 = vst.msk [vmem:[#allocation2 + $0xac] sm:$0xf] %vm536, %v501
      %567 = vst.msk [vmem:[#allocation2 + $0xb4] sm:$0xf] %vm536, %v502
      %568 = vst.msk [vmem:[#allocation2 + $0xb8] sm:$0xf] %vm536, %v503
      %v569 = vld [vmem:[#allocation2] sm:$0xf]
      %v570 = vld [vmem:[#allocation2 + $0x4] sm:$0xf]
      %v571 = vld [vmem:[#allocation2 + $0xc] sm:$0xf]
      %v572 = vld [vmem:[#allocation2 + $0x10] sm:$0xf]
      %v573 = vld [vmem:[#allocation2 + $0x18] sm:$0xf]
      %v574 = vld [vmem:[#allocation2 + $0x1c] sm:$0xf]
      %v575 = vld [vmem:[#allocation2 + $0x24] sm:$0xf]
      %v576 = vld [vmem:[#allocation2 + $0x28] sm:$0xf]
      %v577 = vld [vmem:[#allocation2 + $0x30] sm:$0xf]
      %v578 = vld [vmem:[#allocation2 + $0x34] sm:$0xf]
      %v579 = vld [vmem:[#allocation2 + $0x3c] sm:$0xf]
      %v580 = vld [vmem:[#allocation2 + $0x40] sm:$0xf]
      %v581 = vld [vmem:[#allocation2 + $0x48] sm:$0xf]
      %v582 = vld [vmem:[#allocation2 + $0x4c] sm:$0xf]
      %v583 = vld [vmem:[#allocation2 + $0x54] sm:$0xf]
      %v584 = vld [vmem:[#allocation2 + $0x58] sm:$0xf]
      %v585 = vld [vmem:[#allocation2 + $0x60] sm:$0xf]
      %v586 = vld [vmem:[#allocation2 + $0x64] sm:$0xf]
      %v587 = vld [vmem:[#allocation2 + $0x6c] sm:$0xf]
      %v588 = vld [vmem:[#allocation2 + $0x70] sm:$0xf]
      %v589 = vld [vmem:[#allocation2 + $0x78] sm:$0xf]
      %v590 = vld [vmem:[#allocation2 + $0x7c] sm:$0xf]
      %v591 = vld [vmem:[#allocation2 + $0x84] sm:$0xf]
      %v592 = vld [vmem:[#allocation2 + $0x88] sm:$0xf]
      %v593 = vld [vmem:[#allocation2 + $0x90] sm:$0xf]
      %v594 = vld [vmem:[#allocation2 + $0x94] sm:$0xf]
      %v595 = vld [vmem:[#allocation2 + $0x9c] sm:$0xf]
      %v596 = vld [vmem:[#allocation2 + $0xa0] sm:$0xf]
      %v597 = vld [vmem:[#allocation2 + $0xa8] sm:$0xf]
      %v598 = vld [vmem:[#allocation2 + $0xac] sm:$0xf]
      %v599 = vld [vmem:[#allocation2 + $0xb4] sm:$0xf]
      %v600 = vld [vmem:[#allocation2 + $0xb8] sm:$0xf]
      %v601 = vld [vmem:[%s1] sm:$0x3]
      %v602 = vld [vmem:[#allocation2 + $0x8] sm:$0x1]
      %v603 = vld [vmem:[#allocation2 + $0x14] sm:$0x1]
      %v604 = vld [vmem:[#allocation2 + $0x20] sm:$0x1]
      %v605 = vld [vmem:[#allocation2 + $0x2c] sm:$0x1]
      %v606 = vld [vmem:[#allocation2 + $0x38] sm:$0x1]
      %v607 = vld [vmem:[#allocation2 + $0x44] sm:$0x1]
      %v608 = vld [vmem:[#allocation2 + $0x50] sm:$0x1]
      %v609 = vld [vmem:[#allocation2 + $0x5c] sm:$0x1]
      %v610 = vld [vmem:[#allocation2 + $0x68] sm:$0x1]
      %v611 = vld [vmem:[#allocation2 + $0x74] sm:$0x1]
      %v612 = vld [vmem:[#allocation2 + $0x80] sm:$0x1]
      %v613 = vld [vmem:[#allocation2 + $0x8c] sm:$0x1]
      %v614 = vld [vmem:[#allocation2 + $0x98] sm:$0x1]
      %v615 = vld [vmem:[#allocation2 + $0xa4] sm:$0x1]
      %v616 = vld [vmem:[#allocation2 + $0xb0] sm:$0x1]
      %v617 = vld [vmem:[#allocation2 + $0xbc] sm:$0x1]
      %vm618 = vsmask.f32 3328
      %vm619 = vsmask.f32 7440
      %vm620 = vmor %vm618, %vm619
      %v622 = vshrl.u32 %v569, 16
      %v624 = vrot.slane %v622, 4
      %v625 = vshll.u32 %v569, 16
      %v627 = vrot.slane %v625, 5
      %v628 = vor.u32 %v624, %v627
      %v629 = vrot.slane %v628, 4
      %v631 = vshll.u32 %v570, 16
      %v633 = vrot.slane %v631, 5
      %v634 = vsel %vm620, %v629, %v633
      %v635 = vshrl.u32 %v570, 16
      %v637 = vrot.slane %v635, 4
      %v638 = vor.u32 %v637, %v633
      %v639 = vrot.slane %v638, 4
      %v641 = vshll.u32 %v602, 16
      %v643 = vrot.slane %v641, 5
      %v644 = vsel %vm620, %v639, %v643
      %v646 = vshrl.u32 %v571, 16
      %v648 = vrot.slane %v646, 4
      %v649 = vshll.u32 %v571, 16
      %v651 = vrot.slane %v649, 5
      %v652 = vor.u32 %v648, %v651
      %v653 = vrot.slane %v652, 4
      %v655 = vshll.u32 %v572, 16
      %v657 = vrot.slane %v655, 5
      %v658 = vsel %vm620, %v653, %v657
      %v659 = vshrl.u32 %v572, 16
      %v661 = vrot.slane %v659, 4
      %v662 = vor.u32 %v661, %v657
      %v663 = vrot.slane %v662, 4
      %v665 = vshll.u32 %v603, 16
      %v667 = vrot.slane %v665, 5
      %v668 = vsel %vm620, %v663, %v667
      %v670 = vshrl.u32 %v573, 16
      %v672 = vrot.slane %v670, 4
      %v673 = vshll.u32 %v573, 16
      %v675 = vrot.slane %v673, 5
      %v676 = vor.u32 %v672, %v675
      %v677 = vrot.slane %v676, 4
      %v679 = vshll.u32 %v574, 16
      %v681 = vrot.slane %v679, 5
      %v682 = vsel %vm620, %v677, %v681
      %v683 = vshrl.u32 %v574, 16
      %v685 = vrot.slane %v683, 4
      %v686 = vor.u32 %v685, %v681
      %v687 = vrot.slane %v686, 4
      %v689 = vshll.u32 %v604, 16
      %v691 = vrot.slane %v689, 5
      %v692 = vsel %vm620, %v687, %v691
      %v694 = vshrl.u32 %v575, 16
      %v696 = vrot.slane %v694, 4
      %v697 = vshll.u32 %v575, 16
      %v699 = vrot.slane %v697, 5
      %v700 = vor.u32 %v696, %v699
      %v701 = vrot.slane %v700, 4
      %v703 = vshll.u32 %v576, 16
      %v705 = vrot.slane %v703, 5
      %v706 = vsel %vm620, %v701, %v705
      %v707 = vshrl.u32 %v576, 16
      %v709 = vrot.slane %v707, 4
      %v710 = vor.u32 %v709, %v705
      %v711 = vrot.slane %v710, 4
      %v713 = vshll.u32 %v605, 16
      %v715 = vrot.slane %v713, 5
      %v716 = vsel %vm620, %v711, %v715
      %v718 = vshrl.u32 %v577, 16
      %v720 = vrot.slane %v718, 4
      %v721 = vshll.u32 %v577, 16
      %v723 = vrot.slane %v721, 5
      %v724 = vor.u32 %v720, %v723
      %v725 = vrot.slane %v724, 4
      %v727 = vshll.u32 %v578, 16
      %v729 = vrot.slane %v727, 5
      %v730 = vsel %vm620, %v725, %v729
      %v731 = vshrl.u32 %v578, 16
      %v733 = vrot.slane %v731, 4
      %v734 = vor.u32 %v733, %v729
      %v735 = vrot.slane %v734, 4
      %v737 = vshll.u32 %v606, 16
      %v739 = vrot.slane %v737, 5
      %v740 = vsel %vm620, %v735, %v739
      %v742 = vshrl.u32 %v579, 16
      %v744 = vrot.slane %v742, 4
      %v745 = vshll.u32 %v579, 16
      %v747 = vrot.slane %v745, 5
      %v748 = vor.u32 %v744, %v747
      %v749 = vrot.slane %v748, 4
      %v751 = vshll.u32 %v580, 16
      %v753 = vrot.slane %v751, 5
      %v754 = vsel %vm620, %v749, %v753
      %v755 = vshrl.u32 %v580, 16
      %v757 = vrot.slane %v755, 4
      %v758 = vor.u32 %v757, %v753
      %v759 = vrot.slane %v758, 4
      %v761 = vshll.u32 %v607, 16
      %v763 = vrot.slane %v761, 5
      %v764 = vsel %vm620, %v759, %v763
      %v766 = vshrl.u32 %v581, 16
      %v768 = vrot.slane %v766, 4
      %v769 = vshll.u32 %v581, 16
      %v771 = vrot.slane %v769, 5
      %v772 = vor.u32 %v768, %v771
      %v773 = vrot.slane %v772, 4
      %v775 = vshll.u32 %v582, 16
      %v777 = vrot.slane %v775, 5
      %v778 = vsel %vm620, %v773, %v777
      %v779 = vshrl.u32 %v582, 16
      %v781 = vrot.slane %v779, 4
      %v782 = vor.u32 %v781, %v777
      %v783 = vrot.slane %v782, 4
      %v785 = vshll.u32 %v608, 16
      %v787 = vrot.slane %v785, 5
      %v788 = vsel %vm620, %v783, %v787
      %v790 = vshrl.u32 %v583, 16
      %v792 = vrot.slane %v790, 4
      %v793 = vshll.u32 %v583, 16
      %v795 = vrot.slane %v793, 5
      %v796 = vor.u32 %v792, %v795
      %v797 = vrot.slane %v796, 4
      %v799 = vshll.u32 %v584, 16
      %v801 = vrot.slane %v799, 5
      %v802 = vsel %vm620, %v797, %v801
      %v803 = vshrl.u32 %v584, 16
      %v805 = vrot.slane %v803, 4
      %v806 = vor.u32 %v805, %v801
      %v807 = vrot.slane %v806, 4
      %v809 = vshll.u32 %v609, 16
      %v811 = vrot.slane %v809, 5
      %v812 = vsel %vm620, %v807, %v811
      %v814 = vshrl.u32 %v585, 16
      %v816 = vrot.slane %v814, 4
      %v817 = vshll.u32 %v585, 16
      %v819 = vrot.slane %v817, 5
      %v820 = vor.u32 %v816, %v819
      %v821 = vrot.slane %v820, 4
      %v823 = vshll.u32 %v586, 16
      %v825 = vrot.slane %v823, 5
      %v826 = vsel %vm620, %v821, %v825
      %v827 = vshrl.u32 %v586, 16
      %v829 = vrot.slane %v827, 4
      %v830 = vor.u32 %v829, %v825
      %v831 = vrot.slane %v830, 4
      %v833 = vshll.u32 %v610, 16
      %v835 = vrot.slane %v833, 5
      %v836 = vsel %vm620, %v831, %v835
      %v838 = vshrl.u32 %v587, 16
      %v840 = vrot.slane %v838, 4
      %v841 = vshll.u32 %v587, 16
      %v843 = vrot.slane %v841, 5
      %v844 = vor.u32 %v840, %v843
      %v845 = vrot.slane %v844, 4
      %v847 = vshll.u32 %v588, 16
      %v849 = vrot.slane %v847, 5
      %v850 = vsel %vm620, %v845, %v849
      %v851 = vshrl.u32 %v588, 16
      %v853 = vrot.slane %v851, 4
      %v854 = vor.u32 %v853, %v849
      %v855 = vrot.slane %v854, 4
      %v857 = vshll.u32 %v611, 16
      %v859 = vrot.slane %v857, 5
      %v860 = vsel %vm620, %v855, %v859
      %v862 = vshrl.u32 %v589, 16
      %v864 = vrot.slane %v862, 4
      %v865 = vshll.u32 %v589, 16
      %v867 = vrot.slane %v865, 5
      %v868 = vor.u32 %v864, %v867
      %v869 = vrot.slane %v868, 4
      %v871 = vshll.u32 %v590, 16
      %v873 = vrot.slane %v871, 5
      %v874 = vsel %vm620, %v869, %v873
      %v875 = vshrl.u32 %v590, 16
      %v877 = vrot.slane %v875, 4
      %v878 = vor.u32 %v877, %v873
      %v879 = vrot.slane %v878, 4
      %v881 = vshll.u32 %v612, 16
      %v883 = vrot.slane %v881, 5
      %v884 = vsel %vm620, %v879, %v883
      %v886 = vshrl.u32 %v591, 16
      %v888 = vrot.slane %v886, 4
      %v889 = vshll.u32 %v591, 16
      %v891 = vrot.slane %v889, 5
      %v892 = vor.u32 %v888, %v891
      %v893 = vrot.slane %v892, 4
      %v895 = vshll.u32 %v592, 16
      %v897 = vrot.slane %v895, 5
      %v898 = vsel %vm620, %v893, %v897
      %v899 = vshrl.u32 %v592, 16
      %v901 = vrot.slane %v899, 4
      %v902 = vor.u32 %v901, %v897
      %v903 = vrot.slane %v902, 4
      %v905 = vshll.u32 %v613, 16
      %v907 = vrot.slane %v905, 5
      %v908 = vsel %vm620, %v903, %v907
      %v910 = vshrl.u32 %v593, 16
      %v912 = vrot.slane %v910, 4
      %v913 = vshll.u32 %v593, 16
      %v915 = vrot.slane %v913, 5
      %v916 = vor.u32 %v912, %v915
      %v917 = vrot.slane %v916, 4
      %v919 = vshll.u32 %v594, 16
      %v921 = vrot.slane %v919, 5
      %v922 = vsel %vm620, %v917, %v921
      %v923 = vshrl.u32 %v594, 16
      %v925 = vrot.slane %v923, 4
      %v926 = vor.u32 %v925, %v921
      %v927 = vrot.slane %v926, 4
      %v929 = vshll.u32 %v614, 16
      %v931 = vrot.slane %v929, 5
      %v932 = vsel %vm620, %v927, %v931
      %v934 = vshrl.u32 %v595, 16
      %v936 = vrot.slane %v934, 4
      %v937 = vshll.u32 %v595, 16
      %v939 = vrot.slane %v937, 5
      %v940 = vor.u32 %v936, %v939
      %v941 = vrot.slane %v940, 4
      %v943 = vshll.u32 %v596, 16
      %v945 = vrot.slane %v943, 5
      %v946 = vsel %vm620, %v941, %v945
      %v947 = vshrl.u32 %v596, 16
      %v949 = vrot.slane %v947, 4
      %v950 = vor.u32 %v949, %v945
      %v951 = vrot.slane %v950, 4
      %v953 = vshll.u32 %v615, 16
      %v955 = vrot.slane %v953, 5
      %v956 = vsel %vm620, %v951, %v955
      %v958 = vshrl.u32 %v597, 16
      %v960 = vrot.slane %v958, 4
      %v961 = vshll.u32 %v597, 16
      %v963 = vrot.slane %v961, 5
      %v964 = vor.u32 %v960, %v963
      %v965 = vrot.slane %v964, 4
      %v967 = vshll.u32 %v598, 16
      %v969 = vrot.slane %v967, 5
      %v970 = vsel %vm620, %v965, %v969
      %v971 = vshrl.u32 %v598, 16
      %v973 = vrot.slane %v971, 4
      %v974 = vor.u32 %v973, %v969
      %v975 = vrot.slane %v974, 4
      %v977 = vshll.u32 %v616, 16
      %v979 = vrot.slane %v977, 5
      %v980 = vsel %vm620, %v975, %v979
      %v982 = vshrl.u32 %v599, 16
      %v984 = vrot.slane %v982, 4
      %v985 = vshll.u32 %v599, 16
      %v987 = vrot.slane %v985, 5
      %v988 = vor.u32 %v984, %v987
      %v989 = vrot.slane %v988, 4
      %v991 = vshll.u32 %v600, 16
      %v993 = vrot.slane %v991, 5
      %v994 = vsel %vm620, %v989, %v993
      %v995 = vshrl.u32 %v600, 16
      %v997 = vrot.slane %v995, 4
      %v998 = vor.u32 %v997, %v993
      %v999 = vrot.slane %v998, 4
      %v1001 = vshll.u32 %v617, 16
      %v1003 = vrot.slane %v1001, 5
      %v1004 = vsel %vm620, %v999, %v1003
      %s1005 = scalar_lea.vmem %s1, 2
      %v1006 = vld [vmem:[%s1005] sm:$0x3]
      %v1007 = vunpack.c.l.b16 %v634
      %v1008 = vunpack.c.l.b16 %v644
      %v1009 = vunpack.c.l.b16 %v658
      %v1010 = vunpack.c.l.b16 %v668
      %v1011 = vunpack.c.l.b16 %v682
      %v1012 = vunpack.c.l.b16 %v692
      %v1013 = vunpack.c.l.b16 %v706
      %v1014 = vunpack.c.l.b16 %v716
      %v1015 = vunpack.c.l.b16 %v730
      %v1016 = vunpack.c.l.b16 %v740
      %v1017 = vunpack.c.l.b16 %v754
      %v1018 = vunpack.c.l.b16 %v764
      %v1019 = vunpack.c.l.b16 %v778
      %v1020 = vunpack.c.l.b16 %v788
      %v1021 = vunpack.c.l.b16 %v802
      %v1022 = vunpack.c.l.b16 %v812
      %v1023 = vunpack.c.l.b16 %v826
      %v1024 = vunpack.c.l.b16 %v836
      %v1025 = vunpack.c.l.b16 %v850
      %v1026 = vunpack.c.l.b16 %v860
      %v1027 = vunpack.c.l.b16 %v874
      %v1028 = vunpack.c.l.b16 %v884
      %v1029 = vunpack.c.l.b16 %v898
      %v1030 = vunpack.c.l.b16 %v908
      %v1031 = vunpack.c.l.b16 %v922
      %v1032 = vunpack.c.l.b16 %v932
      %v1033 = vunpack.c.l.b16 %v946
      %v1034 = vunpack.c.l.b16 %v956
      %v1035 = vunpack.c.l.b16 %v970
      %v1036 = vunpack.c.l.b16 %v980
      %v1037 = vunpack.c.l.b16 %v994
      %v1038 = vunpack.c.l.b16 %v1004
      %v1039 = vpack.c.b16 %v1008, %v1007
      %v1040 = vpack.c.b16 %v1010, %v1009
      %v1041 = vpack.c.b16 %v1012, %v1011
      %v1042 = vpack.c.b16 %v1014, %v1013
      %v1043 = vpack.c.b16 %v1016, %v1015
      %v1044 = vpack.c.b16 %v1018, %v1017
      %v1045 = vpack.c.b16 %v1020, %v1019
      %v1046 = vpack.c.b16 %v1022, %v1021
      %v1047 = vpack.c.b16 %v1024, %v1023
      %v1048 = vpack.c.b16 %v1026, %v1025
      %v1049 = vpack.c.b16 %v1028, %v1027
      %v1050 = vpack.c.b16 %v1030, %v1029
      %v1051 = vpack.c.b16 %v1032, %v1031
      %v1052 = vpack.c.b16 %v1034, %v1033
      %v1053 = vpack.c.b16 %v1036, %v1035
      %v1054 = vpack.c.b16 %v1038, %v1037
      %vm1055 = vcmask 31744
      %v1057 = vsel %vm1055, %v1039, 0
      %v1060 = vsel %vm1055, %v1040, 0
      %v1063 = vsel %vm1055, %v1041, 0
      %v1066 = vsel %vm1055, %v1042, 0
      %v1069 = vsel %vm1055, %v1043, 0
      %v1072 = vsel %vm1055, %v1044, 0
      %v1075 = vsel %vm1055, %v1045, 0
      %v1078 = vsel %vm1055, %v1046, 0
      %v1081 = vsel %vm1055, %v1047, 0
      %v1084 = vsel %vm1055, %v1048, 0
      %v1087 = vsel %vm1055, %v1049, 0
      %v1090 = vsel %vm1055, %v1050, 0
      %v1093 = vsel %vm1055, %v1051, 0
      %v1096 = vsel %vm1055, %v1052, 0
      %v1099 = vsel %vm1055, %v1053, 0
      %v1102 = vsel %vm1055, %v1054, 0
      %vm1104 = vcmask 1041408
      %v1106 = vsel %vm1104, %v1006, 0
      %1108 = vmatprep.subr.bf16.mxu0 0
      %1109 = vmatpush1.bf16.msra.mxu0 %v1106
      %1110 = vmatprep.subr.bf16.mxu0 0
      %1111 = vmatpush1.bf16.msra.mxu0 0
      %1112 = vmatprep.subr.bf16.mxu0 0
      %1113 = vmatpush1.bf16.msra.mxu0 0
      %1114 = vmatprep.subr.bf16.mxu0 0
      %1115 = vmatpush1.bf16.msra.mxu0 0
      %1116 = vmatprep.subr.bf16.mxu0 0
      %1117 = vmatpush1.bf16.msra.mxu0 0
      %1118 = vmatprep.subr.bf16.mxu0 0
      %1119 = vmatpush1.bf16.msra.mxu0 0
      %1120 = vmatprep.subr.bf16.mxu0 0
      %1121 = vmatpush1.bf16.msra.mxu0 0
      %1122 = vmatprep.subr.bf16.mxu0 0
      %1123 = vmatpush1.bf16.msra.mxu0 0
      %1124 = vmatprep.subr.bf16.mxu0 0
      %1125 = vmatpush1.bf16.msra.mxu0 0
      %1126 = vmatprep.subr.bf16.mxu0 0
      %1127 = vmatpush1.bf16.msra.mxu0 0
      %1128 = vmatprep.subr.bf16.mxu0 0
      %1129 = vmatpush1.bf16.msra.mxu0 0
      %1130 = vmatprep.subr.bf16.mxu0 0
      %1131 = vmatpush1.bf16.msra.mxu0 0
      %1132 = vmatprep.subr.bf16.mxu0 0
      %1133 = vmatpush1.bf16.msra.mxu0 0
      %1134 = vmatprep.subr.bf16.mxu0 0
      %1135 = vmatpush1.bf16.msra.mxu0 0
      %1136 = vmatprep.subr.bf16.mxu0 0
      %1137 = vmatpush1.bf16.msra.mxu0 0
      %1138 = vmatprep.subr.bf16.mxu0 0
      %1139 = vmatpush1.bf16.msra.mxu0 0
      %1140 = vmatprep.mubr.bf16.mxu0 0
      %1141 = vmatmul.mubr.bf16.gmra.mrb[0].mxu0 %v1057
      %v1142 = vpop.f32.mrb[0].mxu0
      %v1143 = vadd.f32 0.0, %v1142
      %v1144 = vpop.f32.mrb[0].mxu0
      %v1145 = vpop.f32.mrb[0].mxu0
      %v1146 = vadd.f32 0.0, %v1145
      %v1147 = vpop.f32.mrb[0].mxu0
      %1148 = vmatprep.mubr.bf16.mxu0 0
      %1149 = vmatmul.mubr.bf16.gmra.mrb[0].mxu0 %v1060
      %v1150 = vpop.f32.mrb[0].mxu0
      %v1151 = vadd.f32 0.0, %v1150
      %v1152 = vpop.f32.mrb[0].mxu0
      %v1153 = vpop.f32.mrb[0].mxu0
      %v1154 = vadd.f32 0.0, %v1153
      %v1155 = vpop.f32.mrb[0].mxu0
      %1156 = vmatprep.mubr.bf16.mxu0 0
      %1157 = vmatmul.mubr.bf16.gmra.mrb[0].mxu0 %v1063
      %v1158 = vpop.f32.mrb[0].mxu0
      %v1159 = vadd.f32 0.0, %v1158
      %v1160 = vpop.f32.mrb[0].mxu0
      %v1161 = vpop.f32.mrb[0].mxu0
      %v1162 = vadd.f32 0.0, %v1161
      %v1163 = vpop.f32.mrb[0].mxu0
      %1164 = vmatprep.mubr.bf16.mxu0 0
      %1165 = vmatmul.mubr.bf16.gmra.mrb[0].mxu0 %v1066
      %v1166 = vpop.f32.mrb[0].mxu0
      %v1167 = vadd.f32 0.0, %v1166
      %v1168 = vpop.f32.mrb[0].mxu0
      %v1169 = vpop.f32.mrb[0].mxu0
      %v1170 = vadd.f32 0.0, %v1169
      %v1171 = vpop.f32.mrb[0].mxu0
      %1172 = vmatprep.mubr.bf16.mxu0 0
      %1173 = vmatmul.mubr.bf16.gmra.mrb[0].mxu0 %v1069
      %v1174 = vpop.f32.mrb[0].mxu0
      %v1175 = vadd.f32 0.0, %v1174
      %v1176 = vpop.f32.mrb[0].mxu0
      %v1177 = vpop.f32.mrb[0].mxu0
      %v1178 = vadd.f32 0.0, %v1177
      %v1179 = vpop.f32.mrb[0].mxu0
      %1180 = vmatprep.mubr.bf16.mxu0 0
      %1181 = vmatmul.mubr.bf16.gmra.mrb[0].mxu0 %v1072
      %v1182 = vpop.f32.mrb[0].mxu0
      %v1183 = vadd.f32 0.0, %v1182
      %v1184 = vpop.f32.mrb[0].mxu0
      %v1185 = vpop.f32.mrb[0].mxu0
      %v1186 = vadd.f32 0.0, %v1185
      %v1187 = vpop.f32.mrb[0].mxu0
      %1188 = vmatprep.mubr.bf16.mxu0 0
      %1189 = vmatmul.mubr.bf16.gmra.mrb[0].mxu0 %v1075
      %v1190 = vpop.f32.mrb[0].mxu0
      %v1191 = vadd.f32 0.0, %v1190
      %v1192 = vpop.f32.mrb[0].mxu0
      %v1193 = vpop.f32.mrb[0].mxu0
      %v1194 = vadd.f32 0.0, %v1193
      %v1195 = vpop.f32.mrb[0].mxu0
      %1196 = vmatprep.mubr.bf16.mxu0 0
      %1197 = vmatmul.mubr.bf16.gmra.mrb[0].mxu0 %v1078
      %v1198 = vpop.f32.mrb[0].mxu0
      %v1199 = vadd.f32 0.0, %v1198
      %v1200 = vpop.f32.mrb[0].mxu0
      %v1201 = vpop.f32.mrb[0].mxu0
      %v1202 = vadd.f32 0.0, %v1201
      %v1203 = vpop.f32.mrb[0].mxu0
      %1204 = vmatprep.mubr.bf16.mxu0 0
      %1205 = vmatmul.mubr.bf16.gmra.mrb[0].mxu0 %v1081
      %v1206 = vpop.f32.mrb[0].mxu0
      %v1207 = vadd.f32 0.0, %v1206
      %v1208 = vpop.f32.mrb[0].mxu0
      %v1209 = vpop.f32.mrb[0].mxu0
      %v1210 = vadd.f32 0.0, %v1209
      %v1211 = vpop.f32.mrb[0].mxu0
      %1212 = vmatprep.mubr.bf16.mxu0 0
      %1213 = vmatmul.mubr.bf16.gmra.mrb[0].mxu0 %v1084
      %v1214 = vpop.f32.mrb[0].mxu0
      %v1215 = vadd.f32 0.0, %v1214
      %v1216 = vpop.f32.mrb[0].mxu0
      %v1217 = vpop.f32.mrb[0].mxu0
      %v1218 = vadd.f32 0.0, %v1217
      %v1219 = vpop.f32.mrb[0].mxu0
      %1220 = vmatprep.mubr.bf16.mxu0 0
      %1221 = vmatmul.mubr.bf16.gmra.mrb[0].mxu0 %v1087
      %v1222 = vpop.f32.mrb[0].mxu0
      %v1223 = vadd.f32 0.0, %v1222
      %v1224 = vpop.f32.mrb[0].mxu0
      %v1225 = vpop.f32.mrb[0].mxu0
      %v1226 = vadd.f32 0.0, %v1225
      %v1227 = vpop.f32.mrb[0].mxu0
      %1228 = vmatprep.mubr.bf16.mxu0 0
      %1229 = vmatmul.mubr.bf16.gmra.mrb[0].mxu0 %v1090
      %v1230 = vpop.f32.mrb[0].mxu0
      %v1231 = vadd.f32 0.0, %v1230
      %v1232 = vpop.f32.mrb[0].mxu0
      %v1233 = vpop.f32.mrb[0].mxu0
      %v1234 = vadd.f32 0.0, %v1233
      %v1235 = vpop.f32.mrb[0].mxu0
      %1236 = vmatprep.mubr.bf16.mxu0 0
      %1237 = vmatmul.mubr.bf16.gmra.mrb[0].mxu0 %v1093
      %v1238 = vpop.f32.mrb[0].mxu0
      %v1239 = vadd.f32 0.0, %v1238
      %v1240 = vpop.f32.mrb[0].mxu0
      %v1241 = vpop.f32.mrb[0].mxu0
      %v1242 = vadd.f32 0.0, %v1241
      %v1243 = vpop.f32.mrb[0].mxu0
      %1244 = vmatprep.mubr.bf16.mxu0 0
      %1245 = vmatmul.mubr.bf16.gmra.mrb[0].mxu0 %v1096
      %v1246 = vpop.f32.mrb[0].mxu0
      %v1247 = vadd.f32 0.0, %v1246
      %v1248 = vpop.f32.mrb[0].mxu0
      %v1249 = vpop.f32.mrb[0].mxu0
      %v1250 = vadd.f32 0.0, %v1249
      %v1251 = vpop.f32.mrb[0].mxu0
      %1252 = vmatprep.mubr.bf16.mxu0 0
      %1253 = vmatmul.mubr.bf16.gmra.mrb[0].mxu0 %v1099
      %v1254 = vpop.f32.mrb[0].mxu0
      %v1255 = vadd.f32 0.0, %v1254
      %v1256 = vpop.f32.mrb[0].mxu0
      %v1257 = vpop.f32.mrb[0].mxu0
      %v1258 = vadd.f32 0.0, %v1257
      %v1259 = vpop.f32.mrb[0].mxu0
      %1260 = vmatprep.mubr.bf16.mxu0 0
      %1261 = vmatmul.mubr.bf16.gmra.mrb[0].mxu0 %v1102
      %v1262 = vpop.f32.mrb[0].mxu0
      %v1263 = vadd.f32 0.0, %v1262
      %v1264 = vpop.f32.mrb[0].mxu0
      %v1265 = vpop.f32.mrb[0].mxu0
      %v1266 = vadd.f32 0.0, %v1265
      %v1267 = vpop.f32.mrb[0].mxu0
      %1268 = vdwg.mxu0
      %v1301 = vunpack.c.l.b16 %v569
      %v1302 = vunpack.c.l.b16 %v570
      %v1303 = vunpack.c.l.b16 %v571
      %v1304 = vunpack.c.l.b16 %v572
      %v1305 = vunpack.c.l.b16 %v573
      %v1306 = vunpack.c.l.b16 %v574
      %v1307 = vunpack.c.l.b16 %v575
      %v1308 = vunpack.c.l.b16 %v576
      %v1309 = vunpack.c.l.b16 %v577
      %v1310 = vunpack.c.l.b16 %v578
      %v1311 = vunpack.c.l.b16 %v579
      %v1312 = vunpack.c.l.b16 %v580
      %v1313 = vunpack.c.l.b16 %v581
      %v1314 = vunpack.c.l.b16 %v582
      %v1315 = vunpack.c.l.b16 %v583
      %v1316 = vunpack.c.l.b16 %v584
      %v1317 = vunpack.c.l.b16 %v585
      %v1318 = vunpack.c.l.b16 %v586
      %v1319 = vunpack.c.l.b16 %v587
      %v1320 = vunpack.c.l.b16 %v588
      %v1321 = vunpack.c.l.b16 %v589
      %v1322 = vunpack.c.l.b16 %v590
      %v1323 = vunpack.c.l.b16 %v591
      %v1324 = vunpack.c.l.b16 %v592
      %v1325 = vunpack.c.l.b16 %v593
      %v1326 = vunpack.c.l.b16 %v594
      %v1327 = vunpack.c.l.b16 %v595
      %v1328 = vunpack.c.l.b16 %v596
      %v1329 = vunpack.c.l.b16 %v597
      %v1330 = vunpack.c.l.b16 %v598
      %v1331 = vunpack.c.l.b16 %v599
      %v1332 = vunpack.c.l.b16 %v600
      %v1333 = vpack.c.b16 %v1302, %v1301
      %v1334 = vpack.c.b16 %v1304, %v1303
      %v1335 = vpack.c.b16 %v1306, %v1305
      %v1336 = vpack.c.b16 %v1308, %v1307
      %v1337 = vpack.c.b16 %v1310, %v1309
      %v1338 = vpack.c.b16 %v1312, %v1311
      %v1339 = vpack.c.b16 %v1314, %v1313
      %v1340 = vpack.c.b16 %v1316, %v1315
      %v1341 = vpack.c.b16 %v1318, %v1317
      %v1342 = vpack.c.b16 %v1320, %v1319
      %v1343 = vpack.c.b16 %v1322, %v1321
      %v1344 = vpack.c.b16 %v1324, %v1323
      %v1345 = vpack.c.b16 %v1326, %v1325
      %v1346 = vpack.c.b16 %v1328, %v1327
      %v1347 = vpack.c.b16 %v1330, %v1329
      %v1348 = vpack.c.b16 %v1332, %v1331
      %v1350 = vsel %vm1055, %v1333, 0
      %v1353 = vsel %vm1055, %v1334, 0
      %v1356 = vsel %vm1055, %v1335, 0
      %v1359 = vsel %vm1055, %v1336, 0
      %v1362 = vsel %vm1055, %v1337, 0
      %v1365 = vsel %vm1055, %v1338, 0
      %v1368 = vsel %vm1055, %v1339, 0
      %v1371 = vsel %vm1055, %v1340, 0
      %v1374 = vsel %vm1055, %v1341, 0
      %v1377 = vsel %vm1055, %v1342, 0
      %v1380 = vsel %vm1055, %v1343, 0
      %v1383 = vsel %vm1055, %v1344, 0
      %v1386 = vsel %vm1055, %v1345, 0
      %v1389 = vsel %vm1055, %v1346, 0
      %v1392 = vsel %vm1055, %v1347, 0
      %v1395 = vsel %vm1055, %v1348, 0
      %v1398 = vsel %vm1104, %v601, 0
      %1400 = vmatprep.subr.bf16.mxu0 0
      %1401 = vmatpush1.bf16.msra.mxu0 %v1398
      %1402 = vmatprep.subr.bf16.mxu0 0
      %1403 = vmatpush1.bf16.msra.mxu0 0
      %1404 = vmatprep.subr.bf16.mxu0 0
      %1405 = vmatpush1.bf16.msra.mxu0 0
      %1406 = vmatprep.subr.bf16.mxu0 0
      %1407 = vmatpush1.bf16.msra.mxu0 0
      %1408 = vmatprep.subr.bf16.mxu0 0
      %1409 = vmatpush1.bf16.msra.mxu0 0
      %1410 = vmatprep.subr.bf16.mxu0 0
      %1411 = vmatpush1.bf16.msra.mxu0 0
      %1412 = vmatprep.subr.bf16.mxu0 0
      %1413 = vmatpush1.bf16.msra.mxu0 0
      %1414 = vmatprep.subr.bf16.mxu0 0
      %1415 = vmatpush1.bf16.msra.mxu0 0
      %1416 = vmatprep.subr.bf16.mxu0 0
      %1417 = vmatpush1.bf16.msra.mxu0 0
      %1418 = vmatprep.subr.bf16.mxu0 0
      %1419 = vmatpush1.bf16.msra.mxu0 0
      %1420 = vmatprep.subr.bf16.mxu0 0
      %1421 = vmatpush1.bf16.msra.mxu0 0
      %1422 = vmatprep.subr.bf16.mxu0 0
      %1423 = vmatpush1.bf16.msra.mxu0 0
      %1424 = vmatprep.subr.bf16.mxu0 0
      %1425 = vmatpush1.bf16.msra.mxu0 0
      %1426 = vmatprep.subr.bf16.mxu0 0
      %1427 = vmatpush1.bf16.msra.mxu0 0
      %1428 = vmatprep.subr.bf16.mxu0 0
      %1429 = vmatpush1.bf16.msra.mxu0 0
      %1430 = vmatprep.subr.bf16.mxu0 0
      %1431 = vmatpush1.bf16.msra.mxu0 0
      %1432 = vmatprep.mubr.bf16.mxu0 0
      %1433 = vmatmul.mubr.bf16.gmra.mrb[0].mxu0 %v1350
      %v1434 = vpop.f32.mrb[0].mxu0
      %v1435 = vadd.f32 %v1143, %v1434
      %v1436 = vpop.f32.mrb[0].mxu0
      %v1437 = vpop.f32.mrb[0].mxu0
      %v1438 = vadd.f32 %v1146, %v1437
      %v1439 = vpop.f32.mrb[0].mxu0
      %1440 = vmatprep.mubr.bf16.mxu0 0
      %1441 = vmatmul.mubr.bf16.gmra.mrb[0].mxu0 %v1353
      %v1442 = vpop.f32.mrb[0].mxu0
      %v1443 = vadd.f32 %v1151, %v1442
      %v1444 = vpop.f32.mrb[0].mxu0
      %v1445 = vpop.f32.mrb[0].mxu0
      %v1446 = vadd.f32 %v1154, %v1445
      %v1447 = vpop.f32.mrb[0].mxu0
      %1448 = vmatprep.mubr.bf16.mxu0 0
      %1449 = vmatmul.mubr.bf16.gmra.mrb[0].mxu0 %v1356
      %v1450 = vpop.f32.mrb[0].mxu0
      %v1451 = vadd.f32 %v1159, %v1450
      %v1452 = vpop.f32.mrb[0].mxu0
      %v1453 = vpop.f32.mrb[0].mxu0
      %v1454 = vadd.f32 %v1162, %v1453
      %v1455 = vpop.f32.mrb[0].mxu0
      %1456 = vmatprep.mubr.bf16.mxu0 0
      %1457 = vmatmul.mubr.bf16.gmra.mrb[0].mxu0 %v1359
      %v1458 = vpop.f32.mrb[0].mxu0
      %v1459 = vadd.f32 %v1167, %v1458
      %v1460 = vpop.f32.mrb[0].mxu0
      %v1461 = vpop.f32.mrb[0].mxu0
      %v1462 = vadd.f32 %v1170, %v1461
      %v1463 = vpop.f32.mrb[0].mxu0
      %1464 = vmatprep.mubr.bf16.mxu0 0
      %1465 = vmatmul.mubr.bf16.gmra.mrb[0].mxu0 %v1362
      %v1466 = vpop.f32.mrb[0].mxu0
      %v1467 = vadd.f32 %v1175, %v1466
      %v1468 = vpop.f32.mrb[0].mxu0
      %v1469 = vpop.f32.mrb[0].mxu0
      %v1470 = vadd.f32 %v1178, %v1469
      %v1471 = vpop.f32.mrb[0].mxu0
      %1472 = vmatprep.mubr.bf16.mxu0 0
      %1473 = vmatmul.mubr.bf16.gmra.mrb[0].mxu0 %v1365
      %v1474 = vpop.f32.mrb[0].mxu0
      %v1475 = vadd.f32 %v1183, %v1474
      %v1476 = vpop.f32.mrb[0].mxu0
      %v1477 = vpop.f32.mrb[0].mxu0
      %v1478 = vadd.f32 %v1186, %v1477
      %v1479 = vpop.f32.mrb[0].mxu0
      %1480 = vmatprep.mubr.bf16.mxu0 0
      %1481 = vmatmul.mubr.bf16.gmra.mrb[0].mxu0 %v1368
      %v1482 = vpop.f32.mrb[0].mxu0
      %v1483 = vadd.f32 %v1191, %v1482
      %v1484 = vpop.f32.mrb[0].mxu0
      %v1485 = vpop.f32.mrb[0].mxu0
      %v1486 = vadd.f32 %v1194, %v1485
      %v1487 = vpop.f32.mrb[0].mxu0
      %1488 = vmatprep.mubr.bf16.mxu0 0
      %1489 = vmatmul.mubr.bf16.gmra.mrb[0].mxu0 %v1371
      %v1490 = vpop.f32.mrb[0].mxu0
      %v1491 = vadd.f32 %v1199, %v1490
      %v1492 = vpop.f32.mrb[0].mxu0
      %v1493 = vpop.f32.mrb[0].mxu0
      %v1494 = vadd.f32 %v1202, %v1493
      %v1495 = vpop.f32.mrb[0].mxu0
      %1496 = vmatprep.mubr.bf16.mxu0 0
      %1497 = vmatmul.mubr.bf16.gmra.mrb[0].mxu0 %v1374
      %v1498 = vpop.f32.mrb[0].mxu0
      %v1499 = vadd.f32 %v1207, %v1498
      %v1500 = vpop.f32.mrb[0].mxu0
      %v1501 = vpop.f32.mrb[0].mxu0
      %v1502 = vadd.f32 %v1210, %v1501
      %v1503 = vpop.f32.mrb[0].mxu0
      %1504 = vmatprep.mubr.bf16.mxu0 0
      %1505 = vmatmul.mubr.bf16.gmra.mrb[0].mxu0 %v1377
      %v1506 = vpop.f32.mrb[0].mxu0
      %v1507 = vadd.f32 %v1215, %v1506
      %v1508 = vpop.f32.mrb[0].mxu0
      %v1509 = vpop.f32.mrb[0].mxu0
      %v1510 = vadd.f32 %v1218, %v1509
      %v1511 = vpop.f32.mrb[0].mxu0
      %1512 = vmatprep.mubr.bf16.mxu0 0
      %1513 = vmatmul.mubr.bf16.gmra.mrb[0].mxu0 %v1380
      %v1514 = vpop.f32.mrb[0].mxu0
      %v1515 = vadd.f32 %v1223, %v1514
      %v1516 = vpop.f32.mrb[0].mxu0
      %v1517 = vpop.f32.mrb[0].mxu0
      %v1518 = vadd.f32 %v1226, %v1517
      %v1519 = vpop.f32.mrb[0].mxu0
      %1520 = vmatprep.mubr.bf16.mxu0 0
      %1521 = vmatmul.mubr.bf16.gmra.mrb[0].mxu0 %v1383
      %v1522 = vpop.f32.mrb[0].mxu0
      %v1523 = vadd.f32 %v1231, %v1522
      %v1524 = vpop.f32.mrb[0].mxu0
      %v1525 = vpop.f32.mrb[0].mxu0
      %v1526 = vadd.f32 %v1234, %v1525
      %v1527 = vpop.f32.mrb[0].mxu0
      %1528 = vmatprep.mubr.bf16.mxu0 0
      %1529 = vmatmul.mubr.bf16.gmra.mrb[0].mxu0 %v1386
      %v1530 = vpop.f32.mrb[0].mxu0
      %v1531 = vadd.f32 %v1239, %v1530
      %v1532 = vpop.f32.mrb[0].mxu0
      %v1533 = vpop.f32.mrb[0].mxu0
      %v1534 = vadd.f32 %v1242, %v1533
      %v1535 = vpop.f32.mrb[0].mxu0
      %1536 = vmatprep.mubr.bf16.mxu0 0
      %1537 = vmatmul.mubr.bf16.gmra.mrb[0].mxu0 %v1389
      %v1538 = vpop.f32.mrb[0].mxu0
      %v1539 = vadd.f32 %v1247, %v1538
      %v1540 = vpop.f32.mrb[0].mxu0
      %v1541 = vpop.f32.mrb[0].mxu0
      %v1542 = vadd.f32 %v1250, %v1541
      %v1543 = vpop.f32.mrb[0].mxu0
      %1544 = vmatprep.mubr.bf16.mxu0 0
      %1545 = vmatmul.mubr.bf16.gmra.mrb[0].mxu0 %v1392
      %v1546 = vpop.f32.mrb[0].mxu0
      %v1547 = vadd.f32 %v1255, %v1546
      %v1548 = vpop.f32.mrb[0].mxu0
      %v1549 = vpop.f32.mrb[0].mxu0
      %v1550 = vadd.f32 %v1258, %v1549
      %v1551 = vpop.f32.mrb[0].mxu0
      %1552 = vmatprep.mubr.bf16.mxu0 0
      %1553 = vmatmul.mubr.bf16.gmra.mrb[0].mxu0 %v1395
      %v1554 = vpop.f32.mrb[0].mxu0
      %v1555 = vadd.f32 %v1263, %v1554
      %v1556 = vpop.f32.mrb[0].mxu0
      %v1557 = vpop.f32.mrb[0].mxu0
      %v1558 = vadd.f32 %v1266, %v1557
      %v1559 = vpop.f32.mrb[0].mxu0
      %1560 = vdwg.mxu0
      %s1561 = scalar_lea.vmem [#allocation2], 12
      %v1562 = vld [vmem:[%s1561] sm:$0xf]
      %v1563 = vld [vmem:[%s1561 + $0x4] sm:$0xf]
      %v1564 = vld [vmem:[%s1561 + $0xc] sm:$0xf]
      %v1565 = vld [vmem:[%s1561 + $0x10] sm:$0xf]
      %v1566 = vld [vmem:[%s1561 + $0x18] sm:$0xf]
      %v1567 = vld [vmem:[%s1561 + $0x1c] sm:$0xf]
      %v1568 = vld [vmem:[%s1561 + $0x24] sm:$0xf]
      %v1569 = vld [vmem:[%s1561 + $0x28] sm:$0xf]
      %v1570 = vld [vmem:[%s1561 + $0x30] sm:$0xf]
      %v1571 = vld [vmem:[%s1561 + $0x34] sm:$0xf]
      %v1572 = vld [vmem:[%s1561 + $0x3c] sm:$0xf]
      %v1573 = vld [vmem:[%s1561 + $0x40] sm:$0xf]
      %v1574 = vld [vmem:[%s1561 + $0x48] sm:$0xf]
      %v1575 = vld [vmem:[%s1561 + $0x4c] sm:$0xf]
      %v1576 = vld [vmem:[%s1561 + $0x54] sm:$0xf]
      %v1577 = vld [vmem:[%s1561 + $0x58] sm:$0xf]
      %v1578 = vld [vmem:[%s1561 + $0x60] sm:$0xf]
      %v1579 = vld [vmem:[%s1561 + $0x64] sm:$0xf]
      %v1580 = vld [vmem:[%s1561 + $0x6c] sm:$0xf]
      %v1581 = vld [vmem:[%s1561 + $0x70] sm:$0xf]
      %v1582 = vld [vmem:[%s1561 + $0x78] sm:$0xf]
      %v1583 = vld [vmem:[%s1561 + $0x7c] sm:$0xf]
      %v1584 = vld [vmem:[%s1561 + $0x84] sm:$0xf]
      %v1585 = vld [vmem:[%s1561 + $0x88] sm:$0xf]
      %v1586 = vld [vmem:[%s1561 + $0x90] sm:$0xf]
      %v1587 = vld [vmem:[%s1561 + $0x94] sm:$0xf]
      %v1588 = vld [vmem:[%s1561 + $0x9c] sm:$0xf]
      %v1589 = vld [vmem:[%s1561 + $0xa0] sm:$0xf]
      %v1590 = vld [vmem:[%s1561 + $0xa8] sm:$0xf]
      %v1591 = vld [vmem:[%s1561 + $0xac] sm:$0xf]
      %v1592 = vld [vmem:[%s1561 + $0xb4] sm:$0xf]
      %v1593 = vld [vmem:[%s1561 + $0xb8] sm:$0xf]
      %s1594 = scalar_lea.vmem %s1, 4
      %v1595 = vld [vmem:[%s1594] sm:$0x3]
      %v1628 = vunpack.c.l.b16 %v1562
      %v1629 = vunpack.c.l.b16 %v1563
      %v1630 = vunpack.c.l.b16 %v1564
      %v1631 = vunpack.c.l.b16 %v1565
      %v1632 = vunpack.c.l.b16 %v1566
      %v1633 = vunpack.c.l.b16 %v1567
      %v1634 = vunpack.c.l.b16 %v1568
      %v1635 = vunpack.c.l.b16 %v1569
      %v1636 = vunpack.c.l.b16 %v1570
      %v1637 = vunpack.c.l.b16 %v1571
      %v1638 = vunpack.c.l.b16 %v1572
      %v1639 = vunpack.c.l.b16 %v1573
      %v1640 = vunpack.c.l.b16 %v1574
      %v1641 = vunpack.c.l.b16 %v1575
      %v1642 = vunpack.c.l.b16 %v1576
      %v1643 = vunpack.c.l.b16 %v1577
      %v1644 = vunpack.c.l.b16 %v1578
      %v1645 = vunpack.c.l.b16 %v1579
      %v1646 = vunpack.c.l.b16 %v1580
      %v1647 = vunpack.c.l.b16 %v1581
      %v1648 = vunpack.c.l.b16 %v1582
      %v1649 = vunpack.c.l.b16 %v1583
      %v1650 = vunpack.c.l.b16 %v1584
      %v1651 = vunpack.c.l.b16 %v1585
      %v1652 = vunpack.c.l.b16 %v1586
      %v1653 = vunpack.c.l.b16 %v1587
      %v1654 = vunpack.c.l.b16 %v1588
      %v1655 = vunpack.c.l.b16 %v1589
      %v1656 = vunpack.c.l.b16 %v1590
      %v1657 = vunpack.c.l.b16 %v1591
      %v1658 = vunpack.c.l.b16 %v1592
      %v1659 = vunpack.c.l.b16 %v1593
      %v1660 = vpack.c.b16 %v1629, %v1628
      %v1661 = vpack.c.b16 %v1631, %v1630
      %v1662 = vpack.c.b16 %v1633, %v1632
      %v1663 = vpack.c.b16 %v1635, %v1634
      %v1664 = vpack.c.b16 %v1637, %v1636
      %v1665 = vpack.c.b16 %v1639, %v1638
      %v1666 = vpack.c.b16 %v1641, %v1640
      %v1667 = vpack.c.b16 %v1643, %v1642
      %v1668 = vpack.c.b16 %v1645, %v1644
      %v1669 = vpack.c.b16 %v1647, %v1646
      %v1670 = vpack.c.b16 %v1649, %v1648
      %v1671 = vpack.c.b16 %v1651, %v1650
      %v1672 = vpack.c.b16 %v1653, %v1652
      %v1673 = vpack.c.b16 %v1655, %v1654
      %v1674 = vpack.c.b16 %v1657, %v1656
      %v1675 = vpack.c.b16 %v1659, %v1658
      %v1677 = vsel %vm1055, %v1660, 0
      %v1680 = vsel %vm1055, %v1661, 0
      %v1683 = vsel %vm1055, %v1662, 0
      %v1686 = vsel %vm1055, %v1663, 0
      %v1689 = vsel %vm1055, %v1664, 0
      %v1692 = vsel %vm1055, %v1665, 0
      %v1695 = vsel %vm1055, %v1666, 0
      %v1698 = vsel %vm1055, %v1667, 0
      %v1701 = vsel %vm1055, %v1668, 0
      %v1704 = vsel %vm1055, %v1669, 0
      %v1707 = vsel %vm1055, %v1670, 0
      %v1710 = vsel %vm1055, %v1671, 0
      %v1713 = vsel %vm1055, %v1672, 0
      %v1716 = vsel %vm1055, %v1673, 0
      %v1719 = vsel %vm1055, %v1674, 0
      %v1722 = vsel %vm1055, %v1675, 0
      %v1725 = vsel %vm1104, %v1595, 0
      %1727 = vmatprep.subr.bf16.mxu0 0
      %1728 = vmatpush1.bf16.msra.mxu0 %v1725
      %1729 = vmatprep.subr.bf16.mxu0 0
      %1730 = vmatpush1.bf16.msra.mxu0 0
      %1731 = vmatprep.subr.bf16.mxu0 0
      %1732 = vmatpush1.bf16.msra.mxu0 0
      %1733 = vmatprep.subr.bf16.mxu0 0
      %1734 = vmatpush1.bf16.msra.mxu0 0
      %1735 = vmatprep.subr.bf16.mxu0 0
      %1736 = vmatpush1.bf16.msra.mxu0 0
      %1737 = vmatprep.subr.bf16.mxu0 0
      %1738 = vmatpush1.bf16.msra.mxu0 0
      %1739 = vmatprep.subr.bf16.mxu0 0
      %1740 = vmatpush1.bf16.msra.mxu0 0
      %1741 = vmatprep.subr.bf16.mxu0 0
      %1742 = vmatpush1.bf16.msra.mxu0 0
      %1743 = vmatprep.subr.bf16.mxu0 0
      %1744 = vmatpush1.bf16.msra.mxu0 0
      %1745 = vmatprep.subr.bf16.mxu0 0
      %1746 = vmatpush1.bf16.msra.mxu0 0
      %1747 = vmatprep.subr.bf16.mxu0 0
      %1748 = vmatpush1.bf16.msra.mxu0 0
      %1749 = vmatprep.subr.bf16.mxu0 0
      %1750 = vmatpush1.bf16.msra.mxu0 0
      %1751 = vmatprep.subr.bf16.mxu0 0
      %1752 = vmatpush1.bf16.msra.mxu0 0
      %1753 = vmatprep.subr.bf16.mxu0 0
      %1754 = vmatpush1.bf16.msra.mxu0 0
      %1755 = vmatprep.subr.bf16.mxu0 0
      %1756 = vmatpush1.bf16.msra.mxu0 0
      %1757 = vmatprep.subr.bf16.mxu0 0
      %1758 = vmatpush1.bf16.msra.mxu0 0
      %1759 = vmatprep.mubr.bf16.mxu0 0
      %1760 = vmatmul.mubr.bf16.gmra.mrb[0].mxu0 %v1677
      %v1761 = vpop.f32.mrb[0].mxu0
      %v1762 = vadd.f32 0.0, %v1761
      %v1763 = vpop.f32.mrb[0].mxu0
      %v1764 = vpop.f32.mrb[0].mxu0
      %v1765 = vadd.f32 0.0, %v1764
      %v1766 = vpop.f32.mrb[0].mxu0
      %1767 = vmatprep.mubr.bf16.mxu0 0
      %1768 = vmatmul.mubr.bf16.gmra.mrb[0].mxu0 %v1680
      %v1769 = vpop.f32.mrb[0].mxu0
      %v1770 = vadd.f32 0.0, %v1769
      %v1771 = vpop.f32.mrb[0].mxu0
      %v1772 = vpop.f32.mrb[0].mxu0
      %v1773 = vadd.f32 0.0, %v1772
      %v1774 = vpop.f32.mrb[0].mxu0
      %1775 = vmatprep.mubr.bf16.mxu0 0
      %1776 = vmatmul.mubr.bf16.gmra.mrb[0].mxu0 %v1683
      %v1777 = vpop.f32.mrb[0].mxu0
      %v1778 = vadd.f32 0.0, %v1777
      %v1779 = vpop.f32.mrb[0].mxu0
      %v1780 = vpop.f32.mrb[0].mxu0
      %v1781 = vadd.f32 0.0, %v1780
      %v1782 = vpop.f32.mrb[0].mxu0
      %1783 = vmatprep.mubr.bf16.mxu0 0
      %1784 = vmatmul.mubr.bf16.gmra.mrb[0].mxu0 %v1686
      %v1785 = vpop.f32.mrb[0].mxu0
      %v1786 = vadd.f32 0.0, %v1785
      %v1787 = vpop.f32.mrb[0].mxu0
      %v1788 = vpop.f32.mrb[0].mxu0
      %v1789 = vadd.f32 0.0, %v1788
      %v1790 = vpop.f32.mrb[0].mxu0
      %1791 = vmatprep.mubr.bf16.mxu0 0
      %1792 = vmatmul.mubr.bf16.gmra.mrb[0].mxu0 %v1689
      %v1793 = vpop.f32.mrb[0].mxu0
      %v1794 = vadd.f32 0.0, %v1793
      %v1795 = vpop.f32.mrb[0].mxu0
      %v1796 = vpop.f32.mrb[0].mxu0
      %v1797 = vadd.f32 0.0, %v1796
      %v1798 = vpop.f32.mrb[0].mxu0
      %1799 = vmatprep.mubr.bf16.mxu0 0
      %1800 = vmatmul.mubr.bf16.gmra.mrb[0].mxu0 %v1692
      %v1801 = vpop.f32.mrb[0].mxu0
      %v1802 = vadd.f32 0.0, %v1801
      %v1803 = vpop.f32.mrb[0].mxu0
      %v1804 = vpop.f32.mrb[0].mxu0
      %v1805 = vadd.f32 0.0, %v1804
      %v1806 = vpop.f32.mrb[0].mxu0
      %1807 = vmatprep.mubr.bf16.mxu0 0
      %1808 = vmatmul.mubr.bf16.gmra.mrb[0].mxu0 %v1695
      %v1809 = vpop.f32.mrb[0].mxu0
      %v1810 = vadd.f32 0.0, %v1809
      %v1811 = vpop.f32.mrb[0].mxu0
      %v1812 = vpop.f32.mrb[0].mxu0
      %v1813 = vadd.f32 0.0, %v1812
      %v1814 = vpop.f32.mrb[0].mxu0
      %1815 = vmatprep.mubr.bf16.mxu0 0
      %1816 = vmatmul.mubr.bf16.gmra.mrb[0].mxu0 %v1698
      %v1817 = vpop.f32.mrb[0].mxu0
      %v1818 = vadd.f32 0.0, %v1817
      %v1819 = vpop.f32.mrb[0].mxu0
      %v1820 = vpop.f32.mrb[0].mxu0
      %v1821 = vadd.f32 0.0, %v1820
      %v1822 = vpop.f32.mrb[0].mxu0
      %1823 = vmatprep.mubr.bf16.mxu0 0
      %1824 = vmatmul.mubr.bf16.gmra.mrb[0].mxu0 %v1701
      %v1825 = vpop.f32.mrb[0].mxu0
      %v1826 = vadd.f32 0.0, %v1825
      %v1827 = vpop.f32.mrb[0].mxu0
      %v1828 = vpop.f32.mrb[0].mxu0
      %v1829 = vadd.f32 0.0, %v1828
      %v1830 = vpop.f32.mrb[0].mxu0
      %1831 = vmatprep.mubr.bf16.mxu0 0
      %1832 = vmatmul.mubr.bf16.gmra.mrb[0].mxu0 %v1704
      %v1833 = vpop.f32.mrb[0].mxu0
      %v1834 = vadd.f32 0.0, %v1833
      %v1835 = vpop.f32.mrb[0].mxu0
      %v1836 = vpop.f32.mrb[0].mxu0
      %v1837 = vadd.f32 0.0, %v1836
      %v1838 = vpop.f32.mrb[0].mxu0
      %1839 = vmatprep.mubr.bf16.mxu0 0
      %1840 = vmatmul.mubr.bf16.gmra.mrb[0].mxu0 %v1707
      %v1841 = vpop.f32.mrb[0].mxu0
      %v1842 = vadd.f32 0.0, %v1841
      %v1843 = vpop.f32.mrb[0].mxu0
      %v1844 = vpop.f32.mrb[0].mxu0
      %v1845 = vadd.f32 0.0, %v1844
      %v1846 = vpop.f32.mrb[0].mxu0
      %1847 = vmatprep.mubr.bf16.mxu0 0
      %1848 = vmatmul.mubr.bf16.gmra.mrb[0].mxu0 %v1710
      %v1849 = vpop.f32.mrb[0].mxu0
      %v1850 = vadd.f32 0.0, %v1849
      %v1851 = vpop.f32.mrb[0].mxu0
      %v1852 = vpop.f32.mrb[0].mxu0
      %v1853 = vadd.f32 0.0, %v1852
      %v1854 = vpop.f32.mrb[0].mxu0
      %1855 = vmatprep.mubr.bf16.mxu0 0
      %1856 = vmatmul.mubr.bf16.gmra.mrb[0].mxu0 %v1713
      %v1857 = vpop.f32.mrb[0].mxu0
      %v1858 = vadd.f32 0.0, %v1857
      %v1859 = vpop.f32.mrb[0].mxu0
      %v1860 = vpop.f32.mrb[0].mxu0
      %v1861 = vadd.f32 0.0, %v1860
      %v1862 = vpop.f32.mrb[0].mxu0
      %1863 = vmatprep.mubr.bf16.mxu0 0
      %1864 = vmatmul.mubr.bf16.gmra.mrb[0].mxu0 %v1716
      %v1865 = vpop.f32.mrb[0].mxu0
      %v1866 = vadd.f32 0.0, %v1865
      %v1867 = vpop.f32.mrb[0].mxu0
      %v1868 = vpop.f32.mrb[0].mxu0
      %v1869 = vadd.f32 0.0, %v1868
      %v1870 = vpop.f32.mrb[0].mxu0
      %1871 = vmatprep.mubr.bf16.mxu0 0
      %1872 = vmatmul.mubr.bf16.gmra.mrb[0].mxu0 %v1719
      %v1873 = vpop.f32.mrb[0].mxu0
      %v1874 = vadd.f32 0.0, %v1873
      %v1875 = vpop.f32.mrb[0].mxu0
      %v1876 = vpop.f32.mrb[0].mxu0
      %v1877 = vadd.f32 0.0, %v1876
      %v1878 = vpop.f32.mrb[0].mxu0
      %1879 = vmatprep.mubr.bf16.mxu0 0
      %1880 = vmatmul.mubr.bf16.gmra.mrb[0].mxu0 %v1722
      %v1881 = vpop.f32.mrb[0].mxu0
      %v1882 = vadd.f32 0.0, %v1881
      %v1883 = vpop.f32.mrb[0].mxu0
      %v1884 = vpop.f32.mrb[0].mxu0
      %v1885 = vadd.f32 0.0, %v1884
      %v1886 = vpop.f32.mrb[0].mxu0
      %1887 = vdwg.mxu0
      %v1888 = vadd.f32 %v1435, %v1762
      %v1889 = vadd.f32 %v1438, %v1765
      %v1890 = vadd.f32 %v1443, %v1770
      %v1891 = vadd.f32 %v1446, %v1773
      %v1892 = vadd.f32 %v1451, %v1778
      %v1893 = vadd.f32 %v1454, %v1781
      %v1894 = vadd.f32 %v1459, %v1786
      %v1895 = vadd.f32 %v1462, %v1789
      %v1896 = vadd.f32 %v1467, %v1794
      %v1897 = vadd.f32 %v1470, %v1797
      %v1898 = vadd.f32 %v1475, %v1802
      %v1899 = vadd.f32 %v1478, %v1805
      %v1900 = vadd.f32 %v1483, %v1810
      %v1901 = vadd.f32 %v1486, %v1813
      %v1902 = vadd.f32 %v1491, %v1818
      %v1903 = vadd.f32 %v1494, %v1821
      %v1904 = vadd.f32 %v1499, %v1826
      %v1905 = vadd.f32 %v1502, %v1829
      %v1906 = vadd.f32 %v1507, %v1834
      %v1907 = vadd.f32 %v1510, %v1837
      %v1908 = vadd.f32 %v1515, %v1842
      %v1909 = vadd.f32 %v1518, %v1845
      %v1910 = vadd.f32 %v1523, %v1850
      %v1911 = vadd.f32 %v1526, %v1853
      %v1912 = vadd.f32 %v1531, %v1858
      %v1913 = vadd.f32 %v1534, %v1861
      %v1914 = vadd.f32 %v1539, %v1866
      %v1915 = vadd.f32 %v1542, %v1869
      %v1916 = vadd.f32 %v1547, %v1874
      %v1917 = vadd.f32 %v1550, %v1877
      %v1918 = vadd.f32 %v1555, %v1882
      %v1919 = vadd.f32 %v1558, %v1885
      %v1920 = vld [vmem:[%s1561] sm:$0xf]
      %v1921 = vld [vmem:[%s1561 + $0x4] sm:$0xf]
      %v1922 = vld [vmem:[%s1561 + $0x8] sm:$0x1]
      %v1923 = vld [vmem:[%s1561 + $0xc] sm:$0xf]
      %v1924 = vld [vmem:[%s1561 + $0x10] sm:$0xf]
      %v1925 = vld [vmem:[%s1561 + $0x14] sm:$0x1]
      %v1926 = vld [vmem:[%s1561 + $0x18] sm:$0xf]
      %v1927 = vld [vmem:[%s1561 + $0x1c] sm:$0xf]
      %v1928 = vld [vmem:[%s1561 + $0x20] sm:$0x1]
      %v1929 = vld [vmem:[%s1561 + $0x24] sm:$0xf]
      %v1930 = vld [vmem:[%s1561 + $0x28] sm:$0xf]
      %v1931 = vld [vmem:[%s1561 + $0x2c] sm:$0x1]
      %v1932 = vld [vmem:[%s1561 + $0x30] sm:$0xf]
      %v1933 = vld [vmem:[%s1561 + $0x34] sm:$0xf]
      %v1934 = vld [vmem:[%s1561 + $0x38] sm:$0x1]
      %v1935 = vld [vmem:[%s1561 + $0x3c] sm:$0xf]
      %v1936 = vld [vmem:[%s1561 + $0x40] sm:$0xf]
      %v1937 = vld [vmem:[%s1561 + $0x44] sm:$0x1]
      %v1938 = vld [vmem:[%s1561 + $0x48] sm:$0xf]
      %v1939 = vld [vmem:[%s1561 + $0x4c] sm:$0xf]
      %v1940 = vld [vmem:[%s1561 + $0x50] sm:$0x1]
      %v1941 = vld [vmem:[%s1561 + $0x54] sm:$0xf]
      %v1942 = vld [vmem:[%s1561 + $0x58] sm:$0xf]
      %v1943 = vld [vmem:[%s1561 + $0x5c] sm:$0x1]
      %v1944 = vld [vmem:[%s1561 + $0x60] sm:$0xf]
      %v1945 = vld [vmem:[%s1561 + $0x64] sm:$0xf]
      %v1946 = vld [vmem:[%s1561 + $0x68] sm:$0x1]
      %v1947 = vld [vmem:[%s1561 + $0x6c] sm:$0xf]
      %v1948 = vld [vmem:[%s1561 + $0x70] sm:$0xf]
      %v1949 = vld [vmem:[%s1561 + $0x74] sm:$0x1]
      %v1950 = vld [vmem:[%s1561 + $0x78] sm:$0xf]
      %v1951 = vld [vmem:[%s1561 + $0x7c] sm:$0xf]
      %v1952 = vld [vmem:[%s1561 + $0x80] sm:$0x1]
      %v1953 = vld [vmem:[%s1561 + $0x84] sm:$0xf]
      %v1954 = vld [vmem:[%s1561 + $0x88] sm:$0xf]
      %v1955 = vld [vmem:[%s1561 + $0x8c] sm:$0x1]
      %v1956 = vld [vmem:[%s1561 + $0x90] sm:$0xf]
      %v1957 = vld [vmem:[%s1561 + $0x94] sm:$0xf]
      %v1958 = vld [vmem:[%s1561 + $0x98] sm:$0x1]
      %v1959 = vld [vmem:[%s1561 + $0x9c] sm:$0xf]
      %v1960 = vld [vmem:[%s1561 + $0xa0] sm:$0xf]
      %v1961 = vld [vmem:[%s1561 + $0xa4] sm:$0x1]
      %v1962 = vld [vmem:[%s1561 + $0xa8] sm:$0xf]
      %v1963 = vld [vmem:[%s1561 + $0xac] sm:$0xf]
      %v1964 = vld [vmem:[%s1561 + $0xb0] sm:$0x1]
      %v1965 = vld [vmem:[%s1561 + $0xb4] sm:$0xf]
      %v1966 = vld [vmem:[%s1561 + $0xb8] sm:$0xf]
      %v1967 = vld [vmem:[%s1561 + $0xbc] sm:$0x1]
      %v1969 = vshrl.u32 %v1920, 16
      %v1971 = vrot.slane %v1969, 4
      %v1972 = vshll.u32 %v1920, 16
      %v1974 = vrot.slane %v1972, 5
      %v1975 = vor.u32 %v1971, %v1974
      %v1976 = vrot.slane %v1975, 4
      %v1978 = vshll.u32 %v1921, 16
      %v1980 = vrot.slane %v1978, 5
      %v1981 = vsel %vm620, %v1976, %v1980
      %v1982 = vshrl.u32 %v1921, 16
      %v1984 = vrot.slane %v1982, 4
      %v1985 = vor.u32 %v1984, %v1980
      %v1986 = vrot.slane %v1985, 4
      %v1988 = vshll.u32 %v1922, 16
      %v1990 = vrot.slane %v1988, 5
      %v1991 = vsel %vm620, %v1986, %v1990
      %v1993 = vshrl.u32 %v1923, 16
      %v1995 = vrot.slane %v1993, 4
      %v1996 = vshll.u32 %v1923, 16
      %v1998 = vrot.slane %v1996, 5
      %v1999 = vor.u32 %v1995, %v1998
      %v2000 = vrot.slane %v1999, 4
      %v2002 = vshll.u32 %v1924, 16
      %v2004 = vrot.slane %v2002, 5
      %v2005 = vsel %vm620, %v2000, %v2004
      %v2006 = vshrl.u32 %v1924, 16
      %v2008 = vrot.slane %v2006, 4
      %v2009 = vor.u32 %v2008, %v2004
      %v2010 = vrot.slane %v2009, 4
      %v2012 = vshll.u32 %v1925, 16
      %v2014 = vrot.slane %v2012, 5
      %v2015 = vsel %vm620, %v2010, %v2014
      %v2017 = vshrl.u32 %v1926, 16
      %v2019 = vrot.slane %v2017, 4
      %v2020 = vshll.u32 %v1926, 16
      %v2022 = vrot.slane %v2020, 5
      %v2023 = vor.u32 %v2019, %v2022
      %v2024 = vrot.slane %v2023, 4
      %v2026 = vshll.u32 %v1927, 16
      %v2028 = vrot.slane %v2026, 5
      %v2029 = vsel %vm620, %v2024, %v2028
      %v2030 = vshrl.u32 %v1927, 16
      %v2032 = vrot.slane %v2030, 4
      %v2033 = vor.u32 %v2032, %v2028
      %v2034 = vrot.slane %v2033, 4
      %v2036 = vshll.u32 %v1928, 16
      %v2038 = vrot.slane %v2036, 5
      %v2039 = vsel %vm620, %v2034, %v2038
      %v2041 = vshrl.u32 %v1929, 16
      %v2043 = vrot.slane %v2041, 4
      %v2044 = vshll.u32 %v1929, 16
      %v2046 = vrot.slane %v2044, 5
      %v2047 = vor.u32 %v2043, %v2046
      %v2048 = vrot.slane %v2047, 4
      %v2050 = vshll.u32 %v1930, 16
      %v2052 = vrot.slane %v2050, 5
      %v2053 = vsel %vm620, %v2048, %v2052
      %v2054 = vshrl.u32 %v1930, 16
      %v2056 = vrot.slane %v2054, 4
      %v2057 = vor.u32 %v2056, %v2052
      %v2058 = vrot.slane %v2057, 4
      %v2060 = vshll.u32 %v1931, 16
      %v2062 = vrot.slane %v2060, 5
      %v2063 = vsel %vm620, %v2058, %v2062
      %v2065 = vshrl.u32 %v1932, 16
      %v2067 = vrot.slane %v2065, 4
      %v2068 = vshll.u32 %v1932, 16
      %v2070 = vrot.slane %v2068, 5
      %v2071 = vor.u32 %v2067, %v2070
      %v2072 = vrot.slane %v2071, 4
      %v2074 = vshll.u32 %v1933, 16
      %v2076 = vrot.slane %v2074, 5
      %v2077 = vsel %vm620, %v2072, %v2076
      %v2078 = vshrl.u32 %v1933, 16
      %v2080 = vrot.slane %v2078, 4
      %v2081 = vor.u32 %v2080, %v2076
      %v2082 = vrot.slane %v2081, 4
      %v2084 = vshll.u32 %v1934, 16
      %v2086 = vrot.slane %v2084, 5
      %v2087 = vsel %vm620, %v2082, %v2086
      %v2089 = vshrl.u32 %v1935, 16
      %v2091 = vrot.slane %v2089, 4
      %v2092 = vshll.u32 %v1935, 16
      %v2094 = vrot.slane %v2092, 5
      %v2095 = vor.u32 %v2091, %v2094
      %v2096 = vrot.slane %v2095, 4
      %v2098 = vshll.u32 %v1936, 16
      %v2100 = vrot.slane %v2098, 5
      %v2101 = vsel %vm620, %v2096, %v2100
      %v2102 = vshrl.u32 %v1936, 16
      %v2104 = vrot.slane %v2102, 4
      %v2105 = vor.u32 %v2104, %v2100
      %v2106 = vrot.slane %v2105, 4
      %v2108 = vshll.u32 %v1937, 16
      %v2110 = vrot.slane %v2108, 5
      %v2111 = vsel %vm620, %v2106, %v2110
      %v2113 = vshrl.u32 %v1938, 16
      %v2115 = vrot.slane %v2113, 4
      %v2116 = vshll.u32 %v1938, 16
      %v2118 = vrot.slane %v2116, 5
      %v2119 = vor.u32 %v2115, %v2118
      %v2120 = vrot.slane %v2119, 4
      %v2122 = vshll.u32 %v1939, 16
      %v2124 = vrot.slane %v2122, 5
      %v2125 = vsel %vm620, %v2120, %v2124
      %v2126 = vshrl.u32 %v1939, 16
      %v2128 = vrot.slane %v2126, 4
      %v2129 = vor.u32 %v2128, %v2124
      %v2130 = vrot.slane %v2129, 4
      %v2132 = vshll.u32 %v1940, 16
      %v2134 = vrot.slane %v2132, 5
      %v2135 = vsel %vm620, %v2130, %v2134
      %v2137 = vshrl.u32 %v1941, 16
      %v2139 = vrot.slane %v2137, 4
      %v2140 = vshll.u32 %v1941, 16
      %v2142 = vrot.slane %v2140, 5
      %v2143 = vor.u32 %v2139, %v2142
      %v2144 = vrot.slane %v2143, 4
      %v2146 = vshll.u32 %v1942, 16
      %v2148 = vrot.slane %v2146, 5
      %v2149 = vsel %vm620, %v2144, %v2148
      %v2150 = vshrl.u32 %v1942, 16
      %v2152 = vrot.slane %v2150, 4
      %v2153 = vor.u32 %v2152, %v2148
      %v2154 = vrot.slane %v2153, 4
      %v2156 = vshll.u32 %v1943, 16
      %v2158 = vrot.slane %v2156, 5
      %v2159 = vsel %vm620, %v2154, %v2158
      %v2161 = vshrl.u32 %v1944, 16
      %v2163 = vrot.slane %v2161, 4
      %v2164 = vshll.u32 %v1944, 16
      %v2166 = vrot.slane %v2164, 5
      %v2167 = vor.u32 %v2163, %v2166
      %v2168 = vrot.slane %v2167, 4
      %v2170 = vshll.u32 %v1945, 16
      %v2172 = vrot.slane %v2170, 5
      %v2173 = vsel %vm620, %v2168, %v2172
      %v2174 = vshrl.u32 %v1945, 16
      %v2176 = vrot.slane %v2174, 4
      %v2177 = vor.u32 %v2176, %v2172
      %v2178 = vrot.slane %v2177, 4
      %v2180 = vshll.u32 %v1946, 16
      %v2182 = vrot.slane %v2180, 5
      %v2183 = vsel %vm620, %v2178, %v2182
      %v2185 = vshrl.u32 %v1947, 16
      %v2187 = vrot.slane %v2185, 4
      %v2188 = vshll.u32 %v1947, 16
      %v2190 = vrot.slane %v2188, 5
      %v2191 = vor.u32 %v2187, %v2190
      %v2192 = vrot.slane %v2191, 4
      %v2194 = vshll.u32 %v1948, 16
      %v2196 = vrot.slane %v2194, 5
      %v2197 = vsel %vm620, %v2192, %v2196
      %v2198 = vshrl.u32 %v1948, 16
      %v2200 = vrot.slane %v2198, 4
      %v2201 = vor.u32 %v2200, %v2196
      %v2202 = vrot.slane %v2201, 4
      %v2204 = vshll.u32 %v1949, 16
      %v2206 = vrot.slane %v2204, 5
      %v2207 = vsel %vm620, %v2202, %v2206
      %v2209 = vshrl.u32 %v1950, 16
      %v2211 = vrot.slane %v2209, 4
      %v2212 = vshll.u32 %v1950, 16
      %v2214 = vrot.slane %v2212, 5
      %v2215 = vor.u32 %v2211, %v2214
      %v2216 = vrot.slane %v2215, 4
      %v2218 = vshll.u32 %v1951, 16
      %v2220 = vrot.slane %v2218, 5
      %v2221 = vsel %vm620, %v2216, %v2220
      %v2222 = vshrl.u32 %v1951, 16
      %v2224 = vrot.slane %v2222, 4
      %v2225 = vor.u32 %v2224, %v2220
      %v2226 = vrot.slane %v2225, 4
      %v2228 = vshll.u32 %v1952, 16
      %v2230 = vrot.slane %v2228, 5
      %v2231 = vsel %vm620, %v2226, %v2230
      %v2233 = vshrl.u32 %v1953, 16
      %v2235 = vrot.slane %v2233, 4
      %v2236 = vshll.u32 %v1953, 16
      %v2238 = vrot.slane %v2236, 5
      %v2239 = vor.u32 %v2235, %v2238
      %v2240 = vrot.slane %v2239, 4
      %v2242 = vshll.u32 %v1954, 16
      %v2244 = vrot.slane %v2242, 5
      %v2245 = vsel %vm620, %v2240, %v2244
      %v2246 = vshrl.u32 %v1954, 16
      %v2248 = vrot.slane %v2246, 4
      %v2249 = vor.u32 %v2248, %v2244
      %v2250 = vrot.slane %v2249, 4
      %v2252 = vshll.u32 %v1955, 16
      %v2254 = vrot.slane %v2252, 5
      %v2255 = vsel %vm620, %v2250, %v2254
      %v2257 = vshrl.u32 %v1956, 16
      %v2259 = vrot.slane %v2257, 4
      %v2260 = vshll.u32 %v1956, 16
      %v2262 = vrot.slane %v2260, 5
      %v2263 = vor.u32 %v2259, %v2262
      %v2264 = vrot.slane %v2263, 4
      %v2266 = vshll.u32 %v1957, 16
      %v2268 = vrot.slane %v2266, 5
      %v2269 = vsel %vm620, %v2264, %v2268
      %v2270 = vshrl.u32 %v1957, 16
      %v2272 = vrot.slane %v2270, 4
      %v2273 = vor.u32 %v2272, %v2268
      %v2274 = vrot.slane %v2273, 4
      %v2276 = vshll.u32 %v1958, 16
      %v2278 = vrot.slane %v2276, 5
      %v2279 = vsel %vm620, %v2274, %v2278
      %v2281 = vshrl.u32 %v1959, 16
      %v2283 = vrot.slane %v2281, 4
      %v2284 = vshll.u32 %v1959, 16
      %v2286 = vrot.slane %v2284, 5
      %v2287 = vor.u32 %v2283, %v2286
      %v2288 = vrot.slane %v2287, 4
      %v2290 = vshll.u32 %v1960, 16
      %v2292 = vrot.slane %v2290, 5
      %v2293 = vsel %vm620, %v2288, %v2292
      %v2294 = vshrl.u32 %v1960, 16
      %v2296 = vrot.slane %v2294, 4
      %v2297 = vor.u32 %v2296, %v2292
      %v2298 = vrot.slane %v2297, 4
      %v2300 = vshll.u32 %v1961, 16
      %v2302 = vrot.slane %v2300, 5
      %v2303 = vsel %vm620, %v2298, %v2302
      %v2305 = vshrl.u32 %v1962, 16
      %v2307 = vrot.slane %v2305, 4
      %v2308 = vshll.u32 %v1962, 16
      %v2310 = vrot.slane %v2308, 5
      %v2311 = vor.u32 %v2307, %v2310
      %v2312 = vrot.slane %v2311, 4
      %v2314 = vshll.u32 %v1963, 16
      %v2316 = vrot.slane %v2314, 5
      %v2317 = vsel %vm620, %v2312, %v2316
      %v2318 = vshrl.u32 %v1963, 16
      %v2320 = vrot.slane %v2318, 4
      %v2321 = vor.u32 %v2320, %v2316
      %v2322 = vrot.slane %v2321, 4
      %v2324 = vshll.u32 %v1964, 16
      %v2326 = vrot.slane %v2324, 5
      %v2327 = vsel %vm620, %v2322, %v2326
      %v2329 = vshrl.u32 %v1965, 16
      %v2331 = vrot.slane %v2329, 4
      %v2332 = vshll.u32 %v1965, 16
      %v2334 = vrot.slane %v2332, 5
      %v2335 = vor.u32 %v2331, %v2334
      %v2336 = vrot.slane %v2335, 4
      %v2338 = vshll.u32 %v1966, 16
      %v2340 = vrot.slane %v2338, 5
      %v2341 = vsel %vm620, %v2336, %v2340
      %v2342 = vshrl.u32 %v1966, 16
      %v2344 = vrot.slane %v2342, 4
      %v2345 = vor.u32 %v2344, %v2340
      %v2346 = vrot.slane %v2345, 4
      %v2348 = vshll.u32 %v1967, 16
      %v2350 = vrot.slane %v2348, 5
      %v2351 = vsel %vm620, %v2346, %v2350
      %s2352 = scalar_lea.vmem %s1, 6
      %v2353 = vld [vmem:[%s2352] sm:$0x3]
      %v2354 = vunpack.c.l.b16 %v1981
      %v2355 = vunpack.c.l.b16 %v1991
      %v2356 = vunpack.c.l.b16 %v2005
      %v2357 = vunpack.c.l.b16 %v2015
      %v2358 = vunpack.c.l.b16 %v2029
      %v2359 = vunpack.c.l.b16 %v2039
      %v2360 = vunpack.c.l.b16 %v2053
      %v2361 = vunpack.c.l.b16 %v2063
      %v2362 = vunpack.c.l.b16 %v2077
      %v2363 = vunpack.c.l.b16 %v2087
      %v2364 = vunpack.c.l.b16 %v2101
      %v2365 = vunpack.c.l.b16 %v2111
      %v2366 = vunpack.c.l.b16 %v2125
      %v2367 = vunpack.c.l.b16 %v2135
      %v2368 = vunpack.c.l.b16 %v2149
      %v2369 = vunpack.c.l.b16 %v2159
      %v2370 = vunpack.c.l.b16 %v2173
      %v2371 = vunpack.c.l.b16 %v2183
      %v2372 = vunpack.c.l.b16 %v2197
      %v2373 = vunpack.c.l.b16 %v2207
      %v2374 = vunpack.c.l.b16 %v2221
      %v2375 = vunpack.c.l.b16 %v2231
      %v2376 = vunpack.c.l.b16 %v2245
      %v2377 = vunpack.c.l.b16 %v2255
      %v2378 = vunpack.c.l.b16 %v2269
      %v2379 = vunpack.c.l.b16 %v2279
      %v2380 = vunpack.c.l.b16 %v2293
      %v2381 = vunpack.c.l.b16 %v2303
      %v2382 = vunpack.c.l.b16 %v2317
      %v2383 = vunpack.c.l.b16 %v2327
      %v2384 = vunpack.c.l.b16 %v2341
      %v2385 = vunpack.c.l.b16 %v2351
      %v2386 = vpack.c.b16 %v2355, %v2354
      %v2387 = vpack.c.b16 %v2357, %v2356
      %v2388 = vpack.c.b16 %v2359, %v2358
      %v2389 = vpack.c.b16 %v2361, %v2360
      %v2390 = vpack.c.b16 %v2363, %v2362
      %v2391 = vpack.c.b16 %v2365, %v2364
      %v2392 = vpack.c.b16 %v2367, %v2366
      %v2393 = vpack.c.b16 %v2369, %v2368
      %v2394 = vpack.c.b16 %v2371, %v2370
      %v2395 = vpack.c.b16 %v2373, %v2372
      %v2396 = vpack.c.b16 %v2375, %v2374
      %v2397 = vpack.c.b16 %v2377, %v2376
      %v2398 = vpack.c.b16 %v2379, %v2378
      %v2399 = vpack.c.b16 %v2381, %v2380
      %v2400 = vpack.c.b16 %v2383, %v2382
      %v2401 = vpack.c.b16 %v2385, %v2384
      %v2403 = vsel %vm1055, %v2386, 0
      %v2406 = vsel %vm1055, %v2387, 0
      %v2409 = vsel %vm1055, %v2388, 0
      %v2412 = vsel %vm1055, %v2389, 0
      %v2415 = vsel %vm1055, %v2390, 0
      %v2418 = vsel %vm1055, %v2391, 0
      %v2421 = vsel %vm1055, %v2392, 0
      %v2424 = vsel %vm1055, %v2393, 0
      %v2427 = vsel %vm1055, %v2394, 0
      %v2430 = vsel %vm1055, %v2395, 0
      %v2433 = vsel %vm1055, %v2396, 0
      %v2436 = vsel %vm1055, %v2397, 0
      %v2439 = vsel %vm1055, %v2398, 0
      %v2442 = vsel %vm1055, %v2399, 0
      %v2445 = vsel %vm1055, %v2400, 0
      %v2448 = vsel %vm1055, %v2401, 0
      %v2451 = vsel %vm1104, %v2353, 0
      %2453 = vmatprep.subr.bf16.mxu0 0
      %2454 = vmatpush1.bf16.msra.mxu0 %v2451
      %2455 = vmatprep.subr.bf16.mxu0 0
      %2456 = vmatpush1.bf16.msra.mxu0 0
      %2457 = vmatprep.subr.bf16.mxu0 0
      %2458 = vmatpush1.bf16.msra.mxu0 0
      %2459 = vmatprep.subr.bf16.mxu0 0
      %2460 = vmatpush1.bf16.msra.mxu0 0
      %2461 = vmatprep.subr.bf16.mxu0 0
      %2462 = vmatpush1.bf16.msra.mxu0 0
      %2463 = vmatprep.subr.bf16.mxu0 0
      %2464 = vmatpush1.bf16.msra.mxu0 0
      %2465 = vmatprep.subr.bf16.mxu0 0
      %2466 = vmatpush1.bf16.msra.mxu0 0
      %2467 = vmatprep.subr.bf16.mxu0 0
      %2468 = vmatpush1.bf16.msra.mxu0 0
      %2469 = vmatprep.subr.bf16.mxu0 0
      %2470 = vmatpush1.bf16.msra.mxu0 0
      %2471 = vmatprep.subr.bf16.mxu0 0
      %2472 = vmatpush1.bf16.msra.mxu0 0
      %2473 = vmatprep.subr.bf16.mxu0 0
      %2474 = vmatpush1.bf16.msra.mxu0 0
      %2475 = vmatprep.subr.bf16.mxu0 0
      %2476 = vmatpush1.bf16.msra.mxu0 0
      %2477 = vmatprep.subr.bf16.mxu0 0
      %2478 = vmatpush1.bf16.msra.mxu0 0
      %2479 = vmatprep.subr.bf16.mxu0 0
      %2480 = vmatpush1.bf16.msra.mxu0 0
      %2481 = vmatprep.subr.bf16.mxu0 0
      %2482 = vmatpush1.bf16.msra.mxu0 0
      %2483 = vmatprep.subr.bf16.mxu0 0
      %2484 = vmatpush1.bf16.msra.mxu0 0
      %2485 = vmatprep.mubr.bf16.mxu0 0
      %2486 = vmatmul.mubr.bf16.gmra.mrb[0].mxu0 %v2403
      %v2487 = vpop.f32.mrb[0].mxu0
      %v2488 = vadd.f32 0.0, %v2487
      %v2489 = vpop.f32.mrb[0].mxu0
      %v2490 = vpop.f32.mrb[0].mxu0
      %v2491 = vadd.f32 0.0, %v2490
      %v2492 = vpop.f32.mrb[0].mxu0
      %2493 = vmatprep.mubr.bf16.mxu0 0
      %2494 = vmatmul.mubr.bf16.gmra.mrb[0].mxu0 %v2406
      %v2495 = vpop.f32.mrb[0].mxu0
      %v2496 = vadd.f32 0.0, %v2495
      %v2497 = vpop.f32.mrb[0].mxu0
      %v2498 = vpop.f32.mrb[0].mxu0
      %v2499 = vadd.f32 0.0, %v2498
      %v2500 = vpop.f32.mrb[0].mxu0
      %2501 = vmatprep.mubr.bf16.mxu0 0
      %2502 = vmatmul.mubr.bf16.gmra.mrb[0].mxu0 %v2409
      %v2503 = vpop.f32.mrb[0].mxu0
      %v2504 = vadd.f32 0.0, %v2503
      %v2505 = vpop.f32.mrb[0].mxu0
      %v2506 = vpop.f32.mrb[0].mxu0
      %v2507 = vadd.f32 0.0, %v2506
      %v2508 = vpop.f32.mrb[0].mxu0
      %2509 = vmatprep.mubr.bf16.mxu0 0
      %2510 = vmatmul.mubr.bf16.gmra.mrb[0].mxu0 %v2412
      %v2511 = vpop.f32.mrb[0].mxu0
      %v2512 = vadd.f32 0.0, %v2511
      %v2513 = vpop.f32.mrb[0].mxu0
      %v2514 = vpop.f32.mrb[0].mxu0
      %v2515 = vadd.f32 0.0, %v2514
      %v2516 = vpop.f32.mrb[0].mxu0
      %2517 = vmatprep.mubr.bf16.mxu0 0
      %2518 = vmatmul.mubr.bf16.gmra.mrb[0].mxu0 %v2415
      %v2519 = vpop.f32.mrb[0].mxu0
      %v2520 = vadd.f32 0.0, %v2519
      %v2521 = vpop.f32.mrb[0].mxu0
      %v2522 = vpop.f32.mrb[0].mxu0
      %v2523 = vadd.f32 0.0, %v2522
      %v2524 = vpop.f32.mrb[0].mxu0
      %2525 = vmatprep.mubr.bf16.mxu0 0
      %2526 = vmatmul.mubr.bf16.gmra.mrb[0].mxu0 %v2418
      %v2527 = vpop.f32.mrb[0].mxu0
      %v2528 = vadd.f32 0.0, %v2527
      %v2529 = vpop.f32.mrb[0].mxu0
      %v2530 = vpop.f32.mrb[0].mxu0
      %v2531 = vadd.f32 0.0, %v2530
      %v2532 = vpop.f32.mrb[0].mxu0
      %2533 = vmatprep.mubr.bf16.mxu0 0
      %2534 = vmatmul.mubr.bf16.gmra.mrb[0].mxu0 %v2421
      %v2535 = vpop.f32.mrb[0].mxu0
      %v2536 = vadd.f32 0.0, %v2535
      %v2537 = vpop.f32.mrb[0].mxu0
      %v2538 = vpop.f32.mrb[0].mxu0
      %v2539 = vadd.f32 0.0, %v2538
      %v2540 = vpop.f32.mrb[0].mxu0
      %2541 = vmatprep.mubr.bf16.mxu0 0
      %2542 = vmatmul.mubr.bf16.gmra.mrb[0].mxu0 %v2424
      %v2543 = vpop.f32.mrb[0].mxu0
      %v2544 = vadd.f32 0.0, %v2543
      %v2545 = vpop.f32.mrb[0].mxu0
      %v2546 = vpop.f32.mrb[0].mxu0
      %v2547 = vadd.f32 0.0, %v2546
      %v2548 = vpop.f32.mrb[0].mxu0
      %2549 = vmatprep.mubr.bf16.mxu0 0
      %2550 = vmatmul.mubr.bf16.gmra.mrb[0].mxu0 %v2427
      %v2551 = vpop.f32.mrb[0].mxu0
      %v2552 = vadd.f32 0.0, %v2551
      %v2553 = vpop.f32.mrb[0].mxu0
      %v2554 = vpop.f32.mrb[0].mxu0
      %v2555 = vadd.f32 0.0, %v2554
      %v2556 = vpop.f32.mrb[0].mxu0
      %2557 = vmatprep.mubr.bf16.mxu0 0
      %2558 = vmatmul.mubr.bf16.gmra.mrb[0].mxu0 %v2430
      %v2559 = vpop.f32.mrb[0].mxu0
      %v2560 = vadd.f32 0.0, %v2559
      %v2561 = vpop.f32.mrb[0].mxu0
      %v2562 = vpop.f32.mrb[0].mxu0
      %v2563 = vadd.f32 0.0, %v2562
      %v2564 = vpop.f32.mrb[0].mxu0
      %2565 = vmatprep.mubr.bf16.mxu0 0
      %2566 = vmatmul.mubr.bf16.gmra.mrb[0].mxu0 %v2433
      %v2567 = vpop.f32.mrb[0].mxu0
      %v2568 = vadd.f32 0.0, %v2567
      %v2569 = vpop.f32.mrb[0].mxu0
      %v2570 = vpop.f32.mrb[0].mxu0
      %v2571 = vadd.f32 0.0, %v2570
      %v2572 = vpop.f32.mrb[0].mxu0
      %2573 = vmatprep.mubr.bf16.mxu0 0
      %2574 = vmatmul.mubr.bf16.gmra.mrb[0].mxu0 %v2436
      %v2575 = vpop.f32.mrb[0].mxu0
      %v2576 = vadd.f32 0.0, %v2575
      %v2577 = vpop.f32.mrb[0].mxu0
      %v2578 = vpop.f32.mrb[0].mxu0
      %v2579 = vadd.f32 0.0, %v2578
      %v2580 = vpop.f32.mrb[0].mxu0
      %2581 = vmatprep.mubr.bf16.mxu0 0
      %2582 = vmatmul.mubr.bf16.gmra.mrb[0].mxu0 %v2439
      %v2583 = vpop.f32.mrb[0].mxu0
      %v2584 = vadd.f32 0.0, %v2583
      %v2585 = vpop.f32.mrb[0].mxu0
      %v2586 = vpop.f32.mrb[0].mxu0
      %v2587 = vadd.f32 0.0, %v2586
      %v2588 = vpop.f32.mrb[0].mxu0
      %2589 = vmatprep.mubr.bf16.mxu0 0
      %2590 = vmatmul.mubr.bf16.gmra.mrb[0].mxu0 %v2442
      %v2591 = vpop.f32.mrb[0].mxu0
      %v2592 = vadd.f32 0.0, %v2591
      %v2593 = vpop.f32.mrb[0].mxu0
      %v2594 = vpop.f32.mrb[0].mxu0
      %v2595 = vadd.f32 0.0, %v2594
      %v2596 = vpop.f32.mrb[0].mxu0
      %2597 = vmatprep.mubr.bf16.mxu0 0
      %2598 = vmatmul.mubr.bf16.gmra.mrb[0].mxu0 %v2445
      %v2599 = vpop.f32.mrb[0].mxu0
      %v2600 = vadd.f32 0.0, %v2599
      %v2601 = vpop.f32.mrb[0].mxu0
      %v2602 = vpop.f32.mrb[0].mxu0
      %v2603 = vadd.f32 0.0, %v2602
      %v2604 = vpop.f32.mrb[0].mxu0
      %2605 = vmatprep.mubr.bf16.mxu0 0
      %2606 = vmatmul.mubr.bf16.gmra.mrb[0].mxu0 %v2448
      %v2607 = vpop.f32.mrb[0].mxu0
      %v2608 = vadd.f32 0.0, %v2607
      %v2609 = vpop.f32.mrb[0].mxu0
      %v2610 = vpop.f32.mrb[0].mxu0
      %v2611 = vadd.f32 0.0, %v2610
      %v2612 = vpop.f32.mrb[0].mxu0
      %2613 = vdwg.mxu0
      %v2614 = vadd.f32 %v1888, %v2488
      %v2615 = vadd.f32 %v1889, %v2491
      %v2616 = vadd.f32 %v1890, %v2496
      %v2617 = vadd.f32 %v1891, %v2499
      %v2618 = vadd.f32 %v1892, %v2504
      %v2619 = vadd.f32 %v1893, %v2507
      %v2620 = vadd.f32 %v1894, %v2512
      %v2621 = vadd.f32 %v1895, %v2515
      %v2622 = vadd.f32 %v1896, %v2520
      %v2623 = vadd.f32 %v1897, %v2523
      %v2624 = vadd.f32 %v1898, %v2528
      %v2625 = vadd.f32 %v1899, %v2531
      %v2626 = vadd.f32 %v1900, %v2536
      %v2627 = vadd.f32 %v1901, %v2539
      %v2628 = vadd.f32 %v1902, %v2544
      %v2629 = vadd.f32 %v1903, %v2547
      %v2630 = vadd.f32 %v1904, %v2552
      %v2631 = vadd.f32 %v1905, %v2555
      %v2632 = vadd.f32 %v1906, %v2560
      %v2633 = vadd.f32 %v1907, %v2563
      %v2634 = vadd.f32 %v1908, %v2568
      %v2635 = vadd.f32 %v1909, %v2571
      %v2636 = vadd.f32 %v1910, %v2576
      %v2637 = vadd.f32 %v1911, %v2579
      %v2638 = vadd.f32 %v1912, %v2584
      %v2639 = vadd.f32 %v1913, %v2587
      %v2640 = vadd.f32 %v1914, %v2592
      %v2641 = vadd.f32 %v1915, %v2595
      %v2642 = vadd.f32 %v1916, %v2600
      %v2643 = vadd.f32 %v1917, %v2603
      %v2644 = vadd.f32 %v1918, %v2608
      %v2645 = vadd.f32 %v1919, %v2611
      %v2646 = vld [vmem:[%s4] sm:$0x1]
      %v2648 = vlaneseq
      %v2649 = vshrl.u32 %v2648, 7
      %v2650 = vsub.s32 0, %v2649
      %v2651 = vrot.slane %v2646, %v2650
      %v2653 = vadd.f32 %v2614, %v2651
      %v2654 = vadd.f32 %v2615, %v2651
      %v2655 = vadd.f32 %v2616, %v2651
      %v2656 = vadd.f32 %v2617, %v2651
      %v2657 = vadd.f32 %v2618, %v2651
      %v2658 = vadd.f32 %v2619, %v2651
      %v2659 = vadd.f32 %v2620, %v2651
      %v2660 = vadd.f32 %v2621, %v2651
      %v2661 = vadd.f32 %v2622, %v2651
      %v2662 = vadd.f32 %v2623, %v2651
      %v2663 = vadd.f32 %v2624, %v2651
      %v2664 = vadd.f32 %v2625, %v2651
      %v2665 = vadd.f32 %v2626, %v2651
      %v2666 = vadd.f32 %v2627, %v2651
      %v2667 = vadd.f32 %v2628, %v2651
      %v2668 = vadd.f32 %v2629, %v2651
      %v2669 = vadd.f32 %v2630, %v2651
      %v2670 = vadd.f32 %v2631, %v2651
      %v2671 = vadd.f32 %v2632, %v2651
      %v2672 = vadd.f32 %v2633, %v2651
      %v2673 = vadd.f32 %v2634, %v2651
      %v2674 = vadd.f32 %v2635, %v2651
      %v2675 = vadd.f32 %v2636, %v2651
      %v2676 = vadd.f32 %v2637, %v2651
      %v2677 = vadd.f32 %v2638, %v2651
      %v2678 = vadd.f32 %v2639, %v2651
      %v2679 = vadd.f32 %v2640, %v2651
      %v2680 = vadd.f32 %v2641, %v2651
      %v2681 = vadd.f32 %v2642, %v2651
      %v2682 = vadd.f32 %v2643, %v2651
      %v2683 = vadd.f32 %v2644, %v2651
      %v2684 = vadd.f32 %v2645, %v2651
      %v2685 = vmax.f32 %v2653, 0.0
      %v2686 = vmax.f32 %v2654, 0.0
      %v2687 = vmax.f32 %v2655, 0.0
      %v2688 = vmax.f32 %v2656, 0.0
      %v2689 = vmax.f32 %v2657, 0.0
      %v2690 = vmax.f32 %v2658, 0.0
      %v2691 = vmax.f32 %v2659, 0.0
      %v2692 = vmax.f32 %v2660, 0.0
      %v2693 = vmax.f32 %v2661, 0.0
      %v2694 = vmax.f32 %v2662, 0.0
      %v2695 = vmax.f32 %v2663, 0.0
      %v2696 = vmax.f32 %v2664, 0.0
      %v2697 = vmax.f32 %v2665, 0.0
      %v2698 = vmax.f32 %v2666, 0.0
      %v2699 = vmax.f32 %v2667, 0.0
      %v2700 = vmax.f32 %v2668, 0.0
      %v2701 = vmax.f32 %v2669, 0.0
      %v2702 = vmax.f32 %v2670, 0.0
      %v2703 = vmax.f32 %v2671, 0.0
      %v2704 = vmax.f32 %v2672, 0.0
      %v2705 = vmax.f32 %v2673, 0.0
      %v2706 = vmax.f32 %v2674, 0.0
      %v2707 = vmax.f32 %v2675, 0.0
      %v2708 = vmax.f32 %v2676, 0.0
      %v2709 = vmax.f32 %v2677, 0.0
      %v2710 = vmax.f32 %v2678, 0.0
      %v2711 = vmax.f32 %v2679, 0.0
      %v2712 = vmax.f32 %v2680, 0.0
      %v2713 = vmax.f32 %v2681, 0.0
      %v2714 = vmax.f32 %v2682, 0.0
      %v2715 = vmax.f32 %v2683, 0.0
      %v2716 = vmax.f32 %v2684, 0.0
      %2717 = vxpose.xlu0.b32.start [1/16] %v2685, 128
      %2718 = vxpose.xlu0.b32.cont [2/16] %v2686, 128
      %2719 = vxpose.xlu0.b32.cont [3/16] %v2687, 128
      %2720 = vxpose.xlu0.b32.cont [4/16] %v2688, 128
      %2721 = vxpose.xlu0.b32.cont [5/16] %v2689, 128
      %2722 = vxpose.xlu0.b32.cont [6/16] %v2690, 128
      %2723 = vxpose.xlu0.b32.cont [7/16] %v2691, 128
      %2724 = vxpose.xlu0.b32.cont [8/16] %v2692, 128
      %2725 = vxpose.xlu0.b32.cont [9/16] %v2693, 128
      %2726 = vxpose.xlu0.b32.cont [10/16] %v2694, 128
      %2727 = vxpose.xlu0.b32.cont [11/16] %v2695, 128
      %2728 = vxpose.xlu0.b32.cont [12/16] %v2696, 128
      %2729 = vxpose.xlu0.b32.cont [13/16] %v2697, 128
      %2730 = vxpose.xlu0.b32.cont [14/16] %v2698, 128
      %2731 = vxpose.xlu0.b32.cont [15/16] %v2699, 128
      %2732 = vxpose.xlu0.b32.end [16/16] %v2700, 128
      %v2733 = vpop.trf.xlu0
      %v2734 = vpop.trf.xlu0
      %v2735 = vpop.trf.xlu0
      %v2736 = vpop.trf.xlu0
      %v2737 = vpop.trf.xlu0
      %v2738 = vpop.trf.xlu0
      %v2739 = vpop.trf.xlu0
      %v2740 = vpop.trf.xlu0
      %v2741 = vpop.trf.xlu0
      %v2742 = vpop.trf.xlu0
      %v2743 = vpop.trf.xlu0
      %v2744 = vpop.trf.xlu0
      %v2745 = vpop.trf.xlu0
      %v2746 = vpop.trf.xlu0
      %v2747 = vpop.trf.xlu0
      %v2748 = vpop.trf.xlu0
      %2749 = vxpose.xlu0.b32.start [1/16] %v2701, 128
      %2750 = vxpose.xlu0.b32.cont [2/16] %v2702, 128
      %2751 = vxpose.xlu0.b32.cont [3/16] %v2703, 128
      %2752 = vxpose.xlu0.b32.cont [4/16] %v2704, 128
      %2753 = vxpose.xlu0.b32.cont [5/16] %v2705, 128
      %2754 = vxpose.xlu0.b32.cont [6/16] %v2706, 128
      %2755 = vxpose.xlu0.b32.cont [7/16] %v2707, 128
      %2756 = vxpose.xlu0.b32.cont [8/16] %v2708, 128
      %2757 = vxpose.xlu0.b32.cont [9/16] %v2709, 128
      %2758 = vxpose.xlu0.b32.cont [10/16] %v2710, 128
      %2759 = vxpose.xlu0.b32.cont [11/16] %v2711, 128
      %2760 = vxpose.xlu0.b32.cont [12/16] %v2712, 128
      %2761 = vxpose.xlu0.b32.cont [13/16] %v2713, 128
      %2762 = vxpose.xlu0.b32.cont [14/16] %v2714, 128
      %2763 = vxpose.xlu0.b32.cont [15/16] %v2715, 128
      %2764 = vxpose.xlu0.b32.end [16/16] %v2716, 128
      %v2765 = vpop.trf.xlu0
      %v2766 = vpop.trf.xlu0
      %v2767 = vpop.trf.xlu0
      %v2768 = vpop.trf.xlu0
      %v2769 = vpop.trf.xlu0
      %v2770 = vpop.trf.xlu0
      %v2771 = vpop.trf.xlu0
      %v2772 = vpop.trf.xlu0
      %v2773 = vpop.trf.xlu0
      %v2774 = vpop.trf.xlu0
      %v2775 = vpop.trf.xlu0
      %v2776 = vpop.trf.xlu0
      %v2777 = vpop.trf.xlu0
      %v2778 = vpop.trf.xlu0
      %v2779 = vpop.trf.xlu0
      %v2780 = vpop.trf.xlu0
      %vm2787 = vcmask 1043456
      %v2788 = vrot.slane %v2733, 4
      %v2789 = vrot.slane %v2765, 4
      %v2790 = vrot.slane %v2734, 4
      %v2791 = vsel %vm2787, %v2788, %v2790
      %v2792 = vrot.slane %v2766, 4
      %v2793 = vsel %vm2787, %v2789, %v2792
      %v2794 = vrot.slane %v2735, 4
      %v2795 = vsel %vm2787, %v2790, %v2794
      %v2796 = vrot.slane %v2767, 4
      %v2797 = vsel %vm2787, %v2792, %v2796
      %2804 = vst [vmem:[%s278] sm:$0xf0] %v2788
      %2805 = vst [vmem:[%s278 + $0x8] sm:$0xf0] %v2789
      %2806 = vst [vmem:[%s278 + $0x10] sm:$0xff] %v2791
      %2807 = vst [vmem:[%s278 + $0x18] sm:$0xff] %v2793
      %2808 = vst [vmem:[%s278 + $0x20] sm:$0xff] %v2795
      %2809 = vst [vmem:[%s278 + $0x28] sm:$0xff] %v2797
      %v2810 = vpack.c.bf16 %v2686, %v2685
      %v2811 = vpack.c.bf16 %v2688, %v2687
      %v2812 = vpack.c.bf16 %v2690, %v2689
      %v2813 = vpack.c.bf16 %v2692, %v2691
      %v2814 = vpack.c.bf16 %v2694, %v2693
      %v2815 = vpack.c.bf16 %v2696, %v2695
      %v2816 = vpack.c.bf16 %v2698, %v2697
      %v2817 = vpack.c.bf16 %v2700, %v2699
      %v2818 = vpack.c.bf16 %v2702, %v2701
      %v2819 = vpack.c.bf16 %v2704, %v2703
      %v2820 = vpack.c.bf16 %v2706, %v2705
      %v2821 = vpack.c.bf16 %v2708, %v2707
      %v2822 = vpack.c.bf16 %v2710, %v2709
      %v2823 = vpack.c.bf16 %v2712, %v2711
      %v2824 = vpack.c.bf16 %v2714, %v2713
      %v2825 = vpack.c.bf16 %v2716, %v2715
      %v2842 = vunpack.c.l.b16 %v2810
      %v2843 = vunpack.c.h.b16 %v2810
      %v2844 = vunpack.c.l.b16 %v2811
      %v2845 = vunpack.c.h.b16 %v2811
      %v2846 = vunpack.c.l.b16 %v2812
      %v2847 = vunpack.c.h.b16 %v2812
      %v2848 = vunpack.c.l.b16 %v2813
      %v2849 = vunpack.c.h.b16 %v2813
      %v2850 = vunpack.c.l.b16 %v2814
      %v2851 = vunpack.c.h.b16 %v2814
      %v2852 = vunpack.c.l.b16 %v2815
      %v2853 = vunpack.c.h.b16 %v2815
      %v2854 = vunpack.c.l.b16 %v2816
      %v2855 = vunpack.c.h.b16 %v2816
      %v2856 = vunpack.c.l.b16 %v2817
      %v2857 = vunpack.c.h.b16 %v2817
      %v2858 = vunpack.c.l.b16 %v2818
      %v2859 = vunpack.c.h.b16 %v2818
      %v2860 = vunpack.c.l.b16 %v2819
      %v2861 = vunpack.c.h.b16 %v2819
      %v2862 = vunpack.c.l.b16 %v2820
      %v2863 = vunpack.c.h.b16 %v2820
      %v2864 = vunpack.c.l.b16 %v2821
      %v2865 = vunpack.c.h.b16 %v2821
      %v2866 = vunpack.c.l.b16 %v2822
      %v2867 = vunpack.c.h.b16 %v2822
      %v2868 = vunpack.c.l.b16 %v2823
      %v2869 = vunpack.c.h.b16 %v2823
      %v2870 = vunpack.c.l.b16 %v2824
      %v2871 = vunpack.c.h.b16 %v2824
      %v2872 = vunpack.c.l.b16 %v2825
      %v2873 = vunpack.c.h.b16 %v2825
      %v2874 = vpack.c.b16 %v2842, %v2842
      %v2875 = vpack.c.b16 %v2843, %v2843
      %v2876 = vpack.c.b16 %v2844, %v2844
      %v2877 = vpack.c.b16 %v2845, %v2845
      %v2878 = vpack.c.b16 %v2846, %v2846
      %v2879 = vpack.c.b16 %v2847, %v2847
      %v2880 = vpack.c.b16 %v2848, %v2848
      %v2881 = vpack.c.b16 %v2849, %v2849
      %v2882 = vpack.c.b16 %v2850, %v2850
      %v2883 = vpack.c.b16 %v2851, %v2851
      %v2884 = vpack.c.b16 %v2852, %v2852
      %v2885 = vpack.c.b16 %v2853, %v2853
      %v2886 = vpack.c.b16 %v2854, %v2854
      %v2887 = vpack.c.b16 %v2855, %v2855
      %v2888 = vpack.c.b16 %v2856, %v2856
      %v2889 = vpack.c.b16 %v2857, %v2857
      %v2890 = vpack.c.b16 %v2858, %v2858
      %v2891 = vpack.c.b16 %v2859, %v2859
      %v2892 = vpack.c.b16 %v2860, %v2860
      %v2893 = vpack.c.b16 %v2861, %v2861
      %v2894 = vpack.c.b16 %v2862, %v2862
      %v2895 = vpack.c.b16 %v2863, %v2863
      %v2896 = vpack.c.b16 %v2864, %v2864
      %v2897 = vpack.c.b16 %v2865, %v2865
      %v2898 = vpack.c.b16 %v2866, %v2866
      %v2899 = vpack.c.b16 %v2867, %v2867
      %v2900 = vpack.c.b16 %v2868, %v2868
      %v2901 = vpack.c.b16 %v2869, %v2869
      %v2902 = vpack.c.b16 %v2870, %v2870
      %v2903 = vpack.c.b16 %v2871, %v2871
      %v2904 = vpack.c.b16 %v2872, %v2872
      %v2905 = vpack.c.b16 %v2873, %v2873
      %2906 = vrot.lane.b32.xlu0 %v2874, 4
      %v2907 = vpop.permute.xlu0 %2906
      %2908 = vrot.lane.b32.xlu0 %v2875, 4
      %v2909 = vpop.permute.xlu0 %2908
      %2910 = vrot.lane.b32.xlu0 %v2876, 4
      %v2911 = vpop.permute.xlu0 %2910
      %2912 = vrot.lane.b32.xlu0 %v2877, 4
      %v2913 = vpop.permute.xlu0 %2912
      %2914 = vrot.lane.b32.xlu0 %v2878, 4
      %v2915 = vpop.permute.xlu0 %2914
      %2916 = vrot.lane.b32.xlu0 %v2879, 4
      %v2917 = vpop.permute.xlu0 %2916
      %2918 = vrot.lane.b32.xlu0 %v2880, 4
      %v2919 = vpop.permute.xlu0 %2918
      %2920 = vrot.lane.b32.xlu0 %v2881, 4
      %v2921 = vpop.permute.xlu0 %2920
      %2922 = vrot.lane.b32.xlu0 %v2882, 4
      %v2923 = vpop.permute.xlu0 %2922
      %2924 = vrot.lane.b32.xlu0 %v2883, 4
      %v2925 = vpop.permute.xlu0 %2924
      %2926 = vrot.lane.b32.xlu0 %v2884, 4
      %v2927 = vpop.permute.xlu0 %2926
      %2928 = vrot.lane.b32.xlu0 %v2885, 4
      %v2929 = vpop.permute.xlu0 %2928
      %2930 = vrot.lane.b32.xlu0 %v2886, 4
      %v2931 = vpop.permute.xlu0 %2930
      %2932 = vrot.lane.b32.xlu0 %v2887, 4
      %v2933 = vpop.permute.xlu0 %2932
      %2934 = vrot.lane.b32.xlu0 %v2888, 4
      %v2935 = vpop.permute.xlu0 %2934
      %2936 = vrot.lane.b32.xlu0 %v2889, 4
      %v2937 = vpop.permute.xlu0 %2936
      %2938 = vrot.lane.b32.xlu0 %v2890, 4
      %v2939 = vpop.permute.xlu0 %2938
      %2940 = vrot.lane.b32.xlu0 %v2891, 4
      %v2941 = vpop.permute.xlu0 %2940
      %2942 = vrot.lane.b32.xlu0 %v2892, 4
      %v2943 = vpop.permute.xlu0 %2942
      %2944 = vrot.lane.b32.xlu0 %v2893, 4
      %v2945 = vpop.permute.xlu0 %2944
      %2946 = vrot.lane.b32.xlu0 %v2894, 4
      %v2947 = vpop.permute.xlu0 %2946
      %2948 = vrot.lane.b32.xlu0 %v2895, 4
      %v2949 = vpop.permute.xlu0 %2948
      %2950 = vrot.lane.b32.xlu0 %v2896, 4
      %v2951 = vpop.permute.xlu0 %2950
      %2952 = vrot.lane.b32.xlu0 %v2897, 4
      %v2953 = vpop.permute.xlu0 %2952
      %2954 = vrot.lane.b32.xlu0 %v2898, 4
      %v2955 = vpop.permute.xlu0 %2954
      %2956 = vrot.lane.b32.xlu0 %v2899, 4
      %v2957 = vpop.permute.xlu0 %2956
      %2958 = vrot.lane.b32.xlu0 %v2900, 4
      %v2959 = vpop.permute.xlu0 %2958
      %2960 = vrot.lane.b32.xlu0 %v2901, 4
      %v2961 = vpop.permute.xlu0 %2960
      %2962 = vrot.lane.b32.xlu0 %v2902, 4
      %v2963 = vpop.permute.xlu0 %2962
      %2964 = vrot.lane.b32.xlu0 %v2903, 4
      %v2965 = vpop.permute.xlu0 %2964
      %2966 = vrot.lane.b32.xlu0 %v2904, 4
      %v2967 = vpop.permute.xlu0 %2966
      %2968 = vrot.lane.b32.xlu0 %v2905, 4
      %v2969 = vpop.permute.xlu0 %2968
      %vm3002 = vcmask 191520
      %3003 = vst.msk [vmem:[#allocation2] sm:$0xf] %vm3002, %v2907
      %3004 = vst.msk [vmem:[#allocation2 + $0x4] sm:$0xf] %vm3002, %v2909
      %3005 = vst.msk [vmem:[#allocation2 + $0xc] sm:$0xf] %vm3002, %v2911
      %3006 = vst.msk [vmem:[#allocation2 + $0x10] sm:$0xf] %vm3002, %v2913
      %3007 = vst.msk [vmem:[#allocation2 + $0x18] sm:$0xf] %vm3002, %v2915
      %3008 = vst.msk [vmem:[#allocation2 + $0x1c] sm:$0xf] %vm3002, %v2917
      %3009 = vst.msk [vmem:[#allocation2 + $0x24] sm:$0xf] %vm3002, %v2919
      %3010 = vst.msk [vmem:[#allocation2 + $0x28] sm:$0xf] %vm3002, %v2921
      %3011 = vst.msk [vmem:[#allocation2 + $0x30] sm:$0xf] %vm3002, %v2923
      %3012 = vst.msk [vmem:[#allocation2 + $0x34] sm:$0xf] %vm3002, %v2925
      %3013 = vst.msk [vmem:[#allocation2 + $0x3c] sm:$0xf] %vm3002, %v2927
      %3014 = vst.msk [vmem:[#allocation2 + $0x40] sm:$0xf] %vm3002, %v2929
      %3015 = vst.msk [vmem:[#allocation2 + $0x48] sm:$0xf] %vm3002, %v2931
      %3016 = vst.msk [vmem:[#allocation2 + $0x4c] sm:$0xf] %vm3002, %v2933
      %3017 = vst.msk [vmem:[#allocation2 + $0x54] sm:$0xf] %vm3002, %v2935
      %3018 = vst.msk [vmem:[#allocation2 + $0x58] sm:$0xf] %vm3002, %v2937
      %3019 = vst.msk [vmem:[#allocation2 + $0x60] sm:$0xf] %vm3002, %v2939
      %3020 = vst.msk [vmem:[#allocation2 + $0x64] sm:$0xf] %vm3002, %v2941
      %3021 = vst.msk [vmem:[#allocation2 + $0x6c] sm:$0xf] %vm3002, %v2943
      %3022 = vst.msk [vmem:[#allocation2 + $0x70] sm:$0xf] %vm3002, %v2945
      %3023 = vst.msk [vmem:[#allocation2 + $0x78] sm:$0xf] %vm3002, %v2947
      %3024 = vst.msk [vmem:[#allocation2 + $0x7c] sm:$0xf] %vm3002, %v2949
      %3025 = vst.msk [vmem:[#allocation2 + $0x84] sm:$0xf] %vm3002, %v2951
      %3026 = vst.msk [vmem:[#allocation2 + $0x88] sm:$0xf] %vm3002, %v2953
      %3027 = vst.msk [vmem:[#allocation2 + $0x90] sm:$0xf] %vm3002, %v2955
      %3028 = vst.msk [vmem:[#allocation2 + $0x94] sm:$0xf] %vm3002, %v2957
      %3029 = vst.msk [vmem:[#allocation2 + $0x9c] sm:$0xf] %vm3002, %v2959
      %3030 = vst.msk [vmem:[#allocation2 + $0xa0] sm:$0xf] %vm3002, %v2961
      %3031 = vst.msk [vmem:[#allocation2 + $0xa8] sm:$0xf] %vm3002, %v2963
      %3032 = vst.msk [vmem:[#allocation2 + $0xac] sm:$0xf] %vm3002, %v2965
      %3033 = vst.msk [vmem:[#allocation2 + $0xb4] sm:$0xf] %vm3002, %v2967
      %3034 = vst.msk [vmem:[#allocation2 + $0xb8] sm:$0xf] %vm3002, %v2969
      %v3035 = vld [vmem:[#allocation2] sm:$0xf]
      %v3036 = vld [vmem:[#allocation2 + $0x4] sm:$0xf]
      %v3037 = vld [vmem:[#allocation2 + $0xc] sm:$0xf]
      %v3038 = vld [vmem:[#allocation2 + $0x10] sm:$0xf]
      %v3039 = vld [vmem:[#allocation2 + $0x18] sm:$0xf]
      %v3040 = vld [vmem:[#allocation2 + $0x1c] sm:$0xf]
      %v3041 = vld [vmem:[#allocation2 + $0x24] sm:$0xf]
      %v3042 = vld [vmem:[#allocation2 + $0x28] sm:$0xf]
      %v3043 = vld [vmem:[#allocation2 + $0x30] sm:$0xf]
      %v3044 = vld [vmem:[#allocation2 + $0x34] sm:$0xf]
      %v3045 = vld [vmem:[#allocation2 + $0x3c] sm:$0xf]
      %v3046 = vld [vmem:[#allocation2 + $0x40] sm:$0xf]
      %v3047 = vld [vmem:[#allocation2 + $0x48] sm:$0xf]
      %v3048 = vld [vmem:[#allocation2 + $0x4c] sm:$0xf]
      %v3049 = vld [vmem:[#allocation2 + $0x54] sm:$0xf]
      %v3050 = vld [vmem:[#allocation2 + $0x58] sm:$0xf]
      %v3051 = vld [vmem:[#allocation2 + $0x60] sm:$0xf]
      %v3052 = vld [vmem:[#allocation2 + $0x64] sm:$0xf]
      %v3053 = vld [vmem:[#allocation2 + $0x6c] sm:$0xf]
      %v3054 = vld [vmem:[#allocation2 + $0x70] sm:$0xf]
      %v3055 = vld [vmem:[#allocation2 + $0x78] sm:$0xf]
      %v3056 = vld [vmem:[#allocation2 + $0x7c] sm:$0xf]
      %v3057 = vld [vmem:[#allocation2 + $0x84] sm:$0xf]
      %v3058 = vld [vmem:[#allocation2 + $0x88] sm:$0xf]
      %v3059 = vld [vmem:[#allocation2 + $0x90] sm:$0xf]
      %v3060 = vld [vmem:[#allocation2 + $0x94] sm:$0xf]
      %v3061 = vld [vmem:[#allocation2 + $0x9c] sm:$0xf]
      %v3062 = vld [vmem:[#allocation2 + $0xa0] sm:$0xf]
      %v3063 = vld [vmem:[#allocation2 + $0xa8] sm:$0xf]
      %v3064 = vld [vmem:[#allocation2 + $0xac] sm:$0xf]
      %v3065 = vld [vmem:[#allocation2 + $0xb4] sm:$0xf]
      %v3066 = vld [vmem:[#allocation2 + $0xb8] sm:$0xf]
      %v3067 = vld [vmem:[%s2] sm:$0xf]
      %v3068 = vld [vmem:[%s2 + $0x4] sm:$0xf]
      %v3069 = vld [vmem:[%s2 + $0x8] sm:$0xf]
      %v3070 = vld [vmem:[#allocation2 + $0x8] sm:$0x1]
      %v3071 = vld [vmem:[#allocation2 + $0x14] sm:$0x1]
      %v3072 = vld [vmem:[#allocation2 + $0x20] sm:$0x1]
      %v3073 = vld [vmem:[#allocation2 + $0x2c] sm:$0x1]
      %v3074 = vld [vmem:[#allocation2 + $0x38] sm:$0x1]
      %v3075 = vld [vmem:[#allocation2 + $0x44] sm:$0x1]
      %v3076 = vld [vmem:[#allocation2 + $0x50] sm:$0x1]
      %v3077 = vld [vmem:[#allocation2 + $0x5c] sm:$0x1]
      %v3078 = vld [vmem:[#allocation2 + $0x68] sm:$0x1]
      %v3079 = vld [vmem:[#allocation2 + $0x74] sm:$0x1]
      %v3080 = vld [vmem:[#allocation2 + $0x80] sm:$0x1]
      %v3081 = vld [vmem:[#allocation2 + $0x8c] sm:$0x1]
      %v3082 = vld [vmem:[#allocation2 + $0x98] sm:$0x1]
      %v3083 = vld [vmem:[#allocation2 + $0xa4] sm:$0x1]
      %v3084 = vld [vmem:[#allocation2 + $0xb0] sm:$0x1]
      %v3085 = vld [vmem:[#allocation2 + $0xbc] sm:$0x1]
      %v3087 = vshrl.u32 %v3035, 16
      %v3089 = vrot.slane %v3087, 4
      %v3090 = vshll.u32 %v3035, 16
      %v3092 = vrot.slane %v3090, 5
      %v3093 = vor.u32 %v3089, %v3092
      %v3094 = vrot.slane %v3093, 4
      %v3096 = vshll.u32 %v3036, 16
      %v3098 = vrot.slane %v3096, 5
      %v3099 = vsel %vm620, %v3094, %v3098
      %v3100 = vshrl.u32 %v3036, 16
      %v3102 = vrot.slane %v3100, 4
      %v3103 = vor.u32 %v3102, %v3098
      %v3104 = vrot.slane %v3103, 4
      %v3106 = vshll.u32 %v3070, 16
      %v3108 = vrot.slane %v3106, 5
      %v3109 = vsel %vm620, %v3104, %v3108
      %v3111 = vshrl.u32 %v3037, 16
      %v3113 = vrot.slane %v3111, 4
      %v3114 = vshll.u32 %v3037, 16
      %v3116 = vrot.slane %v3114, 5
      %v3117 = vor.u32 %v3113, %v3116
      %v3118 = vrot.slane %v3117, 4
      %v3120 = vshll.u32 %v3038, 16
      %v3122 = vrot.slane %v3120, 5
      %v3123 = vsel %vm620, %v3118, %v3122
      %v3124 = vshrl.u32 %v3038, 16
      %v3126 = vrot.slane %v3124, 4
      %v3127 = vor.u32 %v3126, %v3122
      %v3128 = vrot.slane %v3127, 4
      %v3130 = vshll.u32 %v3071, 16
      %v3132 = vrot.slane %v3130, 5
      %v3133 = vsel %vm620, %v3128, %v3132
      %v3135 = vshrl.u32 %v3039, 16
      %v3137 = vrot.slane %v3135, 4
      %v3138 = vshll.u32 %v3039, 16
      %v3140 = vrot.slane %v3138, 5
      %v3141 = vor.u32 %v3137, %v3140
      %v3142 = vrot.slane %v3141, 4
      %v3144 = vshll.u32 %v3040, 16
      %v3146 = vrot.slane %v3144, 5
      %v3147 = vsel %vm620, %v3142, %v3146
      %v3148 = vshrl.u32 %v3040, 16
      %v3150 = vrot.slane %v3148, 4
      %v3151 = vor.u32 %v3150, %v3146
      %v3152 = vrot.slane %v3151, 4
      %v3154 = vshll.u32 %v3072, 16
      %v3156 = vrot.slane %v3154, 5
      %v3157 = vsel %vm620, %v3152, %v3156
      %v3159 = vshrl.u32 %v3041, 16
      %v3161 = vrot.slane %v3159, 4
      %v3162 = vshll.u32 %v3041, 16
      %v3164 = vrot.slane %v3162, 5
      %v3165 = vor.u32 %v3161, %v3164
      %v3166 = vrot.slane %v3165, 4
      %v3168 = vshll.u32 %v3042, 16
      %v3170 = vrot.slane %v3168, 5
      %v3171 = vsel %vm620, %v3166, %v3170
      %v3172 = vshrl.u32 %v3042, 16
      %v3174 = vrot.slane %v3172, 4
      %v3175 = vor.u32 %v3174, %v3170
      %v3176 = vrot.slane %v3175, 4
      %v3178 = vshll.u32 %v3073, 16
      %v3180 = vrot.slane %v3178, 5
      %v3181 = vsel %vm620, %v3176, %v3180
      %v3183 = vshrl.u32 %v3043, 16
      %v3185 = vrot.slane %v3183, 4
      %v3186 = vshll.u32 %v3043, 16
      %v3188 = vrot.slane %v3186, 5
      %v3189 = vor.u32 %v3185, %v3188
      %v3190 = vrot.slane %v3189, 4
      %v3192 = vshll.u32 %v3044, 16
      %v3194 = vrot.slane %v3192, 5
      %v3195 = vsel %vm620, %v3190, %v3194
      %v3196 = vshrl.u32 %v3044, 16
      %v3198 = vrot.slane %v3196, 4
      %v3199 = vor.u32 %v3198, %v3194
      %v3200 = vrot.slane %v3199, 4
      %v3202 = vshll.u32 %v3074, 16
      %v3204 = vrot.slane %v3202, 5
      %v3205 = vsel %vm620, %v3200, %v3204
      %v3207 = vshrl.u32 %v3045, 16
      %v3209 = vrot.slane %v3207, 4
      %v3210 = vshll.u32 %v3045, 16
      %v3212 = vrot.slane %v3210, 5
      %v3213 = vor.u32 %v3209, %v3212
      %v3214 = vrot.slane %v3213, 4
      %v3216 = vshll.u32 %v3046, 16
      %v3218 = vrot.slane %v3216, 5
      %v3219 = vsel %vm620, %v3214, %v3218
      %v3220 = vshrl.u32 %v3046, 16
      %v3222 = vrot.slane %v3220, 4
      %v3223 = vor.u32 %v3222, %v3218
      %v3224 = vrot.slane %v3223, 4
      %v3226 = vshll.u32 %v3075, 16
      %v3228 = vrot.slane %v3226, 5
      %v3229 = vsel %vm620, %v3224, %v3228
      %v3231 = vshrl.u32 %v3047, 16
      %v3233 = vrot.slane %v3231, 4
      %v3234 = vshll.u32 %v3047, 16
      %v3236 = vrot.slane %v3234, 5
      %v3237 = vor.u32 %v3233, %v3236
      %v3238 = vrot.slane %v3237, 4
      %v3240 = vshll.u32 %v3048, 16
      %v3242 = vrot.slane %v3240, 5
      %v3243 = vsel %vm620, %v3238, %v3242
      %v3244 = vshrl.u32 %v3048, 16
      %v3246 = vrot.slane %v3244, 4
      %v3247 = vor.u32 %v3246, %v3242
      %v3248 = vrot.slane %v3247, 4
      %v3250 = vshll.u32 %v3076, 16
      %v3252 = vrot.slane %v3250, 5
      %v3253 = vsel %vm620, %v3248, %v3252
      %v3255 = vshrl.u32 %v3049, 16
      %v3257 = vrot.slane %v3255, 4
      %v3258 = vshll.u32 %v3049, 16
      %v3260 = vrot.slane %v3258, 5
      %v3261 = vor.u32 %v3257, %v3260
      %v3262 = vrot.slane %v3261, 4
      %v3264 = vshll.u32 %v3050, 16
      %v3266 = vrot.slane %v3264, 5
      %v3267 = vsel %vm620, %v3262, %v3266
      %v3268 = vshrl.u32 %v3050, 16
      %v3270 = vrot.slane %v3268, 4
      %v3271 = vor.u32 %v3270, %v3266
      %v3272 = vrot.slane %v3271, 4
      %v3274 = vshll.u32 %v3077, 16
      %v3276 = vrot.slane %v3274, 5
      %v3277 = vsel %vm620, %v3272, %v3276
      %v3279 = vshrl.u32 %v3051, 16
      %v3281 = vrot.slane %v3279, 4
      %v3282 = vshll.u32 %v3051, 16
      %v3284 = vrot.slane %v3282, 5
      %v3285 = vor.u32 %v3281, %v3284
      %v3286 = vrot.slane %v3285, 4
      %v3288 = vshll.u32 %v3052, 16
      %v3290 = vrot.slane %v3288, 5
      %v3291 = vsel %vm620, %v3286, %v3290
      %v3292 = vshrl.u32 %v3052, 16
      %v3294 = vrot.slane %v3292, 4
      %v3295 = vor.u32 %v3294, %v3290
      %v3296 = vrot.slane %v3295, 4
      %v3298 = vshll.u32 %v3078, 16
      %v3300 = vrot.slane %v3298, 5
      %v3301 = vsel %vm620, %v3296, %v3300
      %v3303 = vshrl.u32 %v3053, 16
      %v3305 = vrot.slane %v3303, 4
      %v3306 = vshll.u32 %v3053, 16
      %v3308 = vrot.slane %v3306, 5
      %v3309 = vor.u32 %v3305, %v3308
      %v3310 = vrot.slane %v3309, 4
      %v3312 = vshll.u32 %v3054, 16
      %v3314 = vrot.slane %v3312, 5
      %v3315 = vsel %vm620, %v3310, %v3314
      %v3316 = vshrl.u32 %v3054, 16
      %v3318 = vrot.slane %v3316, 4
      %v3319 = vor.u32 %v3318, %v3314
      %v3320 = vrot.slane %v3319, 4
      %v3322 = vshll.u32 %v3079, 16
      %v3324 = vrot.slane %v3322, 5
      %v3325 = vsel %vm620, %v3320, %v3324
      %v3327 = vshrl.u32 %v3055, 16
      %v3329 = vrot.slane %v3327, 4
      %v3330 = vshll.u32 %v3055, 16
      %v3332 = vrot.slane %v3330, 5
      %v3333 = vor.u32 %v3329, %v3332
      %v3334 = vrot.slane %v3333, 4
      %v3336 = vshll.u32 %v3056, 16
      %v3338 = vrot.slane %v3336, 5
      %v3339 = vsel %vm620, %v3334, %v3338
      %v3340 = vshrl.u32 %v3056, 16
      %v3342 = vrot.slane %v3340, 4
      %v3343 = vor.u32 %v3342, %v3338
      %v3344 = vrot.slane %v3343, 4
      %v3346 = vshll.u32 %v3080, 16
      %v3348 = vrot.slane %v3346, 5
      %v3349 = vsel %vm620, %v3344, %v3348
      %v3351 = vshrl.u32 %v3057, 16
      %v3353 = vrot.slane %v3351, 4
      %v3354 = vshll.u32 %v3057, 16
      %v3356 = vrot.slane %v3354, 5
      %v3357 = vor.u32 %v3353, %v3356
      %v3358 = vrot.slane %v3357, 4
      %v3360 = vshll.u32 %v3058, 16
      %v3362 = vrot.slane %v3360, 5
      %v3363 = vsel %vm620, %v3358, %v3362
      %v3364 = vshrl.u32 %v3058, 16
      %v3366 = vrot.slane %v3364, 4
      %v3367 = vor.u32 %v3366, %v3362
      %v3368 = vrot.slane %v3367, 4
      %v3370 = vshll.u32 %v3081, 16
      %v3372 = vrot.slane %v3370, 5
      %v3373 = vsel %vm620, %v3368, %v3372
      %v3375 = vshrl.u32 %v3059, 16
      %v3377 = vrot.slane %v3375, 4
      %v3378 = vshll.u32 %v3059, 16
      %v3380 = vrot.slane %v3378, 5
      %v3381 = vor.u32 %v3377, %v3380
      %v3382 = vrot.slane %v3381, 4
      %v3384 = vshll.u32 %v3060, 16
      %v3386 = vrot.slane %v3384, 5
      %v3387 = vsel %vm620, %v3382, %v3386
      %v3388 = vshrl.u32 %v3060, 16
      %v3390 = vrot.slane %v3388, 4
      %v3391 = vor.u32 %v3390, %v3386
      %v3392 = vrot.slane %v3391, 4
      %v3394 = vshll.u32 %v3082, 16
      %v3396 = vrot.slane %v3394, 5
      %v3397 = vsel %vm620, %v3392, %v3396
      %v3399 = vshrl.u32 %v3061, 16
      %v3401 = vrot.slane %v3399, 4
      %v3402 = vshll.u32 %v3061, 16
      %v3404 = vrot.slane %v3402, 5
      %v3405 = vor.u32 %v3401, %v3404
      %v3406 = vrot.slane %v3405, 4
      %v3408 = vshll.u32 %v3062, 16
      %v3410 = vrot.slane %v3408, 5
      %v3411 = vsel %vm620, %v3406, %v3410
      %v3412 = vshrl.u32 %v3062, 16
      %v3414 = vrot.slane %v3412, 4
      %v3415 = vor.u32 %v3414, %v3410
      %v3416 = vrot.slane %v3415, 4
      %v3418 = vshll.u32 %v3083, 16
      %v3420 = vrot.slane %v3418, 5
      %v3421 = vsel %vm620, %v3416, %v3420
      %v3423 = vshrl.u32 %v3063, 16
      %v3425 = vrot.slane %v3423, 4
      %v3426 = vshll.u32 %v3063, 16
      %v3428 = vrot.slane %v3426, 5
      %v3429 = vor.u32 %v3425, %v3428
      %v3430 = vrot.slane %v3429, 4
      %v3432 = vshll.u32 %v3064, 16
      %v3434 = vrot.slane %v3432, 5
      %v3435 = vsel %vm620, %v3430, %v3434
      %v3436 = vshrl.u32 %v3064, 16
      %v3438 = vrot.slane %v3436, 4
      %v3439 = vor.u32 %v3438, %v3434
      %v3440 = vrot.slane %v3439, 4
      %v3442 = vshll.u32 %v3084, 16
      %v3444 = vrot.slane %v3442, 5
      %v3445 = vsel %vm620, %v3440, %v3444
      %v3447 = vshrl.u32 %v3065, 16
      %v3449 = vrot.slane %v3447, 4
      %v3450 = vshll.u32 %v3065, 16
      %v3452 = vrot.slane %v3450, 5
      %v3453 = vor.u32 %v3449, %v3452
      %v3454 = vrot.slane %v3453, 4
      %v3456 = vshll.u32 %v3066, 16
      %v3458 = vrot.slane %v3456, 5
      %v3459 = vsel %vm620, %v3454, %v3458
      %v3460 = vshrl.u32 %v3066, 16
      %v3462 = vrot.slane %v3460, 4
      %v3463 = vor.u32 %v3462, %v3458
      %v3464 = vrot.slane %v3463, 4
      %v3466 = vshll.u32 %v3085, 16
      %v3468 = vrot.slane %v3466, 5
      %v3469 = vsel %vm620, %v3464, %v3468
      %s3470 = scalar_lea.vmem %s2, 12
      %v3471 = vld [vmem:[%s3470] sm:$0xf]
      %v3472 = vld [vmem:[%s3470 + $0x4] sm:$0xf]
      %v3473 = vld [vmem:[%s3470 + $0x8] sm:$0xf]
      %v3474 = vunpack.c.l.b16 %v3099
      %v3475 = vunpack.c.l.b16 %v3109
      %v3476 = vunpack.c.l.b16 %v3123
      %v3477 = vunpack.c.l.b16 %v3133
      %v3478 = vunpack.c.l.b16 %v3147
      %v3479 = vunpack.c.l.b16 %v3157
      %v3480 = vunpack.c.l.b16 %v3171
      %v3481 = vunpack.c.l.b16 %v3181
      %v3482 = vunpack.c.l.b16 %v3195
      %v3483 = vunpack.c.l.b16 %v3205
      %v3484 = vunpack.c.l.b16 %v3219
      %v3485 = vunpack.c.l.b16 %v3229
      %v3486 = vunpack.c.l.b16 %v3243
      %v3487 = vunpack.c.l.b16 %v3253
      %v3488 = vunpack.c.l.b16 %v3267
      %v3489 = vunpack.c.l.b16 %v3277
      %v3490 = vunpack.c.l.b16 %v3291
      %v3491 = vunpack.c.l.b16 %v3301
      %v3492 = vunpack.c.l.b16 %v3315
      %v3493 = vunpack.c.l.b16 %v3325
      %v3494 = vunpack.c.l.b16 %v3339
      %v3495 = vunpack.c.l.b16 %v3349
      %v3496 = vunpack.c.l.b16 %v3363
      %v3497 = vunpack.c.l.b16 %v3373
      %v3498 = vunpack.c.l.b16 %v3387
      %v3499 = vunpack.c.l.b16 %v3397
      %v3500 = vunpack.c.l.b16 %v3411
      %v3501 = vunpack.c.l.b16 %v3421
      %v3502 = vunpack.c.l.b16 %v3435
      %v3503 = vunpack.c.l.b16 %v3445
      %v3504 = vunpack.c.l.b16 %v3459
      %v3505 = vunpack.c.l.b16 %v3469
      %v3506 = vpack.c.b16 %v3475, %v3474
      %v3507 = vpack.c.b16 %v3477, %v3476
      %v3508 = vpack.c.b16 %v3479, %v3478
      %v3509 = vpack.c.b16 %v3481, %v3480
      %v3510 = vpack.c.b16 %v3483, %v3482
      %v3511 = vpack.c.b16 %v3485, %v3484
      %v3512 = vpack.c.b16 %v3487, %v3486
      %v3513 = vpack.c.b16 %v3489, %v3488
      %v3514 = vpack.c.b16 %v3491, %v3490
      %v3515 = vpack.c.b16 %v3493, %v3492
      %v3516 = vpack.c.b16 %v3495, %v3494
      %v3517 = vpack.c.b16 %v3497, %v3496
      %v3518 = vpack.c.b16 %v3499, %v3498
      %v3519 = vpack.c.b16 %v3501, %v3500
      %v3520 = vpack.c.b16 %v3503, %v3502
      %v3521 = vpack.c.b16 %v3505, %v3504
      %v3525 = vunpack.c.l.b16 %v3471
      %v3526 = vunpack.c.l.b16 %v3472
      %v3527 = vunpack.c.l.b16 %v3473
      %v3528 = vpack.c.b16 %v3526, %v3525
      %v3529 = vpack.c.b16 %v3527, %v3527
      %vm3531 = vcmask 195584
      %v3533 = vsel %vm3531, %v3506, 0
      %v3536 = vsel %vm3531, %v3507, 0
      %v3539 = vsel %vm3531, %v3508, 0
      %v3542 = vsel %vm3531, %v3509, 0
      %v3545 = vsel %vm3531, %v3510, 0
      %v3548 = vsel %vm3531, %v3511, 0
      %v3551 = vsel %vm3531, %v3512, 0
      %v3554 = vsel %vm3531, %v3513, 0
      %v3557 = vsel %vm3531, %v3514, 0
      %v3560 = vsel %vm3531, %v3515, 0
      %v3563 = vsel %vm3531, %v3516, 0
      %v3566 = vsel %vm3531, %v3517, 0
      %v3569 = vsel %vm3531, %v3518, 0
      %v3572 = vsel %vm3531, %v3519, 0
      %v3575 = vsel %vm3531, %v3520, 0
      %v3578 = vsel %vm3531, %v3521, 0
      %v3581 = vsel %vm2787, %v3529, 0
      %3583 = vmatprep.subr.bf16.mxu0 0
      %3584 = vmatpush1.bf16.msra.mxu0 %v3528
      %3585 = vmatprep.subr.bf16.mxu0 0
      %3586 = vmatpush1.bf16.msra.mxu0 %v3581
      %3587 = vmatprep.subr.bf16.mxu0 0
      %3588 = vmatpush1.bf16.msra.mxu0 0
      %3589 = vmatprep.subr.bf16.mxu0 0
      %3590 = vmatpush1.bf16.msra.mxu0 0
      %3591 = vmatprep.subr.bf16.mxu0 0
      %3592 = vmatpush1.bf16.msra.mxu0 0
      %3593 = vmatprep.subr.bf16.mxu0 0
      %3594 = vmatpush1.bf16.msra.mxu0 0
      %3595 = vmatprep.subr.bf16.mxu0 0
      %3596 = vmatpush1.bf16.msra.mxu0 0
      %3597 = vmatprep.subr.bf16.mxu0 0
      %3598 = vmatpush1.bf16.msra.mxu0 0
      %3599 = vmatprep.subr.bf16.mxu0 0
      %3600 = vmatpush1.bf16.msra.mxu0 0
      %3601 = vmatprep.subr.bf16.mxu0 0
      %3602 = vmatpush1.bf16.msra.mxu0 0
      %3603 = vmatprep.subr.bf16.mxu0 0
      %3604 = vmatpush1.bf16.msra.mxu0 0
      %3605 = vmatprep.subr.bf16.mxu0 0
      %3606 = vmatpush1.bf16.msra.mxu0 0
      %3607 = vmatprep.subr.bf16.mxu0 0
      %3608 = vmatpush1.bf16.msra.mxu0 0
      %3609 = vmatprep.subr.bf16.mxu0 0
      %3610 = vmatpush1.bf16.msra.mxu0 0
      %3611 = vmatprep.subr.bf16.mxu0 0
      %3612 = vmatpush1.bf16.msra.mxu0 0
      %3613 = vmatprep.subr.bf16.mxu0 0
      %3614 = vmatpush1.bf16.msra.mxu0 0
      %3615 = vmatprep.mubr.bf16.mxu0 0
      %3616 = vmatmul.mubr.bf16.gmra.mrb[0].mxu0 %v3533
      %v3617 = vpop.f32.mrb[0].mxu0
      %v3618 = vadd.f32 0.0, %v3617
      %v3619 = vpop.f32.mrb[0].mxu0
      %v3620 = vpop.f32.mrb[0].mxu0
      %v3621 = vadd.f32 0.0, %v3620
      %v3622 = vpop.f32.mrb[0].mxu0
      %3623 = vmatprep.mubr.bf16.mxu0 0
      %3624 = vmatmul.mubr.bf16.gmra.mrb[0].mxu0 %v3536
      %v3625 = vpop.f32.mrb[0].mxu0
      %v3626 = vadd.f32 0.0, %v3625
      %v3627 = vpop.f32.mrb[0].mxu0
      %v3628 = vpop.f32.mrb[0].mxu0
      %v3629 = vadd.f32 0.0, %v3628
      %v3630 = vpop.f32.mrb[0].mxu0
      %3631 = vmatprep.mubr.bf16.mxu0 0
      %3632 = vmatmul.mubr.bf16.gmra.mrb[0].mxu0 %v3539
      %v3633 = vpop.f32.mrb[0].mxu0
      %v3634 = vadd.f32 0.0, %v3633
      %v3635 = vpop.f32.mrb[0].mxu0
      %v3636 = vpop.f32.mrb[0].mxu0
      %v3637 = vadd.f32 0.0, %v3636
      %v3638 = vpop.f32.mrb[0].mxu0
      %3639 = vmatprep.mubr.bf16.mxu0 0
      %3640 = vmatmul.mubr.bf16.gmra.mrb[0].mxu0 %v3542
      %v3641 = vpop.f32.mrb[0].mxu0
      %v3642 = vadd.f32 0.0, %v3641
      %v3643 = vpop.f32.mrb[0].mxu0
      %v3644 = vpop.f32.mrb[0].mxu0
      %v3645 = vadd.f32 0.0, %v3644
      %v3646 = vpop.f32.mrb[0].mxu0
      %3647 = vmatprep.mubr.bf16.mxu0 0
      %3648 = vmatmul.mubr.bf16.gmra.mrb[0].mxu0 %v3545
      %v3649 = vpop.f32.mrb[0].mxu0
      %v3650 = vadd.f32 0.0, %v3649
      %v3651 = vpop.f32.mrb[0].mxu0
      %v3652 = vpop.f32.mrb[0].mxu0
      %v3653 = vadd.f32 0.0, %v3652
      %v3654 = vpop.f32.mrb[0].mxu0
      %3655 = vmatprep.mubr.bf16.mxu0 0
      %3656 = vmatmul.mubr.bf16.gmra.mrb[0].mxu0 %v3548
      %v3657 = vpop.f32.mrb[0].mxu0
      %v3658 = vadd.f32 0.0, %v3657
      %v3659 = vpop.f32.mrb[0].mxu0
      %v3660 = vpop.f32.mrb[0].mxu0
      %v3661 = vadd.f32 0.0, %v3660
      %v3662 = vpop.f32.mrb[0].mxu0
      %3663 = vmatprep.mubr.bf16.mxu0 0
      %3664 = vmatmul.mubr.bf16.gmra.mrb[0].mxu0 %v3551
      %v3665 = vpop.f32.mrb[0].mxu0
      %v3666 = vadd.f32 0.0, %v3665
      %v3667 = vpop.f32.mrb[0].mxu0
      %v3668 = vpop.f32.mrb[0].mxu0
      %v3669 = vadd.f32 0.0, %v3668
      %v3670 = vpop.f32.mrb[0].mxu0
      %3671 = vmatprep.mubr.bf16.mxu0 0
      %3672 = vmatmul.mubr.bf16.gmra.mrb[0].mxu0 %v3554
      %v3673 = vpop.f32.mrb[0].mxu0
      %v3674 = vadd.f32 0.0, %v3673
      %v3675 = vpop.f32.mrb[0].mxu0
      %v3676 = vpop.f32.mrb[0].mxu0
      %v3677 = vadd.f32 0.0, %v3676
      %v3678 = vpop.f32.mrb[0].mxu0
      %3679 = vmatprep.mubr.bf16.mxu0 0
      %3680 = vmatmul.mubr.bf16.gmra.mrb[0].mxu0 %v3557
      %v3681 = vpop.f32.mrb[0].mxu0
      %v3682 = vadd.f32 0.0, %v3681
      %v3683 = vpop.f32.mrb[0].mxu0
      %v3684 = vpop.f32.mrb[0].mxu0
      %v3685 = vadd.f32 0.0, %v3684
      %v3686 = vpop.f32.mrb[0].mxu0
      %3687 = vmatprep.mubr.bf16.mxu0 0
      %3688 = vmatmul.mubr.bf16.gmra.mrb[0].mxu0 %v3560
      %v3689 = vpop.f32.mrb[0].mxu0
      %v3690 = vadd.f32 0.0, %v3689
      %v3691 = vpop.f32.mrb[0].mxu0
      %v3692 = vpop.f32.mrb[0].mxu0
      %v3693 = vadd.f32 0.0, %v3692
      %v3694 = vpop.f32.mrb[0].mxu0
      %3695 = vmatprep.mubr.bf16.mxu0 0
      %3696 = vmatmul.mubr.bf16.gmra.mrb[0].mxu0 %v3563
      %v3697 = vpop.f32.mrb[0].mxu0
      %v3698 = vadd.f32 0.0, %v3697
      %v3699 = vpop.f32.mrb[0].mxu0
      %v3700 = vpop.f32.mrb[0].mxu0
      %v3701 = vadd.f32 0.0, %v3700
      %v3702 = vpop.f32.mrb[0].mxu0
      %3703 = vmatprep.mubr.bf16.mxu0 0
      %3704 = vmatmul.mubr.bf16.gmra.mrb[0].mxu0 %v3566
      %v3705 = vpop.f32.mrb[0].mxu0
      %v3706 = vadd.f32 0.0, %v3705
      %v3707 = vpop.f32.mrb[0].mxu0
      %v3708 = vpop.f32.mrb[0].mxu0
      %v3709 = vadd.f32 0.0, %v3708
      %v3710 = vpop.f32.mrb[0].mxu0
      %3711 = vmatprep.mubr.bf16.mxu0 0
      %3712 = vmatmul.mubr.bf16.gmra.mrb[0].mxu0 %v3569
      %v3713 = vpop.f32.mrb[0].mxu0
      %v3714 = vadd.f32 0.0, %v3713
      %v3715 = vpop.f32.mrb[0].mxu0
      %v3716 = vpop.f32.mrb[0].mxu0
      %v3717 = vadd.f32 0.0, %v3716
      %v3718 = vpop.f32.mrb[0].mxu0
      %3719 = vmatprep.mubr.bf16.mxu0 0
      %3720 = vmatmul.mubr.bf16.gmra.mrb[0].mxu0 %v3572
      %v3721 = vpop.f32.mrb[0].mxu0
      %v3722 = vadd.f32 0.0, %v3721
      %v3723 = vpop.f32.mrb[0].mxu0
      %v3724 = vpop.f32.mrb[0].mxu0
      %v3725 = vadd.f32 0.0, %v3724
      %v3726 = vpop.f32.mrb[0].mxu0
      %3727 = vmatprep.mubr.bf16.mxu0 0
      %3728 = vmatmul.mubr.bf16.gmra.mrb[0].mxu0 %v3575
      %v3729 = vpop.f32.mrb[0].mxu0
      %v3730 = vadd.f32 0.0, %v3729
      %v3731 = vpop.f32.mrb[0].mxu0
      %v3732 = vpop.f32.mrb[0].mxu0
      %v3733 = vadd.f32 0.0, %v3732
      %v3734 = vpop.f32.mrb[0].mxu0
      %3735 = vmatprep.mubr.bf16.mxu0 0
      %3736 = vmatmul.mubr.bf16.gmra.mrb[0].mxu0 %v3578
      %v3737 = vpop.f32.mrb[0].mxu0
      %v3738 = vadd.f32 0.0, %v3737
      %v3739 = vpop.f32.mrb[0].mxu0
      %v3740 = vpop.f32.mrb[0].mxu0
      %v3741 = vadd.f32 0.0, %v3740
      %v3742 = vpop.f32.mrb[0].mxu0
      %3743 = vdwg.mxu0
      %v3776 = vunpack.c.l.b16 %v3035
      %v3777 = vunpack.c.l.b16 %v3036
      %v3778 = vunpack.c.l.b16 %v3037
      %v3779 = vunpack.c.l.b16 %v3038
      %v3780 = vunpack.c.l.b16 %v3039
      %v3781 = vunpack.c.l.b16 %v3040
      %v3782 = vunpack.c.l.b16 %v3041
      %v3783 = vunpack.c.l.b16 %v3042
      %v3784 = vunpack.c.l.b16 %v3043
      %v3785 = vunpack.c.l.b16 %v3044
      %v3786 = vunpack.c.l.b16 %v3045
      %v3787 = vunpack.c.l.b16 %v3046
      %v3788 = vunpack.c.l.b16 %v3047
      %v3789 = vunpack.c.l.b16 %v3048
      %v3790 = vunpack.c.l.b16 %v3049
      %v3791 = vunpack.c.l.b16 %v3050
      %v3792 = vunpack.c.l.b16 %v3051
      %v3793 = vunpack.c.l.b16 %v3052
      %v3794 = vunpack.c.l.b16 %v3053
      %v3795 = vunpack.c.l.b16 %v3054
      %v3796 = vunpack.c.l.b16 %v3055
      %v3797 = vunpack.c.l.b16 %v3056
      %v3798 = vunpack.c.l.b16 %v3057
      %v3799 = vunpack.c.l.b16 %v3058
      %v3800 = vunpack.c.l.b16 %v3059
      %v3801 = vunpack.c.l.b16 %v3060
      %v3802 = vunpack.c.l.b16 %v3061
      %v3803 = vunpack.c.l.b16 %v3062
      %v3804 = vunpack.c.l.b16 %v3063
      %v3805 = vunpack.c.l.b16 %v3064
      %v3806 = vunpack.c.l.b16 %v3065
      %v3807 = vunpack.c.l.b16 %v3066
      %v3808 = vpack.c.b16 %v3777, %v3776
      %v3809 = vpack.c.b16 %v3779, %v3778
      %v3810 = vpack.c.b16 %v3781, %v3780
      %v3811 = vpack.c.b16 %v3783, %v3782
      %v3812 = vpack.c.b16 %v3785, %v3784
      %v3813 = vpack.c.b16 %v3787, %v3786
      %v3814 = vpack.c.b16 %v3789, %v3788
      %v3815 = vpack.c.b16 %v3791, %v3790
      %v3816 = vpack.c.b16 %v3793, %v3792
      %v3817 = vpack.c.b16 %v3795, %v3794
      %v3818 = vpack.c.b16 %v3797, %v3796
      %v3819 = vpack.c.b16 %v3799, %v3798
      %v3820 = vpack.c.b16 %v3801, %v3800
      %v3821 = vpack.c.b16 %v3803, %v3802
      %v3822 = vpack.c.b16 %v3805, %v3804
      %v3823 = vpack.c.b16 %v3807, %v3806
      %v3827 = vunpack.c.l.b16 %v3067
      %v3828 = vunpack.c.l.b16 %v3068
      %v3829 = vunpack.c.l.b16 %v3069
      %v3830 = vpack.c.b16 %v3828, %v3827
      %v3831 = vpack.c.b16 %v3829, %v3829
      %v3834 = vsel %vm3531, %v3808, 0
      %v3837 = vsel %vm3531, %v3809, 0
      %v3840 = vsel %vm3531, %v3810, 0
      %v3843 = vsel %vm3531, %v3811, 0
      %v3846 = vsel %vm3531, %v3812, 0
      %v3849 = vsel %vm3531, %v3813, 0
      %v3852 = vsel %vm3531, %v3814, 0
      %v3855 = vsel %vm3531, %v3815, 0
      %v3858 = vsel %vm3531, %v3816, 0
      %v3861 = vsel %vm3531, %v3817, 0
      %v3864 = vsel %vm3531, %v3818, 0
      %v3867 = vsel %vm3531, %v3819, 0
      %v3870 = vsel %vm3531, %v3820, 0
      %v3873 = vsel %vm3531, %v3821, 0
      %v3876 = vsel %vm3531, %v3822, 0
      %v3879 = vsel %vm3531, %v3823, 0
      %v3882 = vsel %vm2787, %v3831, 0
      %3884 = vmatprep.subr.bf16.mxu0 0
      %3885 = vmatpush1.bf16.msra.mxu0 %v3830
      %3886 = vmatprep.subr.bf16.mxu0 0
      %3887 = vmatpush1.bf16.msra.mxu0 %v3882
      %3888 = vmatprep.subr.bf16.mxu0 0
      %3889 = vmatpush1.bf16.msra.mxu0 0
      %3890 = vmatprep.subr.bf16.mxu0 0
      %3891 = vmatpush1.bf16.msra.mxu0 0
      %3892 = vmatprep.subr.bf16.mxu0 0
      %3893 = vmatpush1.bf16.msra.mxu0 0
      %3894 = vmatprep.subr.bf16.mxu0 0
      %3895 = vmatpush1.bf16.msra.mxu0 0
      %3896 = vmatprep.subr.bf16.mxu0 0
      %3897 = vmatpush1.bf16.msra.mxu0 0
      %3898 = vmatprep.subr.bf16.mxu0 0
      %3899 = vmatpush1.bf16.msra.mxu0 0
      %3900 = vmatprep.subr.bf16.mxu0 0
      %3901 = vmatpush1.bf16.msra.mxu0 0
      %3902 = vmatprep.subr.bf16.mxu0 0
      %3903 = vmatpush1.bf16.msra.mxu0 0
      %3904 = vmatprep.subr.bf16.mxu0 0
      %3905 = vmatpush1.bf16.msra.mxu0 0
      %3906 = vmatprep.subr.bf16.mxu0 0
      %3907 = vmatpush1.bf16.msra.mxu0 0
      %3908 = vmatprep.subr.bf16.mxu0 0
      %3909 = vmatpush1.bf16.msra.mxu0 0
      %3910 = vmatprep.subr.bf16.mxu0 0
      %3911 = vmatpush1.bf16.msra.mxu0 0
      %3912 = vmatprep.subr.bf16.mxu0 0
      %3913 = vmatpush1.bf16.msra.mxu0 0
      %3914 = vmatprep.subr.bf16.mxu0 0
      %3915 = vmatpush1.bf16.msra.mxu0 0
      %3916 = vmatprep.mubr.bf16.mxu0 0
      %3917 = vmatmul.mubr.bf16.gmra.mrb[0].mxu0 %v3834
      %v3918 = vpop.f32.mrb[0].mxu0
      %v3919 = vadd.f32 %v3618, %v3918
      %v3920 = vpop.f32.mrb[0].mxu0
      %v3921 = vpop.f32.mrb[0].mxu0
      %v3922 = vadd.f32 %v3621, %v3921
      %v3923 = vpop.f32.mrb[0].mxu0
      %3924 = vmatprep.mubr.bf16.mxu0 0
      %3925 = vmatmul.mubr.bf16.gmra.mrb[0].mxu0 %v3837
      %v3926 = vpop.f32.mrb[0].mxu0
      %v3927 = vadd.f32 %v3626, %v3926
      %v3928 = vpop.f32.mrb[0].mxu0
      %v3929 = vpop.f32.mrb[0].mxu0
      %v3930 = vadd.f32 %v3629, %v3929
      %v3931 = vpop.f32.mrb[0].mxu0
      %3932 = vmatprep.mubr.bf16.mxu0 0
      %3933 = vmatmul.mubr.bf16.gmra.mrb[0].mxu0 %v3840
      %v3934 = vpop.f32.mrb[0].mxu0
      %v3935 = vadd.f32 %v3634, %v3934
      %v3936 = vpop.f32.mrb[0].mxu0
      %v3937 = vpop.f32.mrb[0].mxu0
      %v3938 = vadd.f32 %v3637, %v3937
      %v3939 = vpop.f32.mrb[0].mxu0
      %3940 = vmatprep.mubr.bf16.mxu0 0
      %3941 = vmatmul.mubr.bf16.gmra.mrb[0].mxu0 %v3843
      %v3942 = vpop.f32.mrb[0].mxu0
      %v3943 = vadd.f32 %v3642, %v3942
      %v3944 = vpop.f32.mrb[0].mxu0
      %v3945 = vpop.f32.mrb[0].mxu0
      %v3946 = vadd.f32 %v3645, %v3945
      %v3947 = vpop.f32.mrb[0].mxu0
      %3948 = vmatprep.mubr.bf16.mxu0 0
      %3949 = vmatmul.mubr.bf16.gmra.mrb[0].mxu0 %v3846
      %v3950 = vpop.f32.mrb[0].mxu0
      %v3951 = vadd.f32 %v3650, %v3950
      %v3952 = vpop.f32.mrb[0].mxu0
      %v3953 = vpop.f32.mrb[0].mxu0
      %v3954 = vadd.f32 %v3653, %v3953
      %v3955 = vpop.f32.mrb[0].mxu0
      %3956 = vmatprep.mubr.bf16.mxu0 0
      %3957 = vmatmul.mubr.bf16.gmra.mrb[0].mxu0 %v3849
      %v3958 = vpop.f32.mrb[0].mxu0
      %v3959 = vadd.f32 %v3658, %v3958
      %v3960 = vpop.f32.mrb[0].mxu0
      %v3961 = vpop.f32.mrb[0].mxu0
      %v3962 = vadd.f32 %v3661, %v3961
      %v3963 = vpop.f32.mrb[0].mxu0
      %3964 = vmatprep.mubr.bf16.mxu0 0
      %3965 = vmatmul.mubr.bf16.gmra.mrb[0].mxu0 %v3852
      %v3966 = vpop.f32.mrb[0].mxu0
      %v3967 = vadd.f32 %v3666, %v3966
      %v3968 = vpop.f32.mrb[0].mxu0
      %v3969 = vpop.f32.mrb[0].mxu0
      %v3970 = vadd.f32 %v3669, %v3969
      %v3971 = vpop.f32.mrb[0].mxu0
      %3972 = vmatprep.mubr.bf16.mxu0 0
      %3973 = vmatmul.mubr.bf16.gmra.mrb[0].mxu0 %v3855
      %v3974 = vpop.f32.mrb[0].mxu0
      %v3975 = vadd.f32 %v3674, %v3974
      %v3976 = vpop.f32.mrb[0].mxu0
      %v3977 = vpop.f32.mrb[0].mxu0
      %v3978 = vadd.f32 %v3677, %v3977
      %v3979 = vpop.f32.mrb[0].mxu0
      %3980 = vmatprep.mubr.bf16.mxu0 0
      %3981 = vmatmul.mubr.bf16.gmra.mrb[0].mxu0 %v3858
      %v3982 = vpop.f32.mrb[0].mxu0
      %v3983 = vadd.f32 %v3682, %v3982
      %v3984 = vpop.f32.mrb[0].mxu0
      %v3985 = vpop.f32.mrb[0].mxu0
      %v3986 = vadd.f32 %v3685, %v3985
      %v3987 = vpop.f32.mrb[0].mxu0
      %3988 = vmatprep.mubr.bf16.mxu0 0
      %3989 = vmatmul.mubr.bf16.gmra.mrb[0].mxu0 %v3861
      %v3990 = vpop.f32.mrb[0].mxu0
      %v3991 = vadd.f32 %v3690, %v3990
      %v3992 = vpop.f32.mrb[0].mxu0
      %v3993 = vpop.f32.mrb[0].mxu0
      %v3994 = vadd.f32 %v3693, %v3993
      %v3995 = vpop.f32.mrb[0].mxu0
      %3996 = vmatprep.mubr.bf16.mxu0 0
      %3997 = vmatmul.mubr.bf16.gmra.mrb[0].mxu0 %v3864
      %v3998 = vpop.f32.mrb[0].mxu0
      %v3999 = vadd.f32 %v3698, %v3998
      %v4000 = vpop.f32.mrb[0].mxu0
      %v4001 = vpop.f32.mrb[0].mxu0
      %v4002 = vadd.f32 %v3701, %v4001
      %v4003 = vpop.f32.mrb[0].mxu0
      %4004 = vmatprep.mubr.bf16.mxu0 0
      %4005 = vmatmul.mubr.bf16.gmra.mrb[0].mxu0 %v3867
      %v4006 = vpop.f32.mrb[0].mxu0
      %v4007 = vadd.f32 %v3706, %v4006
      %v4008 = vpop.f32.mrb[0].mxu0
      %v4009 = vpop.f32.mrb[0].mxu0
      %v4010 = vadd.f32 %v3709, %v4009
      %v4011 = vpop.f32.mrb[0].mxu0
      %4012 = vmatprep.mubr.bf16.mxu0 0
      %4013 = vmatmul.mubr.bf16.gmra.mrb[0].mxu0 %v3870
      %v4014 = vpop.f32.mrb[0].mxu0
      %v4015 = vadd.f32 %v3714, %v4014
      %v4016 = vpop.f32.mrb[0].mxu0
      %v4017 = vpop.f32.mrb[0].mxu0
      %v4018 = vadd.f32 %v3717, %v4017
      %v4019 = vpop.f32.mrb[0].mxu0
      %4020 = vmatprep.mubr.bf16.mxu0 0
      %4021 = vmatmul.mubr.bf16.gmra.mrb[0].mxu0 %v3873
      %v4022 = vpop.f32.mrb[0].mxu0
      %v4023 = vadd.f32 %v3722, %v4022
      %v4024 = vpop.f32.mrb[0].mxu0
      %v4025 = vpop.f32.mrb[0].mxu0
      %v4026 = vadd.f32 %v3725, %v4025
      %v4027 = vpop.f32.mrb[0].mxu0
      %4028 = vmatprep.mubr.bf16.mxu0 0
      %4029 = vmatmul.mubr.bf16.gmra.mrb[0].mxu0 %v3876
      %v4030 = vpop.f32.mrb[0].mxu0
      %v4031 = vadd.f32 %v3730, %v4030
      %v4032 = vpop.f32.mrb[0].mxu0
      %v4033 = vpop.f32.mrb[0].mxu0
      %v4034 = vadd.f32 %v3733, %v4033
      %v4035 = vpop.f32.mrb[0].mxu0
      %4036 = vmatprep.mubr.bf16.mxu0 0
      %4037 = vmatmul.mubr.bf16.gmra.mrb[0].mxu0 %v3879
      %v4038 = vpop.f32.mrb[0].mxu0
      %v4039 = vadd.f32 %v3738, %v4038
      %v4040 = vpop.f32.mrb[0].mxu0
      %v4041 = vpop.f32.mrb[0].mxu0
      %v4042 = vadd.f32 %v3741, %v4041
      %v4043 = vpop.f32.mrb[0].mxu0
      %4044 = vdwg.mxu0
      %v4045 = vld [vmem:[%s1561] sm:$0xf]
      %v4046 = vld [vmem:[%s1561 + $0x4] sm:$0xf]
      %v4047 = vld [vmem:[%s1561 + $0xc] sm:$0xf]
      %v4048 = vld [vmem:[%s1561 + $0x10] sm:$0xf]
      %v4049 = vld [vmem:[%s1561 + $0x18] sm:$0xf]
      %v4050 = vld [vmem:[%s1561 + $0x1c] sm:$0xf]
      %v4051 = vld [vmem:[%s1561 + $0x24] sm:$0xf]
      %v4052 = vld [vmem:[%s1561 + $0x28] sm:$0xf]
      %v4053 = vld [vmem:[%s1561 + $0x30] sm:$0xf]
      %v4054 = vld [vmem:[%s1561 + $0x34] sm:$0xf]
      %v4055 = vld [vmem:[%s1561 + $0x3c] sm:$0xf]
      %v4056 = vld [vmem:[%s1561 + $0x40] sm:$0xf]
      %v4057 = vld [vmem:[%s1561 + $0x48] sm:$0xf]
      %v4058 = vld [vmem:[%s1561 + $0x4c] sm:$0xf]
      %v4059 = vld [vmem:[%s1561 + $0x54] sm:$0xf]
      %v4060 = vld [vmem:[%s1561 + $0x58] sm:$0xf]
      %v4061 = vld [vmem:[%s1561 + $0x60] sm:$0xf]
      %v4062 = vld [vmem:[%s1561 + $0x64] sm:$0xf]
      %v4063 = vld [vmem:[%s1561 + $0x6c] sm:$0xf]
      %v4064 = vld [vmem:[%s1561 + $0x70] sm:$0xf]
      %v4065 = vld [vmem:[%s1561 + $0x78] sm:$0xf]
      %v4066 = vld [vmem:[%s1561 + $0x7c] sm:$0xf]
      %v4067 = vld [vmem:[%s1561 + $0x84] sm:$0xf]
      %v4068 = vld [vmem:[%s1561 + $0x88] sm:$0xf]
      %v4069 = vld [vmem:[%s1561 + $0x90] sm:$0xf]
      %v4070 = vld [vmem:[%s1561 + $0x94] sm:$0xf]
      %v4071 = vld [vmem:[%s1561 + $0x9c] sm:$0xf]
      %v4072 = vld [vmem:[%s1561 + $0xa0] sm:$0xf]
      %v4073 = vld [vmem:[%s1561 + $0xa8] sm:$0xf]
      %v4074 = vld [vmem:[%s1561 + $0xac] sm:$0xf]
      %v4075 = vld [vmem:[%s1561 + $0xb4] sm:$0xf]
      %v4076 = vld [vmem:[%s1561 + $0xb8] sm:$0xf]
      %s4077 = scalar_lea.vmem %s2, 24
      %v4078 = vld [vmem:[%s4077] sm:$0xf]
      %v4079 = vld [vmem:[%s4077 + $0x4] sm:$0xf]
      %v4080 = vld [vmem:[%s4077 + $0x8] sm:$0xf]
      %v4113 = vunpack.c.l.b16 %v4045
      %v4114 = vunpack.c.l.b16 %v4046
      %v4115 = vunpack.c.l.b16 %v4047
      %v4116 = vunpack.c.l.b16 %v4048
      %v4117 = vunpack.c.l.b16 %v4049
      %v4118 = vunpack.c.l.b16 %v4050
      %v4119 = vunpack.c.l.b16 %v4051
      %v4120 = vunpack.c.l.b16 %v4052
      %v4121 = vunpack.c.l.b16 %v4053
      %v4122 = vunpack.c.l.b16 %v4054
      %v4123 = vunpack.c.l.b16 %v4055
      %v4124 = vunpack.c.l.b16 %v4056
      %v4125 = vunpack.c.l.b16 %v4057
      %v4126 = vunpack.c.l.b16 %v4058
      %v4127 = vunpack.c.l.b16 %v4059
      %v4128 = vunpack.c.l.b16 %v4060
      %v4129 = vunpack.c.l.b16 %v4061
      %v4130 = vunpack.c.l.b16 %v4062
      %v4131 = vunpack.c.l.b16 %v4063
      %v4132 = vunpack.c.l.b16 %v4064
      %v4133 = vunpack.c.l.b16 %v4065
      %v4134 = vunpack.c.l.b16 %v4066
      %v4135 = vunpack.c.l.b16 %v4067
      %v4136 = vunpack.c.l.b16 %v4068
      %v4137 = vunpack.c.l.b16 %v4069
      %v4138 = vunpack.c.l.b16 %v4070
      %v4139 = vunpack.c.l.b16 %v4071
      %v4140 = vunpack.c.l.b16 %v4072
      %v4141 = vunpack.c.l.b16 %v4073
      %v4142 = vunpack.c.l.b16 %v4074
      %v4143 = vunpack.c.l.b16 %v4075
      %v4144 = vunpack.c.l.b16 %v4076
      %v4145 = vpack.c.b16 %v4114, %v4113
      %v4146 = vpack.c.b16 %v4116, %v4115
      %v4147 = vpack.c.b16 %v4118, %v4117
      %v4148 = vpack.c.b16 %v4120, %v4119
      %v4149 = vpack.c.b16 %v4122, %v4121
      %v4150 = vpack.c.b16 %v4124, %v4123
      %v4151 = vpack.c.b16 %v4126, %v4125
      %v4152 = vpack.c.b16 %v4128, %v4127
      %v4153 = vpack.c.b16 %v4130, %v4129
      %v4154 = vpack.c.b16 %v4132, %v4131
      %v4155 = vpack.c.b16 %v4134, %v4133
      %v4156 = vpack.c.b16 %v4136, %v4135
      %v4157 = vpack.c.b16 %v4138, %v4137
      %v4158 = vpack.c.b16 %v4140, %v4139
      %v4159 = vpack.c.b16 %v4142, %v4141
      %v4160 = vpack.c.b16 %v4144, %v4143
      %v4164 = vunpack.c.l.b16 %v4078
      %v4165 = vunpack.c.l.b16 %v4079
      %v4166 = vunpack.c.l.b16 %v4080
      %v4167 = vpack.c.b16 %v4165, %v4164
      %v4168 = vpack.c.b16 %v4166, %v4166
      %v4171 = vsel %vm3531, %v4145, 0
      %v4174 = vsel %vm3531, %v4146, 0
      %v4177 = vsel %vm3531, %v4147, 0
      %v4180 = vsel %vm3531, %v4148, 0
      %v4183 = vsel %vm3531, %v4149, 0
      %v4186 = vsel %vm3531, %v4150, 0
      %v4189 = vsel %vm3531, %v4151, 0
      %v4192 = vsel %vm3531, %v4152, 0
      %v4195 = vsel %vm3531, %v4153, 0
      %v4198 = vsel %vm3531, %v4154, 0
      %v4201 = vsel %vm3531, %v4155, 0
      %v4204 = vsel %vm3531, %v4156, 0
      %v4207 = vsel %vm3531, %v4157, 0
      %v4210 = vsel %vm3531, %v4158, 0
      %v4213 = vsel %vm3531, %v4159, 0
      %v4216 = vsel %vm3531, %v4160, 0
      %v4219 = vsel %vm2787, %v4168, 0
      %4221 = vmatprep.subr.bf16.mxu0 0
      %4222 = vmatpush1.bf16.msra.mxu0 %v4167
      %4223 = vmatprep.subr.bf16.mxu0 0
      %4224 = vmatpush1.bf16.msra.mxu0 %v4219
      %4225 = vmatprep.subr.bf16.mxu0 0
      %4226 = vmatpush1.bf16.msra.mxu0 0
      %4227 = vmatprep.subr.bf16.mxu0 0
      %4228 = vmatpush1.bf16.msra.mxu0 0
      %4229 = vmatprep.subr.bf16.mxu0 0
      %4230 = vmatpush1.bf16.msra.mxu0 0
      %4231 = vmatprep.subr.bf16.mxu0 0
      %4232 = vmatpush1.bf16.msra.mxu0 0
      %4233 = vmatprep.subr.bf16.mxu0 0
      %4234 = vmatpush1.bf16.msra.mxu0 0
      %4235 = vmatprep.subr.bf16.mxu0 0
      %4236 = vmatpush1.bf16.msra.mxu0 0
      %4237 = vmatprep.subr.bf16.mxu0 0
      %4238 = vmatpush1.bf16.msra.mxu0 0
      %4239 = vmatprep.subr.bf16.mxu0 0
      %4240 = vmatpush1.bf16.msra.mxu0 0
      %4241 = vmatprep.subr.bf16.mxu0 0
      %4242 = vmatpush1.bf16.msra.mxu0 0
      %4243 = vmatprep.subr.bf16.mxu0 0
      %4244 = vmatpush1.bf16.msra.mxu0 0
      %4245 = vmatprep.subr.bf16.mxu0 0
      %4246 = vmatpush1.bf16.msra.mxu0 0
      %4247 = vmatprep.subr.bf16.mxu0 0
      %4248 = vmatpush1.bf16.msra.mxu0 0
      %4249 = vmatprep.subr.bf16.mxu0 0
      %4250 = vmatpush1.bf16.msra.mxu0 0
      %4251 = vmatprep.subr.bf16.mxu0 0
      %4252 = vmatpush1.bf16.msra.mxu0 0
      %4253 = vmatprep.mubr.bf16.mxu0 0
      %4254 = vmatmul.mubr.bf16.gmra.mrb[0].mxu0 %v4171
      %v4255 = vpop.f32.mrb[0].mxu0
      %v4256 = vadd.f32 0.0, %v4255
      %v4257 = vpop.f32.mrb[0].mxu0
      %v4258 = vpop.f32.mrb[0].mxu0
      %v4259 = vadd.f32 0.0, %v4258
      %v4260 = vpop.f32.mrb[0].mxu0
      %4261 = vmatprep.mubr.bf16.mxu0 0
      %4262 = vmatmul.mubr.bf16.gmra.mrb[0].mxu0 %v4174
      %v4263 = vpop.f32.mrb[0].mxu0
      %v4264 = vadd.f32 0.0, %v4263
      %v4265 = vpop.f32.mrb[0].mxu0
      %v4266 = vpop.f32.mrb[0].mxu0
      %v4267 = vadd.f32 0.0, %v4266
      %v4268 = vpop.f32.mrb[0].mxu0
      %4269 = vmatprep.mubr.bf16.mxu0 0
      %4270 = vmatmul.mubr.bf16.gmra.mrb[0].mxu0 %v4177
      %v4271 = vpop.f32.mrb[0].mxu0
      %v4272 = vadd.f32 0.0, %v4271
      %v4273 = vpop.f32.mrb[0].mxu0
      %v4274 = vpop.f32.mrb[0].mxu0
      %v4275 = vadd.f32 0.0, %v4274
      %v4276 = vpop.f32.mrb[0].mxu0
      %4277 = vmatprep.mubr.bf16.mxu0 0
      %4278 = vmatmul.mubr.bf16.gmra.mrb[0].mxu0 %v4180
      %v4279 = vpop.f32.mrb[0].mxu0
      %v4280 = vadd.f32 0.0, %v4279
      %v4281 = vpop.f32.mrb[0].mxu0
      %v4282 = vpop.f32.mrb[0].mxu0
      %v4283 = vadd.f32 0.0, %v4282
      %v4284 = vpop.f32.mrb[0].mxu0
      %4285 = vmatprep.mubr.bf16.mxu0 0
      %4286 = vmatmul.mubr.bf16.gmra.mrb[0].mxu0 %v4183
      %v4287 = vpop.f32.mrb[0].mxu0
      %v4288 = vadd.f32 0.0, %v4287
      %v4289 = vpop.f32.mrb[0].mxu0
      %v4290 = vpop.f32.mrb[0].mxu0
      %v4291 = vadd.f32 0.0, %v4290
      %v4292 = vpop.f32.mrb[0].mxu0
      %4293 = vmatprep.mubr.bf16.mxu0 0
      %4294 = vmatmul.mubr.bf16.gmra.mrb[0].mxu0 %v4186
      %v4295 = vpop.f32.mrb[0].mxu0
      %v4296 = vadd.f32 0.0, %v4295
      %v4297 = vpop.f32.mrb[0].mxu0
      %v4298 = vpop.f32.mrb[0].mxu0
      %v4299 = vadd.f32 0.0, %v4298
      %v4300 = vpop.f32.mrb[0].mxu0
      %4301 = vmatprep.mubr.bf16.mxu0 0
      %4302 = vmatmul.mubr.bf16.gmra.mrb[0].mxu0 %v4189
      %v4303 = vpop.f32.mrb[0].mxu0
      %v4304 = vadd.f32 0.0, %v4303
      %v4305 = vpop.f32.mrb[0].mxu0
      %v4306 = vpop.f32.mrb[0].mxu0
      %v4307 = vadd.f32 0.0, %v4306
      %v4308 = vpop.f32.mrb[0].mxu0
      %4309 = vmatprep.mubr.bf16.mxu0 0
      %4310 = vmatmul.mubr.bf16.gmra.mrb[0].mxu0 %v4192
      %v4311 = vpop.f32.mrb[0].mxu0
      %v4312 = vadd.f32 0.0, %v4311
      %v4313 = vpop.f32.mrb[0].mxu0
      %v4314 = vpop.f32.mrb[0].mxu0
      %v4315 = vadd.f32 0.0, %v4314
      %v4316 = vpop.f32.mrb[0].mxu0
      %4317 = vmatprep.mubr.bf16.mxu0 0
      %4318 = vmatmul.mubr.bf16.gmra.mrb[0].mxu0 %v4195
      %v4319 = vpop.f32.mrb[0].mxu0
      %v4320 = vadd.f32 0.0, %v4319
      %v4321 = vpop.f32.mrb[0].mxu0
      %v4322 = vpop.f32.mrb[0].mxu0
      %v4323 = vadd.f32 0.0, %v4322
      %v4324 = vpop.f32.mrb[0].mxu0
      %4325 = vmatprep.mubr.bf16.mxu0 0
      %4326 = vmatmul.mubr.bf16.gmra.mrb[0].mxu0 %v4198
      %v4327 = vpop.f32.mrb[0].mxu0
      %v4328 = vadd.f32 0.0, %v4327
      %v4329 = vpop.f32.mrb[0].mxu0
      %v4330 = vpop.f32.mrb[0].mxu0
      %v4331 = vadd.f32 0.0, %v4330
      %v4332 = vpop.f32.mrb[0].mxu0
      %4333 = vmatprep.mubr.bf16.mxu0 0
      %4334 = vmatmul.mubr.bf16.gmra.mrb[0].mxu0 %v4201
      %v4335 = vpop.f32.mrb[0].mxu0
      %v4336 = vadd.f32 0.0, %v4335
      %v4337 = vpop.f32.mrb[0].mxu0
      %v4338 = vpop.f32.mrb[0].mxu0
      %v4339 = vadd.f32 0.0, %v4338
      %v4340 = vpop.f32.mrb[0].mxu0
      %4341 = vmatprep.mubr.bf16.mxu0 0
      %4342 = vmatmul.mubr.bf16.gmra.mrb[0].mxu0 %v4204
      %v4343 = vpop.f32.mrb[0].mxu0
      %v4344 = vadd.f32 0.0, %v4343
      %v4345 = vpop.f32.mrb[0].mxu0
      %v4346 = vpop.f32.mrb[0].mxu0
      %v4347 = vadd.f32 0.0, %v4346
      %v4348 = vpop.f32.mrb[0].mxu0
      %4349 = vmatprep.mubr.bf16.mxu0 0
      %4350 = vmatmul.mubr.bf16.gmra.mrb[0].mxu0 %v4207
      %v4351 = vpop.f32.mrb[0].mxu0
      %v4352 = vadd.f32 0.0, %v4351
      %v4353 = vpop.f32.mrb[0].mxu0
      %v4354 = vpop.f32.mrb[0].mxu0
      %v4355 = vadd.f32 0.0, %v4354
      %v4356 = vpop.f32.mrb[0].mxu0
      %4357 = vmatprep.mubr.bf16.mxu0 0
      %4358 = vmatmul.mubr.bf16.gmra.mrb[0].mxu0 %v4210
      %v4359 = vpop.f32.mrb[0].mxu0
      %v4360 = vadd.f32 0.0, %v4359
      %v4361 = vpop.f32.mrb[0].mxu0
      %v4362 = vpop.f32.mrb[0].mxu0
      %v4363 = vadd.f32 0.0, %v4362
      %v4364 = vpop.f32.mrb[0].mxu0
      %4365 = vmatprep.mubr.bf16.mxu0 0
      %4366 = vmatmul.mubr.bf16.gmra.mrb[0].mxu0 %v4213
      %v4367 = vpop.f32.mrb[0].mxu0
      %v4368 = vadd.f32 0.0, %v4367
      %v4369 = vpop.f32.mrb[0].mxu0
      %v4370 = vpop.f32.mrb[0].mxu0
      %v4371 = vadd.f32 0.0, %v4370
      %v4372 = vpop.f32.mrb[0].mxu0
      %4373 = vmatprep.mubr.bf16.mxu0 0
      %4374 = vmatmul.mubr.bf16.gmra.mrb[0].mxu0 %v4216
      %v4375 = vpop.f32.mrb[0].mxu0
      %v4376 = vadd.f32 0.0, %v4375
      %v4377 = vpop.f32.mrb[0].mxu0
      %v4378 = vpop.f32.mrb[0].mxu0
      %v4379 = vadd.f32 0.0, %v4378
      %v4380 = vpop.f32.mrb[0].mxu0
      %4381 = vdwg.mxu0
      %v4382 = vadd.f32 %v3919, %v4256
      %v4383 = vadd.f32 %v3922, %v4259
      %v4384 = vadd.f32 %v3927, %v4264
      %v4385 = vadd.f32 %v3930, %v4267
      %v4386 = vadd.f32 %v3935, %v4272
      %v4387 = vadd.f32 %v3938, %v4275
      %v4388 = vadd.f32 %v3943, %v4280
      %v4389 = vadd.f32 %v3946, %v4283
      %v4390 = vadd.f32 %v3951, %v4288
      %v4391 = vadd.f32 %v3954, %v4291
      %v4392 = vadd.f32 %v3959, %v4296
      %v4393 = vadd.f32 %v3962, %v4299
      %v4394 = vadd.f32 %v3967, %v4304
      %v4395 = vadd.f32 %v3970, %v4307
      %v4396 = vadd.f32 %v3975, %v4312
      %v4397 = vadd.f32 %v3978, %v4315
      %v4398 = vadd.f32 %v3983, %v4320
      %v4399 = vadd.f32 %v3986, %v4323
      %v4400 = vadd.f32 %v3991, %v4328
      %v4401 = vadd.f32 %v3994, %v4331
      %v4402 = vadd.f32 %v3999, %v4336
      %v4403 = vadd.f32 %v4002, %v4339
      %v4404 = vadd.f32 %v4007, %v4344
      %v4405 = vadd.f32 %v4010, %v4347
      %v4406 = vadd.f32 %v4015, %v4352
      %v4407 = vadd.f32 %v4018, %v4355
      %v4408 = vadd.f32 %v4023, %v4360
      %v4409 = vadd.f32 %v4026, %v4363
      %v4410 = vadd.f32 %v4031, %v4368
      %v4411 = vadd.f32 %v4034, %v4371
      %v4412 = vadd.f32 %v4039, %v4376
      %v4413 = vadd.f32 %v4042, %v4379
      %v4414 = vld [vmem:[%s1561] sm:$0xf]
      %v4415 = vld [vmem:[%s1561 + $0x4] sm:$0xf]
      %v4416 = vld [vmem:[%s1561 + $0x8] sm:$0x1]
      %v4417 = vld [vmem:[%s1561 + $0xc] sm:$0xf]
      %v4418 = vld [vmem:[%s1561 + $0x10] sm:$0xf]
      %v4419 = vld [vmem:[%s1561 + $0x14] sm:$0x1]
      %v4420 = vld [vmem:[%s1561 + $0x18] sm:$0xf]
      %v4421 = vld [vmem:[%s1561 + $0x1c] sm:$0xf]
      %v4422 = vld [vmem:[%s1561 + $0x20] sm:$0x1]
      %v4423 = vld [vmem:[%s1561 + $0x24] sm:$0xf]
      %v4424 = vld [vmem:[%s1561 + $0x28] sm:$0xf]
      %v4425 = vld [vmem:[%s1561 + $0x2c] sm:$0x1]
      %v4426 = vld [vmem:[%s1561 + $0x30] sm:$0xf]
      %v4427 = vld [vmem:[%s1561 + $0x34] sm:$0xf]
      %v4428 = vld [vmem:[%s1561 + $0x38] sm:$0x1]
      %v4429 = vld [vmem:[%s1561 + $0x3c] sm:$0xf]
      %v4430 = vld [vmem:[%s1561 + $0x40] sm:$0xf]
      %v4431 = vld [vmem:[%s1561 + $0x44] sm:$0x1]
      %v4432 = vld [vmem:[%s1561 + $0x48] sm:$0xf]
      %v4433 = vld [vmem:[%s1561 + $0x4c] sm:$0xf]
      %v4434 = vld [vmem:[%s1561 + $0x50] sm:$0x1]
      %v4435 = vld [vmem:[%s1561 + $0x54] sm:$0xf]
      %v4436 = vld [vmem:[%s1561 + $0x58] sm:$0xf]
      %v4437 = vld [vmem:[%s1561 + $0x5c] sm:$0x1]
      %v4438 = vld [vmem:[%s1561 + $0x60] sm:$0xf]
      %v4439 = vld [vmem:[%s1561 + $0x64] sm:$0xf]
      %v4440 = vld [vmem:[%s1561 + $0x68] sm:$0x1]
      %v4441 = vld [vmem:[%s1561 + $0x6c] sm:$0xf]
      %v4442 = vld [vmem:[%s1561 + $0x70] sm:$0xf]
      %v4443 = vld [vmem:[%s1561 + $0x74] sm:$0x1]
      %v4444 = vld [vmem:[%s1561 + $0x78] sm:$0xf]
      %v4445 = vld [vmem:[%s1561 + $0x7c] sm:$0xf]
      %v4446 = vld [vmem:[%s1561 + $0x80] sm:$0x1]
      %v4447 = vld [vmem:[%s1561 + $0x84] sm:$0xf]
      %v4448 = vld [vmem:[%s1561 + $0x88] sm:$0xf]
      %v4449 = vld [vmem:[%s1561 + $0x8c] sm:$0x1]
      %v4450 = vld [vmem:[%s1561 + $0x90] sm:$0xf]
      %v4451 = vld [vmem:[%s1561 + $0x94] sm:$0xf]
      %v4452 = vld [vmem:[%s1561 + $0x98] sm:$0x1]
      %v4453 = vld [vmem:[%s1561 + $0x9c] sm:$0xf]
      %v4454 = vld [vmem:[%s1561 + $0xa0] sm:$0xf]
      %v4455 = vld [vmem:[%s1561 + $0xa4] sm:$0x1]
      %v4456 = vld [vmem:[%s1561 + $0xa8] sm:$0xf]
      %v4457 = vld [vmem:[%s1561 + $0xac] sm:$0xf]
      %v4458 = vld [vmem:[%s1561 + $0xb0] sm:$0x1]
      %v4459 = vld [vmem:[%s1561 + $0xb4] sm:$0xf]
      %v4460 = vld [vmem:[%s1561 + $0xb8] sm:$0xf]
      %v4461 = vld [vmem:[%s1561 + $0xbc] sm:$0x1]
      %v4463 = vshrl.u32 %v4414, 16
      %v4465 = vrot.slane %v4463, 4
      %v4466 = vshll.u32 %v4414, 16
      %v4468 = vrot.slane %v4466, 5
      %v4469 = vor.u32 %v4465, %v4468
      %v4470 = vrot.slane %v4469, 4
      %v4472 = vshll.u32 %v4415, 16
      %v4474 = vrot.slane %v4472, 5
      %v4475 = vsel %vm620, %v4470, %v4474
      %v4476 = vshrl.u32 %v4415, 16
      %v4478 = vrot.slane %v4476, 4
      %v4479 = vor.u32 %v4478, %v4474
      %v4480 = vrot.slane %v4479, 4
      %v4482 = vshll.u32 %v4416, 16
      %v4484 = vrot.slane %v4482, 5
      %v4485 = vsel %vm620, %v4480, %v4484
      %v4487 = vshrl.u32 %v4417, 16
      %v4489 = vrot.slane %v4487, 4
      %v4490 = vshll.u32 %v4417, 16
      %v4492 = vrot.slane %v4490, 5
      %v4493 = vor.u32 %v4489, %v4492
      %v4494 = vrot.slane %v4493, 4
      %v4496 = vshll.u32 %v4418, 16
      %v4498 = vrot.slane %v4496, 5
      %v4499 = vsel %vm620, %v4494, %v4498
      %v4500 = vshrl.u32 %v4418, 16
      %v4502 = vrot.slane %v4500, 4
      %v4503 = vor.u32 %v4502, %v4498
      %v4504 = vrot.slane %v4503, 4
      %v4506 = vshll.u32 %v4419, 16
      %v4508 = vrot.slane %v4506, 5
      %v4509 = vsel %vm620, %v4504, %v4508
      %v4511 = vshrl.u32 %v4420, 16
      %v4513 = vrot.slane %v4511, 4
      %v4514 = vshll.u32 %v4420, 16
      %v4516 = vrot.slane %v4514, 5
      %v4517 = vor.u32 %v4513, %v4516
      %v4518 = vrot.slane %v4517, 4
      %v4520 = vshll.u32 %v4421, 16
      %v4522 = vrot.slane %v4520, 5
      %v4523 = vsel %vm620, %v4518, %v4522
      %v4524 = vshrl.u32 %v4421, 16
      %v4526 = vrot.slane %v4524, 4
      %v4527 = vor.u32 %v4526, %v4522
      %v4528 = vrot.slane %v4527, 4
      %v4530 = vshll.u32 %v4422, 16
      %v4532 = vrot.slane %v4530, 5
      %v4533 = vsel %vm620, %v4528, %v4532
      %v4535 = vshrl.u32 %v4423, 16
      %v4537 = vrot.slane %v4535, 4
      %v4538 = vshll.u32 %v4423, 16
      %v4540 = vrot.slane %v4538, 5
      %v4541 = vor.u32 %v4537, %v4540
      %v4542 = vrot.slane %v4541, 4
      %v4544 = vshll.u32 %v4424, 16
      %v4546 = vrot.slane %v4544, 5
      %v4547 = vsel %vm620, %v4542, %v4546
      %v4548 = vshrl.u32 %v4424, 16
      %v4550 = vrot.slane %v4548, 4
      %v4551 = vor.u32 %v4550, %v4546
      %v4552 = vrot.slane %v4551, 4
      %v4554 = vshll.u32 %v4425, 16
      %v4556 = vrot.slane %v4554, 5
      %v4557 = vsel %vm620, %v4552, %v4556
      %v4559 = vshrl.u32 %v4426, 16
      %v4561 = vrot.slane %v4559, 4
      %v4562 = vshll.u32 %v4426, 16
      %v4564 = vrot.slane %v4562, 5
      %v4565 = vor.u32 %v4561, %v4564
      %v4566 = vrot.slane %v4565, 4
      %v4568 = vshll.u32 %v4427, 16
      %v4570 = vrot.slane %v4568, 5
      %v4571 = vsel %vm620, %v4566, %v4570
      %v4572 = vshrl.u32 %v4427, 16
      %v4574 = vrot.slane %v4572, 4
      %v4575 = vor.u32 %v4574, %v4570
      %v4576 = vrot.slane %v4575, 4
      %v4578 = vshll.u32 %v4428, 16
      %v4580 = vrot.slane %v4578, 5
      %v4581 = vsel %vm620, %v4576, %v4580
      %v4583 = vshrl.u32 %v4429, 16
      %v4585 = vrot.slane %v4583, 4
      %v4586 = vshll.u32 %v4429, 16
      %v4588 = vrot.slane %v4586, 5
      %v4589 = vor.u32 %v4585, %v4588
      %v4590 = vrot.slane %v4589, 4
      %v4592 = vshll.u32 %v4430, 16
      %v4594 = vrot.slane %v4592, 5
      %v4595 = vsel %vm620, %v4590, %v4594
      %v4596 = vshrl.u32 %v4430, 16
      %v4598 = vrot.slane %v4596, 4
      %v4599 = vor.u32 %v4598, %v4594
      %v4600 = vrot.slane %v4599, 4
      %v4602 = vshll.u32 %v4431, 16
      %v4604 = vrot.slane %v4602, 5
      %v4605 = vsel %vm620, %v4600, %v4604
      %v4607 = vshrl.u32 %v4432, 16
      %v4609 = vrot.slane %v4607, 4
      %v4610 = vshll.u32 %v4432, 16
      %v4612 = vrot.slane %v4610, 5
      %v4613 = vor.u32 %v4609, %v4612
      %v4614 = vrot.slane %v4613, 4
      %v4616 = vshll.u32 %v4433, 16
      %v4618 = vrot.slane %v4616, 5
      %v4619 = vsel %vm620, %v4614, %v4618
      %v4620 = vshrl.u32 %v4433, 16
      %v4622 = vrot.slane %v4620, 4
      %v4623 = vor.u32 %v4622, %v4618
      %v4624 = vrot.slane %v4623, 4
      %v4626 = vshll.u32 %v4434, 16
      %v4628 = vrot.slane %v4626, 5
      %v4629 = vsel %vm620, %v4624, %v4628
      %v4631 = vshrl.u32 %v4435, 16
      %v4633 = vrot.slane %v4631, 4
      %v4634 = vshll.u32 %v4435, 16
      %v4636 = vrot.slane %v4634, 5
      %v4637 = vor.u32 %v4633, %v4636
      %v4638 = vrot.slane %v4637, 4
      %v4640 = vshll.u32 %v4436, 16
      %v4642 = vrot.slane %v4640, 5
      %v4643 = vsel %vm620, %v4638, %v4642
      %v4644 = vshrl.u32 %v4436, 16
      %v4646 = vrot.slane %v4644, 4
      %v4647 = vor.u32 %v4646, %v4642
      %v4648 = vrot.slane %v4647, 4
      %v4650 = vshll.u32 %v4437, 16
      %v4652 = vrot.slane %v4650, 5
      %v4653 = vsel %vm620, %v4648, %v4652
      %v4655 = vshrl.u32 %v4438, 16
      %v4657 = vrot.slane %v4655, 4
      %v4658 = vshll.u32 %v4438, 16
      %v4660 = vrot.slane %v4658, 5
      %v4661 = vor.u32 %v4657, %v4660
      %v4662 = vrot.slane %v4661, 4
      %v4664 = vshll.u32 %v4439, 16
      %v4666 = vrot.slane %v4664, 5
      %v4667 = vsel %vm620, %v4662, %v4666
      %v4668 = vshrl.u32 %v4439, 16
      %v4670 = vrot.slane %v4668, 4
      %v4671 = vor.u32 %v4670, %v4666
      %v4672 = vrot.slane %v4671, 4
      %v4674 = vshll.u32 %v4440, 16
      %v4676 = vrot.slane %v4674, 5
      %v4677 = vsel %vm620, %v4672, %v4676
      %v4679 = vshrl.u32 %v4441, 16
      %v4681 = vrot.slane %v4679, 4
      %v4682 = vshll.u32 %v4441, 16
      %v4684 = vrot.slane %v4682, 5
      %v4685 = vor.u32 %v4681, %v4684
      %v4686 = vrot.slane %v4685, 4
      %v4688 = vshll.u32 %v4442, 16
      %v4690 = vrot.slane %v4688, 5
      %v4691 = vsel %vm620, %v4686, %v4690
      %v4692 = vshrl.u32 %v4442, 16
      %v4694 = vrot.slane %v4692, 4
      %v4695 = vor.u32 %v4694, %v4690
      %v4696 = vrot.slane %v4695, 4
      %v4698 = vshll.u32 %v4443, 16
      %v4700 = vrot.slane %v4698, 5
      %v4701 = vsel %vm620, %v4696, %v4700
      %v4703 = vshrl.u32 %v4444, 16
      %v4705 = vrot.slane %v4703, 4
      %v4706 = vshll.u32 %v4444, 16
      %v4708 = vrot.slane %v4706, 5
      %v4709 = vor.u32 %v4705, %v4708
      %v4710 = vrot.slane %v4709, 4
      %v4712 = vshll.u32 %v4445, 16
      %v4714 = vrot.slane %v4712, 5
      %v4715 = vsel %vm620, %v4710, %v4714
      %v4716 = vshrl.u32 %v4445, 16
      %v4718 = vrot.slane %v4716, 4
      %v4719 = vor.u32 %v4718, %v4714
      %v4720 = vrot.slane %v4719, 4
      %v4722 = vshll.u32 %v4446, 16
      %v4724 = vrot.slane %v4722, 5
      %v4725 = vsel %vm620, %v4720, %v4724
      %v4727 = vshrl.u32 %v4447, 16
      %v4729 = vrot.slane %v4727, 4
      %v4730 = vshll.u32 %v4447, 16
      %v4732 = vrot.slane %v4730, 5
      %v4733 = vor.u32 %v4729, %v4732
      %v4734 = vrot.slane %v4733, 4
      %v4736 = vshll.u32 %v4448, 16
      %v4738 = vrot.slane %v4736, 5
      %v4739 = vsel %vm620, %v4734, %v4738
      %v4740 = vshrl.u32 %v4448, 16
      %v4742 = vrot.slane %v4740, 4
      %v4743 = vor.u32 %v4742, %v4738
      %v4744 = vrot.slane %v4743, 4
      %v4746 = vshll.u32 %v4449, 16
      %v4748 = vrot.slane %v4746, 5
      %v4749 = vsel %vm620, %v4744, %v4748
      %v4751 = vshrl.u32 %v4450, 16
      %v4753 = vrot.slane %v4751, 4
      %v4754 = vshll.u32 %v4450, 16
      %v4756 = vrot.slane %v4754, 5
      %v4757 = vor.u32 %v4753, %v4756
      %v4758 = vrot.slane %v4757, 4
      %v4760 = vshll.u32 %v4451, 16
      %v4762 = vrot.slane %v4760, 5
      %v4763 = vsel %vm620, %v4758, %v4762
      %v4764 = vshrl.u32 %v4451, 16
      %v4766 = vrot.slane %v4764, 4
      %v4767 = vor.u32 %v4766, %v4762
      %v4768 = vrot.slane %v4767, 4
      %v4770 = vshll.u32 %v4452, 16
      %v4772 = vrot.slane %v4770, 5
      %v4773 = vsel %vm620, %v4768, %v4772
      %v4775 = vshrl.u32 %v4453, 16
      %v4777 = vrot.slane %v4775, 4
      %v4778 = vshll.u32 %v4453, 16
      %v4780 = vrot.slane %v4778, 5
      %v4781 = vor.u32 %v4777, %v4780
      %v4782 = vrot.slane %v4781, 4
      %v4784 = vshll.u32 %v4454, 16
      %v4786 = vrot.slane %v4784, 5
      %v4787 = vsel %vm620, %v4782, %v4786
      %v4788 = vshrl.u32 %v4454, 16
      %v4790 = vrot.slane %v4788, 4
      %v4791 = vor.u32 %v4790, %v4786
      %v4792 = vrot.slane %v4791, 4
      %v4794 = vshll.u32 %v4455, 16
      %v4796 = vrot.slane %v4794, 5
      %v4797 = vsel %vm620, %v4792, %v4796
      %v4799 = vshrl.u32 %v4456, 16
      %v4801 = vrot.slane %v4799, 4
      %v4802 = vshll.u32 %v4456, 16
      %v4804 = vrot.slane %v4802, 5
      %v4805 = vor.u32 %v4801, %v4804
      %v4806 = vrot.slane %v4805, 4
      %v4808 = vshll.u32 %v4457, 16
      %v4810 = vrot.slane %v4808, 5
      %v4811 = vsel %vm620, %v4806, %v4810
      %v4812 = vshrl.u32 %v4457, 16
      %v4814 = vrot.slane %v4812, 4
      %v4815 = vor.u32 %v4814, %v4810
      %v4816 = vrot.slane %v4815, 4
      %v4818 = vshll.u32 %v4458, 16
      %v4820 = vrot.slane %v4818, 5
      %v4821 = vsel %vm620, %v4816, %v4820
      %v4823 = vshrl.u32 %v4459, 16
      %v4825 = vrot.slane %v4823, 4
      %v4826 = vshll.u32 %v4459, 16
      %v4828 = vrot.slane %v4826, 5
      %v4829 = vor.u32 %v4825, %v4828
      %v4830 = vrot.slane %v4829, 4
      %v4832 = vshll.u32 %v4460, 16
      %v4834 = vrot.slane %v4832, 5
      %v4835 = vsel %vm620, %v4830, %v4834
      %v4836 = vshrl.u32 %v4460, 16
      %v4838 = vrot.slane %v4836, 4
      %v4839 = vor.u32 %v4838, %v4834
      %v4840 = vrot.slane %v4839, 4
      %v4842 = vshll.u32 %v4461, 16
      %v4844 = vrot.slane %v4842, 5
      %v4845 = vsel %vm620, %v4840, %v4844
      %s4846 = scalar_lea.vmem %s2, 36
      %v4847 = vld [vmem:[%s4846] sm:$0xf]
      %v4848 = vld [vmem:[%s4846 + $0x4] sm:$0xf]
      %v4849 = vld [vmem:[%s4846 + $0x8] sm:$0xf]
      %v4850 = vunpack.c.l.b16 %v4475
      %v4851 = vunpack.c.l.b16 %v4485
      %v4852 = vunpack.c.l.b16 %v4499
      %v4853 = vunpack.c.l.b16 %v4509
      %v4854 = vunpack.c.l.b16 %v4523
      %v4855 = vunpack.c.l.b16 %v4533
      %v4856 = vunpack.c.l.b16 %v4547
      %v4857 = vunpack.c.l.b16 %v4557
      %v4858 = vunpack.c.l.b16 %v4571
      %v4859 = vunpack.c.l.b16 %v4581
      %v4860 = vunpack.c.l.b16 %v4595
      %v4861 = vunpack.c.l.b16 %v4605
      %v4862 = vunpack.c.l.b16 %v4619
      %v4863 = vunpack.c.l.b16 %v4629
      %v4864 = vunpack.c.l.b16 %v4643
      %v4865 = vunpack.c.l.b16 %v4653
      %v4866 = vunpack.c.l.b16 %v4667
      %v4867 = vunpack.c.l.b16 %v4677
      %v4868 = vunpack.c.l.b16 %v4691
      %v4869 = vunpack.c.l.b16 %v4701
      %v4870 = vunpack.c.l.b16 %v4715
      %v4871 = vunpack.c.l.b16 %v4725
      %v4872 = vunpack.c.l.b16 %v4739
      %v4873 = vunpack.c.l.b16 %v4749
      %v4874 = vunpack.c.l.b16 %v4763
      %v4875 = vunpack.c.l.b16 %v4773
      %v4876 = vunpack.c.l.b16 %v4787
      %v4877 = vunpack.c.l.b16 %v4797
      %v4878 = vunpack.c.l.b16 %v4811
      %v4879 = vunpack.c.l.b16 %v4821
      %v4880 = vunpack.c.l.b16 %v4835
      %v4881 = vunpack.c.l.b16 %v4845
      %v4882 = vpack.c.b16 %v4851, %v4850
      %v4883 = vpack.c.b16 %v4853, %v4852
      %v4884 = vpack.c.b16 %v4855, %v4854
      %v4885 = vpack.c.b16 %v4857, %v4856
      %v4886 = vpack.c.b16 %v4859, %v4858
      %v4887 = vpack.c.b16 %v4861, %v4860
      %v4888 = vpack.c.b16 %v4863, %v4862
      %v4889 = vpack.c.b16 %v4865, %v4864
      %v4890 = vpack.c.b16 %v4867, %v4866
      %v4891 = vpack.c.b16 %v4869, %v4868
      %v4892 = vpack.c.b16 %v4871, %v4870
      %v4893 = vpack.c.b16 %v4873, %v4872
      %v4894 = vpack.c.b16 %v4875, %v4874
      %v4895 = vpack.c.b16 %v4877, %v4876
      %v4896 = vpack.c.b16 %v4879, %v4878
      %v4897 = vpack.c.b16 %v4881, %v4880
      %v4901 = vunpack.c.l.b16 %v4847
      %v4902 = vunpack.c.l.b16 %v4848
      %v4903 = vunpack.c.l.b16 %v4849
      %v4904 = vpack.c.b16 %v4902, %v4901
      %v4905 = vpack.c.b16 %v4903, %v4903
      %v4908 = vsel %vm3531, %v4882, 0
      %v4911 = vsel %vm3531, %v4883, 0
      %v4914 = vsel %vm3531, %v4884, 0
      %v4917 = vsel %vm3531, %v4885, 0
      %v4920 = vsel %vm3531, %v4886, 0
      %v4923 = vsel %vm3531, %v4887, 0
      %v4926 = vsel %vm3531, %v4888, 0
      %v4929 = vsel %vm3531, %v4889, 0
      %v4932 = vsel %vm3531, %v4890, 0
      %v4935 = vsel %vm3531, %v4891, 0
      %v4938 = vsel %vm3531, %v4892, 0
      %v4941 = vsel %vm3531, %v4893, 0
      %v4944 = vsel %vm3531, %v4894, 0
      %v4947 = vsel %vm3531, %v4895, 0
      %v4950 = vsel %vm3531, %v4896, 0
      %v4953 = vsel %vm3531, %v4897, 0
      %v4956 = vsel %vm2787, %v4905, 0
      %4958 = vmatprep.subr.bf16.mxu0 0
      %4959 = vmatpush1.bf16.msra.mxu0 %v4904
      %4960 = vmatprep.subr.bf16.mxu0 0
      %4961 = vmatpush1.bf16.msra.mxu0 %v4956
      %4962 = vmatprep.subr.bf16.mxu0 0
      %4963 = vmatpush1.bf16.msra.mxu0 0
      %4964 = vmatprep.subr.bf16.mxu0 0
      %4965 = vmatpush1.bf16.msra.mxu0 0
      %4966 = vmatprep.subr.bf16.mxu0 0
      %4967 = vmatpush1.bf16.msra.mxu0 0
      %4968 = vmatprep.subr.bf16.mxu0 0
      %4969 = vmatpush1.bf16.msra.mxu0 0
      %4970 = vmatprep.subr.bf16.mxu0 0
      %4971 = vmatpush1.bf16.msra.mxu0 0
      %4972 = vmatprep.subr.bf16.mxu0 0
      %4973 = vmatpush1.bf16.msra.mxu0 0
      %4974 = vmatprep.subr.bf16.mxu0 0
      %4975 = vmatpush1.bf16.msra.mxu0 0
      %4976 = vmatprep.subr.bf16.mxu0 0
      %4977 = vmatpush1.bf16.msra.mxu0 0
      %4978 = vmatprep.subr.bf16.mxu0 0
      %4979 = vmatpush1.bf16.msra.mxu0 0
      %4980 = vmatprep.subr.bf16.mxu0 0
      %4981 = vmatpush1.bf16.msra.mxu0 0
      %4982 = vmatprep.subr.bf16.mxu0 0
      %4983 = vmatpush1.bf16.msra.mxu0 0
      %4984 = vmatprep.subr.bf16.mxu0 0
      %4985 = vmatpush1.bf16.msra.mxu0 0
      %4986 = vmatprep.subr.bf16.mxu0 0
      %4987 = vmatpush1.bf16.msra.mxu0 0
      %4988 = vmatprep.subr.bf16.mxu0 0
      %4989 = vmatpush1.bf16.msra.mxu0 0
      %4990 = vmatprep.mubr.bf16.mxu0 0
      %4991 = vmatmul.mubr.bf16.gmra.mrb[0].mxu0 %v4908
      %v4992 = vpop.f32.mrb[0].mxu0
      %v4993 = vadd.f32 0.0, %v4992
      %v4994 = vpop.f32.mrb[0].mxu0
      %v4995 = vpop.f32.mrb[0].mxu0
      %v4996 = vadd.f32 0.0, %v4995
      %v4997 = vpop.f32.mrb[0].mxu0
      %4998 = vmatprep.mubr.bf16.mxu0 0
      %4999 = vmatmul.mubr.bf16.gmra.mrb[0].mxu0 %v4911
      %v5000 = vpop.f32.mrb[0].mxu0
      %v5001 = vadd.f32 0.0, %v5000
      %v5002 = vpop.f32.mrb[0].mxu0
      %v5003 = vpop.f32.mrb[0].mxu0
      %v5004 = vadd.f32 0.0, %v5003
      %v5005 = vpop.f32.mrb[0].mxu0
      %5006 = vmatprep.mubr.bf16.mxu0 0
      %5007 = vmatmul.mubr.bf16.gmra.mrb[0].mxu0 %v4914
      %v5008 = vpop.f32.mrb[0].mxu0
      %v5009 = vadd.f32 0.0, %v5008
      %v5010 = vpop.f32.mrb[0].mxu0
      %v5011 = vpop.f32.mrb[0].mxu0
      %v5012 = vadd.f32 0.0, %v5011
      %v5013 = vpop.f32.mrb[0].mxu0
      %5014 = vmatprep.mubr.bf16.mxu0 0
      %5015 = vmatmul.mubr.bf16.gmra.mrb[0].mxu0 %v4917
      %v5016 = vpop.f32.mrb[0].mxu0
      %v5017 = vadd.f32 0.0, %v5016
      %v5018 = vpop.f32.mrb[0].mxu0
      %v5019 = vpop.f32.mrb[0].mxu0
      %v5020 = vadd.f32 0.0, %v5019
      %v5021 = vpop.f32.mrb[0].mxu0
      %5022 = vmatprep.mubr.bf16.mxu0 0
      %5023 = vmatmul.mubr.bf16.gmra.mrb[0].mxu0 %v4920
      %v5024 = vpop.f32.mrb[0].mxu0
      %v5025 = vadd.f32 0.0, %v5024
      %v5026 = vpop.f32.mrb[0].mxu0
      %v5027 = vpop.f32.mrb[0].mxu0
      %v5028 = vadd.f32 0.0, %v5027
      %v5029 = vpop.f32.mrb[0].mxu0
      %5030 = vmatprep.mubr.bf16.mxu0 0
      %5031 = vmatmul.mubr.bf16.gmra.mrb[0].mxu0 %v4923
      %v5032 = vpop.f32.mrb[0].mxu0
      %v5033 = vadd.f32 0.0, %v5032
      %v5034 = vpop.f32.mrb[0].mxu0
      %v5035 = vpop.f32.mrb[0].mxu0
      %v5036 = vadd.f32 0.0, %v5035
      %v5037 = vpop.f32.mrb[0].mxu0
      %5038 = vmatprep.mubr.bf16.mxu0 0
      %5039 = vmatmul.mubr.bf16.gmra.mrb[0].mxu0 %v4926
      %v5040 = vpop.f32.mrb[0].mxu0
      %v5041 = vadd.f32 0.0, %v5040
      %v5042 = vpop.f32.mrb[0].mxu0
      %v5043 = vpop.f32.mrb[0].mxu0
      %v5044 = vadd.f32 0.0, %v5043
      %v5045 = vpop.f32.mrb[0].mxu0
      %5046 = vmatprep.mubr.bf16.mxu0 0
      %5047 = vmatmul.mubr.bf16.gmra.mrb[0].mxu0 %v4929
      %v5048 = vpop.f32.mrb[0].mxu0
      %v5049 = vadd.f32 0.0, %v5048
      %v5050 = vpop.f32.mrb[0].mxu0
      %v5051 = vpop.f32.mrb[0].mxu0
      %v5052 = vadd.f32 0.0, %v5051
      %v5053 = vpop.f32.mrb[0].mxu0
      %5054 = vmatprep.mubr.bf16.mxu0 0
      %5055 = vmatmul.mubr.bf16.gmra.mrb[0].mxu0 %v4932
      %v5056 = vpop.f32.mrb[0].mxu0
      %v5057 = vadd.f32 0.0, %v5056
      %v5058 = vpop.f32.mrb[0].mxu0
      %v5059 = vpop.f32.mrb[0].mxu0
      %v5060 = vadd.f32 0.0, %v5059
      %v5061 = vpop.f32.mrb[0].mxu0
      %5062 = vmatprep.mubr.bf16.mxu0 0
      %5063 = vmatmul.mubr.bf16.gmra.mrb[0].mxu0 %v4935
      %v5064 = vpop.f32.mrb[0].mxu0
      %v5065 = vadd.f32 0.0, %v5064
      %v5066 = vpop.f32.mrb[0].mxu0
      %v5067 = vpop.f32.mrb[0].mxu0
      %v5068 = vadd.f32 0.0, %v5067
      %v5069 = vpop.f32.mrb[0].mxu0
      %5070 = vmatprep.mubr.bf16.mxu0 0
      %5071 = vmatmul.mubr.bf16.gmra.mrb[0].mxu0 %v4938
      %v5072 = vpop.f32.mrb[0].mxu0
      %v5073 = vadd.f32 0.0, %v5072
      %v5074 = vpop.f32.mrb[0].mxu0
      %v5075 = vpop.f32.mrb[0].mxu0
      %v5076 = vadd.f32 0.0, %v5075
      %v5077 = vpop.f32.mrb[0].mxu0
      %5078 = vmatprep.mubr.bf16.mxu0 0
      %5079 = vmatmul.mubr.bf16.gmra.mrb[0].mxu0 %v4941
      %v5080 = vpop.f32.mrb[0].mxu0
      %v5081 = vadd.f32 0.0, %v5080
      %v5082 = vpop.f32.mrb[0].mxu0
      %v5083 = vpop.f32.mrb[0].mxu0
      %v5084 = vadd.f32 0.0, %v5083
      %v5085 = vpop.f32.mrb[0].mxu0
      %5086 = vmatprep.mubr.bf16.mxu0 0
      %5087 = vmatmul.mubr.bf16.gmra.mrb[0].mxu0 %v4944
      %v5088 = vpop.f32.mrb[0].mxu0
      %v5089 = vadd.f32 0.0, %v5088
      %v5090 = vpop.f32.mrb[0].mxu0
      %v5091 = vpop.f32.mrb[0].mxu0
      %v5092 = vadd.f32 0.0, %v5091
      %v5093 = vpop.f32.mrb[0].mxu0
      %5094 = vmatprep.mubr.bf16.mxu0 0
      %5095 = vmatmul.mubr.bf16.gmra.mrb[0].mxu0 %v4947
      %v5096 = vpop.f32.mrb[0].mxu0
      %v5097 = vadd.f32 0.0, %v5096
      %v5098 = vpop.f32.mrb[0].mxu0
      %v5099 = vpop.f32.mrb[0].mxu0
      %v5100 = vadd.f32 0.0, %v5099
      %v5101 = vpop.f32.mrb[0].mxu0
      %5102 = vmatprep.mubr.bf16.mxu0 0
      %5103 = vmatmul.mubr.bf16.gmra.mrb[0].mxu0 %v4950
      %v5104 = vpop.f32.mrb[0].mxu0
      %v5105 = vadd.f32 0.0, %v5104
      %v5106 = vpop.f32.mrb[0].mxu0
      %v5107 = vpop.f32.mrb[0].mxu0
      %v5108 = vadd.f32 0.0, %v5107
      %v5109 = vpop.f32.mrb[0].mxu0
      %5110 = vmatprep.mubr.bf16.mxu0 0
      %5111 = vmatmul.mubr.bf16.gmra.mrb[0].mxu0 %v4953
      %v5112 = vpop.f32.mrb[0].mxu0
      %v5113 = vadd.f32 0.0, %v5112
      %v5114 = vpop.f32.mrb[0].mxu0
      %v5115 = vpop.f32.mrb[0].mxu0
      %v5116 = vadd.f32 0.0, %v5115
      %v5117 = vpop.f32.mrb[0].mxu0
      %5118 = vdwg.mxu0
      %v5119 = vadd.f32 %v4382, %v4993
      %v5120 = vadd.f32 %v4383, %v4996
      %v5121 = vadd.f32 %v4384, %v5001
      %v5122 = vadd.f32 %v4385, %v5004
      %v5123 = vadd.f32 %v4386, %v5009
      %v5124 = vadd.f32 %v4387, %v5012
      %v5125 = vadd.f32 %v4388, %v5017
      %v5126 = vadd.f32 %v4389, %v5020
      %v5127 = vadd.f32 %v4390, %v5025
      %v5128 = vadd.f32 %v4391, %v5028
      %v5129 = vadd.f32 %v4392, %v5033
      %v5130 = vadd.f32 %v4393, %v5036
      %v5131 = vadd.f32 %v4394, %v5041
      %v5132 = vadd.f32 %v4395, %v5044
      %v5133 = vadd.f32 %v4396, %v5049
      %v5134 = vadd.f32 %v4397, %v5052
      %v5135 = vadd.f32 %v4398, %v5057
      %v5136 = vadd.f32 %v4399, %v5060
      %v5137 = vadd.f32 %v4400, %v5065
      %v5138 = vadd.f32 %v4401, %v5068
      %v5139 = vadd.f32 %v4402, %v5073
      %v5140 = vadd.f32 %v4403, %v5076
      %v5141 = vadd.f32 %v4404, %v5081
      %v5142 = vadd.f32 %v4405, %v5084
      %v5143 = vadd.f32 %v4406, %v5089
      %v5144 = vadd.f32 %v4407, %v5092
      %v5145 = vadd.f32 %v4408, %v5097
      %v5146 = vadd.f32 %v4409, %v5100
      %v5147 = vadd.f32 %v4410, %v5105
      %v5148 = vadd.f32 %v4411, %v5108
      %v5149 = vadd.f32 %v4412, %v5113
      %v5150 = vadd.f32 %v4413, %v5116
      %v5151 = vld [vmem:[%s5] sm:$0x1]
      %v5153 = vlaneseq
      %v5154 = vshrl.u32 %v5153, 7
      %v5155 = vsub.s32 0, %v5154
      %v5156 = vrot.slane %v5151, %v5155
      %v5158 = vadd.f32 %v5119, %v5156
      %v5159 = vadd.f32 %v5120, %v5156
      %v5160 = vadd.f32 %v5121, %v5156
      %v5161 = vadd.f32 %v5122, %v5156
      %v5162 = vadd.f32 %v5123, %v5156
      %v5163 = vadd.f32 %v5124, %v5156
      %v5164 = vadd.f32 %v5125, %v5156
      %v5165 = vadd.f32 %v5126, %v5156
      %v5166 = vadd.f32 %v5127, %v5156
      %v5167 = vadd.f32 %v5128, %v5156
      %v5168 = vadd.f32 %v5129, %v5156
      %v5169 = vadd.f32 %v5130, %v5156
      %v5170 = vadd.f32 %v5131, %v5156
      %v5171 = vadd.f32 %v5132, %v5156
      %v5172 = vadd.f32 %v5133, %v5156
      %v5173 = vadd.f32 %v5134, %v5156
      %v5174 = vadd.f32 %v5135, %v5156
      %v5175 = vadd.f32 %v5136, %v5156
      %v5176 = vadd.f32 %v5137, %v5156
      %v5177 = vadd.f32 %v5138, %v5156
      %v5178 = vadd.f32 %v5139, %v5156
      %v5179 = vadd.f32 %v5140, %v5156
      %v5180 = vadd.f32 %v5141, %v5156
      %v5181 = vadd.f32 %v5142, %v5156
      %v5182 = vadd.f32 %v5143, %v5156
      %v5183 = vadd.f32 %v5144, %v5156
      %v5184 = vadd.f32 %v5145, %v5156
      %v5185 = vadd.f32 %v5146, %v5156
      %v5186 = vadd.f32 %v5147, %v5156
      %v5187 = vadd.f32 %v5148, %v5156
      %v5188 = vadd.f32 %v5149, %v5156
      %v5189 = vadd.f32 %v5150, %v5156
      %v5190 = vmax.f32 %v5158, 0.0
      %v5191 = vmax.f32 %v5159, 0.0
      %v5192 = vmax.f32 %v5160, 0.0
      %v5193 = vmax.f32 %v5161, 0.0
      %v5194 = vmax.f32 %v5162, 0.0
      %v5195 = vmax.f32 %v5163, 0.0
      %v5196 = vmax.f32 %v5164, 0.0
      %v5197 = vmax.f32 %v5165, 0.0
      %v5198 = vmax.f32 %v5166, 0.0
      %v5199 = vmax.f32 %v5167, 0.0
      %v5200 = vmax.f32 %v5168, 0.0
      %v5201 = vmax.f32 %v5169, 0.0
      %v5202 = vmax.f32 %v5170, 0.0
      %v5203 = vmax.f32 %v5171, 0.0
      %v5204 = vmax.f32 %v5172, 0.0
      %v5205 = vmax.f32 %v5173, 0.0
      %v5206 = vmax.f32 %v5174, 0.0
      %v5207 = vmax.f32 %v5175, 0.0
      %v5208 = vmax.f32 %v5176, 0.0
      %v5209 = vmax.f32 %v5177, 0.0
      %v5210 = vmax.f32 %v5178, 0.0
      %v5211 = vmax.f32 %v5179, 0.0
      %v5212 = vmax.f32 %v5180, 0.0
      %v5213 = vmax.f32 %v5181, 0.0
      %v5214 = vmax.f32 %v5182, 0.0
      %v5215 = vmax.f32 %v5183, 0.0
      %v5216 = vmax.f32 %v5184, 0.0
      %v5217 = vmax.f32 %v5185, 0.0
      %v5218 = vmax.f32 %v5186, 0.0
      %v5219 = vmax.f32 %v5187, 0.0
      %v5220 = vmax.f32 %v5188, 0.0
      %v5221 = vmax.f32 %v5189, 0.0
      %5222 = vxpose.xlu0.b32.start [1/16] %v5190, 128
      %5223 = vxpose.xlu0.b32.cont [2/16] %v5191, 128
      %5224 = vxpose.xlu0.b32.cont [3/16] %v5192, 128
      %5225 = vxpose.xlu0.b32.cont [4/16] %v5193, 128
      %5226 = vxpose.xlu0.b32.cont [5/16] %v5194, 128
      %5227 = vxpose.xlu0.b32.cont [6/16] %v5195, 128
      %5228 = vxpose.xlu0.b32.cont [7/16] %v5196, 128
      %5229 = vxpose.xlu0.b32.cont [8/16] %v5197, 128
      %5230 = vxpose.xlu0.b32.cont [9/16] %v5198, 128
      %5231 = vxpose.xlu0.b32.cont [10/16] %v5199, 128
      %5232 = vxpose.xlu0.b32.cont [11/16] %v5200, 128
      %5233 = vxpose.xlu0.b32.cont [12/16] %v5201, 128
      %5234 = vxpose.xlu0.b32.cont [13/16] %v5202, 128
      %5235 = vxpose.xlu0.b32.cont [14/16] %v5203, 128
      %5236 = vxpose.xlu0.b32.cont [15/16] %v5204, 128
      %5237 = vxpose.xlu0.b32.end [16/16] %v5205, 128
      %v5238 = vpop.trf.xlu0
      %v5239 = vpop.trf.xlu0
      %v5240 = vpop.trf.xlu0
      %v5241 = vpop.trf.xlu0
      %v5242 = vpop.trf.xlu0
      %v5243 = vpop.trf.xlu0
      %v5244 = vpop.trf.xlu0
      %v5245 = vpop.trf.xlu0
      %v5246 = vpop.trf.xlu0
      %v5247 = vpop.trf.xlu0
      %v5248 = vpop.trf.xlu0
      %v5249 = vpop.trf.xlu0
      %v5250 = vpop.trf.xlu0
      %v5251 = vpop.trf.xlu0
      %v5252 = vpop.trf.xlu0
      %v5253 = vpop.trf.xlu0
      %5254 = vxpose.xlu0.b32.start [1/16] %v5206, 128
      %5255 = vxpose.xlu0.b32.cont [2/16] %v5207, 128
      %5256 = vxpose.xlu0.b32.cont [3/16] %v5208, 128
      %5257 = vxpose.xlu0.b32.cont [4/16] %v5209, 128
      %5258 = vxpose.xlu0.b32.cont [5/16] %v5210, 128
      %5259 = vxpose.xlu0.b32.cont [6/16] %v5211, 128
      %5260 = vxpose.xlu0.b32.cont [7/16] %v5212, 128
      %5261 = vxpose.xlu0.b32.cont [8/16] %v5213, 128
      %5262 = vxpose.xlu0.b32.cont [9/16] %v5214, 128
      %5263 = vxpose.xlu0.b32.cont [10/16] %v5215, 128
      %5264 = vxpose.xlu0.b32.cont [11/16] %v5216, 128
      %5265 = vxpose.xlu0.b32.cont [12/16] %v5217, 128
      %5266 = vxpose.xlu0.b32.cont [13/16] %v5218, 128
      %5267 = vxpose.xlu0.b32.cont [14/16] %v5219, 128
      %5268 = vxpose.xlu0.b32.cont [15/16] %v5220, 128
      %5269 = vxpose.xlu0.b32.end [16/16] %v5221, 128
      %v5270 = vpop.trf.xlu0
      %v5271 = vpop.trf.xlu0
      %v5272 = vpop.trf.xlu0
      %v5273 = vpop.trf.xlu0
      %v5274 = vpop.trf.xlu0
      %v5275 = vpop.trf.xlu0
      %v5276 = vpop.trf.xlu0
      %v5277 = vpop.trf.xlu0
      %v5278 = vpop.trf.xlu0
      %v5279 = vpop.trf.xlu0
      %v5280 = vpop.trf.xlu0
      %v5281 = vpop.trf.xlu0
      %v5282 = vpop.trf.xlu0
      %v5283 = vpop.trf.xlu0
      %v5284 = vpop.trf.xlu0
      %v5285 = vpop.trf.xlu0
      %5286 = vst [vmem:[%s278 + $0x30] sm:$0xff] %v5238
      %5287 = vst [vmem:[%s278 + $0x38] sm:$0xff] %v5270
      %5288 = vst [vmem:[%s278 + $0x40] sm:$0xff] %v5239
      %5289 = vst [vmem:[%s278 + $0x48] sm:$0xff] %v5271
      %5290 = vst [vmem:[%s278 + $0x50] sm:$0xf] %v5240
      %5291 = vst [vmem:[%s278 + $0x58] sm:$0xf] %v5272
      %v5292 = vpack.c.bf16 %v5191, %v5190
      %v5293 = vpack.c.bf16 %v5193, %v5192
      %v5294 = vpack.c.bf16 %v5195, %v5194
      %v5295 = vpack.c.bf16 %v5197, %v5196
      %v5296 = vpack.c.bf16 %v5199, %v5198
      %v5297 = vpack.c.bf16 %v5201, %v5200
      %v5298 = vpack.c.bf16 %v5203, %v5202
      %v5299 = vpack.c.bf16 %v5205, %v5204
      %v5300 = vpack.c.bf16 %v5207, %v5206
      %v5301 = vpack.c.bf16 %v5209, %v5208
      %v5302 = vpack.c.bf16 %v5211, %v5210
      %v5303 = vpack.c.bf16 %v5213, %v5212
      %v5304 = vpack.c.bf16 %v5215, %v5214
      %v5305 = vpack.c.bf16 %v5217, %v5216
      %v5306 = vpack.c.bf16 %v5219, %v5218
      %v5307 = vpack.c.bf16 %v5221, %v5220
      %v5324 = vunpack.c.l.b16 %v5292
      %v5325 = vunpack.c.h.b16 %v5292
      %v5326 = vunpack.c.l.b16 %v5293
      %v5327 = vunpack.c.h.b16 %v5293
      %v5328 = vunpack.c.l.b16 %v5294
      %v5329 = vunpack.c.h.b16 %v5294
      %v5330 = vunpack.c.l.b16 %v5295
      %v5331 = vunpack.c.h.b16 %v5295
      %v5332 = vunpack.c.l.b16 %v5296
      %v5333 = vunpack.c.h.b16 %v5296
      %v5334 = vunpack.c.l.b16 %v5297
      %v5335 = vunpack.c.h.b16 %v5297
      %v5336 = vunpack.c.l.b16 %v5298
      %v5337 = vunpack.c.h.b16 %v5298
      %v5338 = vunpack.c.l.b16 %v5299
      %v5339 = vunpack.c.h.b16 %v5299
      %v5340 = vunpack.c.l.b16 %v5300
      %v5341 = vunpack.c.h.b16 %v5300
      %v5342 = vunpack.c.l.b16 %v5301
      %v5343 = vunpack.c.h.b16 %v5301
      %v5344 = vunpack.c.l.b16 %v5302
      %v5345 = vunpack.c.h.b16 %v5302
      %v5346 = vunpack.c.l.b16 %v5303
      %v5347 = vunpack.c.h.b16 %v5303
      %v5348 = vunpack.c.l.b16 %v5304
      %v5349 = vunpack.c.h.b16 %v5304
      %v5350 = vunpack.c.l.b16 %v5305
      %v5351 = vunpack.c.h.b16 %v5305
      %v5352 = vunpack.c.l.b16 %v5306
      %v5353 = vunpack.c.h.b16 %v5306
      %v5354 = vunpack.c.l.b16 %v5307
      %v5355 = vunpack.c.h.b16 %v5307
      %v5356 = vpack.c.b16 %v5324, %v5324
      %v5357 = vpack.c.b16 %v5325, %v5325
      %v5358 = vpack.c.b16 %v5326, %v5326
      %v5359 = vpack.c.b16 %v5327, %v5327
      %v5360 = vpack.c.b16 %v5328, %v5328
      %v5361 = vpack.c.b16 %v5329, %v5329
      %v5362 = vpack.c.b16 %v5330, %v5330
      %v5363 = vpack.c.b16 %v5331, %v5331
      %v5364 = vpack.c.b16 %v5332, %v5332
      %v5365 = vpack.c.b16 %v5333, %v5333
      %v5366 = vpack.c.b16 %v5334, %v5334
      %v5367 = vpack.c.b16 %v5335, %v5335
      %v5368 = vpack.c.b16 %v5336, %v5336
      %v5369 = vpack.c.b16 %v5337, %v5337
      %v5370 = vpack.c.b16 %v5338, %v5338
      %v5371 = vpack.c.b16 %v5339, %v5339
      %v5372 = vpack.c.b16 %v5340, %v5340
      %v5373 = vpack.c.b16 %v5341, %v5341
      %v5374 = vpack.c.b16 %v5342, %v5342
      %v5375 = vpack.c.b16 %v5343, %v5343
      %v5376 = vpack.c.b16 %v5344, %v5344
      %v5377 = vpack.c.b16 %v5345, %v5345
      %v5378 = vpack.c.b16 %v5346, %v5346
      %v5379 = vpack.c.b16 %v5347, %v5347
      %v5380 = vpack.c.b16 %v5348, %v5348
      %v5381 = vpack.c.b16 %v5349, %v5349
      %v5382 = vpack.c.b16 %v5350, %v5350
      %v5383 = vpack.c.b16 %v5351, %v5351
      %v5384 = vpack.c.b16 %v5352, %v5352
      %v5385 = vpack.c.b16 %v5353, %v5353
      %v5386 = vpack.c.b16 %v5354, %v5354
      %v5387 = vpack.c.b16 %v5355, %v5355
      %5388 = vrot.lane.b32.xlu0 %v5356, 24
      %v5389 = vpop.permute.xlu0 %5388
      %5390 = vrot.lane.b32.xlu0 %v5357, 24
      %v5391 = vpop.permute.xlu0 %5390
      %5392 = vrot.lane.b32.xlu0 %v5358, 24
      %v5393 = vpop.permute.xlu0 %5392
      %5394 = vrot.lane.b32.xlu0 %v5359, 24
      %v5395 = vpop.permute.xlu0 %5394
      %5396 = vrot.lane.b32.xlu0 %v5360, 24
      %v5397 = vpop.permute.xlu0 %5396
      %5398 = vrot.lane.b32.xlu0 %v5361, 24
      %v5399 = vpop.permute.xlu0 %5398
      %5400 = vrot.lane.b32.xlu0 %v5362, 24
      %v5401 = vpop.permute.xlu0 %5400
      %5402 = vrot.lane.b32.xlu0 %v5363, 24
      %v5403 = vpop.permute.xlu0 %5402
      %5404 = vrot.lane.b32.xlu0 %v5364, 24
      %v5405 = vpop.permute.xlu0 %5404
      %5406 = vrot.lane.b32.xlu0 %v5365, 24
      %v5407 = vpop.permute.xlu0 %5406
      %5408 = vrot.lane.b32.xlu0 %v5366, 24
      %v5409 = vpop.permute.xlu0 %5408
      %5410 = vrot.lane.b32.xlu0 %v5367, 24
      %v5411 = vpop.permute.xlu0 %5410
      %5412 = vrot.lane.b32.xlu0 %v5368, 24
      %v5413 = vpop.permute.xlu0 %5412
      %5414 = vrot.lane.b32.xlu0 %v5369, 24
      %v5415 = vpop.permute.xlu0 %5414
      %5416 = vrot.lane.b32.xlu0 %v5370, 24
      %v5417 = vpop.permute.xlu0 %5416
      %5418 = vrot.lane.b32.xlu0 %v5371, 24
      %v5419 = vpop.permute.xlu0 %5418
      %5420 = vrot.lane.b32.xlu0 %v5372, 24
      %v5421 = vpop.permute.xlu0 %5420
      %5422 = vrot.lane.b32.xlu0 %v5373, 24
      %v5423 = vpop.permute.xlu0 %5422
      %5424 = vrot.lane.b32.xlu0 %v5374, 24
      %v5425 = vpop.permute.xlu0 %5424
      %5426 = vrot.lane.b32.xlu0 %v5375, 24
      %v5427 = vpop.permute.xlu0 %5426
      %5428 = vrot.lane.b32.xlu0 %v5376, 24
      %v5429 = vpop.permute.xlu0 %5428
      %5430 = vrot.lane.b32.xlu0 %v5377, 24
      %v5431 = vpop.permute.xlu0 %5430
      %5432 = vrot.lane.b32.xlu0 %v5378, 24
      %v5433 = vpop.permute.xlu0 %5432
      %5434 = vrot.lane.b32.xlu0 %v5379, 24
      %v5435 = vpop.permute.xlu0 %5434
      %5436 = vrot.lane.b32.xlu0 %v5380, 24
      %v5437 = vpop.permute.xlu0 %5436
      %5438 = vrot.lane.b32.xlu0 %v5381, 24
      %v5439 = vpop.permute.xlu0 %5438
      %5440 = vrot.lane.b32.xlu0 %v5382, 24
      %v5441 = vpop.permute.xlu0 %5440
      %5442 = vrot.lane.b32.xlu0 %v5383, 24
      %v5443 = vpop.permute.xlu0 %5442
      %5444 = vrot.lane.b32.xlu0 %v5384, 24
      %v5445 = vpop.permute.xlu0 %5444
      %5446 = vrot.lane.b32.xlu0 %v5385, 24
      %v5447 = vpop.permute.xlu0 %5446
      %5448 = vrot.lane.b32.xlu0 %v5386, 24
      %v5449 = vpop.permute.xlu0 %5448
      %5450 = vrot.lane.b32.xlu0 %v5387, 24
      %v5451 = vpop.permute.xlu0 %5450
      %vm5484 = vcmask 355520
      %5485 = vst.msk [vmem:[#allocation2] sm:$0xf] %vm5484, %v5389
      %5486 = vst.msk [vmem:[#allocation2 + $0x4] sm:$0xf] %vm5484, %v5391
      %5487 = vst.msk [vmem:[#allocation2 + $0xc] sm:$0xf] %vm5484, %v5393
      %5488 = vst.msk [vmem:[#allocation2 + $0x10] sm:$0xf] %vm5484, %v5395
      %5489 = vst.msk [vmem:[#allocation2 + $0x18] sm:$0xf] %vm5484, %v5397
      %5490 = vst.msk [vmem:[#allocation2 + $0x1c] sm:$0xf] %vm5484, %v5399
      %5491 = vst.msk [vmem:[#allocation2 + $0x24] sm:$0xf] %vm5484, %v5401
      %5492 = vst.msk [vmem:[#allocation2 + $0x28] sm:$0xf] %vm5484, %v5403
      %5493 = vst.msk [vmem:[#allocation2 + $0x30] sm:$0xf] %vm5484, %v5405
      %5494 = vst.msk [vmem:[#allocation2 + $0x34] sm:$0xf] %vm5484, %v5407
      %5495 = vst.msk [vmem:[#allocation2 + $0x3c] sm:$0xf] %vm5484, %v5409
      %5496 = vst.msk [vmem:[#allocation2 + $0x40] sm:$0xf] %vm5484, %v5411
      %5497 = vst.msk [vmem:[#allocation2 + $0x48] sm:$0xf] %vm5484, %v5413
      %5498 = vst.msk [vmem:[#allocation2 + $0x4c] sm:$0xf] %vm5484, %v5415
      %5499 = vst.msk [vmem:[#allocation2 + $0x54] sm:$0xf] %vm5484, %v5417
      %5500 = vst.msk [vmem:[#allocation2 + $0x58] sm:$0xf] %vm5484, %v5419
      %5501 = vst.msk [vmem:[#allocation2 + $0x60] sm:$0xf] %vm5484, %v5421
      %5502 = vst.msk [vmem:[#allocation2 + $0x64] sm:$0xf] %vm5484, %v5423
      %5503 = vst.msk [vmem:[#allocation2 + $0x6c] sm:$0xf] %vm5484, %v5425
      %5504 = vst.msk [vmem:[#allocation2 + $0x70] sm:$0xf] %vm5484, %v5427
      %5505 = vst.msk [vmem:[#allocation2 + $0x78] sm:$0xf] %vm5484, %v5429
      %5506 = vst.msk [vmem:[#allocation2 + $0x7c] sm:$0xf] %vm5484, %v5431
      %5507 = vst.msk [vmem:[#allocation2 + $0x84] sm:$0xf] %vm5484, %v5433
      %5508 = vst.msk [vmem:[#allocation2 + $0x88] sm:$0xf] %vm5484, %v5435
      %5509 = vst.msk [vmem:[#allocation2 + $0x90] sm:$0xf] %vm5484, %v5437
      %5510 = vst.msk [vmem:[#allocation2 + $0x94] sm:$0xf] %vm5484, %v5439
      %5511 = vst.msk [vmem:[#allocation2 + $0x9c] sm:$0xf] %vm5484, %v5441
      %5512 = vst.msk [vmem:[#allocation2 + $0xa0] sm:$0xf] %vm5484, %v5443
      %5513 = vst.msk [vmem:[#allocation2 + $0xa8] sm:$0xf] %vm5484, %v5445
      %5514 = vst.msk [vmem:[#allocation2 + $0xac] sm:$0xf] %vm5484, %v5447
      %5515 = vst.msk [vmem:[#allocation2 + $0xb4] sm:$0xf] %vm5484, %v5449
      %5516 = vst.msk [vmem:[#allocation2 + $0xb8] sm:$0xf] %vm5484, %v5451
      %v5517 = vld [vmem:[#allocation2] sm:$0xf]
      %v5518 = vld [vmem:[#allocation2 + $0x4] sm:$0xf]
      %v5519 = vld [vmem:[#allocation2 + $0xc] sm:$0xf]
      %v5520 = vld [vmem:[#allocation2 + $0x10] sm:$0xf]
      %v5521 = vld [vmem:[#allocation2 + $0x18] sm:$0xf]
      %v5522 = vld [vmem:[#allocation2 + $0x1c] sm:$0xf]
      %v5523 = vld [vmem:[#allocation2 + $0x24] sm:$0xf]
      %v5524 = vld [vmem:[#allocation2 + $0x28] sm:$0xf]
      %v5525 = vld [vmem:[#allocation2 + $0x30] sm:$0xf]
      %v5526 = vld [vmem:[#allocation2 + $0x34] sm:$0xf]
      %v5527 = vld [vmem:[#allocation2 + $0x3c] sm:$0xf]
      %v5528 = vld [vmem:[#allocation2 + $0x40] sm:$0xf]
      %v5529 = vld [vmem:[#allocation2 + $0x48] sm:$0xf]
      %v5530 = vld [vmem:[#allocation2 + $0x4c] sm:$0xf]
      %v5531 = vld [vmem:[#allocation2 + $0x54] sm:$0xf]
      %v5532 = vld [vmem:[#allocation2 + $0x58] sm:$0xf]
      %v5533 = vld [vmem:[#allocation2 + $0x60] sm:$0xf]
      %v5534 = vld [vmem:[#allocation2 + $0x64] sm:$0xf]
      %v5535 = vld [vmem:[#allocation2 + $0x6c] sm:$0xf]
      %v5536 = vld [vmem:[#allocation2 + $0x70] sm:$0xf]
      %v5537 = vld [vmem:[#allocation2 + $0x78] sm:$0xf]
      %v5538 = vld [vmem:[#allocation2 + $0x7c] sm:$0xf]
      %v5539 = vld [vmem:[#allocation2 + $0x84] sm:$0xf]
      %v5540 = vld [vmem:[#allocation2 + $0x88] sm:$0xf]
      %v5541 = vld [vmem:[#allocation2 + $0x90] sm:$0xf]
      %v5542 = vld [vmem:[#allocation2 + $0x94] sm:$0xf]
      %v5543 = vld [vmem:[#allocation2 + $0x9c] sm:$0xf]
      %v5544 = vld [vmem:[#allocation2 + $0xa0] sm:$0xf]
      %v5545 = vld [vmem:[#allocation2 + $0xa8] sm:$0xf]
      %v5546 = vld [vmem:[#allocation2 + $0xac] sm:$0xf]
      %v5547 = vld [vmem:[#allocation2 + $0xb4] sm:$0xf]
      %v5548 = vld [vmem:[#allocation2 + $0xb8] sm:$0xf]
      %v5549 = vld [vmem:[%s3] sm:$0xf]
      %v5550 = vld [vmem:[%s3 + $0x4] sm:$0xf]
      %v5551 = vld [vmem:[%s3 + $0x8] sm:$0xf]
      %v5552 = vld [vmem:[%s3 + $0xc] sm:$0xf]
      %v5553 = vld [vmem:[%s3 + $0x10] sm:$0xf]
      %v5554 = vld [vmem:[%s3 + $0x14] sm:$0x3]
      %v5555 = vld [vmem:[#allocation2 + $0x8] sm:$0x1]
      %v5556 = vld [vmem:[#allocation2 + $0x14] sm:$0x1]
      %v5557 = vld [vmem:[#allocation2 + $0x20] sm:$0x1]
      %v5558 = vld [vmem:[#allocation2 + $0x2c] sm:$0x1]
      %v5559 = vld [vmem:[#allocation2 + $0x38] sm:$0x1]
      %v5560 = vld [vmem:[#allocation2 + $0x44] sm:$0x1]
      %v5561 = vld [vmem:[#allocation2 + $0x50] sm:$0x1]
      %v5562 = vld [vmem:[#allocation2 + $0x5c] sm:$0x1]
      %v5563 = vld [vmem:[#allocation2 + $0x68] sm:$0x1]
      %v5564 = vld [vmem:[#allocation2 + $0x74] sm:$0x1]
      %v5565 = vld [vmem:[#allocation2 + $0x80] sm:$0x1]
      %v5566 = vld [vmem:[#allocation2 + $0x8c] sm:$0x1]
      %v5567 = vld [vmem:[#allocation2 + $0x98] sm:$0x1]
      %v5568 = vld [vmem:[#allocation2 + $0xa4] sm:$0x1]
      %v5569 = vld [vmem:[#allocation2 + $0xb0] sm:$0x1]
      %v5570 = vld [vmem:[#allocation2 + $0xbc] sm:$0x1]
      %v5572 = vshrl.u32 %v5517, 16
      %v5574 = vrot.slane %v5572, 4
      %v5575 = vshll.u32 %v5517, 16
      %v5577 = vrot.slane %v5575, 5
      %v5578 = vor.u32 %v5574, %v5577
      %v5579 = vrot.slane %v5578, 4
      %v5581 = vshll.u32 %v5518, 16
      %v5583 = vrot.slane %v5581, 5
      %v5584 = vsel %vm620, %v5579, %v5583
      %v5585 = vshrl.u32 %v5518, 16
      %v5587 = vrot.slane %v5585, 4
      %v5588 = vor.u32 %v5587, %v5583
      %v5589 = vrot.slane %v5588, 4
      %v5591 = vshll.u32 %v5555, 16
      %v5593 = vrot.slane %v5591, 5
      %v5594 = vsel %vm620, %v5589, %v5593
      %v5596 = vshrl.u32 %v5519, 16
      %v5598 = vrot.slane %v5596, 4
      %v5599 = vshll.u32 %v5519, 16
      %v5601 = vrot.slane %v5599, 5
      %v5602 = vor.u32 %v5598, %v5601
      %v5603 = vrot.slane %v5602, 4
      %v5605 = vshll.u32 %v5520, 16
      %v5607 = vrot.slane %v5605, 5
      %v5608 = vsel %vm620, %v5603, %v5607
      %v5609 = vshrl.u32 %v5520, 16
      %v5611 = vrot.slane %v5609, 4
      %v5612 = vor.u32 %v5611, %v5607
      %v5613 = vrot.slane %v5612, 4
      %v5615 = vshll.u32 %v5556, 16
      %v5617 = vrot.slane %v5615, 5
      %v5618 = vsel %vm620, %v5613, %v5617
      %v5620 = vshrl.u32 %v5521, 16
      %v5622 = vrot.slane %v5620, 4
      %v5623 = vshll.u32 %v5521, 16
      %v5625 = vrot.slane %v5623, 5
      %v5626 = vor.u32 %v5622, %v5625
      %v5627 = vrot.slane %v5626, 4
      %v5629 = vshll.u32 %v5522, 16
      %v5631 = vrot.slane %v5629, 5
      %v5632 = vsel %vm620, %v5627, %v5631
      %v5633 = vshrl.u32 %v5522, 16
      %v5635 = vrot.slane %v5633, 4
      %v5636 = vor.u32 %v5635, %v5631
      %v5637 = vrot.slane %v5636, 4
      %v5639 = vshll.u32 %v5557, 16
      %v5641 = vrot.slane %v5639, 5
      %v5642 = vsel %vm620, %v5637, %v5641
      %v5644 = vshrl.u32 %v5523, 16
      %v5646 = vrot.slane %v5644, 4
      %v5647 = vshll.u32 %v5523, 16
      %v5649 = vrot.slane %v5647, 5
      %v5650 = vor.u32 %v5646, %v5649
      %v5651 = vrot.slane %v5650, 4
      %v5653 = vshll.u32 %v5524, 16
      %v5655 = vrot.slane %v5653, 5
      %v5656 = vsel %vm620, %v5651, %v5655
      %v5657 = vshrl.u32 %v5524, 16
      %v5659 = vrot.slane %v5657, 4
      %v5660 = vor.u32 %v5659, %v5655
      %v5661 = vrot.slane %v5660, 4
      %v5663 = vshll.u32 %v5558, 16
      %v5665 = vrot.slane %v5663, 5
      %v5666 = vsel %vm620, %v5661, %v5665
      %v5668 = vshrl.u32 %v5525, 16
      %v5670 = vrot.slane %v5668, 4
      %v5671 = vshll.u32 %v5525, 16
      %v5673 = vrot.slane %v5671, 5
      %v5674 = vor.u32 %v5670, %v5673
      %v5675 = vrot.slane %v5674, 4
      %v5677 = vshll.u32 %v5526, 16
      %v5679 = vrot.slane %v5677, 5
      %v5680 = vsel %vm620, %v5675, %v5679
      %v5681 = vshrl.u32 %v5526, 16
      %v5683 = vrot.slane %v5681, 4
      %v5684 = vor.u32 %v5683, %v5679
      %v5685 = vrot.slane %v5684, 4
      %v5687 = vshll.u32 %v5559, 16
      %v5689 = vrot.slane %v5687, 5
      %v5690 = vsel %vm620, %v5685, %v5689
      %v5692 = vshrl.u32 %v5527, 16
      %v5694 = vrot.slane %v5692, 4
      %v5695 = vshll.u32 %v5527, 16
      %v5697 = vrot.slane %v5695, 5
      %v5698 = vor.u32 %v5694, %v5697
      %v5699 = vrot.slane %v5698, 4
      %v5701 = vshll.u32 %v5528, 16
      %v5703 = vrot.slane %v5701, 5
      %v5704 = vsel %vm620, %v5699, %v5703
      %v5705 = vshrl.u32 %v5528, 16
      %v5707 = vrot.slane %v5705, 4
      %v5708 = vor.u32 %v5707, %v5703
      %v5709 = vrot.slane %v5708, 4
      %v5711 = vshll.u32 %v5560, 16
      %v5713 = vrot.slane %v5711, 5
      %v5714 = vsel %vm620, %v5709, %v5713
      %v5716 = vshrl.u32 %v5529, 16
      %v5718 = vrot.slane %v5716, 4
      %v5719 = vshll.u32 %v5529, 16
      %v5721 = vrot.slane %v5719, 5
      %v5722 = vor.u32 %v5718, %v5721
      %v5723 = vrot.slane %v5722, 4
      %v5725 = vshll.u32 %v5530, 16
      %v5727 = vrot.slane %v5725, 5
      %v5728 = vsel %vm620, %v5723, %v5727
      %v5729 = vshrl.u32 %v5530, 16
      %v5731 = vrot.slane %v5729, 4
      %v5732 = vor.u32 %v5731, %v5727
      %v5733 = vrot.slane %v5732, 4
      %v5735 = vshll.u32 %v5561, 16
      %v5737 = vrot.slane %v5735, 5
      %v5738 = vsel %vm620, %v5733, %v5737
      %v5740 = vshrl.u32 %v5531, 16
      %v5742 = vrot.slane %v5740, 4
      %v5743 = vshll.u32 %v5531, 16
      %v5745 = vrot.slane %v5743, 5
      %v5746 = vor.u32 %v5742, %v5745
      %v5747 = vrot.slane %v5746, 4
      %v5749 = vshll.u32 %v5532, 16
      %v5751 = vrot.slane %v5749, 5
      %v5752 = vsel %vm620, %v5747, %v5751
      %v5753 = vshrl.u32 %v5532, 16
      %v5755 = vrot.slane %v5753, 4
      %v5756 = vor.u32 %v5755, %v5751
      %v5757 = vrot.slane %v5756, 4
      %v5759 = vshll.u32 %v5562, 16
      %v5761 = vrot.slane %v5759, 5
      %v5762 = vsel %vm620, %v5757, %v5761
      %v5764 = vshrl.u32 %v5533, 16
      %v5766 = vrot.slane %v5764, 4
      %v5767 = vshll.u32 %v5533, 16
      %v5769 = vrot.slane %v5767, 5
      %v5770 = vor.u32 %v5766, %v5769
      %v5771 = vrot.slane %v5770, 4
      %v5773 = vshll.u32 %v5534, 16
      %v5775 = vrot.slane %v5773, 5
      %v5776 = vsel %vm620, %v5771, %v5775
      %v5777 = vshrl.u32 %v5534, 16
      %v5779 = vrot.slane %v5777, 4
      %v5780 = vor.u32 %v5779, %v5775
      %v5781 = vrot.slane %v5780, 4
      %v5783 = vshll.u32 %v5563, 16
      %v5785 = vrot.slane %v5783, 5
      %v5786 = vsel %vm620, %v5781, %v5785
      %v5788 = vshrl.u32 %v5535, 16
      %v5790 = vrot.slane %v5788, 4
      %v5791 = vshll.u32 %v5535, 16
      %v5793 = vrot.slane %v5791, 5
      %v5794 = vor.u32 %v5790, %v5793
      %v5795 = vrot.slane %v5794, 4
      %v5797 = vshll.u32 %v5536, 16
      %v5799 = vrot.slane %v5797, 5
      %v5800 = vsel %vm620, %v5795, %v5799
      %v5801 = vshrl.u32 %v5536, 16
      %v5803 = vrot.slane %v5801, 4
      %v5804 = vor.u32 %v5803, %v5799
      %v5805 = vrot.slane %v5804, 4
      %v5807 = vshll.u32 %v5564, 16
      %v5809 = vrot.slane %v5807, 5
      %v5810 = vsel %vm620, %v5805, %v5809
      %v5812 = vshrl.u32 %v5537, 16
      %v5814 = vrot.slane %v5812, 4
      %v5815 = vshll.u32 %v5537, 16
      %v5817 = vrot.slane %v5815, 5
      %v5818 = vor.u32 %v5814, %v5817
      %v5819 = vrot.slane %v5818, 4
      %v5821 = vshll.u32 %v5538, 16
      %v5823 = vrot.slane %v5821, 5
      %v5824 = vsel %vm620, %v5819, %v5823
      %v5825 = vshrl.u32 %v5538, 16
      %v5827 = vrot.slane %v5825, 4
      %v5828 = vor.u32 %v5827, %v5823
      %v5829 = vrot.slane %v5828, 4
      %v5831 = vshll.u32 %v5565, 16
      %v5833 = vrot.slane %v5831, 5
      %v5834 = vsel %vm620, %v5829, %v5833
      %v5836 = vshrl.u32 %v5539, 16
      %v5838 = vrot.slane %v5836, 4
      %v5839 = vshll.u32 %v5539, 16
      %v5841 = vrot.slane %v5839, 5
      %v5842 = vor.u32 %v5838, %v5841
      %v5843 = vrot.slane %v5842, 4
      %v5845 = vshll.u32 %v5540, 16
      %v5847 = vrot.slane %v5845, 5
      %v5848 = vsel %vm620, %v5843, %v5847
      %v5849 = vshrl.u32 %v5540, 16
      %v5851 = vrot.slane %v5849, 4
      %v5852 = vor.u32 %v5851, %v5847
      %v5853 = vrot.slane %v5852, 4
      %v5855 = vshll.u32 %v5566, 16
      %v5857 = vrot.slane %v5855, 5
      %v5858 = vsel %vm620, %v5853, %v5857
      %v5860 = vshrl.u32 %v5541, 16
      %v5862 = vrot.slane %v5860, 4
      %v5863 = vshll.u32 %v5541, 16
      %v5865 = vrot.slane %v5863, 5
      %v5866 = vor.u32 %v5862, %v5865
      %v5867 = vrot.slane %v5866, 4
      %v5869 = vshll.u32 %v5542, 16
      %v5871 = vrot.slane %v5869, 5
      %v5872 = vsel %vm620, %v5867, %v5871
      %v5873 = vshrl.u32 %v5542, 16
      %v5875 = vrot.slane %v5873, 4
      %v5876 = vor.u32 %v5875, %v5871
      %v5877 = vrot.slane %v5876, 4
      %v5879 = vshll.u32 %v5567, 16
      %v5881 = vrot.slane %v5879, 5
      %v5882 = vsel %vm620, %v5877, %v5881
      %v5884 = vshrl.u32 %v5543, 16
      %v5886 = vrot.slane %v5884, 4
      %v5887 = vshll.u32 %v5543, 16
      %v5889 = vrot.slane %v5887, 5
      %v5890 = vor.u32 %v5886, %v5889
      %v5891 = vrot.slane %v5890, 4
      %v5893 = vshll.u32 %v5544, 16
      %v5895 = vrot.slane %v5893, 5
      %v5896 = vsel %vm620, %v5891, %v5895
      %v5897 = vshrl.u32 %v5544, 16
      %v5899 = vrot.slane %v5897, 4
      %v5900 = vor.u32 %v5899, %v5895
      %v5901 = vrot.slane %v5900, 4
      %v5903 = vshll.u32 %v5568, 16
      %v5905 = vrot.slane %v5903, 5
      %v5906 = vsel %vm620, %v5901, %v5905
      %v5908 = vshrl.u32 %v5545, 16
      %v5910 = vrot.slane %v5908, 4
      %v5911 = vshll.u32 %v5545, 16
      %v5913 = vrot.slane %v5911, 5
      %v5914 = vor.u32 %v5910, %v5913
      %v5915 = vrot.slane %v5914, 4
      %v5917 = vshll.u32 %v5546, 16
      %v5919 = vrot.slane %v5917, 5
      %v5920 = vsel %vm620, %v5915, %v5919
      %v5921 = vshrl.u32 %v5546, 16
      %v5923 = vrot.slane %v5921, 4
      %v5924 = vor.u32 %v5923, %v5919
      %v5925 = vrot.slane %v5924, 4
      %v5927 = vshll.u32 %v5569, 16
      %v5929 = vrot.slane %v5927, 5
      %v5930 = vsel %vm620, %v5925, %v5929
      %v5932 = vshrl.u32 %v5547, 16
      %v5934 = vrot.slane %v5932, 4
      %v5935 = vshll.u32 %v5547, 16
      %v5937 = vrot.slane %v5935, 5
      %v5938 = vor.u32 %v5934, %v5937
      %v5939 = vrot.slane %v5938, 4
      %v5941 = vshll.u32 %v5548, 16
      %v5943 = vrot.slane %v5941, 5
      %v5944 = vsel %vm620, %v5939, %v5943
      %v5945 = vshrl.u32 %v5548, 16
      %v5947 = vrot.slane %v5945, 4
      %v5948 = vor.u32 %v5947, %v5943
      %v5949 = vrot.slane %v5948, 4
      %v5951 = vshll.u32 %v5570, 16
      %v5953 = vrot.slane %v5951, 5
      %v5954 = vsel %vm620, %v5949, %v5953
      %s5955 = scalar_lea.vmem %s3, 24
      %v5956 = vld [vmem:[%s5955] sm:$0xf]
      %v5957 = vld [vmem:[%s5955 + $0x4] sm:$0xf]
      %v5958 = vld [vmem:[%s5955 + $0x8] sm:$0xf]
      %v5959 = vld [vmem:[%s5955 + $0xc] sm:$0xf]
      %v5960 = vld [vmem:[%s5955 + $0x10] sm:$0xf]
      %v5961 = vld [vmem:[%s5955 + $0x14] sm:$0x3]
      %v5962 = vunpack.c.l.b16 %v5584
      %v5963 = vunpack.c.l.b16 %v5594
      %v5964 = vunpack.c.l.b16 %v5608
      %v5965 = vunpack.c.l.b16 %v5618
      %v5966 = vunpack.c.l.b16 %v5632
      %v5967 = vunpack.c.l.b16 %v5642
      %v5968 = vunpack.c.l.b16 %v5656
      %v5969 = vunpack.c.l.b16 %v5666
      %v5970 = vunpack.c.l.b16 %v5680
      %v5971 = vunpack.c.l.b16 %v5690
      %v5972 = vunpack.c.l.b16 %v5704
      %v5973 = vunpack.c.l.b16 %v5714
      %v5974 = vunpack.c.l.b16 %v5728
      %v5975 = vunpack.c.l.b16 %v5738
      %v5976 = vunpack.c.l.b16 %v5752
      %v5977 = vunpack.c.l.b16 %v5762
      %v5978 = vunpack.c.l.b16 %v5776
      %v5979 = vunpack.c.l.b16 %v5786
      %v5980 = vunpack.c.l.b16 %v5800
      %v5981 = vunpack.c.l.b16 %v5810
      %v5982 = vunpack.c.l.b16 %v5824
      %v5983 = vunpack.c.l.b16 %v5834
      %v5984 = vunpack.c.l.b16 %v5848
      %v5985 = vunpack.c.l.b16 %v5858
      %v5986 = vunpack.c.l.b16 %v5872
      %v5987 = vunpack.c.l.b16 %v5882
      %v5988 = vunpack.c.l.b16 %v5896
      %v5989 = vunpack.c.l.b16 %v5906
      %v5990 = vunpack.c.l.b16 %v5920
      %v5991 = vunpack.c.l.b16 %v5930
      %v5992 = vunpack.c.l.b16 %v5944
      %v5993 = vunpack.c.l.b16 %v5954
      %v5994 = vpack.c.b16 %v5963, %v5962
      %v5995 = vpack.c.b16 %v5965, %v5964
      %v5996 = vpack.c.b16 %v5967, %v5966
      %v5997 = vpack.c.b16 %v5969, %v5968
      %v5998 = vpack.c.b16 %v5971, %v5970
      %v5999 = vpack.c.b16 %v5973, %v5972
      %v6000 = vpack.c.b16 %v5975, %v5974
      %v6001 = vpack.c.b16 %v5977, %v5976
      %v6002 = vpack.c.b16 %v5979, %v5978
      %v6003 = vpack.c.b16 %v5981, %v5980
      %v6004 = vpack.c.b16 %v5983, %v5982
      %v6005 = vpack.c.b16 %v5985, %v5984
      %v6006 = vpack.c.b16 %v5987, %v5986
      %v6007 = vpack.c.b16 %v5989, %v5988
      %v6008 = vpack.c.b16 %v5991, %v5990
      %v6009 = vpack.c.b16 %v5993, %v5992
      %v6016 = vunpack.c.l.b16 %v5956
      %v6017 = vunpack.c.l.b16 %v5957
      %v6018 = vunpack.c.l.b16 %v5958
      %v6019 = vunpack.c.l.b16 %v5959
      %v6020 = vunpack.c.l.b16 %v5960
      %v6021 = vunpack.c.l.b16 %v5961
      %v6022 = vpack.c.b16 %v6017, %v6016
      %v6023 = vpack.c.b16 %v6019, %v6018
      %v6024 = vpack.c.b16 %v6021, %v6020
      %vm6027 = vcmask 359424
      %v6029 = vsel %vm6027, %v5994, 0
      %v6032 = vsel %vm6027, %v5995, 0
      %v6035 = vsel %vm6027, %v5996, 0
      %v6038 = vsel %vm6027, %v5997, 0
      %v6041 = vsel %vm6027, %v5998, 0
      %v6044 = vsel %vm6027, %v5999, 0
      %v6047 = vsel %vm6027, %v6000, 0
      %v6050 = vsel %vm6027, %v6001, 0
      %v6053 = vsel %vm6027, %v6002, 0
      %v6056 = vsel %vm6027, %v6003, 0
      %v6059 = vsel %vm6027, %v6004, 0
      %v6062 = vsel %vm6027, %v6005, 0
      %v6065 = vsel %vm6027, %v6006, 0
      %v6068 = vsel %vm6027, %v6007, 0
      %v6071 = vsel %vm6027, %v6008, 0
      %v6074 = vsel %vm6027, %v6009, 0
      %vm6076 = vcmask 1045504
      %v6078 = vsel %vm6076, %v6024, 0
      %6080 = vmatprep.subr.bf16.mxu0 0
      %6081 = vmatpush1.bf16.msra.mxu0 %v6022
      %6082 = vmatprep.subr.bf16.mxu0 0
      %6083 = vmatpush1.bf16.msra.mxu0 %v6023
      %6084 = vmatprep.subr.bf16.mxu0 0
      %6085 = vmatpush1.bf16.msra.mxu0 %v6078
      %6086 = vmatprep.subr.bf16.mxu0 0
      %6087 = vmatpush1.bf16.msra.mxu0 0
      %6088 = vmatprep.subr.bf16.mxu0 0
      %6089 = vmatpush1.bf16.msra.mxu0 0
      %6090 = vmatprep.subr.bf16.mxu0 0
      %6091 = vmatpush1.bf16.msra.mxu0 0
      %6092 = vmatprep.subr.bf16.mxu0 0
      %6093 = vmatpush1.bf16.msra.mxu0 0
      %6094 = vmatprep.subr.bf16.mxu0 0
      %6095 = vmatpush1.bf16.msra.mxu0 0
      %6096 = vmatprep.subr.bf16.mxu0 0
      %6097 = vmatpush1.bf16.msra.mxu0 0
      %6098 = vmatprep.subr.bf16.mxu0 0
      %6099 = vmatpush1.bf16.msra.mxu0 0
      %6100 = vmatprep.subr.bf16.mxu0 0
      %6101 = vmatpush1.bf16.msra.mxu0 0
      %6102 = vmatprep.subr.bf16.mxu0 0
      %6103 = vmatpush1.bf16.msra.mxu0 0
      %6104 = vmatprep.subr.bf16.mxu0 0
      %6105 = vmatpush1.bf16.msra.mxu0 0
      %6106 = vmatprep.subr.bf16.mxu0 0
      %6107 = vmatpush1.bf16.msra.mxu0 0
      %6108 = vmatprep.subr.bf16.mxu0 0
      %6109 = vmatpush1.bf16.msra.mxu0 0
      %6110 = vmatprep.subr.bf16.mxu0 0
      %6111 = vmatpush1.bf16.msra.mxu0 0
      %6112 = vmatprep.mubr.bf16.mxu0 0
      %6113 = vmatmul.mubr.bf16.gmra.mrb[0].mxu0 %v6029
      %v6114 = vpop.f32.mrb[0].mxu0
      %v6115 = vadd.f32 0.0, %v6114
      %v6116 = vpop.f32.mrb[0].mxu0
      %v6117 = vpop.f32.mrb[0].mxu0
      %v6118 = vadd.f32 0.0, %v6117
      %v6119 = vpop.f32.mrb[0].mxu0
      %6120 = vmatprep.mubr.bf16.mxu0 0
      %6121 = vmatmul.mubr.bf16.gmra.mrb[0].mxu0 %v6032
      %v6122 = vpop.f32.mrb[0].mxu0
      %v6123 = vadd.f32 0.0, %v6122
      %v6124 = vpop.f32.mrb[0].mxu0
      %v6125 = vpop.f32.mrb[0].mxu0
      %v6126 = vadd.f32 0.0, %v6125
      %v6127 = vpop.f32.mrb[0].mxu0
      %6128 = vmatprep.mubr.bf16.mxu0 0
      %6129 = vmatmul.mubr.bf16.gmra.mrb[0].mxu0 %v6035
      %v6130 = vpop.f32.mrb[0].mxu0
      %v6131 = vadd.f32 0.0, %v6130
      %v6132 = vpop.f32.mrb[0].mxu0
      %v6133 = vpop.f32.mrb[0].mxu0
      %v6134 = vadd.f32 0.0, %v6133
      %v6135 = vpop.f32.mrb[0].mxu0
      %6136 = vmatprep.mubr.bf16.mxu0 0
      %6137 = vmatmul.mubr.bf16.gmra.mrb[0].mxu0 %v6038
      %v6138 = vpop.f32.mrb[0].mxu0
      %v6139 = vadd.f32 0.0, %v6138
      %v6140 = vpop.f32.mrb[0].mxu0
      %v6141 = vpop.f32.mrb[0].mxu0
      %v6142 = vadd.f32 0.0, %v6141
      %v6143 = vpop.f32.mrb[0].mxu0
      %6144 = vmatprep.mubr.bf16.mxu0 0
      %6145 = vmatmul.mubr.bf16.gmra.mrb[0].mxu0 %v6041
      %v6146 = vpop.f32.mrb[0].mxu0
      %v6147 = vadd.f32 0.0, %v6146
      %v6148 = vpop.f32.mrb[0].mxu0
      %v6149 = vpop.f32.mrb[0].mxu0
      %v6150 = vadd.f32 0.0, %v6149
      %v6151 = vpop.f32.mrb[0].mxu0
      %6152 = vmatprep.mubr.bf16.mxu0 0
      %6153 = vmatmul.mubr.bf16.gmra.mrb[0].mxu0 %v6044
      %v6154 = vpop.f32.mrb[0].mxu0
      %v6155 = vadd.f32 0.0, %v6154
      %v6156 = vpop.f32.mrb[0].mxu0
      %v6157 = vpop.f32.mrb[0].mxu0
      %v6158 = vadd.f32 0.0, %v6157
      %v6159 = vpop.f32.mrb[0].mxu0
      %6160 = vmatprep.mubr.bf16.mxu0 0
      %6161 = vmatmul.mubr.bf16.gmra.mrb[0].mxu0 %v6047
      %v6162 = vpop.f32.mrb[0].mxu0
      %v6163 = vadd.f32 0.0, %v6162
      %v6164 = vpop.f32.mrb[0].mxu0
      %v6165 = vpop.f32.mrb[0].mxu0
      %v6166 = vadd.f32 0.0, %v6165
      %v6167 = vpop.f32.mrb[0].mxu0
      %6168 = vmatprep.mubr.bf16.mxu0 0
      %6169 = vmatmul.mubr.bf16.gmra.mrb[0].mxu0 %v6050
      %v6170 = vpop.f32.mrb[0].mxu0
      %v6171 = vadd.f32 0.0, %v6170
      %v6172 = vpop.f32.mrb[0].mxu0
      %v6173 = vpop.f32.mrb[0].mxu0
      %v6174 = vadd.f32 0.0, %v6173
      %v6175 = vpop.f32.mrb[0].mxu0
      %6176 = vmatprep.mubr.bf16.mxu0 0
      %6177 = vmatmul.mubr.bf16.gmra.mrb[0].mxu0 %v6053
      %v6178 = vpop.f32.mrb[0].mxu0
      %v6179 = vadd.f32 0.0, %v6178
      %v6180 = vpop.f32.mrb[0].mxu0
      %v6181 = vpop.f32.mrb[0].mxu0
      %v6182 = vadd.f32 0.0, %v6181
      %v6183 = vpop.f32.mrb[0].mxu0
      %6184 = vmatprep.mubr.bf16.mxu0 0
      %6185 = vmatmul.mubr.bf16.gmra.mrb[0].mxu0 %v6056
      %v6186 = vpop.f32.mrb[0].mxu0
      %v6187 = vadd.f32 0.0, %v6186
      %v6188 = vpop.f32.mrb[0].mxu0
      %v6189 = vpop.f32.mrb[0].mxu0
      %v6190 = vadd.f32 0.0, %v6189
      %v6191 = vpop.f32.mrb[0].mxu0
      %6192 = vmatprep.mubr.bf16.mxu0 0
      %6193 = vmatmul.mubr.bf16.gmra.mrb[0].mxu0 %v6059
      %v6194 = vpop.f32.mrb[0].mxu0
      %v6195 = vadd.f32 0.0, %v6194
      %v6196 = vpop.f32.mrb[0].mxu0
      %v6197 = vpop.f32.mrb[0].mxu0
      %v6198 = vadd.f32 0.0, %v6197
      %v6199 = vpop.f32.mrb[0].mxu0
      %6200 = vmatprep.mubr.bf16.mxu0 0
      %6201 = vmatmul.mubr.bf16.gmra.mrb[0].mxu0 %v6062
      %v6202 = vpop.f32.mrb[0].mxu0
      %v6203 = vadd.f32 0.0, %v6202
      %v6204 = vpop.f32.mrb[0].mxu0
      %v6205 = vpop.f32.mrb[0].mxu0
      %v6206 = vadd.f32 0.0, %v6205
      %v6207 = vpop.f32.mrb[0].mxu0
      %6208 = vmatprep.mubr.bf16.mxu0 0
      %6209 = vmatmul.mubr.bf16.gmra.mrb[0].mxu0 %v6065
      %v6210 = vpop.f32.mrb[0].mxu0
      %v6211 = vadd.f32 0.0, %v6210
      %v6212 = vpop.f32.mrb[0].mxu0
      %v6213 = vpop.f32.mrb[0].mxu0
      %v6214 = vadd.f32 0.0, %v6213
      %v6215 = vpop.f32.mrb[0].mxu0
      %6216 = vmatprep.mubr.bf16.mxu0 0
      %6217 = vmatmul.mubr.bf16.gmra.mrb[0].mxu0 %v6068
      %v6218 = vpop.f32.mrb[0].mxu0
      %v6219 = vadd.f32 0.0, %v6218
      %v6220 = vpop.f32.mrb[0].mxu0
      %v6221 = vpop.f32.mrb[0].mxu0
      %v6222 = vadd.f32 0.0, %v6221
      %v6223 = vpop.f32.mrb[0].mxu0
      %6224 = vmatprep.mubr.bf16.mxu0 0
      %6225 = vmatmul.mubr.bf16.gmra.mrb[0].mxu0 %v6071
      %v6226 = vpop.f32.mrb[0].mxu0
      %v6227 = vadd.f32 0.0, %v6226
      %v6228 = vpop.f32.mrb[0].mxu0
      %v6229 = vpop.f32.mrb[0].mxu0
      %v6230 = vadd.f32 0.0, %v6229
      %v6231 = vpop.f32.mrb[0].mxu0
      %6232 = vmatprep.mubr.bf16.mxu0 0
      %6233 = vmatmul.mubr.bf16.gmra.mrb[0].mxu0 %v6074
      %v6234 = vpop.f32.mrb[0].mxu0
      %v6235 = vadd.f32 0.0, %v6234
      %v6236 = vpop.f32.mrb[0].mxu0
      %v6237 = vpop.f32.mrb[0].mxu0
      %v6238 = vadd.f32 0.0, %v6237
      %v6239 = vpop.f32.mrb[0].mxu0
      %6240 = vdwg.mxu0
      %v6273 = vunpack.c.l.b16 %v5517
      %v6274 = vunpack.c.l.b16 %v5518
      %v6275 = vunpack.c.l.b16 %v5519
      %v6276 = vunpack.c.l.b16 %v5520
      %v6277 = vunpack.c.l.b16 %v5521
      %v6278 = vunpack.c.l.b16 %v5522
      %v6279 = vunpack.c.l.b16 %v5523
      %v6280 = vunpack.c.l.b16 %v5524
      %v6281 = vunpack.c.l.b16 %v5525
      %v6282 = vunpack.c.l.b16 %v5526
      %v6283 = vunpack.c.l.b16 %v5527
      %v6284 = vunpack.c.l.b16 %v5528
      %v6285 = vunpack.c.l.b16 %v5529
      %v6286 = vunpack.c.l.b16 %v5530
      %v6287 = vunpack.c.l.b16 %v5531
      %v6288 = vunpack.c.l.b16 %v5532
      %v6289 = vunpack.c.l.b16 %v5533
      %v6290 = vunpack.c.l.b16 %v5534
      %v6291 = vunpack.c.l.b16 %v5535
      %v6292 = vunpack.c.l.b16 %v5536
      %v6293 = vunpack.c.l.b16 %v5537
      %v6294 = vunpack.c.l.b16 %v5538
      %v6295 = vunpack.c.l.b16 %v5539
      %v6296 = vunpack.c.l.b16 %v5540
      %v6297 = vunpack.c.l.b16 %v5541
      %v6298 = vunpack.c.l.b16 %v5542
      %v6299 = vunpack.c.l.b16 %v5543
      %v6300 = vunpack.c.l.b16 %v5544
      %v6301 = vunpack.c.l.b16 %v5545
      %v6302 = vunpack.c.l.b16 %v5546
      %v6303 = vunpack.c.l.b16 %v5547
      %v6304 = vunpack.c.l.b16 %v5548
      %v6305 = vpack.c.b16 %v6274, %v6273
      %v6306 = vpack.c.b16 %v6276, %v6275
      %v6307 = vpack.c.b16 %v6278, %v6277
      %v6308 = vpack.c.b16 %v6280, %v6279
      %v6309 = vpack.c.b16 %v6282, %v6281
      %v6310 = vpack.c.b16 %v6284, %v6283
      %v6311 = vpack.c.b16 %v6286, %v6285
      %v6312 = vpack.c.b16 %v6288, %v6287
      %v6313 = vpack.c.b16 %v6290, %v6289
      %v6314 = vpack.c.b16 %v6292, %v6291
      %v6315 = vpack.c.b16 %v6294, %v6293
      %v6316 = vpack.c.b16 %v6296, %v6295
      %v6317 = vpack.c.b16 %v6298, %v6297
      %v6318 = vpack.c.b16 %v6300, %v6299
      %v6319 = vpack.c.b16 %v6302, %v6301
      %v6320 = vpack.c.b16 %v6304, %v6303
      %v6327 = vunpack.c.l.b16 %v5549
      %v6328 = vunpack.c.l.b16 %v5550
      %v6329 = vunpack.c.l.b16 %v5551
      %v6330 = vunpack.c.l.b16 %v5552
      %v6331 = vunpack.c.l.b16 %v5553
      %v6332 = vunpack.c.l.b16 %v5554
      %v6333 = vpack.c.b16 %v6328, %v6327
      %v6334 = vpack.c.b16 %v6330, %v6329
      %v6335 = vpack.c.b16 %v6332, %v6331
      %v6339 = vsel %vm6027, %v6305, 0
      %v6342 = vsel %vm6027, %v6306, 0
      %v6345 = vsel %vm6027, %v6307, 0
      %v6348 = vsel %vm6027, %v6308, 0
      %v6351 = vsel %vm6027, %v6309, 0
      %v6354 = vsel %vm6027, %v6310, 0
      %v6357 = vsel %vm6027, %v6311, 0
      %v6360 = vsel %vm6027, %v6312, 0
      %v6363 = vsel %vm6027, %v6313, 0
      %v6366 = vsel %vm6027, %v6314, 0
      %v6369 = vsel %vm6027, %v6315, 0
      %v6372 = vsel %vm6027, %v6316, 0
      %v6375 = vsel %vm6027, %v6317, 0
      %v6378 = vsel %vm6027, %v6318, 0
      %v6381 = vsel %vm6027, %v6319, 0
      %v6384 = vsel %vm6027, %v6320, 0
      %v6387 = vsel %vm6076, %v6335, 0
      %6389 = vmatprep.subr.bf16.mxu0 0
      %6390 = vmatpush1.bf16.msra.mxu0 %v6333
      %6391 = vmatprep.subr.bf16.mxu0 0
      %6392 = vmatpush1.bf16.msra.mxu0 %v6334
      %6393 = vmatprep.subr.bf16.mxu0 0
      %6394 = vmatpush1.bf16.msra.mxu0 %v6387
      %6395 = vmatprep.subr.bf16.mxu0 0
      %6396 = vmatpush1.bf16.msra.mxu0 0
      %6397 = vmatprep.subr.bf16.mxu0 0
      %6398 = vmatpush1.bf16.msra.mxu0 0
      %6399 = vmatprep.subr.bf16.mxu0 0
      %6400 = vmatpush1.bf16.msra.mxu0 0
      %6401 = vmatprep.subr.bf16.mxu0 0
      %6402 = vmatpush1.bf16.msra.mxu0 0
      %6403 = vmatprep.subr.bf16.mxu0 0
      %6404 = vmatpush1.bf16.msra.mxu0 0
      %6405 = vmatprep.subr.bf16.mxu0 0
      %6406 = vmatpush1.bf16.msra.mxu0 0
      %6407 = vmatprep.subr.bf16.mxu0 0
      %6408 = vmatpush1.bf16.msra.mxu0 0
      %6409 = vmatprep.subr.bf16.mxu0 0
      %6410 = vmatpush1.bf16.msra.mxu0 0
      %6411 = vmatprep.subr.bf16.mxu0 0
      %6412 = vmatpush1.bf16.msra.mxu0 0
      %6413 = vmatprep.subr.bf16.mxu0 0
      %6414 = vmatpush1.bf16.msra.mxu0 0
      %6415 = vmatprep.subr.bf16.mxu0 0
      %6416 = vmatpush1.bf16.msra.mxu0 0
      %6417 = vmatprep.subr.bf16.mxu0 0
      %6418 = vmatpush1.bf16.msra.mxu0 0
      %6419 = vmatprep.subr.bf16.mxu0 0
      %6420 = vmatpush1.bf16.msra.mxu0 0
      %6421 = vmatprep.mubr.bf16.mxu0 0
      %6422 = vmatmul.mubr.bf16.gmra.mrb[0].mxu0 %v6339
      %v6423 = vpop.f32.mrb[0].mxu0
      %v6424 = vadd.f32 %v6115, %v6423
      %v6425 = vpop.f32.mrb[0].mxu0
      %v6426 = vpop.f32.mrb[0].mxu0
      %v6427 = vadd.f32 %v6118, %v6426
      %v6428 = vpop.f32.mrb[0].mxu0
      %6429 = vmatprep.mubr.bf16.mxu0 0
      %6430 = vmatmul.mubr.bf16.gmra.mrb[0].mxu0 %v6342
      %v6431 = vpop.f32.mrb[0].mxu0
      %v6432 = vadd.f32 %v6123, %v6431
      %v6433 = vpop.f32.mrb[0].mxu0
      %v6434 = vpop.f32.mrb[0].mxu0
      %v6435 = vadd.f32 %v6126, %v6434
      %v6436 = vpop.f32.mrb[0].mxu0
      %6437 = vmatprep.mubr.bf16.mxu0 0
      %6438 = vmatmul.mubr.bf16.gmra.mrb[0].mxu0 %v6345
      %v6439 = vpop.f32.mrb[0].mxu0
      %v6440 = vadd.f32 %v6131, %v6439
      %v6441 = vpop.f32.mrb[0].mxu0
      %v6442 = vpop.f32.mrb[0].mxu0
      %v6443 = vadd.f32 %v6134, %v6442
      %v6444 = vpop.f32.mrb[0].mxu0
      %6445 = vmatprep.mubr.bf16.mxu0 0
      %6446 = vmatmul.mubr.bf16.gmra.mrb[0].mxu0 %v6348
      %v6447 = vpop.f32.mrb[0].mxu0
      %v6448 = vadd.f32 %v6139, %v6447
      %v6449 = vpop.f32.mrb[0].mxu0
      %v6450 = vpop.f32.mrb[0].mxu0
      %v6451 = vadd.f32 %v6142, %v6450
      %v6452 = vpop.f32.mrb[0].mxu0
      %6453 = vmatprep.mubr.bf16.mxu0 0
      %6454 = vmatmul.mubr.bf16.gmra.mrb[0].mxu0 %v6351
      %v6455 = vpop.f32.mrb[0].mxu0
      %v6456 = vadd.f32 %v6147, %v6455
      %v6457 = vpop.f32.mrb[0].mxu0
      %v6458 = vpop.f32.mrb[0].mxu0
      %v6459 = vadd.f32 %v6150, %v6458
      %v6460 = vpop.f32.mrb[0].mxu0
      %6461 = vmatprep.mubr.bf16.mxu0 0
      %6462 = vmatmul.mubr.bf16.gmra.mrb[0].mxu0 %v6354
      %v6463 = vpop.f32.mrb[0].mxu0
      %v6464 = vadd.f32 %v6155, %v6463
      %v6465 = vpop.f32.mrb[0].mxu0
      %v6466 = vpop.f32.mrb[0].mxu0
      %v6467 = vadd.f32 %v6158, %v6466
      %v6468 = vpop.f32.mrb[0].mxu0
      %6469 = vmatprep.mubr.bf16.mxu0 0
      %6470 = vmatmul.mubr.bf16.gmra.mrb[0].mxu0 %v6357
      %v6471 = vpop.f32.mrb[0].mxu0
      %v6472 = vadd.f32 %v6163, %v6471
      %v6473 = vpop.f32.mrb[0].mxu0
      %v6474 = vpop.f32.mrb[0].mxu0
      %v6475 = vadd.f32 %v6166, %v6474
      %v6476 = vpop.f32.mrb[0].mxu0
      %6477 = vmatprep.mubr.bf16.mxu0 0
      %6478 = vmatmul.mubr.bf16.gmra.mrb[0].mxu0 %v6360
      %v6479 = vpop.f32.mrb[0].mxu0
      %v6480 = vadd.f32 %v6171, %v6479
      %v6481 = vpop.f32.mrb[0].mxu0
      %v6482 = vpop.f32.mrb[0].mxu0
      %v6483 = vadd.f32 %v6174, %v6482
      %v6484 = vpop.f32.mrb[0].mxu0
      %6485 = vmatprep.mubr.bf16.mxu0 0
      %6486 = vmatmul.mubr.bf16.gmra.mrb[0].mxu0 %v6363
      %v6487 = vpop.f32.mrb[0].mxu0
      %v6488 = vadd.f32 %v6179, %v6487
      %v6489 = vpop.f32.mrb[0].mxu0
      %v6490 = vpop.f32.mrb[0].mxu0
      %v6491 = vadd.f32 %v6182, %v6490
      %v6492 = vpop.f32.mrb[0].mxu0
      %6493 = vmatprep.mubr.bf16.mxu0 0
      %6494 = vmatmul.mubr.bf16.gmra.mrb[0].mxu0 %v6366
      %v6495 = vpop.f32.mrb[0].mxu0
      %v6496 = vadd.f32 %v6187, %v6495
      %v6497 = vpop.f32.mrb[0].mxu0
      %v6498 = vpop.f32.mrb[0].mxu0
      %v6499 = vadd.f32 %v6190, %v6498
      %v6500 = vpop.f32.mrb[0].mxu0
      %6501 = vmatprep.mubr.bf16.mxu0 0
      %6502 = vmatmul.mubr.bf16.gmra.mrb[0].mxu0 %v6369
      %v6503 = vpop.f32.mrb[0].mxu0
      %v6504 = vadd.f32 %v6195, %v6503
      %v6505 = vpop.f32.mrb[0].mxu0
      %v6506 = vpop.f32.mrb[0].mxu0
      %v6507 = vadd.f32 %v6198, %v6506
      %v6508 = vpop.f32.mrb[0].mxu0
      %6509 = vmatprep.mubr.bf16.mxu0 0
      %6510 = vmatmul.mubr.bf16.gmra.mrb[0].mxu0 %v6372
      %v6511 = vpop.f32.mrb[0].mxu0
      %v6512 = vadd.f32 %v6203, %v6511
      %v6513 = vpop.f32.mrb[0].mxu0
      %v6514 = vpop.f32.mrb[0].mxu0
      %v6515 = vadd.f32 %v6206, %v6514
      %v6516 = vpop.f32.mrb[0].mxu0
      %6517 = vmatprep.mubr.bf16.mxu0 0
      %6518 = vmatmul.mubr.bf16.gmra.mrb[0].mxu0 %v6375
      %v6519 = vpop.f32.mrb[0].mxu0
      %v6520 = vadd.f32 %v6211, %v6519
      %v6521 = vpop.f32.mrb[0].mxu0
      %v6522 = vpop.f32.mrb[0].mxu0
      %v6523 = vadd.f32 %v6214, %v6522
      %v6524 = vpop.f32.mrb[0].mxu0
      %6525 = vmatprep.mubr.bf16.mxu0 0
      %6526 = vmatmul.mubr.bf16.gmra.mrb[0].mxu0 %v6378
      %v6527 = vpop.f32.mrb[0].mxu0
      %v6528 = vadd.f32 %v6219, %v6527
      %v6529 = vpop.f32.mrb[0].mxu0
      %v6530 = vpop.f32.mrb[0].mxu0
      %v6531 = vadd.f32 %v6222, %v6530
      %v6532 = vpop.f32.mrb[0].mxu0
      %6533 = vmatprep.mubr.bf16.mxu0 0
      %6534 = vmatmul.mubr.bf16.gmra.mrb[0].mxu0 %v6381
      %v6535 = vpop.f32.mrb[0].mxu0
      %v6536 = vadd.f32 %v6227, %v6535
      %v6537 = vpop.f32.mrb[0].mxu0
      %v6538 = vpop.f32.mrb[0].mxu0
      %v6539 = vadd.f32 %v6230, %v6538
      %v6540 = vpop.f32.mrb[0].mxu0
      %6541 = vmatprep.mubr.bf16.mxu0 0
      %6542 = vmatmul.mubr.bf16.gmra.mrb[0].mxu0 %v6384
      %v6543 = vpop.f32.mrb[0].mxu0
      %v6544 = vadd.f32 %v6235, %v6543
      %v6545 = vpop.f32.mrb[0].mxu0
      %v6546 = vpop.f32.mrb[0].mxu0
      %v6547 = vadd.f32 %v6238, %v6546
      %v6548 = vpop.f32.mrb[0].mxu0
      %6549 = vdwg.mxu0
      %v6550 = vld [vmem:[%s1561] sm:$0xf]
      %v6551 = vld [vmem:[%s1561 + $0x4] sm:$0xf]
      %v6552 = vld [vmem:[%s1561 + $0xc] sm:$0xf]
      %v6553 = vld [vmem:[%s1561 + $0x10] sm:$0xf]
      %v6554 = vld [vmem:[%s1561 + $0x18] sm:$0xf]
      %v6555 = vld [vmem:[%s1561 + $0x1c] sm:$0xf]
      %v6556 = vld [vmem:[%s1561 + $0x24] sm:$0xf]
      %v6557 = vld [vmem:[%s1561 + $0x28] sm:$0xf]
      %v6558 = vld [vmem:[%s1561 + $0x30] sm:$0xf]
      %v6559 = vld [vmem:[%s1561 + $0x34] sm:$0xf]
      %v6560 = vld [vmem:[%s1561 + $0x3c] sm:$0xf]
      %v6561 = vld [vmem:[%s1561 + $0x40] sm:$0xf]
      %v6562 = vld [vmem:[%s1561 + $0x48] sm:$0xf]
      %v6563 = vld [vmem:[%s1561 + $0x4c] sm:$0xf]
      %v6564 = vld [vmem:[%s1561 + $0x54] sm:$0xf]
      %v6565 = vld [vmem:[%s1561 + $0x58] sm:$0xf]
      %v6566 = vld [vmem:[%s1561 + $0x60] sm:$0xf]
      %v6567 = vld [vmem:[%s1561 + $0x64] sm:$0xf]
      %v6568 = vld [vmem:[%s1561 + $0x6c] sm:$0xf]
      %v6569 = vld [vmem:[%s1561 + $0x70] sm:$0xf]
      %v6570 = vld [vmem:[%s1561 + $0x78] sm:$0xf]
      %v6571 = vld [vmem:[%s1561 + $0x7c] sm:$0xf]
      %v6572 = vld [vmem:[%s1561 + $0x84] sm:$0xf]
      %v6573 = vld [vmem:[%s1561 + $0x88] sm:$0xf]
      %v6574 = vld [vmem:[%s1561 + $0x90] sm:$0xf]
      %v6575 = vld [vmem:[%s1561 + $0x94] sm:$0xf]
      %v6576 = vld [vmem:[%s1561 + $0x9c] sm:$0xf]
      %v6577 = vld [vmem:[%s1561 + $0xa0] sm:$0xf]
      %v6578 = vld [vmem:[%s1561 + $0xa8] sm:$0xf]
      %v6579 = vld [vmem:[%s1561 + $0xac] sm:$0xf]
      %v6580 = vld [vmem:[%s1561 + $0xb4] sm:$0xf]
      %v6581 = vld [vmem:[%s1561 + $0xb8] sm:$0xf]
      %s6582 = scalar_lea.vmem %s3, 48
      %v6583 = vld [vmem:[%s6582] sm:$0xf]
      %v6584 = vld [vmem:[%s6582 + $0x4] sm:$0xf]
      %v6585 = vld [vmem:[%s6582 + $0x8] sm:$0xf]
      %v6586 = vld [vmem:[%s6582 + $0xc] sm:$0xf]
      %v6587 = vld [vmem:[%s6582 + $0x10] sm:$0xf]
      %v6588 = vld [vmem:[%s6582 + $0x14] sm:$0x3]
      %v6621 = vunpack.c.l.b16 %v6550
      %v6622 = vunpack.c.l.b16 %v6551
      %v6623 = vunpack.c.l.b16 %v6552
      %v6624 = vunpack.c.l.b16 %v6553
      %v6625 = vunpack.c.l.b16 %v6554
      %v6626 = vunpack.c.l.b16 %v6555
      %v6627 = vunpack.c.l.b16 %v6556
      %v6628 = vunpack.c.l.b16 %v6557
      %v6629 = vunpack.c.l.b16 %v6558
      %v6630 = vunpack.c.l.b16 %v6559
      %v6631 = vunpack.c.l.b16 %v6560
      %v6632 = vunpack.c.l.b16 %v6561
      %v6633 = vunpack.c.l.b16 %v6562
      %v6634 = vunpack.c.l.b16 %v6563
      %v6635 = vunpack.c.l.b16 %v6564
      %v6636 = vunpack.c.l.b16 %v6565
      %v6637 = vunpack.c.l.b16 %v6566
      %v6638 = vunpack.c.l.b16 %v6567
      %v6639 = vunpack.c.l.b16 %v6568
      %v6640 = vunpack.c.l.b16 %v6569
      %v6641 = vunpack.c.l.b16 %v6570
      %v6642 = vunpack.c.l.b16 %v6571
      %v6643 = vunpack.c.l.b16 %v6572
      %v6644 = vunpack.c.l.b16 %v6573
      %v6645 = vunpack.c.l.b16 %v6574
      %v6646 = vunpack.c.l.b16 %v6575
      %v6647 = vunpack.c.l.b16 %v6576
      %v6648 = vunpack.c.l.b16 %v6577
      %v6649 = vunpack.c.l.b16 %v6578
      %v6650 = vunpack.c.l.b16 %v6579
      %v6651 = vunpack.c.l.b16 %v6580
      %v6652 = vunpack.c.l.b16 %v6581
      %v6653 = vpack.c.b16 %v6622, %v6621
      %v6654 = vpack.c.b16 %v6624, %v6623
      %v6655 = vpack.c.b16 %v6626, %v6625
      %v6656 = vpack.c.b16 %v6628, %v6627
      %v6657 = vpack.c.b16 %v6630, %v6629
      %v6658 = vpack.c.b16 %v6632, %v6631
      %v6659 = vpack.c.b16 %v6634, %v6633
      %v6660 = vpack.c.b16 %v6636, %v6635
      %v6661 = vpack.c.b16 %v6638, %v6637
      %v6662 = vpack.c.b16 %v6640, %v6639
      %v6663 = vpack.c.b16 %v6642, %v6641
      %v6664 = vpack.c.b16 %v6644, %v6643
      %v6665 = vpack.c.b16 %v6646, %v6645
      %v6666 = vpack.c.b16 %v6648, %v6647
      %v6667 = vpack.c.b16 %v6650, %v6649
      %v6668 = vpack.c.b16 %v6652, %v6651
      %v6675 = vunpack.c.l.b16 %v6583
      %v6676 = vunpack.c.l.b16 %v6584
      %v6677 = vunpack.c.l.b16 %v6585
      %v6678 = vunpack.c.l.b16 %v6586
      %v6679 = vunpack.c.l.b16 %v6587
      %v6680 = vunpack.c.l.b16 %v6588
      %v6681 = vpack.c.b16 %v6676, %v6675
      %v6682 = vpack.c.b16 %v6678, %v6677
      %v6683 = vpack.c.b16 %v6680, %v6679
      %v6687 = vsel %vm6027, %v6653, 0
      %v6690 = vsel %vm6027, %v6654, 0
      %v6693 = vsel %vm6027, %v6655, 0
      %v6696 = vsel %vm6027, %v6656, 0
      %v6699 = vsel %vm6027, %v6657, 0
      %v6702 = vsel %vm6027, %v6658, 0
      %v6705 = vsel %vm6027, %v6659, 0
      %v6708 = vsel %vm6027, %v6660, 0
      %v6711 = vsel %vm6027, %v6661, 0
      %v6714 = vsel %vm6027, %v6662, 0
      %v6717 = vsel %vm6027, %v6663, 0
      %v6720 = vsel %vm6027, %v6664, 0
      %v6723 = vsel %vm6027, %v6665, 0
      %v6726 = vsel %vm6027, %v6666, 0
      %v6729 = vsel %vm6027, %v6667, 0
      %v6732 = vsel %vm6027, %v6668, 0
      %v6735 = vsel %vm6076, %v6683, 0
      %6737 = vmatprep.subr.bf16.mxu0 0
      %6738 = vmatpush1.bf16.msra.mxu0 %v6681
      %6739 = vmatprep.subr.bf16.mxu0 0
      %6740 = vmatpush1.bf16.msra.mxu0 %v6682
      %6741 = vmatprep.subr.bf16.mxu0 0
      %6742 = vmatpush1.bf16.msra.mxu0 %v6735
      %6743 = vmatprep.subr.bf16.mxu0 0
      %6744 = vmatpush1.bf16.msra.mxu0 0
      %6745 = vmatprep.subr.bf16.mxu0 0
      %6746 = vmatpush1.bf16.msra.mxu0 0
      %6747 = vmatprep.subr.bf16.mxu0 0
      %6748 = vmatpush1.bf16.msra.mxu0 0
      %6749 = vmatprep.subr.bf16.mxu0 0
      %6750 = vmatpush1.bf16.msra.mxu0 0
      %6751 = vmatprep.subr.bf16.mxu0 0
      %6752 = vmatpush1.bf16.msra.mxu0 0
      %6753 = vmatprep.subr.bf16.mxu0 0
      %6754 = vmatpush1.bf16.msra.mxu0 0
      %6755 = vmatprep.subr.bf16.mxu0 0
      %6756 = vmatpush1.bf16.msra.mxu0 0
      %6757 = vmatprep.subr.bf16.mxu0 0
      %6758 = vmatpush1.bf16.msra.mxu0 0
      %6759 = vmatprep.subr.bf16.mxu0 0
      %6760 = vmatpush1.bf16.msra.mxu0 0
      %6761 = vmatprep.subr.bf16.mxu0 0
      %6762 = vmatpush1.bf16.msra.mxu0 0
      %6763 = vmatprep.subr.bf16.mxu0 0
      %6764 = vmatpush1.bf16.msra.mxu0 0
      %6765 = vmatprep.subr.bf16.mxu0 0
      %6766 = vmatpush1.bf16.msra.mxu0 0
      %6767 = vmatprep.subr.bf16.mxu0 0
      %6768 = vmatpush1.bf16.msra.mxu0 0
      %6769 = vmatprep.mubr.bf16.mxu0 0
      %6770 = vmatmul.mubr.bf16.gmra.mrb[0].mxu0 %v6687
      %v6771 = vpop.f32.mrb[0].mxu0
      %v6772 = vadd.f32 0.0, %v6771
      %v6773 = vpop.f32.mrb[0].mxu0
      %v6774 = vpop.f32.mrb[0].mxu0
      %v6775 = vadd.f32 0.0, %v6774
      %v6776 = vpop.f32.mrb[0].mxu0
      %6777 = vmatprep.mubr.bf16.mxu0 0
      %6778 = vmatmul.mubr.bf16.gmra.mrb[0].mxu0 %v6690
      %v6779 = vpop.f32.mrb[0].mxu0
      %v6780 = vadd.f32 0.0, %v6779
      %v6781 = vpop.f32.mrb[0].mxu0
      %v6782 = vpop.f32.mrb[0].mxu0
      %v6783 = vadd.f32 0.0, %v6782
      %v6784 = vpop.f32.mrb[0].mxu0
      %6785 = vmatprep.mubr.bf16.mxu0 0
      %6786 = vmatmul.mubr.bf16.gmra.mrb[0].mxu0 %v6693
      %v6787 = vpop.f32.mrb[0].mxu0
      %v6788 = vadd.f32 0.0, %v6787
      %v6789 = vpop.f32.mrb[0].mxu0
      %v6790 = vpop.f32.mrb[0].mxu0
      %v6791 = vadd.f32 0.0, %v6790
      %v6792 = vpop.f32.mrb[0].mxu0
      %6793 = vmatprep.mubr.bf16.mxu0 0
      %6794 = vmatmul.mubr.bf16.gmra.mrb[0].mxu0 %v6696
      %v6795 = vpop.f32.mrb[0].mxu0
      %v6796 = vadd.f32 0.0, %v6795
      %v6797 = vpop.f32.mrb[0].mxu0
      %v6798 = vpop.f32.mrb[0].mxu0
      %v6799 = vadd.f32 0.0, %v6798
      %v6800 = vpop.f32.mrb[0].mxu0
      %6801 = vmatprep.mubr.bf16.mxu0 0
      %6802 = vmatmul.mubr.bf16.gmra.mrb[0].mxu0 %v6699
      %v6803 = vpop.f32.mrb[0].mxu0
      %v6804 = vadd.f32 0.0, %v6803
      %v6805 = vpop.f32.mrb[0].mxu0
      %v6806 = vpop.f32.mrb[0].mxu0
      %v6807 = vadd.f32 0.0, %v6806
      %v6808 = vpop.f32.mrb[0].mxu0
      %6809 = vmatprep.mubr.bf16.mxu0 0
      %6810 = vmatmul.mubr.bf16.gmra.mrb[0].mxu0 %v6702
      %v6811 = vpop.f32.mrb[0].mxu0
      %v6812 = vadd.f32 0.0, %v6811
      %v6813 = vpop.f32.mrb[0].mxu0
      %v6814 = vpop.f32.mrb[0].mxu0
      %v6815 = vadd.f32 0.0, %v6814
      %v6816 = vpop.f32.mrb[0].mxu0
      %6817 = vmatprep.mubr.bf16.mxu0 0
      %6818 = vmatmul.mubr.bf16.gmra.mrb[0].mxu0 %v6705
      %v6819 = vpop.f32.mrb[0].mxu0
      %v6820 = vadd.f32 0.0, %v6819
      %v6821 = vpop.f32.mrb[0].mxu0
      %v6822 = vpop.f32.mrb[0].mxu0
      %v6823 = vadd.f32 0.0, %v6822
      %v6824 = vpop.f32.mrb[0].mxu0
      %6825 = vmatprep.mubr.bf16.mxu0 0
      %6826 = vmatmul.mubr.bf16.gmra.mrb[0].mxu0 %v6708
      %v6827 = vpop.f32.mrb[0].mxu0
      %v6828 = vadd.f32 0.0, %v6827
      %v6829 = vpop.f32.mrb[0].mxu0
      %v6830 = vpop.f32.mrb[0].mxu0
      %v6831 = vadd.f32 0.0, %v6830
      %v6832 = vpop.f32.mrb[0].mxu0
      %6833 = vmatprep.mubr.bf16.mxu0 0
      %6834 = vmatmul.mubr.bf16.gmra.mrb[0].mxu0 %v6711
      %v6835 = vpop.f32.mrb[0].mxu0
      %v6836 = vadd.f32 0.0, %v6835
      %v6837 = vpop.f32.mrb[0].mxu0
      %v6838 = vpop.f32.mrb[0].mxu0
      %v6839 = vadd.f32 0.0, %v6838
      %v6840 = vpop.f32.mrb[0].mxu0
      %6841 = vmatprep.mubr.bf16.mxu0 0
      %6842 = vmatmul.mubr.bf16.gmra.mrb[0].mxu0 %v6714
      %v6843 = vpop.f32.mrb[0].mxu0
      %v6844 = vadd.f32 0.0, %v6843
      %v6845 = vpop.f32.mrb[0].mxu0
      %v6846 = vpop.f32.mrb[0].mxu0
      %v6847 = vadd.f32 0.0, %v6846
      %v6848 = vpop.f32.mrb[0].mxu0
      %6849 = vmatprep.mubr.bf16.mxu0 0
      %6850 = vmatmul.mubr.bf16.gmra.mrb[0].mxu0 %v6717
      %v6851 = vpop.f32.mrb[0].mxu0
      %v6852 = vadd.f32 0.0, %v6851
      %v6853 = vpop.f32.mrb[0].mxu0
      %v6854 = vpop.f32.mrb[0].mxu0
      %v6855 = vadd.f32 0.0, %v6854
      %v6856 = vpop.f32.mrb[0].mxu0
      %6857 = vmatprep.mubr.bf16.mxu0 0
      %6858 = vmatmul.mubr.bf16.gmra.mrb[0].mxu0 %v6720
      %v6859 = vpop.f32.mrb[0].mxu0
      %v6860 = vadd.f32 0.0, %v6859
      %v6861 = vpop.f32.mrb[0].mxu0
      %v6862 = vpop.f32.mrb[0].mxu0
      %v6863 = vadd.f32 0.0, %v6862
      %v6864 = vpop.f32.mrb[0].mxu0
      %6865 = vmatprep.mubr.bf16.mxu0 0
      %6866 = vmatmul.mubr.bf16.gmra.mrb[0].mxu0 %v6723
      %v6867 = vpop.f32.mrb[0].mxu0
      %v6868 = vadd.f32 0.0, %v6867
      %v6869 = vpop.f32.mrb[0].mxu0
      %v6870 = vpop.f32.mrb[0].mxu0
      %v6871 = vadd.f32 0.0, %v6870
      %v6872 = vpop.f32.mrb[0].mxu0
      %6873 = vmatprep.mubr.bf16.mxu0 0
      %6874 = vmatmul.mubr.bf16.gmra.mrb[0].mxu0 %v6726
      %v6875 = vpop.f32.mrb[0].mxu0
      %v6876 = vadd.f32 0.0, %v6875
      %v6877 = vpop.f32.mrb[0].mxu0
      %v6878 = vpop.f32.mrb[0].mxu0
      %v6879 = vadd.f32 0.0, %v6878
      %v6880 = vpop.f32.mrb[0].mxu0
      %6881 = vmatprep.mubr.bf16.mxu0 0
      %6882 = vmatmul.mubr.bf16.gmra.mrb[0].mxu0 %v6729
      %v6883 = vpop.f32.mrb[0].mxu0
      %v6884 = vadd.f32 0.0, %v6883
      %v6885 = vpop.f32.mrb[0].mxu0
      %v6886 = vpop.f32.mrb[0].mxu0
      %v6887 = vadd.f32 0.0, %v6886
      %v6888 = vpop.f32.mrb[0].mxu0
      %6889 = vmatprep.mubr.bf16.mxu0 0
      %6890 = vmatmul.mubr.bf16.gmra.mrb[0].mxu0 %v6732
      %v6891 = vpop.f32.mrb[0].mxu0
      %v6892 = vadd.f32 0.0, %v6891
      %v6893 = vpop.f32.mrb[0].mxu0
      %v6894 = vpop.f32.mrb[0].mxu0
      %v6895 = vadd.f32 0.0, %v6894
      %v6896 = vpop.f32.mrb[0].mxu0
      %6897 = vdwg.mxu0
      %v6898 = vadd.f32 %v6424, %v6772
      %v6899 = vadd.f32 %v6427, %v6775
      %v6900 = vadd.f32 %v6432, %v6780
      %v6901 = vadd.f32 %v6435, %v6783
      %v6902 = vadd.f32 %v6440, %v6788
      %v6903 = vadd.f32 %v6443, %v6791
      %v6904 = vadd.f32 %v6448, %v6796
      %v6905 = vadd.f32 %v6451, %v6799
      %v6906 = vadd.f32 %v6456, %v6804
      %v6907 = vadd.f32 %v6459, %v6807
      %v6908 = vadd.f32 %v6464, %v6812
      %v6909 = vadd.f32 %v6467, %v6815
      %v6910 = vadd.f32 %v6472, %v6820
      %v6911 = vadd.f32 %v6475, %v6823
      %v6912 = vadd.f32 %v6480, %v6828
      %v6913 = vadd.f32 %v6483, %v6831
      %v6914 = vadd.f32 %v6488, %v6836
      %v6915 = vadd.f32 %v6491, %v6839
      %v6916 = vadd.f32 %v6496, %v6844
      %v6917 = vadd.f32 %v6499, %v6847
      %v6918 = vadd.f32 %v6504, %v6852
      %v6919 = vadd.f32 %v6507, %v6855
      %v6920 = vadd.f32 %v6512, %v6860
      %v6921 = vadd.f32 %v6515, %v6863
      %v6922 = vadd.f32 %v6520, %v6868
      %v6923 = vadd.f32 %v6523, %v6871
      %v6924 = vadd.f32 %v6528, %v6876
      %v6925 = vadd.f32 %v6531, %v6879
      %v6926 = vadd.f32 %v6536, %v6884
      %v6927 = vadd.f32 %v6539, %v6887
      %v6928 = vadd.f32 %v6544, %v6892
      %v6929 = vadd.f32 %v6547, %v6895
      %v6930 = vld [vmem:[%s1561] sm:$0xf]
      %v6931 = vld [vmem:[%s1561 + $0x4] sm:$0xf]
      %v6932 = vld [vmem:[%s1561 + $0x8] sm:$0x1]
      %v6933 = vld [vmem:[%s1561 + $0xc] sm:$0xf]
      %v6934 = vld [vmem:[%s1561 + $0x10] sm:$0xf]
      %v6935 = vld [vmem:[%s1561 + $0x14] sm:$0x1]
      %v6936 = vld [vmem:[%s1561 + $0x18] sm:$0xf]
      %v6937 = vld [vmem:[%s1561 + $0x1c] sm:$0xf]
      %v6938 = vld [vmem:[%s1561 + $0x20] sm:$0x1]
      %v6939 = vld [vmem:[%s1561 + $0x24] sm:$0xf]
      %v6940 = vld [vmem:[%s1561 + $0x28] sm:$0xf]
      %v6941 = vld [vmem:[%s1561 + $0x2c] sm:$0x1]
      %v6942 = vld [vmem:[%s1561 + $0x30] sm:$0xf]
      %v6943 = vld [vmem:[%s1561 + $0x34] sm:$0xf]
      %v6944 = vld [vmem:[%s1561 + $0x38] sm:$0x1]
      %v6945 = vld [vmem:[%s1561 + $0x3c] sm:$0xf]
      %v6946 = vld [vmem:[%s1561 + $0x40] sm:$0xf]
      %v6947 = vld [vmem:[%s1561 + $0x44] sm:$0x1]
      %v6948 = vld [vmem:[%s1561 + $0x48] sm:$0xf]
      %v6949 = vld [vmem:[%s1561 + $0x4c] sm:$0xf]
      %v6950 = vld [vmem:[%s1561 + $0x50] sm:$0x1]
      %v6951 = vld [vmem:[%s1561 + $0x54] sm:$0xf]
      %v6952 = vld [vmem:[%s1561 + $0x58] sm:$0xf]
      %v6953 = vld [vmem:[%s1561 + $0x5c] sm:$0x1]
      %v6954 = vld [vmem:[%s1561 + $0x60] sm:$0xf]
      %v6955 = vld [vmem:[%s1561 + $0x64] sm:$0xf]
      %v6956 = vld [vmem:[%s1561 + $0x68] sm:$0x1]
      %v6957 = vld [vmem:[%s1561 + $0x6c] sm:$0xf]
      %v6958 = vld [vmem:[%s1561 + $0x70] sm:$0xf]
      %v6959 = vld [vmem:[%s1561 + $0x74] sm:$0x1]
      %v6960 = vld [vmem:[%s1561 + $0x78] sm:$0xf]
      %v6961 = vld [vmem:[%s1561 + $0x7c] sm:$0xf]
      %v6962 = vld [vmem:[%s1561 + $0x80] sm:$0x1]
      %v6963 = vld [vmem:[%s1561 + $0x84] sm:$0xf]
      %v6964 = vld [vmem:[%s1561 + $0x88] sm:$0xf]
      %v6965 = vld [vmem:[%s1561 + $0x8c] sm:$0x1]
      %v6966 = vld [vmem:[%s1561 + $0x90] sm:$0xf]
      %v6967 = vld [vmem:[%s1561 + $0x94] sm:$0xf]
      %v6968 = vld [vmem:[%s1561 + $0x98] sm:$0x1]
      %v6969 = vld [vmem:[%s1561 + $0x9c] sm:$0xf]
      %v6970 = vld [vmem:[%s1561 + $0xa0] sm:$0xf]
      %v6971 = vld [vmem:[%s1561 + $0xa4] sm:$0x1]
      %v6972 = vld [vmem:[%s1561 + $0xa8] sm:$0xf]
      %v6973 = vld [vmem:[%s1561 + $0xac] sm:$0xf]
      %v6974 = vld [vmem:[%s1561 + $0xb0] sm:$0x1]
      %v6975 = vld [vmem:[%s1561 + $0xb4] sm:$0xf]
      %v6976 = vld [vmem:[%s1561 + $0xb8] sm:$0xf]
      %v6977 = vld [vmem:[%s1561 + $0xbc] sm:$0x1]
      %v6979 = vshrl.u32 %v6930, 16
      %v6981 = vrot.slane %v6979, 4
      %v6982 = vshll.u32 %v6930, 16
      %v6984 = vrot.slane %v6982, 5
      %v6985 = vor.u32 %v6981, %v6984
      %v6986 = vrot.slane %v6985, 4
      %v6988 = vshll.u32 %v6931, 16
      %v6990 = vrot.slane %v6988, 5
      %v6991 = vsel %vm620, %v6986, %v6990
      %v6992 = vshrl.u32 %v6931, 16
      %v6994 = vrot.slane %v6992, 4
      %v6995 = vor.u32 %v6994, %v6990
      %v6996 = vrot.slane %v6995, 4
      %v6998 = vshll.u32 %v6932, 16
      %v7000 = vrot.slane %v6998, 5
      %v7001 = vsel %vm620, %v6996, %v7000
      %v7003 = vshrl.u32 %v6933, 16
      %v7005 = vrot.slane %v7003, 4
      %v7006 = vshll.u32 %v6933, 16
      %v7008 = vrot.slane %v7006, 5
      %v7009 = vor.u32 %v7005, %v7008
      %v7010 = vrot.slane %v7009, 4
      %v7012 = vshll.u32 %v6934, 16
      %v7014 = vrot.slane %v7012, 5
      %v7015 = vsel %vm620, %v7010, %v7014
      %v7016 = vshrl.u32 %v6934, 16
      %v7018 = vrot.slane %v7016, 4
      %v7019 = vor.u32 %v7018, %v7014
      %v7020 = vrot.slane %v7019, 4
      %v7022 = vshll.u32 %v6935, 16
      %v7024 = vrot.slane %v7022, 5
      %v7025 = vsel %vm620, %v7020, %v7024
      %v7027 = vshrl.u32 %v6936, 16
      %v7029 = vrot.slane %v7027, 4
      %v7030 = vshll.u32 %v6936, 16
      %v7032 = vrot.slane %v7030, 5
      %v7033 = vor.u32 %v7029, %v7032
      %v7034 = vrot.slane %v7033, 4
      %v7036 = vshll.u32 %v6937, 16
      %v7038 = vrot.slane %v7036, 5
      %v7039 = vsel %vm620, %v7034, %v7038
      %v7040 = vshrl.u32 %v6937, 16
      %v7042 = vrot.slane %v7040, 4
      %v7043 = vor.u32 %v7042, %v7038
      %v7044 = vrot.slane %v7043, 4
      %v7046 = vshll.u32 %v6938, 16
      %v7048 = vrot.slane %v7046, 5
      %v7049 = vsel %vm620, %v7044, %v7048
      %v7051 = vshrl.u32 %v6939, 16
      %v7053 = vrot.slane %v7051, 4
      %v7054 = vshll.u32 %v6939, 16
      %v7056 = vrot.slane %v7054, 5
      %v7057 = vor.u32 %v7053, %v7056
      %v7058 = vrot.slane %v7057, 4
      %v7060 = vshll.u32 %v6940, 16
      %v7062 = vrot.slane %v7060, 5
      %v7063 = vsel %vm620, %v7058, %v7062
      %v7064 = vshrl.u32 %v6940, 16
      %v7066 = vrot.slane %v7064, 4
      %v7067 = vor.u32 %v7066, %v7062
      %v7068 = vrot.slane %v7067, 4
      %v7070 = vshll.u32 %v6941, 16
      %v7072 = vrot.slane %v7070, 5
      %v7073 = vsel %vm620, %v7068, %v7072
      %v7075 = vshrl.u32 %v6942, 16
      %v7077 = vrot.slane %v7075, 4
      %v7078 = vshll.u32 %v6942, 16
      %v7080 = vrot.slane %v7078, 5
      %v7081 = vor.u32 %v7077, %v7080
      %v7082 = vrot.slane %v7081, 4
      %v7084 = vshll.u32 %v6943, 16
      %v7086 = vrot.slane %v7084, 5
      %v7087 = vsel %vm620, %v7082, %v7086
      %v7088 = vshrl.u32 %v6943, 16
      %v7090 = vrot.slane %v7088, 4
      %v7091 = vor.u32 %v7090, %v7086
      %v7092 = vrot.slane %v7091, 4
      %v7094 = vshll.u32 %v6944, 16
      %v7096 = vrot.slane %v7094, 5
      %v7097 = vsel %vm620, %v7092, %v7096
      %v7099 = vshrl.u32 %v6945, 16
      %v7101 = vrot.slane %v7099, 4
      %v7102 = vshll.u32 %v6945, 16
      %v7104 = vrot.slane %v7102, 5
      %v7105 = vor.u32 %v7101, %v7104
      %v7106 = vrot.slane %v7105, 4
      %v7108 = vshll.u32 %v6946, 16
      %v7110 = vrot.slane %v7108, 5
      %v7111 = vsel %vm620, %v7106, %v7110
      %v7112 = vshrl.u32 %v6946, 16
      %v7114 = vrot.slane %v7112, 4
      %v7115 = vor.u32 %v7114, %v7110
      %v7116 = vrot.slane %v7115, 4
      %v7118 = vshll.u32 %v6947, 16
      %v7120 = vrot.slane %v7118, 5
      %v7121 = vsel %vm620, %v7116, %v7120
      %v7123 = vshrl.u32 %v6948, 16
      %v7125 = vrot.slane %v7123, 4
      %v7126 = vshll.u32 %v6948, 16
      %v7128 = vrot.slane %v7126, 5
      %v7129 = vor.u32 %v7125, %v7128
      %v7130 = vrot.slane %v7129, 4
      %v7132 = vshll.u32 %v6949, 16
      %v7134 = vrot.slane %v7132, 5
      %v7135 = vsel %vm620, %v7130, %v7134
      %v7136 = vshrl.u32 %v6949, 16
      %v7138 = vrot.slane %v7136, 4
      %v7139 = vor.u32 %v7138, %v7134
      %v7140 = vrot.slane %v7139, 4
      %v7142 = vshll.u32 %v6950, 16
      %v7144 = vrot.slane %v7142, 5
      %v7145 = vsel %vm620, %v7140, %v7144
      %v7147 = vshrl.u32 %v6951, 16
      %v7149 = vrot.slane %v7147, 4
      %v7150 = vshll.u32 %v6951, 16
      %v7152 = vrot.slane %v7150, 5
      %v7153 = vor.u32 %v7149, %v7152
      %v7154 = vrot.slane %v7153, 4
      %v7156 = vshll.u32 %v6952, 16
      %v7158 = vrot.slane %v7156, 5
      %v7159 = vsel %vm620, %v7154, %v7158
      %v7160 = vshrl.u32 %v6952, 16
      %v7162 = vrot.slane %v7160, 4
      %v7163 = vor.u32 %v7162, %v7158
      %v7164 = vrot.slane %v7163, 4
      %v7166 = vshll.u32 %v6953, 16
      %v7168 = vrot.slane %v7166, 5
      %v7169 = vsel %vm620, %v7164, %v7168
      %v7171 = vshrl.u32 %v6954, 16
      %v7173 = vrot.slane %v7171, 4
      %v7174 = vshll.u32 %v6954, 16
      %v7176 = vrot.slane %v7174, 5
      %v7177 = vor.u32 %v7173, %v7176
      %v7178 = vrot.slane %v7177, 4
      %v7180 = vshll.u32 %v6955, 16
      %v7182 = vrot.slane %v7180, 5
      %v7183 = vsel %vm620, %v7178, %v7182
      %v7184 = vshrl.u32 %v6955, 16
      %v7186 = vrot.slane %v7184, 4
      %v7187 = vor.u32 %v7186, %v7182
      %v7188 = vrot.slane %v7187, 4
      %v7190 = vshll.u32 %v6956, 16
      %v7192 = vrot.slane %v7190, 5
      %v7193 = vsel %vm620, %v7188, %v7192
      %v7195 = vshrl.u32 %v6957, 16
      %v7197 = vrot.slane %v7195, 4
      %v7198 = vshll.u32 %v6957, 16
      %v7200 = vrot.slane %v7198, 5
      %v7201 = vor.u32 %v7197, %v7200
      %v7202 = vrot.slane %v7201, 4
      %v7204 = vshll.u32 %v6958, 16
      %v7206 = vrot.slane %v7204, 5
      %v7207 = vsel %vm620, %v7202, %v7206
      %v7208 = vshrl.u32 %v6958, 16
      %v7210 = vrot.slane %v7208, 4
      %v7211 = vor.u32 %v7210, %v7206
      %v7212 = vrot.slane %v7211, 4
      %v7214 = vshll.u32 %v6959, 16
      %v7216 = vrot.slane %v7214, 5
      %v7217 = vsel %vm620, %v7212, %v7216
      %v7219 = vshrl.u32 %v6960, 16
      %v7221 = vrot.slane %v7219, 4
      %v7222 = vshll.u32 %v6960, 16
      %v7224 = vrot.slane %v7222, 5
      %v7225 = vor.u32 %v7221, %v7224
      %v7226 = vrot.slane %v7225, 4
      %v7228 = vshll.u32 %v6961, 16
      %v7230 = vrot.slane %v7228, 5
      %v7231 = vsel %vm620, %v7226, %v7230
      %v7232 = vshrl.u32 %v6961, 16
      %v7234 = vrot.slane %v7232, 4
      %v7235 = vor.u32 %v7234, %v7230
      %v7236 = vrot.slane %v7235, 4
      %v7238 = vshll.u32 %v6962, 16
      %v7240 = vrot.slane %v7238, 5
      %v7241 = vsel %vm620, %v7236, %v7240
      %v7243 = vshrl.u32 %v6963, 16
      %v7245 = vrot.slane %v7243, 4
      %v7246 = vshll.u32 %v6963, 16
      %v7248 = vrot.slane %v7246, 5
      %v7249 = vor.u32 %v7245, %v7248
      %v7250 = vrot.slane %v7249, 4
      %v7252 = vshll.u32 %v6964, 16
      %v7254 = vrot.slane %v7252, 5
      %v7255 = vsel %vm620, %v7250, %v7254
      %v7256 = vshrl.u32 %v6964, 16
      %v7258 = vrot.slane %v7256, 4
      %v7259 = vor.u32 %v7258, %v7254
      %v7260 = vrot.slane %v7259, 4
      %v7262 = vshll.u32 %v6965, 16
      %v7264 = vrot.slane %v7262, 5
      %v7265 = vsel %vm620, %v7260, %v7264
      %v7267 = vshrl.u32 %v6966, 16
      %v7269 = vrot.slane %v7267, 4
      %v7270 = vshll.u32 %v6966, 16
      %v7272 = vrot.slane %v7270, 5
      %v7273 = vor.u32 %v7269, %v7272
      %v7274 = vrot.slane %v7273, 4
      %v7276 = vshll.u32 %v6967, 16
      %v7278 = vrot.slane %v7276, 5
      %v7279 = vsel %vm620, %v7274, %v7278
      %v7280 = vshrl.u32 %v6967, 16
      %v7282 = vrot.slane %v7280, 4
      %v7283 = vor.u32 %v7282, %v7278
      %v7284 = vrot.slane %v7283, 4
      %v7286 = vshll.u32 %v6968, 16
      %v7288 = vrot.slane %v7286, 5
      %v7289 = vsel %vm620, %v7284, %v7288
      %v7291 = vshrl.u32 %v6969, 16
      %v7293 = vrot.slane %v7291, 4
      %v7294 = vshll.u32 %v6969, 16
      %v7296 = vrot.slane %v7294, 5
      %v7297 = vor.u32 %v7293, %v7296
      %v7298 = vrot.slane %v7297, 4
      %v7300 = vshll.u32 %v6970, 16
      %v7302 = vrot.slane %v7300, 5
      %v7303 = vsel %vm620, %v7298, %v7302
      %v7304 = vshrl.u32 %v6970, 16
      %v7306 = vrot.slane %v7304, 4
      %v7307 = vor.u32 %v7306, %v7302
      %v7308 = vrot.slane %v7307, 4
      %v7310 = vshll.u32 %v6971, 16
      %v7312 = vrot.slane %v7310, 5
      %v7313 = vsel %vm620, %v7308, %v7312
      %v7315 = vshrl.u32 %v6972, 16
      %v7317 = vrot.slane %v7315, 4
      %v7318 = vshll.u32 %v6972, 16
      %v7320 = vrot.slane %v7318, 5
      %v7321 = vor.u32 %v7317, %v7320
      %v7322 = vrot.slane %v7321, 4
      %v7324 = vshll.u32 %v6973, 16
      %v7326 = vrot.slane %v7324, 5
      %v7327 = vsel %vm620, %v7322, %v7326
      %v7328 = vshrl.u32 %v6973, 16
      %v7330 = vrot.slane %v7328, 4
      %v7331 = vor.u32 %v7330, %v7326
      %v7332 = vrot.slane %v7331, 4
      %v7334 = vshll.u32 %v6974, 16
      %v7336 = vrot.slane %v7334, 5
      %v7337 = vsel %vm620, %v7332, %v7336
      %v7339 = vshrl.u32 %v6975, 16
      %v7341 = vrot.slane %v7339, 4
      %v7342 = vshll.u32 %v6975, 16
      %v7344 = vrot.slane %v7342, 5
      %v7345 = vor.u32 %v7341, %v7344
      %v7346 = vrot.slane %v7345, 4
      %v7348 = vshll.u32 %v6976, 16
      %v7350 = vrot.slane %v7348, 5
      %v7351 = vsel %vm620, %v7346, %v7350
      %v7352 = vshrl.u32 %v6976, 16
      %v7354 = vrot.slane %v7352, 4
      %v7355 = vor.u32 %v7354, %v7350
      %v7356 = vrot.slane %v7355, 4
      %v7358 = vshll.u32 %v6977, 16
      %v7360 = vrot.slane %v7358, 5
      %v7361 = vsel %vm620, %v7356, %v7360
      %s7362 = scalar_lea.vmem %s3, 72
      %v7363 = vld [vmem:[%s7362] sm:$0xf]
      %v7364 = vld [vmem:[%s7362 + $0x4] sm:$0xf]
      %v7365 = vld [vmem:[%s7362 + $0x8] sm:$0xf]
      %v7366 = vld [vmem:[%s7362 + $0xc] sm:$0xf]
      %v7367 = vld [vmem:[%s7362 + $0x10] sm:$0xf]
      %v7368 = vld [vmem:[%s7362 + $0x14] sm:$0x3]
      %v7369 = vunpack.c.l.b16 %v6991
      %v7370 = vunpack.c.l.b16 %v7001
      %v7371 = vunpack.c.l.b16 %v7015
      %v7372 = vunpack.c.l.b16 %v7025
      %v7373 = vunpack.c.l.b16 %v7039
      %v7374 = vunpack.c.l.b16 %v7049
      %v7375 = vunpack.c.l.b16 %v7063
      %v7376 = vunpack.c.l.b16 %v7073
      %v7377 = vunpack.c.l.b16 %v7087
      %v7378 = vunpack.c.l.b16 %v7097
      %v7379 = vunpack.c.l.b16 %v7111
      %v7380 = vunpack.c.l.b16 %v7121
      %v7381 = vunpack.c.l.b16 %v7135
      %v7382 = vunpack.c.l.b16 %v7145
      %v7383 = vunpack.c.l.b16 %v7159
      %v7384 = vunpack.c.l.b16 %v7169
      %v7385 = vunpack.c.l.b16 %v7183
      %v7386 = vunpack.c.l.b16 %v7193
      %v7387 = vunpack.c.l.b16 %v7207
      %v7388 = vunpack.c.l.b16 %v7217
      %v7389 = vunpack.c.l.b16 %v7231
      %v7390 = vunpack.c.l.b16 %v7241
      %v7391 = vunpack.c.l.b16 %v7255
      %v7392 = vunpack.c.l.b16 %v7265
      %v7393 = vunpack.c.l.b16 %v7279
      %v7394 = vunpack.c.l.b16 %v7289
      %v7395 = vunpack.c.l.b16 %v7303
      %v7396 = vunpack.c.l.b16 %v7313
      %v7397 = vunpack.c.l.b16 %v7327
      %v7398 = vunpack.c.l.b16 %v7337
      %v7399 = vunpack.c.l.b16 %v7351
      %v7400 = vunpack.c.l.b16 %v7361
      %v7401 = vpack.c.b16 %v7370, %v7369
      %v7402 = vpack.c.b16 %v7372, %v7371
      %v7403 = vpack.c.b16 %v7374, %v7373
      %v7404 = vpack.c.b16 %v7376, %v7375
      %v7405 = vpack.c.b16 %v7378, %v7377
      %v7406 = vpack.c.b16 %v7380, %v7379
      %v7407 = vpack.c.b16 %v7382, %v7381
      %v7408 = vpack.c.b16 %v7384, %v7383
      %v7409 = vpack.c.b16 %v7386, %v7385
      %v7410 = vpack.c.b16 %v7388, %v7387
      %v7411 = vpack.c.b16 %v7390, %v7389
      %v7412 = vpack.c.b16 %v7392, %v7391
      %v7413 = vpack.c.b16 %v7394, %v7393
      %v7414 = vpack.c.b16 %v7396, %v7395
      %v7415 = vpack.c.b16 %v7398, %v7397
      %v7416 = vpack.c.b16 %v7400, %v7399
      %v7423 = vunpack.c.l.b16 %v7363
      %v7424 = vunpack.c.l.b16 %v7364
      %v7425 = vunpack.c.l.b16 %v7365
      %v7426 = vunpack.c.l.b16 %v7366
      %v7427 = vunpack.c.l.b16 %v7367
      %v7428 = vunpack.c.l.b16 %v7368
      %v7429 = vpack.c.b16 %v7424, %v7423
      %v7430 = vpack.c.b16 %v7426, %v7425
      %v7431 = vpack.c.b16 %v7428, %v7427
      %v7435 = vsel %vm6027, %v7401, 0
      %v7438 = vsel %vm6027, %v7402, 0
      %v7441 = vsel %vm6027, %v7403, 0
      %v7444 = vsel %vm6027, %v7404, 0
      %v7447 = vsel %vm6027, %v7405, 0
      %v7450 = vsel %vm6027, %v7406, 0
      %v7453 = vsel %vm6027, %v7407, 0
      %v7456 = vsel %vm6027, %v7408, 0
      %v7459 = vsel %vm6027, %v7409, 0
      %v7462 = vsel %vm6027, %v7410, 0
      %v7465 = vsel %vm6027, %v7411, 0
      %v7468 = vsel %vm6027, %v7412, 0
      %v7471 = vsel %vm6027, %v7413, 0
      %v7474 = vsel %vm6027, %v7414, 0
      %v7477 = vsel %vm6027, %v7415, 0
      %v7480 = vsel %vm6027, %v7416, 0
      %v7483 = vsel %vm6076, %v7431, 0
      %7485 = vmatprep.subr.bf16.mxu0 0
      %7486 = vmatpush1.bf16.msra.mxu0 %v7429
      %7487 = vmatprep.subr.bf16.mxu0 0
      %7488 = vmatpush1.bf16.msra.mxu0 %v7430
      %7489 = vmatprep.subr.bf16.mxu0 0
      %7490 = vmatpush1.bf16.msra.mxu0 %v7483
      %7491 = vmatprep.subr.bf16.mxu0 0
      %7492 = vmatpush1.bf16.msra.mxu0 0
      %7493 = vmatprep.subr.bf16.mxu0 0
      %7494 = vmatpush1.bf16.msra.mxu0 0
      %7495 = vmatprep.subr.bf16.mxu0 0
      %7496 = vmatpush1.bf16.msra.mxu0 0
      %7497 = vmatprep.subr.bf16.mxu0 0
      %7498 = vmatpush1.bf16.msra.mxu0 0
      %7499 = vmatprep.subr.bf16.mxu0 0
      %7500 = vmatpush1.bf16.msra.mxu0 0
      %7501 = vmatprep.subr.bf16.mxu0 0
      %7502 = vmatpush1.bf16.msra.mxu0 0
      %7503 = vmatprep.subr.bf16.mxu0 0
      %7504 = vmatpush1.bf16.msra.mxu0 0
      %7505 = vmatprep.subr.bf16.mxu0 0
      %7506 = vmatpush1.bf16.msra.mxu0 0
      %7507 = vmatprep.subr.bf16.mxu0 0
      %7508 = vmatpush1.bf16.msra.mxu0 0
      %7509 = vmatprep.subr.bf16.mxu0 0
      %7510 = vmatpush1.bf16.msra.mxu0 0
      %7511 = vmatprep.subr.bf16.mxu0 0
      %7512 = vmatpush1.bf16.msra.mxu0 0
      %7513 = vmatprep.subr.bf16.mxu0 0
      %7514 = vmatpush1.bf16.msra.mxu0 0
      %7515 = vmatprep.subr.bf16.mxu0 0
      %7516 = vmatpush1.bf16.msra.mxu0 0
      %7517 = vmatprep.mubr.bf16.mxu0 0
      %7518 = vmatmul.mubr.bf16.gmra.mrb[0].mxu0 %v7435
      %v7519 = vpop.f32.mrb[0].mxu0
      %v7520 = vadd.f32 0.0, %v7519
      %v7521 = vpop.f32.mrb[0].mxu0
      %v7522 = vpop.f32.mrb[0].mxu0
      %v7523 = vadd.f32 0.0, %v7522
      %v7524 = vpop.f32.mrb[0].mxu0
      %7525 = vmatprep.mubr.bf16.mxu0 0
      %7526 = vmatmul.mubr.bf16.gmra.mrb[0].mxu0 %v7438
      %v7527 = vpop.f32.mrb[0].mxu0
      %v7528 = vadd.f32 0.0, %v7527
      %v7529 = vpop.f32.mrb[0].mxu0
      %v7530 = vpop.f32.mrb[0].mxu0
      %v7531 = vadd.f32 0.0, %v7530
      %v7532 = vpop.f32.mrb[0].mxu0
      %7533 = vmatprep.mubr.bf16.mxu0 0
      %7534 = vmatmul.mubr.bf16.gmra.mrb[0].mxu0 %v7441
      %v7535 = vpop.f32.mrb[0].mxu0
      %v7536 = vadd.f32 0.0, %v7535
      %v7537 = vpop.f32.mrb[0].mxu0
      %v7538 = vpop.f32.mrb[0].mxu0
      %v7539 = vadd.f32 0.0, %v7538
      %v7540 = vpop.f32.mrb[0].mxu0
      %7541 = vmatprep.mubr.bf16.mxu0 0
      %7542 = vmatmul.mubr.bf16.gmra.mrb[0].mxu0 %v7444
      %v7543 = vpop.f32.mrb[0].mxu0
      %v7544 = vadd.f32 0.0, %v7543
      %v7545 = vpop.f32.mrb[0].mxu0
      %v7546 = vpop.f32.mrb[0].mxu0
      %v7547 = vadd.f32 0.0, %v7546
      %v7548 = vpop.f32.mrb[0].mxu0
      %7549 = vmatprep.mubr.bf16.mxu0 0
      %7550 = vmatmul.mubr.bf16.gmra.mrb[0].mxu0 %v7447
      %v7551 = vpop.f32.mrb[0].mxu0
      %v7552 = vadd.f32 0.0, %v7551
      %v7553 = vpop.f32.mrb[0].mxu0
      %v7554 = vpop.f32.mrb[0].mxu0
      %v7555 = vadd.f32 0.0, %v7554
      %v7556 = vpop.f32.mrb[0].mxu0
      %7557 = vmatprep.mubr.bf16.mxu0 0
      %7558 = vmatmul.mubr.bf16.gmra.mrb[0].mxu0 %v7450
      %v7559 = vpop.f32.mrb[0].mxu0
      %v7560 = vadd.f32 0.0, %v7559
      %v7561 = vpop.f32.mrb[0].mxu0
      %v7562 = vpop.f32.mrb[0].mxu0
      %v7563 = vadd.f32 0.0, %v7562
      %v7564 = vpop.f32.mrb[0].mxu0
      %7565 = vmatprep.mubr.bf16.mxu0 0
      %7566 = vmatmul.mubr.bf16.gmra.mrb[0].mxu0 %v7453
      %v7567 = vpop.f32.mrb[0].mxu0
      %v7568 = vadd.f32 0.0, %v7567
      %v7569 = vpop.f32.mrb[0].mxu0
      %v7570 = vpop.f32.mrb[0].mxu0
      %v7571 = vadd.f32 0.0, %v7570
      %v7572 = vpop.f32.mrb[0].mxu0
      %7573 = vmatprep.mubr.bf16.mxu0 0
      %7574 = vmatmul.mubr.bf16.gmra.mrb[0].mxu0 %v7456
      %v7575 = vpop.f32.mrb[0].mxu0
      %v7576 = vadd.f32 0.0, %v7575
      %v7577 = vpop.f32.mrb[0].mxu0
      %v7578 = vpop.f32.mrb[0].mxu0
      %v7579 = vadd.f32 0.0, %v7578
      %v7580 = vpop.f32.mrb[0].mxu0
      %7581 = vmatprep.mubr.bf16.mxu0 0
      %7582 = vmatmul.mubr.bf16.gmra.mrb[0].mxu0 %v7459
      %v7583 = vpop.f32.mrb[0].mxu0
      %v7584 = vadd.f32 0.0, %v7583
      %v7585 = vpop.f32.mrb[0].mxu0
      %v7586 = vpop.f32.mrb[0].mxu0
      %v7587 = vadd.f32 0.0, %v7586
      %v7588 = vpop.f32.mrb[0].mxu0
      %7589 = vmatprep.mubr.bf16.mxu0 0
      %7590 = vmatmul.mubr.bf16.gmra.mrb[0].mxu0 %v7462
      %v7591 = vpop.f32.mrb[0].mxu0
      %v7592 = vadd.f32 0.0, %v7591
      %v7593 = vpop.f32.mrb[0].mxu0
      %v7594 = vpop.f32.mrb[0].mxu0
      %v7595 = vadd.f32 0.0, %v7594
      %v7596 = vpop.f32.mrb[0].mxu0
      %7597 = vmatprep.mubr.bf16.mxu0 0
      %7598 = vmatmul.mubr.bf16.gmra.mrb[0].mxu0 %v7465
      %v7599 = vpop.f32.mrb[0].mxu0
      %v7600 = vadd.f32 0.0, %v7599
      %v7601 = vpop.f32.mrb[0].mxu0
      %v7602 = vpop.f32.mrb[0].mxu0
      %v7603 = vadd.f32 0.0, %v7602
      %v7604 = vpop.f32.mrb[0].mxu0
      %7605 = vmatprep.mubr.bf16.mxu0 0
      %7606 = vmatmul.mubr.bf16.gmra.mrb[0].mxu0 %v7468
      %v7607 = vpop.f32.mrb[0].mxu0
      %v7608 = vadd.f32 0.0, %v7607
      %v7609 = vpop.f32.mrb[0].mxu0
      %v7610 = vpop.f32.mrb[0].mxu0
      %v7611 = vadd.f32 0.0, %v7610
      %v7612 = vpop.f32.mrb[0].mxu0
      %7613 = vmatprep.mubr.bf16.mxu0 0
      %7614 = vmatmul.mubr.bf16.gmra.mrb[0].mxu0 %v7471
      %v7615 = vpop.f32.mrb[0].mxu0
      %v7616 = vadd.f32 0.0, %v7615
      %v7617 = vpop.f32.mrb[0].mxu0
      %v7618 = vpop.f32.mrb[0].mxu0
      %v7619 = vadd.f32 0.0, %v7618
      %v7620 = vpop.f32.mrb[0].mxu0
      %7621 = vmatprep.mubr.bf16.mxu0 0
      %7622 = vmatmul.mubr.bf16.gmra.mrb[0].mxu0 %v7474
      %v7623 = vpop.f32.mrb[0].mxu0
      %v7624 = vadd.f32 0.0, %v7623
      %v7625 = vpop.f32.mrb[0].mxu0
      %v7626 = vpop.f32.mrb[0].mxu0
      %v7627 = vadd.f32 0.0, %v7626
      %v7628 = vpop.f32.mrb[0].mxu0
      %7629 = vmatprep.mubr.bf16.mxu0 0
      %7630 = vmatmul.mubr.bf16.gmra.mrb[0].mxu0 %v7477
      %v7631 = vpop.f32.mrb[0].mxu0
      %v7632 = vadd.f32 0.0, %v7631
      %v7633 = vpop.f32.mrb[0].mxu0
      %v7634 = vpop.f32.mrb[0].mxu0
      %v7635 = vadd.f32 0.0, %v7634
      %v7636 = vpop.f32.mrb[0].mxu0
      %7637 = vmatprep.mubr.bf16.mxu0 0
      %7638 = vmatmul.mubr.bf16.gmra.mrb[0].mxu0 %v7480
      %v7639 = vpop.f32.mrb[0].mxu0
      %v7640 = vadd.f32 0.0, %v7639
      %v7641 = vpop.f32.mrb[0].mxu0
      %v7642 = vpop.f32.mrb[0].mxu0
      %v7643 = vadd.f32 0.0, %v7642
      %v7644 = vpop.f32.mrb[0].mxu0
      %7645 = vdwg.mxu0
      %v7646 = vadd.f32 %v6898, %v7520
      %v7647 = vadd.f32 %v6899, %v7523
      %v7648 = vadd.f32 %v6900, %v7528
      %v7649 = vadd.f32 %v6901, %v7531
      %v7650 = vadd.f32 %v6902, %v7536
      %v7651 = vadd.f32 %v6903, %v7539
      %v7652 = vadd.f32 %v6904, %v7544
      %v7653 = vadd.f32 %v6905, %v7547
      %v7654 = vadd.f32 %v6906, %v7552
      %v7655 = vadd.f32 %v6907, %v7555
      %v7656 = vadd.f32 %v6908, %v7560
      %v7657 = vadd.f32 %v6909, %v7563
      %v7658 = vadd.f32 %v6910, %v7568
      %v7659 = vadd.f32 %v6911, %v7571
      %v7660 = vadd.f32 %v6912, %v7576
      %v7661 = vadd.f32 %v6913, %v7579
      %v7662 = vadd.f32 %v6914, %v7584
      %v7663 = vadd.f32 %v6915, %v7587
      %v7664 = vadd.f32 %v6916, %v7592
      %v7665 = vadd.f32 %v6917, %v7595
      %v7666 = vadd.f32 %v6918, %v7600
      %v7667 = vadd.f32 %v6919, %v7603
      %v7668 = vadd.f32 %v6920, %v7608
      %v7669 = vadd.f32 %v6921, %v7611
      %v7670 = vadd.f32 %v6922, %v7616
      %v7671 = vadd.f32 %v6923, %v7619
      %v7672 = vadd.f32 %v6924, %v7624
      %v7673 = vadd.f32 %v6925, %v7627
      %v7674 = vadd.f32 %v6926, %v7632
      %v7675 = vadd.f32 %v6927, %v7635
      %v7676 = vadd.f32 %v6928, %v7640
      %v7677 = vadd.f32 %v6929, %v7643
      %v7678 = vld [vmem:[%s6] sm:$0x1]
      %v7680 = vlaneseq
      %v7681 = vshrl.u32 %v7680, 7
      %v7682 = vsub.s32 0, %v7681
      %v7683 = vrot.slane %v7678, %v7682
      %v7685 = vadd.f32 %v7646, %v7683
      %v7686 = vadd.f32 %v7647, %v7683
      %v7687 = vadd.f32 %v7648, %v7683
      %v7688 = vadd.f32 %v7649, %v7683
      %v7689 = vadd.f32 %v7650, %v7683
      %v7690 = vadd.f32 %v7651, %v7683
      %v7691 = vadd.f32 %v7652, %v7683
      %v7692 = vadd.f32 %v7653, %v7683
      %v7693 = vadd.f32 %v7654, %v7683
      %v7694 = vadd.f32 %v7655, %v7683
      %v7695 = vadd.f32 %v7656, %v7683
      %v7696 = vadd.f32 %v7657, %v7683
      %v7697 = vadd.f32 %v7658, %v7683
      %v7698 = vadd.f32 %v7659, %v7683
      %v7699 = vadd.f32 %v7660, %v7683
      %v7700 = vadd.f32 %v7661, %v7683
      %v7701 = vadd.f32 %v7662, %v7683
      %v7702 = vadd.f32 %v7663, %v7683
      %v7703 = vadd.f32 %v7664, %v7683
      %v7704 = vadd.f32 %v7665, %v7683
      %v7705 = vadd.f32 %v7666, %v7683
      %v7706 = vadd.f32 %v7667, %v7683
      %v7707 = vadd.f32 %v7668, %v7683
      %v7708 = vadd.f32 %v7669, %v7683
      %v7709 = vadd.f32 %v7670, %v7683
      %v7710 = vadd.f32 %v7671, %v7683
      %v7711 = vadd.f32 %v7672, %v7683
      %v7712 = vadd.f32 %v7673, %v7683
      %v7713 = vadd.f32 %v7674, %v7683
      %v7714 = vadd.f32 %v7675, %v7683
      %v7715 = vadd.f32 %v7676, %v7683
      %v7716 = vadd.f32 %v7677, %v7683
      %v7717 = vmax.f32 %v7685, 0.0
      %v7718 = vmax.f32 %v7686, 0.0
      %v7719 = vmax.f32 %v7687, 0.0
      %v7720 = vmax.f32 %v7688, 0.0
      %v7721 = vmax.f32 %v7689, 0.0
      %v7722 = vmax.f32 %v7690, 0.0
      %v7723 = vmax.f32 %v7691, 0.0
      %v7724 = vmax.f32 %v7692, 0.0
      %v7725 = vmax.f32 %v7693, 0.0
      %v7726 = vmax.f32 %v7694, 0.0
      %v7727 = vmax.f32 %v7695, 0.0
      %v7728 = vmax.f32 %v7696, 0.0
      %v7729 = vmax.f32 %v7697, 0.0
      %v7730 = vmax.f32 %v7698, 0.0
      %v7731 = vmax.f32 %v7699, 0.0
      %v7732 = vmax.f32 %v7700, 0.0
      %v7733 = vmax.f32 %v7701, 0.0
      %v7734 = vmax.f32 %v7702, 0.0
      %v7735 = vmax.f32 %v7703, 0.0
      %v7736 = vmax.f32 %v7704, 0.0
      %v7737 = vmax.f32 %v7705, 0.0
      %v7738 = vmax.f32 %v7706, 0.0
      %v7739 = vmax.f32 %v7707, 0.0
      %v7740 = vmax.f32 %v7708, 0.0
      %v7741 = vmax.f32 %v7709, 0.0
      %v7742 = vmax.f32 %v7710, 0.0
      %v7743 = vmax.f32 %v7711, 0.0
      %v7744 = vmax.f32 %v7712, 0.0
      %v7745 = vmax.f32 %v7713, 0.0
      %v7746 = vmax.f32 %v7714, 0.0
      %v7747 = vmax.f32 %v7715, 0.0
      %v7748 = vmax.f32 %v7716, 0.0
      %7749 = vxpose.xlu0.b32.start [1/16] %v7717, 128
      %7750 = vxpose.xlu0.b32.cont [2/16] %v7718, 128
      %7751 = vxpose.xlu0.b32.cont [3/16] %v7719, 128
      %7752 = vxpose.xlu0.b32.cont [4/16] %v7720, 128
      %7753 = vxpose.xlu0.b32.cont [5/16] %v7721, 128
      %7754 = vxpose.xlu0.b32.cont [6/16] %v7722, 128
      %7755 = vxpose.xlu0.b32.cont [7/16] %v7723, 128
      %7756 = vxpose.xlu0.b32.cont [8/16] %v7724, 128
      %7757 = vxpose.xlu0.b32.cont [9/16] %v7725, 128
      %7758 = vxpose.xlu0.b32.cont [10/16] %v7726, 128
      %7759 = vxpose.xlu0.b32.cont [11/16] %v7727, 128
      %7760 = vxpose.xlu0.b32.cont [12/16] %v7728, 128
      %7761 = vxpose.xlu0.b32.cont [13/16] %v7729, 128
      %7762 = vxpose.xlu0.b32.cont [14/16] %v7730, 128
      %7763 = vxpose.xlu0.b32.cont [15/16] %v7731, 128
      %7764 = vxpose.xlu0.b32.end [16/16] %v7732, 128
      %v7765 = vpop.trf.xlu0
      %v7766 = vpop.trf.xlu0
      %v7767 = vpop.trf.xlu0
      %v7768 = vpop.trf.xlu0
      %v7769 = vpop.trf.xlu0
      %v7770 = vpop.trf.xlu0
      %v7771 = vpop.trf.xlu0
      %v7772 = vpop.trf.xlu0
      %v7773 = vpop.trf.xlu0
      %v7774 = vpop.trf.xlu0
      %v7775 = vpop.trf.xlu0
      %v7776 = vpop.trf.xlu0
      %v7777 = vpop.trf.xlu0
      %v7778 = vpop.trf.xlu0
      %v7779 = vpop.trf.xlu0
      %v7780 = vpop.trf.xlu0
      %7781 = vxpose.xlu0.b32.start [1/16] %v7733, 128
      %7782 = vxpose.xlu0.b32.cont [2/16] %v7734, 128
      %7783 = vxpose.xlu0.b32.cont [3/16] %v7735, 128
      %7784 = vxpose.xlu0.b32.cont [4/16] %v7736, 128
      %7785 = vxpose.xlu0.b32.cont [5/16] %v7737, 128
      %7786 = vxpose.xlu0.b32.cont [6/16] %v7738, 128
      %7787 = vxpose.xlu0.b32.cont [7/16] %v7739, 128
      %7788 = vxpose.xlu0.b32.cont [8/16] %v7740, 128
      %7789 = vxpose.xlu0.b32.cont [9/16] %v7741, 128
      %7790 = vxpose.xlu0.b32.cont [10/16] %v7742, 128
      %7791 = vxpose.xlu0.b32.cont [11/16] %v7743, 128
      %7792 = vxpose.xlu0.b32.cont [12/16] %v7744, 128
      %7793 = vxpose.xlu0.b32.cont [13/16] %v7745, 128
      %7794 = vxpose.xlu0.b32.cont [14/16] %v7746, 128
      %7795 = vxpose.xlu0.b32.cont [15/16] %v7747, 128
      %7796 = vxpose.xlu0.b32.end [16/16] %v7748, 128
      %v7797 = vpop.trf.xlu0
      %v7798 = vpop.trf.xlu0
      %v7799 = vpop.trf.xlu0
      %v7800 = vpop.trf.xlu0
      %v7801 = vpop.trf.xlu0
      %v7802 = vpop.trf.xlu0
      %v7803 = vpop.trf.xlu0
      %v7804 = vpop.trf.xlu0
      %v7805 = vpop.trf.xlu0
      %v7806 = vpop.trf.xlu0
      %v7807 = vpop.trf.xlu0
      %v7808 = vpop.trf.xlu0
      %v7809 = vpop.trf.xlu0
      %v7810 = vpop.trf.xlu0
      %v7811 = vpop.trf.xlu0
      %v7812 = vpop.trf.xlu0
      %v7819 = vrot.slane %v7765, 4
      %v7820 = vrot.slane %v7797, 4
      %v7821 = vrot.slane %v7766, 4
      %v7822 = vsel %vm2787, %v7819, %v7821
      %v7823 = vrot.slane %v7798, 4
      %v7824 = vsel %vm2787, %v7820, %v7823
      %v7825 = vrot.slane %v7767, 4
      %v7826 = vsel %vm2787, %v7821, %v7825
      %v7827 = vrot.slane %v7799, 4
      %v7828 = vsel %vm2787, %v7823, %v7827
      %7835 = vst [vmem:[%s278 + $0x50] sm:$0xf0] %v7819
      %7836 = vst [vmem:[%s278 + $0x58] sm:$0xf0] %v7820
      %7837 = vst [vmem:[%s278 + $0x60] sm:$0xff] %v7822
      %7838 = vst [vmem:[%s278 + $0x68] sm:$0xff] %v7824
      %7839 = vst [vmem:[%s278 + $0x70] sm:$0xff] %v7826
      %7840 = vst [vmem:[%s278 + $0x78] sm:$0xff] %v7828
      %p7841 = scmp.lt.s32.totalorder %s18, 1
      %s7842 = scalar_select %p7841, %s18, 1
      %s7843 = smul.addr %s7842, 16
      %s7844 = smul.addr %s7843, 8
      %s7845 = scalar_lea.vmem %s7, %s7844
      // Predicated region
      $region49: #{dense_block_forward.1} parent=47 // pred_check
        %p7846 = pneg %p188
      $region50: #{dense_block_forward.1} parent=47 // pred_check_branch
        %7848 = sbr.rel (%p7846) target = $region52
      $region51: #{dense_block_forward.1} parent=47 // pred_region
        _
      $region52: #{dense_block_forward.1} parent=47 // pred_fallthru
        _
    $region48: #{dense_block_forward.1} parent=5 // pred_fallthru
      _
    %p7849 = scmp.le.s32.totalorder 2, %s13
    // Predicated region
    $region53: #{dense_block_forward.1} parent=5 // pred_check
      %p7850 = pneg %p7849
    $region54: #{dense_block_forward.1} parent=5 // pred_check_branch
      %7852 = sbr.rel (%p7850) target = $region56
    $region55: #{dense_block_forward.1} parent=5 // pred_region
      %s7853 = ssub.s32 %s13, 2
      // Predicated region
      $region57: #{dense_block_forward.1} parent=55 // pred_check
        %p7854 = pneg %p194
      $region58: #{dense_block_forward.1} parent=55 // pred_check_branch
        %7856 = sbr.rel (%p7854) target = $region60
      $region59: #{dense_block_forward.1} parent=55 // pred_region
        %p7857 = scmp.lt.s32.totalorder %s19, 1
        %s7858 = scalar_select %p7857, %s19, 1
        %s7859 = smul.addr %s7858, 16
        %s7860 = smul.addr %s7859, 8
        %s7861 = scalar_lea.vmem %s7, %s7860
      $region60: #{dense_block_forward.1} parent=55 // pred_fallthru
        _
    $region56: #{dense_block_forward.1} parent=5 // pred_fallthru
      _
  $region6: #{dense_block_forward.1} parent=0 // loop_footer
    %s17 = sadd.s32 1, %s13
  $region7: #{dense_block_forward.1} parent=0 // loop_footer_branch
    %12 = sbr.rel target = $region3
  $region8: #{dense_block_forward.1} parent=0 // loop_exit
    _

</llo_original>
